<compile_context>
chip_gen: v5e
topology: v5e:2x2
jax: 0.10.0
libtpu: 0.0.40
codegen_flags: <defaults>
</compile_context>

<pallas_src>
import functools

import jax
import jax.numpy as jnp
from jax import lax
from jax.experimental import pallas as pl
from jax.experimental.pallas import tpu as pltpu

_BN_EPS = 1e-4          # BatchNorm2d eps used by the `block` in mug/denoising.py
_LEAKY_SLOPE = 0.2      # LeakyReLU negative slope used by the `block`
_VMEM_LIMIT_BYTES = 64 * 1024 * 1024   # fits v7x physical; v5e/v6e have 128 MiB


def _round_up(x, m):
    return ((x + m - 1) // m) * m


# ---------------------------------------------------------------------------
# Fused layer kernel:
#   input epilogue (deferred BN affine + LeakyReLU of the producing layer)
#   [+ optional second input for the skip add]
#   -> 3x3 conv as ONE (Cout_p, 9*Cin_p) @ (9*Cin_p, R) MXU matmul
#   -> output written in slab layout (pads exactly zero)
#   -> optional per-image BN partial statistics [sum, sumsq]
# ---------------------------------------------------------------------------
def _make_layer_kernel(n_in, act_flags, with_stats, *, Wp, R, mxu_dtype,
                       neg_slope):
    """Builds the kernel body for one UNet layer.

    Ref order (matches the pallas_call argument order):
      inputs : x_0..x_{n_in-1}          (1, Cin_p, L)  slabs (act dtype)
               ss_i for each act input  (2, Cin_p, 1)  [scale, shift] f32
               w                        (Cout_p, 9*Cin_p) packed taps
               mask                     (1, L)          1.0 on interior pixels
      outputs: y                        (1, Cout_p, L)  slab (act dtype)
               stats (if with_stats)    (1, 2, Cout_p, 1) per-image [sum,sumsq]
      scratch: xin                      (Cin_p, L) f32
               patch                    (9*Cin_p, R) f32
    """
    n_ss = sum(act_flags)
    if jnp.dtype(mxu_dtype) == jnp.dtype(jnp.float32):
        dot_kwargs = dict(preferred_element_type=jnp.float32,
                          precision=lax.Precision.HIGHEST)
    else:
        dot_kwargs = dict(preferred_element_type=jnp.float32)

    def kernel(*refs):
        it = iter(refs)
        x_refs = [next(it) for _ in range(n_in)]
        ss_refs = [next(it) for _ in range(n_ss)]
        w_ref = next(it)
        mask_ref = next(it)
        y_ref = next(it)
        st_ref = next(it) if with_stats else None
        xin_ref = next(it)
        patch_ref = next(it)

        cin_p = xin_ref.shape[0]
        L = xin_ref.shape[1]
        cout_p = y_ref.shape[1]

        mask_l = mask_ref[...]                                   # (1, L) f32

        # ---- deferred epilogue of the producing layer(s) + skip add ------
        xin = None
        si = 0
        for i in range(n_in):
            v = x_refs[i][0].astype(jnp.float32)                 # (cin_p, L)
            if act_flags[i]:
                ss = ss_refs[si]
                si += 1
                v = v * ss[0] + ss[1]                            # BN affine
                v = jnp.where(v >= 0, v, neg_slope * v)          # LeakyReLU
                v = v * mask_l                                   # keep pads == 0
            xin = v if xin is None else xin + v
        xin_ref[...] = xin

        # ---- build the (9*cin_p, R) patch: tap (kh, kw) occupies sublane
        #      rows [(kh*3+kw)*cin_p, ...) as a lane-shifted view of the slab.
        for k in range(9):
            kh, kw = divmod(k, 3)
            patch_ref[pl.ds(k * cin_p, cin_p), :] = (
                xin_ref[:, pl.ds(kh * Wp + kw, R)])

        # ---- one MXU matmul, f32 accumulation -----------------------------
        out = jnp.dot(w_ref[...], patch_ref[...].astype(mxu_dtype),
                      **dot_kwargs)                              # (cout_p, R) f32

        # Zero the two wrap-around columns of each flattened row; they
        # coincide with the slab's pad columns so the store keeps pads == 0.
        out = out * mask_ref[:, pl.ds(Wp + 1, R)]

        # ---- write output in slab layout ----------------------------------
        y_ref[0] = jnp.zeros((cout_p, L), y_ref.dtype)
        y_ref[0, :, pl.ds(Wp + 1, R)] = out.astype(y_ref.dtype)

        # ---- per-image BatchNorm partial statistics (f32) ------------------
        if with_stats:
            st_ref[0, 0] = jnp.sum(out, axis=1, keepdims=True)
            st_ref[0, 1] = jnp.sum(out * out, axis=1, keepdims=True)

    return kernel


# ---------------------------------------------------------------------------
# Layer wrapper.
# ---------------------------------------------------------------------------
def _run_layer(inputs, conv_w, *, with_stats, act_dtype, mxu_dtype, dims):
    """Runs one fused layer.

    inputs : list of (slab (N, Cin_p, L), pending_scale_shift (2, Cin_p, 1) or
             None).  Multiple inputs are summed (UNet skip add).
    conv_w : (Cout, Cin, 3, 3) conv weight.
    Returns (output slab (N, Cout_p, L), per-image partial stats or None).
    """
    H, W, Wp, L = dims
    R = H * Wp
    slabs = [s for s, _ in inputs]
    sss = [ss for _, ss in inputs if ss is not None]
    act_flags = tuple(ss is not None for _, ss in inputs)
    N, cin_p, _ = slabs[0].shape
    cout, cin = conv_w.shape[0], conv_w.shape[1]
    cout_p = _round_up(max(cout, 8), 8)

    # (Cout, Cin, 3, 3) -> (Cout_p, 9*Cin_p); column index = (kh*3+kw)*Cin_p + c
    # (matches the sublane-stacked patch built inside the kernel).
    w2d = jnp.transpose(conv_w.astype(jnp.float32), (0, 2, 3, 1))   # (Cout,3,3,Cin)
    w2d = jnp.pad(w2d, ((0, cout_p - cout), (0, 0), (0, 0), (0, cin_p - cin)))
    w2d = w2d.reshape(cout_p, 9 * cin_p).astype(mxu_dtype)

    # Interior mask over the slab: rows 1..H, cols 1..W of the padded grid.
    pos = jnp.arange(L, dtype=jnp.int32)
    rows, cols = pos // Wp, pos % Wp
    mask = (((rows >= 1) & (rows <= H) & (cols >= 1) & (cols <= W))
            .astype(jnp.float32).reshape(1, L))

    kernel = _make_layer_kernel(len(inputs), act_flags, with_stats,
                                Wp=Wp, R=R, mxu_dtype=mxu_dtype,
                                neg_slope=_LEAKY_SLOPE)

    in_specs = (
        [pl.BlockSpec((1, cin_p, L), lambda n: (n, 0, 0)) for _ in slabs]
        + [pl.BlockSpec((2, cin_p, 1), lambda n: (0, 0, 0)) for _ in sss]
        + [pl.BlockSpec((cout_p, 9 * cin_p), lambda n: (0, 0)),   # weights (pinned)
           pl.BlockSpec((1, L), lambda n: (0, 0))])               # mask    (pinned)
    out_shape = [jax.ShapeDtypeStruct((N, cout_p, L), act_dtype)]
    out_specs = [pl.BlockSpec((1, cout_p, L), lambda n: (n, 0, 0))]
    if with_stats:
        out_shape.append(jax.ShapeDtypeStruct((N, 2, cout_p, 1), jnp.float32))
        out_specs.append(pl.BlockSpec((1, 2, cout_p, 1), lambda n: (n, 0, 0, 0)))

    act_bytes = jnp.dtype(act_dtype).itemsize
    cost = pl.CostEstimate(
        flops=2 * N * cout_p * 9 * cin_p * R,
        transcendentals=0,
        bytes_accessed=(N * (len(slabs) + 1) * cin_p * L * act_bytes
                        + 9 * cout_p * cin_p * jnp.dtype(mxu_dtype).itemsize
                        + L * 4))

    res = pl.pallas_call(
        kernel,
        grid=(N,),   # per-image partial stats -> no carry -> megacore-parallel
        in_specs=in_specs,
        out_specs=out_specs,
        out_shape=out_shape,
        scratch_shapes=[pltpu.VMEM((cin_p, L), jnp.float32),
                        pltpu.VMEM((9 * cin_p, R), jnp.float32)],
        compiler_params=pltpu.CompilerParams(
            dimension_semantics=("parallel",),
            vmem_limit_bytes=_VMEM_LIMIT_BYTES),
        cost_estimate=cost,
    )(*slabs, *sss, w2d, mask)

    if with_stats:
        return res[0], res[1]
    return res[0], None


def _finalize_bn(partials, gamma, beta, count, eps):
    """(N, 2, Cout_p, 1) per-image [sum, sumsq] -> (2, Cout_p, 1) [scale, shift]."""
    cout_p = partials.shape[2]
    cout = gamma.shape[0]
    s = jnp.sum(partials.astype(jnp.float32), axis=0)      # (2, cout_p, 1)
    mean = s[0] / count
    var = jnp.maximum(s[1] / count - mean * mean, 0.0)      # biased, like PyTorch BN
    g = jnp.pad(gamma.astype(jnp.float32), (0, cout_p - cout)).reshape(cout_p, 1)
    b = jnp.pad(beta.astype(jnp.float32), (0, cout_p - cout)).reshape(cout_p, 1)
    scale = g / jnp.sqrt(var + eps)
    shift = b - mean * scale
    return jnp.stack([scale, shift], axis=0)                # (2, cout_p, 1)


def _pack_input_slab(x, cin_p, H, W, Wp, L, act_dtype):
    """NCHW image -> zero-padded, channel-padded, row-major flattened slab."""
    N, cin = x.shape[0], x.shape[1]
    xp = jnp.pad(x.astype(jnp.float32),
                 ((0, 0), (0, cin_p - cin), (1, 2), (1, 1)))    # (N, cin_p, H+3, Wp)
    xp = xp.reshape(N, cin_p, (H + 3) * Wp)
    xp = jnp.pad(xp, ((0, 0), (0, 0), (0, L - (H + 3) * Wp)))
    return xp.astype(act_dtype)


def _extract_output(slab, cout, H, W, Wp):
    """Slab -> NCHW (drop channel padding, pad columns and pad rows)."""
    N = slab.shape[0]
    core = slab[:, :cout, Wp + 1:Wp + 1 + H * Wp].astype(jnp.float32)
    return core.reshape(N, cout, H, Wp)[..., :W]


def convtranspose_to_conv_weight(w_t):
    # ConvTranspose2d(C, C, 3, stride=1, padding=1) == Conv2d with the
    # (in,out)-swapped, spatially flipped kernel and padding 3-1-1 = 1.
    # PyTorch ConvTranspose weight layout is (in_channels, out_channels, kh, kw).
    return jnp.flip(jnp.transpose(w_t, (1, 0, 2, 3)), axis=(2, 3))


# ---------------------------------------------------------------------------
# UNet2D parameters + forward (mirrors the PyTorch module construction).
# ---------------------------------------------------------------------------
def init_unet_params(key, in_channels=1, out_channels=1, nfeatures=(4, 8), nblocks=2):
    def conv_init(k, cout, cin):
        return 0.3 * jax.random.normal(k, (cout, cin, 3, 3), jnp.float32)

    def block_init(k, cin, cout):
        kw, kg, kb = jax.random.split(k, 3)
        return dict(w=conv_init(kw, cout, cin),
                    gamma=1.0 + 0.1 * jax.random.normal(kg, (cout,), jnp.float32),
                    beta=0.1 * jax.random.normal(kb, (cout,), jnp.float32))

    keys = iter(jax.random.split(key, 64))
    params = dict()
    params["head"] = conv_init(next(keys), nfeatures[0], in_channels)
    down = []
    for k in range(len(nfeatures) - 1):
        blocks = [block_init(next(keys),
                             nfeatures[k] if l == 0 else nfeatures[k + 1],
                             nfeatures[k + 1]) for l in range(nblocks)]
        down.append(dict(blocks=blocks,
                         down_w=conv_init(next(keys), nfeatures[k + 1], nfeatures[k + 1])))
    params["down"] = down
    # NB: the PyTorch module builds the body with an OrderedDict whose key
    # 'block' repeats, so only the LAST block survives -> body is ONE block.
    params["body"] = block_init(next(keys), nfeatures[-1], nfeatures[-1])
    up = []
    for k in range(len(nfeatures) - 1):
        up_w_t = 0.3 * jax.random.normal(
            next(keys), (nfeatures[-k - 1], nfeatures[-k - 1], 3, 3), jnp.float32)
        blocks = [block_init(next(keys),
                             nfeatures[-k - 1] if l == 0 else nfeatures[-k - 2],
                             nfeatures[-k - 2]) for l in range(nblocks)]
        up.append(dict(up_w_t=up_w_t, blocks=blocks))
    params["up"] = up
    params["tail"] = conv_init(next(keys), out_channels, nfeatures[0])
    return params


def unet2d_forward(params, x, *, act_dtype=jnp.bfloat16, mxu_dtype=jnp.bfloat16):
    """Pallas forward.  Activations travel between layers in slab layout; each
    layer kernel applies the previous layer's BN affine + LeakyReLU on load."""
    N, cin, H, W = x.shape
    Wp = W + 2
    L = _round_up((H + 3) * Wp, 128)    # lane-dense, >= tap-overrun slack
    dims = (H, W, Wp, L)
    count = float(N * H * W)

    run = functools.partial(_run_layer, act_dtype=act_dtype,
                            mxu_dtype=mxu_dtype, dims=dims)

    def plain_conv(ins, w):                       # conv-only layer (head/down/up/tail)
        y, _ = run(ins, w, with_stats=False)
        return (y, None)

    def block(t, p):                              # conv + (deferred) BN + LeakyReLU
        y, part = run([t], p["w"], with_stats=True)
        ss = _finalize_bn(part, p["gamma"], p["beta"], count, _BN_EPS)
        return (y, ss)

    cin_p0 = _round_up(max(cin, 8), 8)
    x_slab = _pack_input_slab(x, cin_p0, H, W, Wp, L, act_dtype)

    z = [plain_conv([(x_slab, None)], params["head"])]
    for down_k in params["down"]:
        t = z[-1]
        for blk in down_k["blocks"]:
            t = block(t, blk)
        z.append(plain_conv([t], down_k["down_w"]))
    y = block(z[-1], params["body"])
    for k, up_k in enumerate(params["up"]):
        w_up = convtranspose_to_conv_weight(up_k["up_w_t"])
        y = plain_conv([y, z[-k - 1]], w_up)      # skip add fused into the up conv
        for blk in up_k["blocks"]:
            y = block(y, blk)
    tail_slab, _ = plain_conv([y], params["tail"])
    return _extract_output(tail_slab, params["tail"].shape[0], H, W, Wp)


# ---------------------------------------------------------------------------
# Pure-JAX reference (PyTorch-faithful, full f32).
# ---------------------------------------------------------------------------
def _conv_ref(x, w):
    return lax.conv_general_dilated(
        x, w, window_strides=(1, 1), padding=((1, 1), (1, 1)),
        dimension_numbers=("NCHW", "OIHW", "NCHW"),
        precision=lax.Precision.HIGHEST)


def _block_ref(x, p):
    y = _conv_ref(x, p["w"])
    mean = jnp.mean(y, axis=(0, 2, 3), keepdims=True)
    var = jnp.mean(jnp.square(y - mean), axis=(0, 2, 3), keepdims=True)  # biased
    y = (y - mean) / jnp.sqrt(var + _BN_EPS)
    y = y * p["gamma"].reshape(1, -1, 1, 1) + p["beta"].reshape(1, -1, 1, 1)
    return jnp.where(y >= 0, y, _LEAKY_SLOPE * y)


def unet2d_reference(params, x):
    z = [_conv_ref(x, params["head"])]
    for down_k in params["down"]:
        h = z[-1]
        for blk in down_k["blocks"]:
            h = _block_ref(h, blk)
        z.append(_conv_ref(h, down_k["down_w"]))
    y = _block_ref(z[-1], params["body"])
    for k, up_k in enumerate(params["up"]):
        y = _conv_ref(y + z[-k - 1], convtranspose_to_conv_weight(up_k["up_w_t"]))
        for blk in up_k["blocks"]:
            y = _block_ref(y, blk)
    return _conv_ref(y, params["tail"])


if __name__ == "__main__":
    N, C_IN, H, W = 2, 1, 16, 16       # UNet2D defaults: in_channels=1, out_channels=1
    key = jax.random.PRNGKey(0)
    k_params, k_x = jax.random.split(key)
    params = init_unet_params(k_params, in_channels=C_IN, out_channels=1,
                              nfeatures=(4, 8), nblocks=2)
    x = jax.random.normal(k_x, (N, C_IN, H, W), dtype=jnp.float32)

    ref = unet2d_reference(params, x)

    # --- correctness: f32 operands / f32 slabs must match the module closely.
    unet_f32 = jax.jit(functools.partial(unet2d_forward,
                                         act_dtype=jnp.float32,
                                         mxu_dtype=jnp.float32))
    out_f32 = jax.block_until_ready(unet_f32(params, x))
    assert out_f32.shape == (N, 1, H, W)
    max_err = float(jnp.max(jnp.abs(out_f32 - ref)))
    assert jnp.allclose(out_f32, ref, atol=2e-3, rtol=2e-3), \
        f"Pallas UNet2D (f32) deviates from the module reference (max err {max_err})"

    # --- fast path: bf16 slabs + bf16 MXU operands; loose sanity bound only
    #     (bf16 rounding compounds through BN over ~12 layers; expected rel
    #     Frobenius error is ~1e-2).
    unet_bf16 = jax.jit(functools.partial(unet2d_forward,
                                          act_dtype=jnp.bfloat16,
                                          mxu_dtype=jnp.bfloat16))
    out_bf16 = jax.block_until_ready(unet_bf16(params, x))
    rel = float(jnp.linalg.norm(out_bf16 - ref) / (jnp.linalg.norm(ref) + 1e-12))
    assert bool(jnp.all(jnp.isfinite(out_bf16))) and rel < 0.3, \
        f"Pallas UNet2D (bf16) sanity check failed (rel err {rel})"

    print("KERNEL_OK")
</pallas_src>

<mosaic_0001>
module attributes {stable_mosaic.version = 11 : i64} {
  func.func @kernel(%arg0: i32, %arg1: memref<1x8x384xf32, #tpu.memory_space<vmem>>, %arg2: memref<8x72xf32, #tpu.memory_space<vmem>>, %arg3: memref<1x384xf32, #tpu.memory_space<vmem>>, %arg4: memref<1x8x384xf32, #tpu.memory_space<vmem>>, %arg5: memref<8x384xf32, #tpu.memory_space<vmem>>, %arg6: memref<72x288xf32, #tpu.memory_space<vmem>>) attributes {dimension_semantics = [#tpu.dimension_semantics<parallel>], iteration_bounds = array<i64: 2>, scalar_prefetch = 0 : i64, scratch_operands = 2 : i64, tpu.core_type = #tpu.core_type<tc>, window_params = [{transform_indices = @transform_0, window_bounds = array<i64: 1, 8, 384>}, {pipeline_mode = #tpu.pipeline_mode<synchronous>, transform_indices = @transform_1, window_bounds = array<i64: 8, 72>}, {pipeline_mode = #tpu.pipeline_mode<synchronous>, transform_indices = @transform_2, window_bounds = array<i64: 1, 384>}, {transform_indices = @transform_3, window_bounds = array<i64: 1, 8, 384>}]} {
    %c0 = arith.constant 0 : index
    %c0_0 = arith.constant 0 : index
    %c0_1 = arith.constant 0 : index
    %0 = vector.load %arg1[%c0, %c0_0, %c0_1] : memref<1x8x384xf32, #tpu.memory_space<vmem>>, vector<1x8x384xf32>
    %1 = vector.shape_cast %0 : vector<1x8x384xf32> to vector<8x384xf32>
    %c0_2 = arith.constant 0 : index
    %c0_3 = arith.constant 0 : index
    %2 = vector.load %arg5[%c0_2, %c0_3] : memref<8x384xf32, #tpu.memory_space<vmem>>, vector<8x384xf32>
    tpu.vector_store %arg5[%c0_2, %c0_3], %1 {strides = array<i32>} : memref<8x384xf32, #tpu.memory_space<vmem>>, vector<8x384xf32>,
    %c0_4 = arith.constant 0 : index
    %c0_5 = arith.constant 0 : index
    %3 = vector.load %arg5[%c0_4, %c0_5] : memref<8x384xf32, #tpu.memory_space<vmem>>, vector<8x288xf32>
    %c0_6 = arith.constant 0 : index
    %c0_7 = arith.constant 0 : index
    %4 = vector.load %arg6[%c0_6, %c0_7] : memref<72x288xf32, #tpu.memory_space<vmem>>, vector<8x288xf32>
    tpu.vector_store %arg6[%c0_6, %c0_7], %3 {strides = array<i32>} : memref<72x288xf32, #tpu.memory_space<vmem>>, vector<8x288xf32>,
    %c0_8 = arith.constant 0 : index
    %c1 = arith.constant 1 : index
    %5 = vector.load %arg5[%c0_8, %c1] : memref<8x384xf32, #tpu.memory_space<vmem>>, vector<8x288xf32>
    %c8 = arith.constant 8 : index
    %c0_9 = arith.constant 0 : index
    %6 = vector.load %arg6[%c8, %c0_9] : memref<72x288xf32, #tpu.memory_space<vmem>>, vector<8x288xf32>
    tpu.vector_store %arg6[%c8, %c0_9], %5 {strides = array<i32>} : memref<72x288xf32, #tpu.memory_space<vmem>>, vector<8x288xf32>,
    %c0_10 = arith.constant 0 : index
    %c2 = arith.constant 2 : index
    %7 = vector.load %arg5[%c0_10, %c2] : memref<8x384xf32, #tpu.memory_space<vmem>>, vector<8x288xf32>
    %c16 = arith.constant 16 : index
    %c0_11 = arith.constant 0 : index
    %8 = vector.load %arg6[%c16, %c0_11] : memref<72x288xf32, #tpu.memory_space<vmem>>, vector<8x288xf32>
    tpu.vector_store %arg6[%c16, %c0_11], %7 {strides = array<i32>} : memref<72x288xf32, #tpu.memory_space<vmem>>, vector<8x288xf32>,
    %c0_12 = arith.constant 0 : index
    %c18 = arith.constant 18 : index
    %9 = vector.load %arg5[%c0_12, %c18] : memref<8x384xf32, #tpu.memory_space<vmem>>, vector<8x288xf32>
    %c24 = arith.constant 24 : index
    %c0_13 = arith.constant 0 : index
    %10 = vector.load %arg6[%c24, %c0_13] : memref<72x288xf32, #tpu.memory_space<vmem>>, vector<8x288xf32>
    tpu.vector_store %arg6[%c24, %c0_13], %9 {strides = array<i32>} : memref<72x288xf32, #tpu.memory_space<vmem>>, vector<8x288xf32>,
    %c0_14 = arith.constant 0 : index
    %c19 = arith.constant 19 : index
    %11 = vector.load %arg5[%c0_14, %c19] : memref<8x384xf32, #tpu.memory_space<vmem>>, vector<8x288xf32>
    %c32 = arith.constant 32 : index
    %c0_15 = arith.constant 0 : index
    %12 = vector.load %arg6[%c32, %c0_15] : memref<72x288xf32, #tpu.memory_space<vmem>>, vector<8x288xf32>
    tpu.vector_store %arg6[%c32, %c0_15], %11 {strides = array<i32>} : memref<72x288xf32, #tpu.memory_space<vmem>>, vector<8x288xf32>,
    %c0_16 = arith.constant 0 : index
    %c20 = arith.constant 20 : index
    %13 = vector.load %arg5[%c0_16, %c20] : memref<8x384xf32, #tpu.memory_space<vmem>>, vector<8x288xf32>
    %c40 = arith.constant 40 : index
    %c0_17 = arith.constant 0 : index
    %14 = vector.load %arg6[%c40, %c0_17] : memref<72x288xf32, #tpu.memory_space<vmem>>, vector<8x288xf32>
    tpu.vector_store %arg6[%c40, %c0_17], %13 {strides = array<i32>} : memref<72x288xf32, #tpu.memory_space<vmem>>, vector<8x288xf32>,
    %c0_18 = arith.constant 0 : index
    %c36 = arith.constant 36 : index
    %15 = vector.load %arg5[%c0_18, %c36] : memref<8x384xf32, #tpu.memory_space<vmem>>, vector<8x288xf32>
    %c48 = arith.constant 48 : index
    %c0_19 = arith.constant 0 : index
    %16 = vector.load %arg6[%c48, %c0_19] : memref<72x288xf32, #tpu.memory_space<vmem>>, vector<8x288xf32>
    tpu.vector_store %arg6[%c48, %c0_19], %15 {strides = array<i32>} : memref<72x288xf32, #tpu.memory_space<vmem>>, vector<8x288xf32>,
    %c0_20 = arith.constant 0 : index
    %c37 = arith.constant 37 : index
    %17 = vector.load %arg5[%c0_20, %c37] : memref<8x384xf32, #tpu.memory_space<vmem>>, vector<8x288xf32>
    %c56 = arith.constant 56 : index
    %c0_21 = arith.constant 0 : index
    %18 = vector.load %arg6[%c56, %c0_21] : memref<72x288xf32, #tpu.memory_space<vmem>>, vector<8x288xf32>
    tpu.vector_store %arg6[%c56, %c0_21], %17 {strides = array<i32>} : memref<72x288xf32, #tpu.memory_space<vmem>>, vector<8x288xf32>,
    %c0_22 = arith.constant 0 : index
    %c38 = arith.constant 38 : index
    %19 = vector.load %arg5[%c0_22, %c38] : memref<8x384xf32, #tpu.memory_space<vmem>>, vector<8x288xf32>
    %c64 = arith.constant 64 : index
    %c0_23 = arith.constant 0 : index
    %20 = vector.load %arg6[%c64, %c0_23] : memref<72x288xf32, #tpu.memory_space<vmem>>, vector<8x288xf32>
    tpu.vector_store %arg6[%c64, %c0_23], %19 {strides = array<i32>} : memref<72x288xf32, #tpu.memory_space<vmem>>, vector<8x288xf32>,
    %c0_24 = arith.constant 0 : index
    %c0_25 = arith.constant 0 : index
    %21 = vector.load %arg2[%c0_24, %c0_25] : memref<8x72xf32, #tpu.memory_space<vmem>>, vector<8x72xf32>
    %c0_26 = arith.constant 0 : index
    %c0_27 = arith.constant 0 : index
    %22 = vector.load %arg6[%c0_26, %c0_27] : memref<72x288xf32, #tpu.memory_space<vmem>>, vector<72x288xf32>
    %cst = arith.constant dense<0.000000e+00> : vector<8x288xf32>
    %23 = tpu.matmul %21, %22, %cst {dimension_numbers = #tpu.dot_dimension_numbers<[1], [0], [0], [1], [0, 0, 1, 1], [], []>, precision = #tpu.contract_precision<fp32>} : vector<8x72xf32>, vector<72x288xf32>, vector<8x288xf32> -> vector<8x288xf32>
    %c0_28 = arith.constant 0 : index
    %c19_29 = arith.constant 19 : index
    %24 = vector.load %arg3[%c0_28, %c19_29] : memref<1x384xf32, #tpu.memory_space<vmem>>, vector<1x288xf32>
    %25 = vector.broadcast %24 : vector<1x288xf32> to vector<8x288xf32>
    %26 = arith.mulf %23, %25 : vector<8x288xf32>
    %cst_30 = arith.constant 0.000000e+00 : f32
    %27 = vector.broadcast %cst_30 : f32 to vector<8x384xf32>
    %c0_31 = arith.constant 0 : index
    %c0_32 = arith.constant 0 : index
    %c0_33 = arith.constant 0 : index
    %28 = vector.load %arg4[%c0_31, %c0_32, %c0_33] : memref<1x8x384xf32, #tpu.memory_space<vmem>>, vector<1x8x384xf32>
    %29 = vector.shape_cast %28 : vector<1x8x384xf32> to vector<8x384xf32>
    %30 = vector.shape_cast %27 : vector<8x384xf32> to vector<1x8x384xf32>
    tpu.vector_store %arg4[%c0_31, %c0_32, %c0_33], %30 {strides = array<i32>} : memref<1x8x384xf32, #tpu.memory_space<vmem>>, vector<1x8x384xf32>,
    %c0_34 = arith.constant 0 : index
    %c0_35 = arith.constant 0 : index
    %c19_36 = arith.constant 19 : index
    %31 = vector.load %arg4[%c0_34, %c0_35, %c19_36] : memref<1x8x384xf32, #tpu.memory_space<vmem>>, vector<1x8x288xf32>
    %32 = vector.shape_cast %31 : vector<1x8x288xf32> to vector<8x288xf32>
    %33 = vector.shape_cast %26 : vector<8x288xf32> to vector<1x8x288xf32>
    tpu.vector_store %arg4[%c0_34, %c0_35, %c19_36], %33 {strides = array<i32>} : memref<1x8x384xf32, #tpu.memory_space<vmem>>, vector<1x8x288xf32>,
    return
  }
  func.func @transform_0(%arg0: i32) -> (i32, i32, i32) {
    %c0_i32 = arith.constant 0 : i32
    %c0_i32_0 = arith.constant 0 : i32
    %c0_i32_1 = arith.constant 0 : i32
    return %arg0, %c0_i32, %c0_i32_0 : i32, i32, i32
  }
  func.func @transform_1(%arg0: i32) -> (i32, i32) {
    %c0_i32 = arith.constant 0 : i32
    %c0_i32_0 = arith.constant 0 : i32
    %c0_i32_1 = arith.constant 0 : i32
    return %c0_i32, %c0_i32_0 : i32, i32
  }
  func.func @transform_2(%arg0: i32) -> (i32, i32) {
    %c0_i32 = arith.constant 0 : i32
    %c0_i32_0 = arith.constant 0 : i32
    %c0_i32_1 = arith.constant 0 : i32
    return %c0_i32, %c0_i32_0 : i32, i32
  }
  func.func @transform_3(%arg0: i32) -> (i32, i32, i32) {
    %c0_i32 = arith.constant 0 : i32
    %c0_i32_0 = arith.constant 0 : i32
    %c0_i32_1 = arith.constant 0 : i32
    return %arg0, %c0_i32, %c0_i32_0 : i32, i32, i32
  }
}

module attributes {stable_mosaic.version = 11 : i64} {
  func.func @kernel(%arg0: i32, %arg1: memref<1x8x384xf32, #tpu.memory_space<vmem>>, %arg2: memref<8x72xf32, #tpu.memory_space<vmem>>, %arg3: memref<1x384xf32, #tpu.memory_space<vmem>>, %arg4: memref<1x8x384xf32, #tpu.memory_space<vmem>>, %arg5: memref<1x2x8x1xf32, #tpu.memory_space<vmem>>, %arg6: memref<8x384xf32, #tpu.memory_space<vmem>>, %arg7: memref<72x288xf32, #tpu.memory_space<vmem>>) attributes {dimension_semantics = [#tpu.dimension_semantics<parallel>], iteration_bounds = array<i64: 2>, scalar_prefetch = 0 : i64, scratch_operands = 2 : i64, tpu.core_type = #tpu.core_type<tc>, window_params = [{transform_indices = @transform_0, window_bounds = array<i64: 1, 8, 384>}, {pipeline_mode = #tpu.pipeline_mode<synchronous>, transform_indices = @transform_1, window_bounds = array<i64: 8, 72>}, {pipeline_mode = #tpu.pipeline_mode<synchronous>, transform_indices = @transform_2, window_bounds = array<i64: 1, 384>}, {transform_indices = @transform_3, window_bounds = array<i64: 1, 8, 384>}, {transform_indices = @transform_4, window_bounds = array<i64: 1, 2, 8, 1>}]} {
    %c0 = arith.constant 0 : index
    %c0_0 = arith.constant 0 : index
    %c0_1 = arith.constant 0 : index
    %0 = vector.load %arg1[%c0, %c0_0, %c0_1] : memref<1x8x384xf32, #tpu.memory_space<vmem>>, vector<1x8x384xf32>
    %1 = vector.shape_cast %0 : vector<1x8x384xf32> to vector<8x384xf32>
    %c0_2 = arith.constant 0 : index
    %c0_3 = arith.constant 0 : index
    %2 = vector.load %arg6[%c0_2, %c0_3] : memref<8x384xf32, #tpu.memory_space<vmem>>, vector<8x384xf32>
    tpu.vector_store %arg6[%c0_2, %c0_3], %1 {strides = array<i32>} : memref<8x384xf32, #tpu.memory_space<vmem>>, vector<8x384xf32>,
    %c0_4 = arith.constant 0 : index
    %c0_5 = arith.constant 0 : index
    %3 = vector.load %arg6[%c0_4, %c0_5] : memref<8x384xf32, #tpu.memory_space<vmem>>, vector<8x288xf32>
    %c0_6 = arith.constant 0 : index
    %c0_7 = arith.constant 0 : index
    %4 = vector.load %arg7[%c0_6, %c0_7] : memref<72x288xf32, #tpu.memory_space<vmem>>, vector<8x288xf32>
    tpu.vector_store %arg7[%c0_6, %c0_7], %3 {strides = array<i32>} : memref<72x288xf32, #tpu.memory_space<vmem>>, vector<8x288xf32>,
    %c0_8 = arith.constant 0 : index
    %c1 = arith.constant 1 : index
    %5 = vector.load %arg6[%c0_8, %c1] : memref<8x384xf32, #tpu.memory_space<vmem>>, vector<8x288xf32>
    %c8 = arith.constant 8 : index
    %c0_9 = arith.constant 0 : index
    %6 = vector.load %arg7[%c8, %c0_9] : memref<72x288xf32, #tpu.memory_space<vmem>>, vector<8x288xf32>
    tpu.vector_store %arg7[%c8, %c0_9], %5 {strides = array<i32>} : memref<72x288xf32, #tpu.memory_space<vmem>>, vector<8x288xf32>,
    %c0_10 = arith.constant 0 : index
    %c2 = arith.constant 2 : index
    %7 = vector.load %arg6[%c0_10, %c2] : memref<8x384xf32, #tpu.memory_space<vmem>>, vector<8x288xf32>
    %c16 = arith.constant 16 : index
    %c0_11 = arith.constant 0 : index
    %8 = vector.load %arg7[%c16, %c0_11] : memref<72x288xf32, #tpu.memory_space<vmem>>, vector<8x288xf32>
    tpu.vector_store %arg7[%c16, %c0_11], %7 {strides = array<i32>} : memref<72x288xf32, #tpu.memory_space<vmem>>, vector<8x288xf32>,
    %c0_12 = arith.constant 0 : index
    %c18 = arith.constant 18 : index
    %9 = vector.load %arg6[%c0_12, %c18] : memref<8x384xf32, #tpu.memory_space<vmem>>, vector<8x288xf32>
    %c24 = arith.constant 24 : index
    %c0_13 = arith.constant 0 : index
    %10 = vector.load %arg7[%c24, %c0_13] : memref<72x288xf32, #tpu.memory_space<vmem>>, vector<8x288xf32>
    tpu.vector_store %arg7[%c24, %c0_13], %9 {strides = array<i32>} : memref<72x288xf32, #tpu.memory_space<vmem>>, vector<8x288xf32>,
    %c0_14 = arith.constant 0 : index
    %c19 = arith.constant 19 : index
    %11 = vector.load %arg6[%c0_14, %c19] : memref<8x384xf32, #tpu.memory_space<vmem>>, vector<8x288xf32>
    %c32 = arith.constant 32 : index
    %c0_15 = arith.constant 0 : index
    %12 = vector.load %arg7[%c32, %c0_15] : memref<72x288xf32, #tpu.memory_space<vmem>>, vector<8x288xf32>
    tpu.vector_store %arg7[%c32, %c0_15], %11 {strides = array<i32>} : memref<72x288xf32, #tpu.memory_space<vmem>>, vector<8x288xf32>,
    %c0_16 = arith.constant 0 : index
    %c20 = arith.constant 20 : index
    %13 = vector.load %arg6[%c0_16, %c20] : memref<8x384xf32, #tpu.memory_space<vmem>>, vector<8x288xf32>
    %c40 = arith.constant 40 : index
    %c0_17 = arith.constant 0 : index
    %14 = vector.load %arg7[%c40, %c0_17] : memref<72x288xf32, #tpu.memory_space<vmem>>, vector<8x288xf32>
    tpu.vector_store %arg7[%c40, %c0_17], %13 {strides = array<i32>} : memref<72x288xf32, #tpu.memory_space<vmem>>, vector<8x288xf32>,
    %c0_18 = arith.constant 0 : index
    %c36 = arith.constant 36 : index
    %15 = vector.load %arg6[%c0_18, %c36] : memref<8x384xf32, #tpu.memory_space<vmem>>, vector<8x288xf32>
    %c48 = arith.constant 48 : index
    %c0_19 = arith.constant 0 : index
    %16 = vector.load %arg7[%c48, %c0_19] : memref<72x288xf32, #tpu.memory_space<vmem>>, vector<8x288xf32>
    tpu.vector_store %arg7[%c48, %c0_19], %15 {strides = array<i32>} : memref<72x288xf32, #tpu.memory_space<vmem>>, vector<8x288xf32>,
    %c0_20 = arith.constant 0 : index
    %c37 = arith.constant 37 : index
    %17 = vector.load %arg6[%c0_20, %c37] : memref<8x384xf32, #tpu.memory_space<vmem>>, vector<8x288xf32>
    %c56 = arith.constant 56 : index
    %c0_21 = arith.constant 0 : index
    %18 = vector.load %arg7[%c56, %c0_21] : memref<72x288xf32, #tpu.memory_space<vmem>>, vector<8x288xf32>
    tpu.vector_store %arg7[%c56, %c0_21], %17 {strides = array<i32>} : memref<72x288xf32, #tpu.memory_space<vmem>>, vector<8x288xf32>,
    %c0_22 = arith.constant 0 : index
    %c38 = arith.constant 38 : index
    %19 = vector.load %arg6[%c0_22, %c38] : memref<8x384xf32, #tpu.memory_space<vmem>>, vector<8x288xf32>
    %c64 = arith.constant 64 : index
    %c0_23 = arith.constant 0 : index
    %20 = vector.load %arg7[%c64, %c0_23] : memref<72x288xf32, #tpu.memory_space<vmem>>, vector<8x288xf32>
    tpu.vector_store %arg7[%c64, %c0_23], %19 {strides = array<i32>} : memref<72x288xf32, #tpu.memory_space<vmem>>, vector<8x288xf32>,
    %c0_24 = arith.constant 0 : index
    %c0_25 = arith.constant 0 : index
    %21 = vector.load %arg2[%c0_24, %c0_25] : memref<8x72xf32, #tpu.memory_space<vmem>>, vector<8x72xf32>
    %c0_26 = arith.constant 0 : index
    %c0_27 = arith.constant 0 : index
    %22 = vector.load %arg7[%c0_26, %c0_27] : memref<72x288xf32, #tpu.memory_space<vmem>>, vector<72x288xf32>
    %cst = arith.constant dense<0.000000e+00> : vector<8x288xf32>
    %23 = tpu.matmul %21, %22, %cst {dimension_numbers = #tpu.dot_dimension_numbers<[1], [0], [0], [1], [0, 0, 1, 1], [], []>, precision = #tpu.contract_precision<fp32>} : vector<8x72xf32>, vector<72x288xf32>, vector<8x288xf32> -> vector<8x288xf32>
    %c0_28 = arith.constant 0 : index
    %c19_29 = arith.constant 19 : index
    %24 = vector.load %arg3[%c0_28, %c19_29] : memref<1x384xf32, #tpu.memory_space<vmem>>, vector<1x288xf32>
    %25 = vector.broadcast %24 : vector<1x288xf32> to vector<8x288xf32>
    %26 = arith.mulf %23, %25 : vector<8x288xf32>
    %cst_30 = arith.constant 0.000000e+00 : f32
    %27 = vector.broadcast %cst_30 : f32 to vector<8x384xf32>
    %c0_31 = arith.constant 0 : index
    %c0_32 = arith.constant 0 : index
    %c0_33 = arith.constant 0 : index
    %28 = vector.load %arg4[%c0_31, %c0_32, %c0_33] : memref<1x8x384xf32, #tpu.memory_space<vmem>>, vector<1x8x384xf32>
    %29 = vector.shape_cast %28 : vector<1x8x384xf32> to vector<8x384xf32>
    %30 = vector.shape_cast %27 : vector<8x384xf32> to vector<1x8x384xf32>
    tpu.vector_store %arg4[%c0_31, %c0_32, %c0_33], %30 {strides = array<i32>} : memref<1x8x384xf32, #tpu.memory_space<vmem>>, vector<1x8x384xf32>,
    %c0_34 = arith.constant 0 : index
    %c0_35 = arith.constant 0 : index
    %c19_36 = arith.constant 19 : index
    %31 = vector.load %arg4[%c0_34, %c0_35, %c19_36] : memref<1x8x384xf32, #tpu.memory_space<vmem>>, vector<1x8x288xf32>
    %32 = vector.shape_cast %31 : vector<1x8x288xf32> to vector<8x288xf32>
    %33 = vector.shape_cast %26 : vector<8x288xf32> to vector<1x8x288xf32>
    tpu.vector_store %arg4[%c0_34, %c0_35, %c19_36], %33 {strides = array<i32>} : memref<1x8x384xf32, #tpu.memory_space<vmem>>, vector<1x8x288xf32>,
    %cst_37 = arith.constant dense<0.000000e+00> : vector<8xf32>
    %34 = vector.multi_reduction <add>, %26, %cst_37 [1] : vector<8x288xf32> to vector<8xf32>
    %35 = vector.shape_cast %34 : vector<8xf32> to vector<8x1xf32>
    %c0_38 = arith.constant 0 : index
    %c0_39 = arith.constant 0 : index
    %c0_40 = arith.constant 0 : index
    %c0_41 = arith.constant 0 : index
    %36 = vector.load %arg5[%c0_38, %c0_39, %c0_40, %c0_41] : memref<1x2x8x1xf32, #tpu.memory_space<vmem>>, vector<1x1x8x1xf32>
    %37 = vector.shape_cast %36 : vector<1x1x8x1xf32> to vector<8x1xf32>
    %38 = vector.shape_cast %35 : vector<8x1xf32> to vector<1x1x8x1xf32>
    tpu.vector_store %arg5[%c0_38, %c0_39, %c0_40, %c0_41], %38 {strides = array<i32>} : memref<1x2x8x1xf32, #tpu.memory_space<vmem>>, vector<1x1x8x1xf32>,
    %39 = arith.mulf %26, %26 : vector<8x288xf32>
    %cst_42 = arith.constant dense<0.000000e+00> : vector<8xf32>
    %40 = vector.multi_reduction <add>, %39, %cst_42 [1] : vector<8x288xf32> to vector<8xf32>
    %41 = vector.shape_cast %40 : vector<8xf32> to vector<8x1xf32>
    %c0_43 = arith.constant 0 : index
    %c1_44 = arith.constant 1 : index
    %c0_45 = arith.constant 0 : index
    %c0_46 = arith.constant 0 : index
    %42 = vector.load %arg5[%c0_43, %c1_44, %c0_45, %c0_46] : memref<1x2x8x1xf32, #tpu.memory_space<vmem>>, vector<1x1x8x1xf32>
    %43 = vector.shape_cast %42 : vector<1x1x8x1xf32> to vector<8x1xf32>
    %44 = vector.shape_cast %41 : vector<8x1xf32> to vector<1x1x8x1xf32>
    tpu.vector_store %arg5[%c0_43, %c1_44, %c0_45, %c0_46], %44 {strides = array<i32>} : memref<1x2x8x1xf32, #tpu.memory_space<vmem>>, vector<1x1x8x1xf32>,
    return
  }
  func.func @transform_0(%arg0: i32) -> (i32, i32, i32) {
    %c0_i32 = arith.constant 0 : i32
    %c0_i32_0 = arith.constant 0 : i32
    %c0_i32_1 = arith.constant 0 : i32
    return %arg0, %c0_i32, %c0_i32_0 : i32, i32, i32
  }
  func.func @transform_1(%arg0: i32) -> (i32, i32) {
    %c0_i32 = arith.constant 0 : i32
    %c0_i32_0 = arith.constant 0 : i32
    %c0_i32_1 = arith.constant 0 : i32
    return %c0_i32, %c0_i32_0 : i32, i32
  }
  func.func @transform_2(%arg0: i32) -> (i32, i32) {
    %c0_i32 = arith.constant 0 : i32
    %c0_i32_0 = arith.constant 0 : i32
    %c0_i32_1 = arith.constant 0 : i32
    return %c0_i32, %c0_i32_0 : i32, i32
  }
  func.func @transform_3(%arg0: i32) -> (i32, i32, i32) {
    %c0_i32 = arith.constant 0 : i32
    %c0_i32_0 = arith.constant 0 : i32
    %c0_i32_1 = arith.constant 0 : i32
    return %arg0, %c0_i32, %c0_i32_0 : i32, i32, i32
  }
  func.func @transform_4(%arg0: i32) -> (i32, i32, i32, i32) {
    %c0_i32 = arith.constant 0 : i32
    %c0_i32_0 = arith.constant 0 : i32
    %c0_i32_1 = arith.constant 0 : i32
    %c0_i32_2 = arith.constant 0 : i32
    return %arg0, %c0_i32, %c0_i32_0, %c0_i32_1 : i32, i32, i32, i32
  }
}

module attributes {stable_mosaic.version = 11 : i64} {
  func.func @kernel(%arg0: i32, %arg1: memref<1x8x384xf32, #tpu.memory_space<vmem>>, %arg2: memref<2x8x1xf32, #tpu.memory_space<vmem>>, %arg3: memref<8x72xf32, #tpu.memory_space<vmem>>, %arg4: memref<1x384xf32, #tpu.memory_space<vmem>>, %arg5: memref<1x8x384xf32, #tpu.memory_space<vmem>>, %arg6: memref<8x384xf32, #tpu.memory_space<vmem>>, %arg7: memref<72x288xf32, #tpu.memory_space<vmem>>) attributes {dimension_semantics = [#tpu.dimension_semantics<parallel>], iteration_bounds = array<i64: 2>, scalar_prefetch = 0 : i64, scratch_operands = 2 : i64, tpu.core_type = #tpu.core_type<tc>, window_params = [{transform_indices = @transform_0, window_bounds = array<i64: 1, 8, 384>}, {pipeline_mode = #tpu.pipeline_mode<synchronous>, transform_indices = @transform_1, window_bounds = array<i64: 2, 8, 1>}, {pipeline_mode = #tpu.pipeline_mode<synchronous>, transform_indices = @transform_2, window_bounds = array<i64: 8, 72>}, {pipeline_mode = #tpu.pipeline_mode<synchronous>, transform_indices = @transform_3, window_bounds = array<i64: 1, 384>}, {transform_indices = @transform_4, window_bounds = array<i64: 1, 8, 384>}]} {
    %c0 = arith.constant 0 : index
    %c0_0 = arith.constant 0 : index
    %0 = vector.load %arg4[%c0, %c0_0] : memref<1x384xf32, #tpu.memory_space<vmem>>, vector<1x384xf32>
    %c0_1 = arith.constant 0 : index
    %c0_2 = arith.constant 0 : index
    %c0_3 = arith.constant 0 : index
    %1 = vector.load %arg1[%c0_1, %c0_2, %c0_3] : memref<1x8x384xf32, #tpu.memory_space<vmem>>, vector<1x8x384xf32>
    %2 = vector.shape_cast %1 : vector<1x8x384xf32> to vector<8x384xf32>
    %c0_4 = arith.constant 0 : index
    %c0_5 = arith.constant 0 : index
    %c0_6 = arith.constant 0 : index
    %3 = vector.load %arg2[%c0_4, %c0_5, %c0_6] : memref<2x8x1xf32, #tpu.memory_space<vmem>>, vector<1x8x1xf32>
    %4 = vector.shape_cast %3 : vector<1x8x1xf32> to vector<8x1xf32>
    %5 = vector.broadcast %4 : vector<8x1xf32> to vector<8x384xf32>
    %6 = arith.mulf %2, %5 : vector<8x384xf32>
    %c1 = arith.constant 1 : index
    %c0_7 = arith.constant 0 : index
    %c0_8 = arith.constant 0 : index
    %7 = vector.load %arg2[%c1, %c0_7, %c0_8] : memref<2x8x1xf32, #tpu.memory_space<vmem>>, vector<1x8x1xf32>
    %8 = vector.shape_cast %7 : vector<1x8x1xf32> to vector<8x1xf32>
    %9 = vector.broadcast %8 : vector<8x1xf32> to vector<8x384xf32>
    %10 = arith.addf %6, %9 : vector<8x384xf32>
    %cst = arith.constant 0.000000e+00 : f32
    %11 = vector.broadcast %cst : f32 to vector<8x384xf32>
    %12 = arith.cmpf oge, %10, %11 : vector<8x384xf32>
    %cst_9 = arith.constant 2.000000e-01 : f32
    %13 = vector.broadcast %cst_9 : f32 to vector<8x384xf32>
    %14 = arith.mulf %13, %10 : vector<8x384xf32>
    %15 = arith.select %12, %10, %14 : vector<8x384xi1>, vector<8x384xf32>
    %16 = vector.broadcast %0 : vector<1x384xf32> to vector<8x384xf32>
    %17 = arith.mulf %15, %16 : vector<8x384xf32>
    %c0_10 = arith.constant 0 : index
    %c0_11 = arith.constant 0 : index
    %18 = vector.load %arg6[%c0_10, %c0_11] : memref<8x384xf32, #tpu.memory_space<vmem>>, vector<8x384xf32>
    tpu.vector_store %arg6[%c0_10, %c0_11], %17 {strides = array<i32>} : memref<8x384xf32, #tpu.memory_space<vmem>>, vector<8x384xf32>,
    %c0_12 = arith.constant 0 : index
    %c0_13 = arith.constant 0 : index
    %19 = vector.load %arg6[%c0_12, %c0_13] : memref<8x384xf32, #tpu.memory_space<vmem>>, vector<8x288xf32>
    %c0_14 = arith.constant 0 : index
    %c0_15 = arith.constant 0 : index
    %20 = vector.load %arg7[%c0_14, %c0_15] : memref<72x288xf32, #tpu.memory_space<vmem>>, vector<8x288xf32>
    tpu.vector_store %arg7[%c0_14, %c0_15], %19 {strides = array<i32>} : memref<72x288xf32, #tpu.memory_space<vmem>>, vector<8x288xf32>,
    %c0_16 = arith.constant 0 : index
    %c1_17 = arith.constant 1 : index
    %21 = vector.load %arg6[%c0_16, %c1_17] : memref<8x384xf32, #tpu.memory_space<vmem>>, vector<8x288xf32>
    %c8 = arith.constant 8 : index
    %c0_18 = arith.constant 0 : index
    %22 = vector.load %arg7[%c8, %c0_18] : memref<72x288xf32, #tpu.memory_space<vmem>>, vector<8x288xf32>
    tpu.vector_store %arg7[%c8, %c0_18], %21 {strides = array<i32>} : memref<72x288xf32, #tpu.memory_space<vmem>>, vector<8x288xf32>,
    %c0_19 = arith.constant 0 : index
    %c2 = arith.constant 2 : index
    %23 = vector.load %arg6[%c0_19, %c2] : memref<8x384xf32, #tpu.memory_space<vmem>>, vector<8x288xf32>
    %c16 = arith.constant 16 : index
    %c0_20 = arith.constant 0 : index
    %24 = vector.load %arg7[%c16, %c0_20] : memref<72x288xf32, #tpu.memory_space<vmem>>, vector<8x288xf32>
    tpu.vector_store %arg7[%c16, %c0_20], %23 {strides = array<i32>} : memref<72x288xf32, #tpu.memory_space<vmem>>, vector<8x288xf32>,
    %c0_21 = arith.constant 0 : index
    %c18 = arith.constant 18 : index
    %25 = vector.load %arg6[%c0_21, %c18] : memref<8x384xf32, #tpu.memory_space<vmem>>, vector<8x288xf32>
    %c24 = arith.constant 24 : index
    %c0_22 = arith.constant 0 : index
    %26 = vector.load %arg7[%c24, %c0_22] : memref<72x288xf32, #tpu.memory_space<vmem>>, vector<8x288xf32>
    tpu.vector_store %arg7[%c24, %c0_22], %25 {strides = array<i32>} : memref<72x288xf32, #tpu.memory_space<vmem>>, vector<8x288xf32>,
    %c0_23 = arith.constant 0 : index
    %c19 = arith.constant 19 : index
    %27 = vector.load %arg6[%c0_23, %c19] : memref<8x384xf32, #tpu.memory_space<vmem>>, vector<8x288xf32>
    %c32 = arith.constant 32 : index
    %c0_24 = arith.constant 0 : index
    %28 = vector.load %arg7[%c32, %c0_24] : memref<72x288xf32, #tpu.memory_space<vmem>>, vector<8x288xf32>
    tpu.vector_store %arg7[%c32, %c0_24], %27 {strides = array<i32>} : memref<72x288xf32, #tpu.memory_space<vmem>>, vector<8x288xf32>,
    %c0_25 = arith.constant 0 : index
    %c20 = arith.constant 20 : index
    %29 = vector.load %arg6[%c0_25, %c20] : memref<8x384xf32, #tpu.memory_space<vmem>>, vector<8x288xf32>
    %c40 = arith.constant 40 : index
    %c0_26 = arith.constant 0 : index
    %30 = vector.load %arg7[%c40, %c0_26] : memref<72x288xf32, #tpu.memory_space<vmem>>, vector<8x288xf32>
    tpu.vector_store %arg7[%c40, %c0_26], %29 {strides = array<i32>} : memref<72x288xf32, #tpu.memory_space<vmem>>, vector<8x288xf32>,
    %c0_27 = arith.constant 0 : index
    %c36 = arith.constant 36 : index
    %31 = vector.load %arg6[%c0_27, %c36] : memref<8x384xf32, #tpu.memory_space<vmem>>, vector<8x288xf32>
    %c48 = arith.constant 48 : index
    %c0_28 = arith.constant 0 : index
    %32 = vector.load %arg7[%c48, %c0_28] : memref<72x288xf32, #tpu.memory_space<vmem>>, vector<8x288xf32>
    tpu.vector_store %arg7[%c48, %c0_28], %31 {strides = array<i32>} : memref<72x288xf32, #tpu.memory_space<vmem>>, vector<8x288xf32>,
    %c0_29 = arith.constant 0 : index
    %c37 = arith.constant 37 : index
    %33 = vector.load %arg6[%c0_29, %c37] : memref<8x384xf32, #tpu.memory_space<vmem>>, vector<8x288xf32>
    %c56 = arith.constant 56 : index
    %c0_30 = arith.constant 0 : index
    %34 = vector.load %arg7[%c56, %c0_30] : memref<72x288xf32, #tpu.memory_space<vmem>>, vector<8x288xf32>
    tpu.vector_store %arg7[%c56, %c0_30], %33 {strides = array<i32>} : memref<72x288xf32, #tpu.memory_space<vmem>>, vector<8x288xf32>,
    %c0_31 = arith.constant 0 : index
    %c38 = arith.constant 38 : index
    %35 = vector.load %arg6[%c0_31, %c38] : memref<8x384xf32, #tpu.memory_space<vmem>>, vector<8x288xf32>
    %c64 = arith.constant 64 : index
    %c0_32 = arith.constant 0 : index
    %36 = vector.load %arg7[%c64, %c0_32] : memref<72x288xf32, #tpu.memory_space<vmem>>, vector<8x288xf32>
    tpu.vector_store %arg7[%c64, %c0_32], %35 {strides = array<i32>} : memref<72x288xf32, #tpu.memory_space<vmem>>, vector<8x288xf32>,
    %c0_33 = arith.constant 0 : index
    %c0_34 = arith.constant 0 : index
    %37 = vector.load %arg3[%c0_33, %c0_34] : memref<8x72xf32, #tpu.memory_space<vmem>>, vector<8x72xf32>
    %c0_35 = arith.constant 0 : index
    %c0_36 = arith.constant 0 : index
    %38 = vector.load %arg7[%c0_35, %c0_36] : memref<72x288xf32, #tpu.memory_space<vmem>>, vector<72x288xf32>
    %cst_37 = arith.constant dense<0.000000e+00> : vector<8x288xf32>
    %39 = tpu.matmul %37, %38, %cst_37 {dimension_numbers = #tpu.dot_dimension_numbers<[1], [0], [0], [1], [0, 0, 1, 1], [], []>, precision = #tpu.contract_precision<fp32>} : vector<8x72xf32>, vector<72x288xf32>, vector<8x288xf32> -> vector<8x288xf32>
    %c0_38 = arith.constant 0 : index
    %c19_39 = arith.constant 19 : index
    %40 = vector.load %arg4[%c0_38, %c19_39] : memref<1x384xf32, #tpu.memory_space<vmem>>, vector<1x288xf32>
    %41 = vector.broadcast %40 : vector<1x288xf32> to vector<8x288xf32>
    %42 = arith.mulf %39, %41 : vector<8x288xf32>
    %cst_40 = arith.constant 0.000000e+00 : f32
    %43 = vector.broadcast %cst_40 : f32 to vector<8x384xf32>
    %c0_41 = arith.constant 0 : index
    %c0_42 = arith.constant 0 : index
    %c0_43 = arith.constant 0 : index
    %44 = vector.load %arg5[%c0_41, %c0_42, %c0_43] : memref<1x8x384xf32, #tpu.memory_space<vmem>>, vector<1x8x384xf32>
    %45 = vector.shape_cast %44 : vector<1x8x384xf32> to vector<8x384xf32>
    %46 = vector.shape_cast %43 : vector<8x384xf32> to vector<1x8x384xf32>
    tpu.vector_store %arg5[%c0_41, %c0_42, %c0_43], %46 {strides = array<i32>} : memref<1x8x384xf32, #tpu.memory_space<vmem>>, vector<1x8x384xf32>,
    %c0_44 = arith.constant 0 : index
    %c0_45 = arith.constant 0 : index
    %c19_46 = arith.constant 19 : index
    %47 = vector.load %arg5[%c0_44, %c0_45, %c19_46] : memref<1x8x384xf32, #tpu.memory_space<vmem>>, vector<1x8x288xf32>
    %48 = vector.shape_cast %47 : vector<1x8x288xf32> to vector<8x288xf32>
    %49 = vector.shape_cast %42 : vector<8x288xf32> to vector<1x8x288xf32>
    tpu.vector_store %arg5[%c0_44, %c0_45, %c19_46], %49 {strides = array<i32>} : memref<1x8x384xf32, #tpu.memory_space<vmem>>, vector<1x8x288xf32>,
    return
  }
  func.func @transform_0(%arg0: i32) -> (i32, i32, i32) {
    %c0_i32 = arith.constant 0 : i32
    %c0_i32_0 = arith.constant 0 : i32
    %c0_i32_1 = arith.constant 0 : i32
    return %arg0, %c0_i32, %c0_i32_0 : i32, i32, i32
  }
  func.func @transform_1(%arg0: i32) -> (i32, i32, i32) {
    %c0_i32 = arith.constant 0 : i32
    %c0_i32_0 = arith.constant 0 : i32
    %c0_i32_1 = arith.constant 0 : i32
    %c0_i32_2 = arith.constant 0 : i32
    return %c0_i32, %c0_i32_0, %c0_i32_1 : i32, i32, i32
  }
  func.func @transform_2(%arg0: i32) -> (i32, i32) {
    %c0_i32 = arith.constant 0 : i32
    %c0_i32_0 = arith.constant 0 : i32
    %c0_i32_1 = arith.constant 0 : i32
    return %c0_i32, %c0_i32_0 : i32, i32
  }
  func.func @transform_3(%arg0: i32) -> (i32, i32) {
    %c0_i32 = arith.constant 0 : i32
    %c0_i32_0 = arith.constant 0 : i32
    %c0_i32_1 = arith.constant 0 : i32
    return %c0_i32, %c0_i32_0 : i32, i32
  }
  func.func @transform_4(%arg0: i32) -> (i32, i32, i32) {
    %c0_i32 = arith.constant 0 : i32
    %c0_i32_0 = arith.constant 0 : i32
    %c0_i32_1 = arith.constant 0 : i32
    return %arg0, %c0_i32, %c0_i32_0 : i32, i32, i32
  }
}

module attributes {stable_mosaic.version = 11 : i64} {
  func.func @kernel(%arg0: i32, %arg1: memref<1x8x384xf32, #tpu.memory_space<vmem>>, %arg2: memref<2x8x1xf32, #tpu.memory_space<vmem>>, %arg3: memref<8x72xf32, #tpu.memory_space<vmem>>, %arg4: memref<1x384xf32, #tpu.memory_space<vmem>>, %arg5: memref<1x8x384xf32, #tpu.memory_space<vmem>>, %arg6: memref<1x2x8x1xf32, #tpu.memory_space<vmem>>, %arg7: memref<8x384xf32, #tpu.memory_space<vmem>>, %arg8: memref<72x288xf32, #tpu.memory_space<vmem>>) attributes {dimension_semantics = [#tpu.dimension_semantics<parallel>], iteration_bounds = array<i64: 2>, scalar_prefetch = 0 : i64, scratch_operands = 2 : i64, tpu.core_type = #tpu.core_type<tc>, window_params = [{transform_indices = @transform_0, window_bounds = array<i64: 1, 8, 384>}, {pipeline_mode = #tpu.pipeline_mode<synchronous>, transform_indices = @transform_1, window_bounds = array<i64: 2, 8, 1>}, {pipeline_mode = #tpu.pipeline_mode<synchronous>, transform_indices = @transform_2, window_bounds = array<i64: 8, 72>}, {pipeline_mode = #tpu.pipeline_mode<synchronous>, transform_indices = @transform_3, window_bounds = array<i64: 1, 384>}, {transform_indices = @transform_4, window_bounds = array<i64: 1, 8, 384>}, {transform_indices = @transform_5, window_bounds = array<i64: 1, 2, 8, 1>}]} {
    %c0 = arith.constant 0 : index
    %c0_0 = arith.constant 0 : index
    %0 = vector.load %arg4[%c0, %c0_0] : memref<1x384xf32, #tpu.memory_space<vmem>>, vector<1x384xf32>
    %c0_1 = arith.constant 0 : index
    %c0_2 = arith.constant 0 : index
    %c0_3 = arith.constant 0 : index
    %1 = vector.load %arg1[%c0_1, %c0_2, %c0_3] : memref<1x8x384xf32, #tpu.memory_space<vmem>>, vector<1x8x384xf32>
    %2 = vector.shape_cast %1 : vector<1x8x384xf32> to vector<8x384xf32>
    %c0_4 = arith.constant 0 : index
    %c0_5 = arith.constant 0 : index
    %c0_6 = arith.constant 0 : index
    %3 = vector.load %arg2[%c0_4, %c0_5, %c0_6] : memref<2x8x1xf32, #tpu.memory_space<vmem>>, vector<1x8x1xf32>
    %4 = vector.shape_cast %3 : vector<1x8x1xf32> to vector<8x1xf32>
    %5 = vector.broadcast %4 : vector<8x1xf32> to vector<8x384xf32>
    %6 = arith.mulf %2, %5 : vector<8x384xf32>
    %c1 = arith.constant 1 : index
    %c0_7 = arith.constant 0 : index
    %c0_8 = arith.constant 0 : index
    %7 = vector.load %arg2[%c1, %c0_7, %c0_8] : memref<2x8x1xf32, #tpu.memory_space<vmem>>, vector<1x8x1xf32>
    %8 = vector.shape_cast %7 : vector<1x8x1xf32> to vector<8x1xf32>
    %9 = vector.broadcast %8 : vector<8x1xf32> to vector<8x384xf32>
    %10 = arith.addf %6, %9 : vector<8x384xf32>
    %cst = arith.constant 0.000000e+00 : f32
    %11 = vector.broadcast %cst : f32 to vector<8x384xf32>
    %12 = arith.cmpf oge, %10, %11 : vector<8x384xf32>
    %cst_9 = arith.constant 2.000000e-01 : f32
    %13 = vector.broadcast %cst_9 : f32 to vector<8x384xf32>
    %14 = arith.mulf %13, %10 : vector<8x384xf32>
    %15 = arith.select %12, %10, %14 : vector<8x384xi1>, vector<8x384xf32>
    %16 = vector.broadcast %0 : vector<1x384xf32> to vector<8x384xf32>
    %17 = arith.mulf %15, %16 : vector<8x384xf32>
    %c0_10 = arith.constant 0 : index
    %c0_11 = arith.constant 0 : index
    %18 = vector.load %arg7[%c0_10, %c0_11] : memref<8x384xf32, #tpu.memory_space<vmem>>, vector<8x384xf32>
    tpu.vector_store %arg7[%c0_10, %c0_11], %17 {strides = array<i32>} : memref<8x384xf32, #tpu.memory_space<vmem>>, vector<8x384xf32>,
    %c0_12 = arith.constant 0 : index
    %c0_13 = arith.constant 0 : index
    %19 = vector.load %arg7[%c0_12, %c0_13] : memref<8x384xf32, #tpu.memory_space<vmem>>, vector<8x288xf32>
    %c0_14 = arith.constant 0 : index
    %c0_15 = arith.constant 0 : index
    %20 = vector.load %arg8[%c0_14, %c0_15] : memref<72x288xf32, #tpu.memory_space<vmem>>, vector<8x288xf32>
    tpu.vector_store %arg8[%c0_14, %c0_15], %19 {strides = array<i32>} : memref<72x288xf32, #tpu.memory_space<vmem>>, vector<8x288xf32>,
    %c0_16 = arith.constant 0 : index
    %c1_17 = arith.constant 1 : index
    %21 = vector.load %arg7[%c0_16, %c1_17] : memref<8x384xf32, #tpu.memory_space<vmem>>, vector<8x288xf32>
    %c8 = arith.constant 8 : index
    %c0_18 = arith.constant 0 : index
    %22 = vector.load %arg8[%c8, %c0_18] : memref<72x288xf32, #tpu.memory_space<vmem>>, vector<8x288xf32>
    tpu.vector_store %arg8[%c8, %c0_18], %21 {strides = array<i32>} : memref<72x288xf32, #tpu.memory_space<vmem>>, vector<8x288xf32>,
    %c0_19 = arith.constant 0 : index
    %c2 = arith.constant 2 : index
    %23 = vector.load %arg7[%c0_19, %c2] : memref<8x384xf32, #tpu.memory_space<vmem>>, vector<8x288xf32>
    %c16 = arith.constant 16 : index
    %c0_20 = arith.constant 0 : index
    %24 = vector.load %arg8[%c16, %c0_20] : memref<72x288xf32, #tpu.memory_space<vmem>>, vector<8x288xf32>
    tpu.vector_store %arg8[%c16, %c0_20], %23 {strides = array<i32>} : memref<72x288xf32, #tpu.memory_space<vmem>>, vector<8x288xf32>,
    %c0_21 = arith.constant 0 : index
    %c18 = arith.constant 18 : index
    %25 = vector.load %arg7[%c0_21, %c18] : memref<8x384xf32, #tpu.memory_space<vmem>>, vector<8x288xf32>
    %c24 = arith.constant 24 : index
    %c0_22 = arith.constant 0 : index
    %26 = vector.load %arg8[%c24, %c0_22] : memref<72x288xf32, #tpu.memory_space<vmem>>, vector<8x288xf32>
    tpu.vector_store %arg8[%c24, %c0_22], %25 {strides = array<i32>} : memref<72x288xf32, #tpu.memory_space<vmem>>, vector<8x288xf32>,
    %c0_23 = arith.constant 0 : index
    %c19 = arith.constant 19 : index
    %27 = vector.load %arg7[%c0_23, %c19] : memref<8x384xf32, #tpu.memory_space<vmem>>, vector<8x288xf32>
    %c32 = arith.constant 32 : index
    %c0_24 = arith.constant 0 : index
    %28 = vector.load %arg8[%c32, %c0_24] : memref<72x288xf32, #tpu.memory_space<vmem>>, vector<8x288xf32>
    tpu.vector_store %arg8[%c32, %c0_24], %27 {strides = array<i32>} : memref<72x288xf32, #tpu.memory_space<vmem>>, vector<8x288xf32>,
    %c0_25 = arith.constant 0 : index
    %c20 = arith.constant 20 : index
    %29 = vector.load %arg7[%c0_25, %c20] : memref<8x384xf32, #tpu.memory_space<vmem>>, vector<8x288xf32>
    %c40 = arith.constant 40 : index
    %c0_26 = arith.constant 0 : index
    %30 = vector.load %arg8[%c40, %c0_26] : memref<72x288xf32, #tpu.memory_space<vmem>>, vector<8x288xf32>
    tpu.vector_store %arg8[%c40, %c0_26], %29 {strides = array<i32>} : memref<72x288xf32, #tpu.memory_space<vmem>>, vector<8x288xf32>,
    %c0_27 = arith.constant 0 : index
    %c36 = arith.constant 36 : index
    %31 = vector.load %arg7[%c0_27, %c36] : memref<8x384xf32, #tpu.memory_space<vmem>>, vector<8x288xf32>
    %c48 = arith.constant 48 : index
    %c0_28 = arith.constant 0 : index
    %32 = vector.load %arg8[%c48, %c0_28] : memref<72x288xf32, #tpu.memory_space<vmem>>, vector<8x288xf32>
    tpu.vector_store %arg8[%c48, %c0_28], %31 {strides = array<i32>} : memref<72x288xf32, #tpu.memory_space<vmem>>, vector<8x288xf32>,
    %c0_29 = arith.constant 0 : index
    %c37 = arith.constant 37 : index
    %33 = vector.load %arg7[%c0_29, %c37] : memref<8x384xf32, #tpu.memory_space<vmem>>, vector<8x288xf32>
    %c56 = arith.constant 56 : index
    %c0_30 = arith.constant 0 : index
    %34 = vector.load %arg8[%c56, %c0_30] : memref<72x288xf32, #tpu.memory_space<vmem>>, vector<8x288xf32>
    tpu.vector_store %arg8[%c56, %c0_30], %33 {strides = array<i32>} : memref<72x288xf32, #tpu.memory_space<vmem>>, vector<8x288xf32>,
    %c0_31 = arith.constant 0 : index
    %c38 = arith.constant 38 : index
    %35 = vector.load %arg7[%c0_31, %c38] : memref<8x384xf32, #tpu.memory_space<vmem>>, vector<8x288xf32>
    %c64 = arith.constant 64 : index
    %c0_32 = arith.constant 0 : index
    %36 = vector.load %arg8[%c64, %c0_32] : memref<72x288xf32, #tpu.memory_space<vmem>>, vector<8x288xf32>
    tpu.vector_store %arg8[%c64, %c0_32], %35 {strides = array<i32>} : memref<72x288xf32, #tpu.memory_space<vmem>>, vector<8x288xf32>,
    %c0_33 = arith.constant 0 : index
    %c0_34 = arith.constant 0 : index
    %37 = vector.load %arg3[%c0_33, %c0_34] : memref<8x72xf32, #tpu.memory_space<vmem>>, vector<8x72xf32>
    %c0_35 = arith.constant 0 : index
    %c0_36 = arith.constant 0 : index
    %38 = vector.load %arg8[%c0_35, %c0_36] : memref<72x288xf32, #tpu.memory_space<vmem>>, vector<72x288xf32>
    %cst_37 = arith.constant dense<0.000000e+00> : vector<8x288xf32>
    %39 = tpu.matmul %37, %38, %cst_37 {dimension_numbers = #tpu.dot_dimension_numbers<[1], [0], [0], [1], [0, 0, 1, 1], [], []>, precision = #tpu.contract_precision<fp32>} : vector<8x72xf32>, vector<72x288xf32>, vector<8x288xf32> -> vector<8x288xf32>
    %c0_38 = arith.constant 0 : index
    %c19_39 = arith.constant 19 : index
    %40 = vector.load %arg4[%c0_38, %c19_39] : memref<1x384xf32, #tpu.memory_space<vmem>>, vector<1x288xf32>
    %41 = vector.broadcast %40 : vector<1x288xf32> to vector<8x288xf32>
    %42 = arith.mulf %39, %41 : vector<8x288xf32>
    %cst_40 = arith.constant 0.000000e+00 : f32
    %43 = vector.broadcast %cst_40 : f32 to vector<8x384xf32>
    %c0_41 = arith.constant 0 : index
    %c0_42 = arith.constant 0 : index
    %c0_43 = arith.constant 0 : index
    %44 = vector.load %arg5[%c0_41, %c0_42, %c0_43] : memref<1x8x384xf32, #tpu.memory_space<vmem>>, vector<1x8x384xf32>
    %45 = vector.shape_cast %44 : vector<1x8x384xf32> to vector<8x384xf32>
    %46 = vector.shape_cast %43 : vector<8x384xf32> to vector<1x8x384xf32>
    tpu.vector_store %arg5[%c0_41, %c0_42, %c0_43], %46 {strides = array<i32>} : memref<1x8x384xf32, #tpu.memory_space<vmem>>, vector<1x8x384xf32>,
    %c0_44 = arith.constant 0 : index
    %c0_45 = arith.constant 0 : index
    %c19_46 = arith.constant 19 : index
    %47 = vector.load %arg5[%c0_44, %c0_45, %c19_46] : memref<1x8x384xf32, #tpu.memory_space<vmem>>, vector<1x8x288xf32>
    %48 = vector.shape_cast %47 : vector<1x8x288xf32> to vector<8x288xf32>
    %49 = vector.shape_cast %42 : vector<8x288xf32> to vector<1x8x288xf32>
    tpu.vector_store %arg5[%c0_44, %c0_45, %c19_46], %49 {strides = array<i32>} : memref<1x8x384xf32, #tpu.memory_space<vmem>>, vector<1x8x288xf32>,
    %cst_47 = arith.constant dense<0.000000e+00> : vector<8xf32>
    %50 = vector.multi_reduction <add>, %42, %cst_47 [1] : vector<8x288xf32> to vector<8xf32>
    %51 = vector.shape_cast %50 : vector<8xf32> to vector<8x1xf32>
    %c0_48 = arith.constant 0 : index
    %c0_49 = arith.constant 0 : index
    %c0_50 = arith.constant 0 : index
    %c0_51 = arith.constant 0 : index
    %52 = vector.load %arg6[%c0_48, %c0_49, %c0_50, %c0_51] : memref<1x2x8x1xf32, #tpu.memory_space<vmem>>, vector<1x1x8x1xf32>
    %53 = vector.shape_cast %52 : vector<1x1x8x1xf32> to vector<8x1xf32>
    %54 = vector.shape_cast %51 : vector<8x1xf32> to vector<1x1x8x1xf32>
    tpu.vector_store %arg6[%c0_48, %c0_49, %c0_50, %c0_51], %54 {strides = array<i32>} : memref<1x2x8x1xf32, #tpu.memory_space<vmem>>, vector<1x1x8x1xf32>,
    %55 = arith.mulf %42, %42 : vector<8x288xf32>
    %cst_52 = arith.constant dense<0.000000e+00> : vector<8xf32>
    %56 = vector.multi_reduction <add>, %55, %cst_52 [1] : vector<8x288xf32> to vector<8xf32>
    %57 = vector.shape_cast %56 : vector<8xf32> to vector<8x1xf32>
    %c0_53 = arith.constant 0 : index
    %c1_54 = arith.constant 1 : index
    %c0_55 = arith.constant 0 : index
    %c0_56 = arith.constant 0 : index
    %58 = vector.load %arg6[%c0_53, %c1_54, %c0_55, %c0_56] : memref<1x2x8x1xf32, #tpu.memory_space<vmem>>, vector<1x1x8x1xf32>
    %59 = vector.shape_cast %58 : vector<1x1x8x1xf32> to vector<8x1xf32>
    %60 = vector.shape_cast %57 : vector<8x1xf32> to vector<1x1x8x1xf32>
    tpu.vector_store %arg6[%c0_53, %c1_54, %c0_55, %c0_56], %60 {strides = array<i32>} : memref<1x2x8x1xf32, #tpu.memory_space<vmem>>, vector<1x1x8x1xf32>,
    return
  }
  func.func @transform_0(%arg0: i32) -> (i32, i32, i32) {
    %c0_i32 = arith.constant 0 : i32
    %c0_i32_0 = arith.constant 0 : i32
    %c0_i32_1 = arith.constant 0 : i32
    return %arg0, %c0_i32, %c0_i32_0 : i32, i32, i32
  }
  func.func @transform_1(%arg0: i32) -> (i32, i32, i32) {
    %c0_i32 = arith.constant 0 : i32
    %c0_i32_0 = arith.constant 0 : i32
    %c0_i32_1 = arith.constant 0 : i32
    %c0_i32_2 = arith.constant 0 : i32
    return %c0_i32, %c0_i32_0, %c0_i32_1 : i32, i32, i32
  }
  func.func @transform_2(%arg0: i32) -> (i32, i32) {
    %c0_i32 = arith.constant 0 : i32
    %c0_i32_0 = arith.constant 0 : i32
    %c0_i32_1 = arith.constant 0 : i32
    return %c0_i32, %c0_i32_0 : i32, i32
  }
  func.func @transform_3(%arg0: i32) -> (i32, i32) {
    %c0_i32 = arith.constant 0 : i32
    %c0_i32_0 = arith.constant 0 : i32
    %c0_i32_1 = arith.constant 0 : i32
    return %c0_i32, %c0_i32_0 : i32, i32
  }
  func.func @transform_4(%arg0: i32) -> (i32, i32, i32) {
    %c0_i32 = arith.constant 0 : i32
    %c0_i32_0 = arith.constant 0 : i32
    %c0_i32_1 = arith.constant 0 : i32
    return %arg0, %c0_i32, %c0_i32_0 : i32, i32, i32
  }
  func.func @transform_5(%arg0: i32) -> (i32, i32, i32, i32) {
    %c0_i32 = arith.constant 0 : i32
    %c0_i32_0 = arith.constant 0 : i32
    %c0_i32_1 = arith.constant 0 : i32
    %c0_i32_2 = arith.constant 0 : i32
    return %arg0, %c0_i32, %c0_i32_0, %c0_i32_1 : i32, i32, i32, i32
  }
}

module attributes {stable_mosaic.version = 11 : i64} {
  func.func @kernel(%arg0: i32, %arg1: memref<1x8x384xf32, #tpu.memory_space<vmem>>, %arg2: memref<1x8x384xf32, #tpu.memory_space<vmem>>, %arg3: memref<2x8x1xf32, #tpu.memory_space<vmem>>, %arg4: memref<8x72xf32, #tpu.memory_space<vmem>>, %arg5: memref<1x384xf32, #tpu.memory_space<vmem>>, %arg6: memref<1x8x384xf32, #tpu.memory_space<vmem>>, %arg7: memref<8x384xf32, #tpu.memory_space<vmem>>, %arg8: memref<72x288xf32, #tpu.memory_space<vmem>>) attributes {dimension_semantics = [#tpu.dimension_semantics<parallel>], iteration_bounds = array<i64: 2>, scalar_prefetch = 0 : i64, scratch_operands = 2 : i64, tpu.core_type = #tpu.core_type<tc>, window_params = [{transform_indices = @transform_0, window_bounds = array<i64: 1, 8, 384>}, {transform_indices = @transform_1, window_bounds = array<i64: 1, 8, 384>}, {pipeline_mode = #tpu.pipeline_mode<synchronous>, transform_indices = @transform_2, window_bounds = array<i64: 2, 8, 1>}, {pipeline_mode = #tpu.pipeline_mode<synchronous>, transform_indices = @transform_3, window_bounds = array<i64: 8, 72>}, {pipeline_mode = #tpu.pipeline_mode<synchronous>, transform_indices = @transform_4, window_bounds = array<i64: 1, 384>}, {transform_indices = @transform_5, window_bounds = array<i64: 1, 8, 384>}]} {
    %c0 = arith.constant 0 : index
    %c0_0 = arith.constant 0 : index
    %0 = vector.load %arg5[%c0, %c0_0] : memref<1x384xf32, #tpu.memory_space<vmem>>, vector<1x384xf32>
    %c0_1 = arith.constant 0 : index
    %c0_2 = arith.constant 0 : index
    %c0_3 = arith.constant 0 : index
    %1 = vector.load %arg1[%c0_1, %c0_2, %c0_3] : memref<1x8x384xf32, #tpu.memory_space<vmem>>, vector<1x8x384xf32>
    %2 = vector.shape_cast %1 : vector<1x8x384xf32> to vector<8x384xf32>
    %c0_4 = arith.constant 0 : index
    %c0_5 = arith.constant 0 : index
    %c0_6 = arith.constant 0 : index
    %3 = vector.load %arg3[%c0_4, %c0_5, %c0_6] : memref<2x8x1xf32, #tpu.memory_space<vmem>>, vector<1x8x1xf32>
    %4 = vector.shape_cast %3 : vector<1x8x1xf32> to vector<8x1xf32>
    %5 = vector.broadcast %4 : vector<8x1xf32> to vector<8x384xf32>
    %6 = arith.mulf %2, %5 : vector<8x384xf32>
    %c1 = arith.constant 1 : index
    %c0_7 = arith.constant 0 : index
    %c0_8 = arith.constant 0 : index
    %7 = vector.load %arg3[%c1, %c0_7, %c0_8] : memref<2x8x1xf32, #tpu.memory_space<vmem>>, vector<1x8x1xf32>
    %8 = vector.shape_cast %7 : vector<1x8x1xf32> to vector<8x1xf32>
    %9 = vector.broadcast %8 : vector<8x1xf32> to vector<8x384xf32>
    %10 = arith.addf %6, %9 : vector<8x384xf32>
    %cst = arith.constant 0.000000e+00 : f32
    %11 = vector.broadcast %cst : f32 to vector<8x384xf32>
    %12 = arith.cmpf oge, %10, %11 : vector<8x384xf32>
    %cst_9 = arith.constant 2.000000e-01 : f32
    %13 = vector.broadcast %cst_9 : f32 to vector<8x384xf32>
    %14 = arith.mulf %13, %10 : vector<8x384xf32>
    %15 = arith.select %12, %10, %14 : vector<8x384xi1>, vector<8x384xf32>
    %16 = vector.broadcast %0 : vector<1x384xf32> to vector<8x384xf32>
    %17 = arith.mulf %15, %16 : vector<8x384xf32>
    %c0_10 = arith.constant 0 : index
    %c0_11 = arith.constant 0 : index
    %c0_12 = arith.constant 0 : index
    %18 = vector.load %arg2[%c0_10, %c0_11, %c0_12] : memref<1x8x384xf32, #tpu.memory_space<vmem>>, vector<1x8x384xf32>
    %19 = vector.shape_cast %18 : vector<1x8x384xf32> to vector<8x384xf32>
    %20 = arith.addf %17, %19 : vector<8x384xf32>
    %c0_13 = arith.constant 0 : index
    %c0_14 = arith.constant 0 : index
    %21 = vector.load %arg7[%c0_13, %c0_14] : memref<8x384xf32, #tpu.memory_space<vmem>>, vector<8x384xf32>
    tpu.vector_store %arg7[%c0_13, %c0_14], %20 {strides = array<i32>} : memref<8x384xf32, #tpu.memory_space<vmem>>, vector<8x384xf32>,
    %c0_15 = arith.constant 0 : index
    %c0_16 = arith.constant 0 : index
    %22 = vector.load %arg7[%c0_15, %c0_16] : memref<8x384xf32, #tpu.memory_space<vmem>>, vector<8x288xf32>
    %c0_17 = arith.constant 0 : index
    %c0_18 = arith.constant 0 : index
    %23 = vector.load %arg8[%c0_17, %c0_18] : memref<72x288xf32, #tpu.memory_space<vmem>>, vector<8x288xf32>
    tpu.vector_store %arg8[%c0_17, %c0_18], %22 {strides = array<i32>} : memref<72x288xf32, #tpu.memory_space<vmem>>, vector<8x288xf32>,
    %c0_19 = arith.constant 0 : index
    %c1_20 = arith.constant 1 : index
    %24 = vector.load %arg7[%c0_19, %c1_20] : memref<8x384xf32, #tpu.memory_space<vmem>>, vector<8x288xf32>
    %c8 = arith.constant 8 : index
    %c0_21 = arith.constant 0 : index
    %25 = vector.load %arg8[%c8, %c0_21] : memref<72x288xf32, #tpu.memory_space<vmem>>, vector<8x288xf32>
    tpu.vector_store %arg8[%c8, %c0_21], %24 {strides = array<i32>} : memref<72x288xf32, #tpu.memory_space<vmem>>, vector<8x288xf32>,
    %c0_22 = arith.constant 0 : index
    %c2 = arith.constant 2 : index
    %26 = vector.load %arg7[%c0_22, %c2] : memref<8x384xf32, #tpu.memory_space<vmem>>, vector<8x288xf32>
    %c16 = arith.constant 16 : index
    %c0_23 = arith.constant 0 : index
    %27 = vector.load %arg8[%c16, %c0_23] : memref<72x288xf32, #tpu.memory_space<vmem>>, vector<8x288xf32>
    tpu.vector_store %arg8[%c16, %c0_23], %26 {strides = array<i32>} : memref<72x288xf32, #tpu.memory_space<vmem>>, vector<8x288xf32>,
    %c0_24 = arith.constant 0 : index
    %c18 = arith.constant 18 : index
    %28 = vector.load %arg7[%c0_24, %c18] : memref<8x384xf32, #tpu.memory_space<vmem>>, vector<8x288xf32>
    %c24 = arith.constant 24 : index
    %c0_25 = arith.constant 0 : index
    %29 = vector.load %arg8[%c24, %c0_25] : memref<72x288xf32, #tpu.memory_space<vmem>>, vector<8x288xf32>
    tpu.vector_store %arg8[%c24, %c0_25], %28 {strides = array<i32>} : memref<72x288xf32, #tpu.memory_space<vmem>>, vector<8x288xf32>,
    %c0_26 = arith.constant 0 : index
    %c19 = arith.constant 19 : index
    %30 = vector.load %arg7[%c0_26, %c19] : memref<8x384xf32, #tpu.memory_space<vmem>>, vector<8x288xf32>
    %c32 = arith.constant 32 : index
    %c0_27 = arith.constant 0 : index
    %31 = vector.load %arg8[%c32, %c0_27] : memref<72x288xf32, #tpu.memory_space<vmem>>, vector<8x288xf32>
    tpu.vector_store %arg8[%c32, %c0_27], %30 {strides = array<i32>} : memref<72x288xf32, #tpu.memory_space<vmem>>, vector<8x288xf32>,
    %c0_28 = arith.constant 0 : index
    %c20 = arith.constant 20 : index
    %32 = vector.load %arg7[%c0_28, %c20] : memref<8x384xf32, #tpu.memory_space<vmem>>, vector<8x288xf32>
    %c40 = arith.constant 40 : index
    %c0_29 = arith.constant 0 : index
    %33 = vector.load %arg8[%c40, %c0_29] : memref<72x288xf32, #tpu.memory_space<vmem>>, vector<8x288xf32>
    tpu.vector_store %arg8[%c40, %c0_29], %32 {strides = array<i32>} : memref<72x288xf32, #tpu.memory_space<vmem>>, vector<8x288xf32>,
    %c0_30 = arith.constant 0 : index
    %c36 = arith.constant 36 : index
    %34 = vector.load %arg7[%c0_30, %c36] : memref<8x384xf32, #tpu.memory_space<vmem>>, vector<8x288xf32>
    %c48 = arith.constant 48 : index
    %c0_31 = arith.constant 0 : index
    %35 = vector.load %arg8[%c48, %c0_31] : memref<72x288xf32, #tpu.memory_space<vmem>>, vector<8x288xf32>
    tpu.vector_store %arg8[%c48, %c0_31], %34 {strides = array<i32>} : memref<72x288xf32, #tpu.memory_space<vmem>>, vector<8x288xf32>,
    %c0_32 = arith.constant 0 : index
    %c37 = arith.constant 37 : index
    %36 = vector.load %arg7[%c0_32, %c37] : memref<8x384xf32, #tpu.memory_space<vmem>>, vector<8x288xf32>
    %c56 = arith.constant 56 : index
    %c0_33 = arith.constant 0 : index
    %37 = vector.load %arg8[%c56, %c0_33] : memref<72x288xf32, #tpu.memory_space<vmem>>, vector<8x288xf32>
    tpu.vector_store %arg8[%c56, %c0_33], %36 {strides = array<i32>} : memref<72x288xf32, #tpu.memory_space<vmem>>, vector<8x288xf32>,
    %c0_34 = arith.constant 0 : index
    %c38 = arith.constant 38 : index
    %38 = vector.load %arg7[%c0_34, %c38] : memref<8x384xf32, #tpu.memory_space<vmem>>, vector<8x288xf32>
    %c64 = arith.constant 64 : index
    %c0_35 = arith.constant 0 : index
    %39 = vector.load %arg8[%c64, %c0_35] : memref<72x288xf32, #tpu.memory_space<vmem>>, vector<8x288xf32>
    tpu.vector_store %arg8[%c64, %c0_35], %38 {strides = array<i32>} : memref<72x288xf32, #tpu.memory_space<vmem>>, vector<8x288xf32>,
    %c0_36 = arith.constant 0 : index
    %c0_37 = arith.constant 0 : index
    %40 = vector.load %arg4[%c0_36, %c0_37] : memref<8x72xf32, #tpu.memory_space<vmem>>, vector<8x72xf32>
    %c0_38 = arith.constant 0 : index
    %c0_39 = arith.constant 0 : index
    %41 = vector.load %arg8[%c0_38, %c0_39] : memref<72x288xf32, #tpu.memory_space<vmem>>, vector<72x288xf32>
    %cst_40 = arith.constant dense<0.000000e+00> : vector<8x288xf32>
    %42 = tpu.matmul %40, %41, %cst_40 {dimension_numbers = #tpu.dot_dimension_numbers<[1], [0], [0], [1], [0, 0, 1, 1], [], []>, precision = #tpu.contract_precision<fp32>} : vector<8x72xf32>, vector<72x288xf32>, vector<8x288xf32> -> vector<8x288xf32>
    %c0_41 = arith.constant 0 : index
    %c19_42 = arith.constant 19 : index
    %43 = vector.load %arg5[%c0_41, %c19_42] : memref<1x384xf32, #tpu.memory_space<vmem>>, vector<1x288xf32>
    %44 = vector.broadcast %43 : vector<1x288xf32> to vector<8x288xf32>
    %45 = arith.mulf %42, %44 : vector<8x288xf32>
    %cst_43 = arith.constant 0.000000e+00 : f32
    %46 = vector.broadcast %cst_43 : f32 to vector<8x384xf32>
    %c0_44 = arith.constant 0 : index
    %c0_45 = arith.constant 0 : index
    %c0_46 = arith.constant 0 : index
    %47 = vector.load %arg6[%c0_44, %c0_45, %c0_46] : memref<1x8x384xf32, #tpu.memory_space<vmem>>, vector<1x8x384xf32>
    %48 = vector.shape_cast %47 : vector<1x8x384xf32> to vector<8x384xf32>
    %49 = vector.shape_cast %46 : vector<8x384xf32> to vector<1x8x384xf32>
    tpu.vector_store %arg6[%c0_44, %c0_45, %c0_46], %49 {strides = array<i32>} : memref<1x8x384xf32, #tpu.memory_space<vmem>>, vector<1x8x384xf32>,
    %c0_47 = arith.constant 0 : index
    %c0_48 = arith.constant 0 : index
    %c19_49 = arith.constant 19 : index
    %50 = vector.load %arg6[%c0_47, %c0_48, %c19_49] : memref<1x8x384xf32, #tpu.memory_space<vmem>>, vector<1x8x288xf32>
    %51 = vector.shape_cast %50 : vector<1x8x288xf32> to vector<8x288xf32>
    %52 = vector.shape_cast %45 : vector<8x288xf32> to vector<1x8x288xf32>
    tpu.vector_store %arg6[%c0_47, %c0_48, %c19_49], %52 {strides = array<i32>} : memref<1x8x384xf32, #tpu.memory_space<vmem>>, vector<1x8x288xf32>,
    return
  }
  func.func @transform_0(%arg0: i32) -> (i32, i32, i32) {
    %c0_i32 = arith.constant 0 : i32
    %c0_i32_0 = arith.constant 0 : i32
    %c0_i32_1 = arith.constant 0 : i32
    return %arg0, %c0_i32, %c0_i32_0 : i32, i32, i32
  }
  func.func @transform_1(%arg0: i32) -> (i32, i32, i32) {
    %c0_i32 = arith.constant 0 : i32
    %c0_i32_0 = arith.constant 0 : i32
    %c0_i32_1 = arith.constant 0 : i32
    return %arg0, %c0_i32, %c0_i32_0 : i32, i32, i32
  }
  func.func @transform_2(%arg0: i32) -> (i32, i32, i32) {
    %c0_i32 = arith.constant 0 : i32
    %c0_i32_0 = arith.constant 0 : i32
    %c0_i32_1 = arith.constant 0 : i32
    %c0_i32_2 = arith.constant 0 : i32
    return %c0_i32, %c0_i32_0, %c0_i32_1 : i32, i32, i32
  }
  func.func @transform_3(%arg0: i32) -> (i32, i32) {
    %c0_i32 = arith.constant 0 : i32
    %c0_i32_0 = arith.constant 0 : i32
    %c0_i32_1 = arith.constant 0 : i32
    return %c0_i32, %c0_i32_0 : i32, i32
  }
  func.func @transform_4(%arg0: i32) -> (i32, i32) {
    %c0_i32 = arith.constant 0 : i32
    %c0_i32_0 = arith.constant 0 : i32
    %c0_i32_1 = arith.constant 0 : i32
    return %c0_i32, %c0_i32_0 : i32, i32
  }
  func.func @transform_5(%arg0: i32) -> (i32, i32, i32) {
    %c0_i32 = arith.constant 0 : i32
    %c0_i32_0 = arith.constant 0 : i32
    %c0_i32_1 = arith.constant 0 : i32
    return %arg0, %c0_i32, %c0_i32_0 : i32, i32, i32
  }
}

</mosaic_0001>

<llo_original>
// kernel: unet2d_forward.9
$region0: #{unet2d_forward.9}
  #allocation0 [shape = 'u32[]', space=smem, size = 0x4, offset = 0x4, fixed_abs, tag = 'smem constant byte address 0x4 - core index']
  #allocation1 [shape = 'u32[72,128]{1,0:T(1,128)}', space=vmem, size = 0x9000, scoped, tag = 'internal scratch']
  #allocation2 [shape = 'f32[8,384]{1,0:T(8,128)}', space=vmem, size = 0x3000, scoped, tag = 'scratch operand']
  #allocation3 [shape = 'f32[72,288]{1,0:T(8,128)}', space=vmem, size = 0x1b000, scoped, tag = 'scratch operand']
  %s0 = inlined_call_operand.vmem [shape: f32[2,8,384], index: 0, kind: input, shape index: {}]
  %s1 = inlined_call_operand.vmem [shape: f32[8,72], index: 1, kind: input, shape index: {}]
  %s2 = inlined_call_operand.vmem [shape: f32[1,384], index: 2, kind: input, shape index: {}]
  %s3 = inlined_call_operand.vmem [shape: f32[2,8,384], index: 3, kind: output, shape index: {}]
  %s4 = sld [smem:[#allocation0]]
  $region45: #{unet2d_forward.9} parent=0
    _
  %s6 = ssub.s32 1, %s4
  %s7 = scalar_select 0, %s6, %s4
  loop: start=0, step=1, limit=4
  $region2: #{unet2d_forward.9} parent=0 // loop_pre_header
    _
  $region3: #{unet2d_forward.9} parent=0 // loop_header
    %s9 = sphi 0, %s13
    %p10 = scmp.ge.s32.totalorder %s9, 4
    %s19 = sphi 0, %s21
    %s22 = sphi 0, %s19
    %s23 = sphi 0, %s22
    %s39 = sphi 0, %s23
    %s43 = sphi 0, %s43
    %s45 = sphi 0, %s43
    %s46 = sphi 0, %s45
    %s60 = sphi 0, %s46
    %s64 = sphi 0, %s64
    %s66 = sphi 0, %s64
    %s67 = sphi 0, %s66
    %s81 = sphi 0, %s67
    %s87 = sphi 0, %s89
    %s90 = sphi 0, %s87
    %s91 = sphi 0, %s90
    %s107 = sphi 0, %s91
  $region4: #{unet2d_forward.9} parent=0 // loop_header_branch
    %12 = sbr.rel (%p10) target = $region8
  $region5: #{unet2d_forward.9} parent=0 // loop_body
    %s14 = ssub.s32 %s9, 1
    %s15 = ssub.s32 %s9, 2
    %s16 = sadd.s32 %s9, 1
    %s17 = ssub.s32 %s9, %s16
    %p18 = scmp.eq.s32.totalorder %s17, 0
    %s20 = sadd.s32 %s19, 1
    %s21 = scalar_select %p18, %s19, %s20
    %p24 = pneg %p18
    %p25 = scmp.eq.s32.totalorder %s9, 1
    %p26 = por %p24, %p25
    %p27 = scmp.ne.s32.totalorder %s19, %s22
    %p28 = scmp.eq.s32.totalorder %s9, 0
    %p29 = por %p27, %p28
    %p30 = scmp.ne.s32.totalorder %s19, %s22
    %p31 = scmp.eq.s32.totalorder %s14, 1
    %p32 = por %p30, %p31
    %p33 = scmp.ne.s32.totalorder %s22, %s23
    %p34 = scmp.eq.s32.totalorder %s14, 0
    %p35 = por %p33, %p34
    %p36 = scmp.ne.s32.totalorder %s22, %s23
    %p37 = scmp.eq.s32.totalorder %s15, 1
    %p38 = por %p36, %p37
    %p40 = scmp.ne.s32.totalorder %s23, %s39
    %p41 = scmp.eq.s32.totalorder %s15, 0
    %p42 = por %p40, %p41
    %s44 = sadd.s32 %s43, 1
    %p47 = scmp.eq.s32.totalorder %s9, 1
    %p48 = scmp.ne.s32.totalorder %s43, %s45
    %p49 = scmp.eq.s32.totalorder %s9, 0
    %p50 = por %p48, %p49
    %p51 = scmp.ne.s32.totalorder %s43, %s45
    %p52 = scmp.eq.s32.totalorder %s14, 1
    %p53 = por %p51, %p52
    %p54 = scmp.ne.s32.totalorder %s45, %s46
    %p55 = scmp.eq.s32.totalorder %s14, 0
    %p56 = por %p54, %p55
    %p57 = scmp.ne.s32.totalorder %s45, %s46
    %p58 = scmp.eq.s32.totalorder %s15, 1
    %p59 = por %p57, %p58
    %p61 = scmp.ne.s32.totalorder %s46, %s60
    %p62 = scmp.eq.s32.totalorder %s15, 0
    %p63 = por %p61, %p62
    %s65 = sadd.s32 %s64, 1
    %p68 = scmp.eq.s32.totalorder %s9, 1
    %p69 = scmp.ne.s32.totalorder %s64, %s66
    %p70 = scmp.eq.s32.totalorder %s9, 0
    %p71 = por %p69, %p70
    %p72 = scmp.ne.s32.totalorder %s64, %s66
    %p73 = scmp.eq.s32.totalorder %s14, 1
    %p74 = por %p72, %p73
    %p75 = scmp.ne.s32.totalorder %s66, %s67
    %p76 = scmp.eq.s32.totalorder %s14, 0
    %p77 = por %p75, %p76
    %p78 = scmp.ne.s32.totalorder %s66, %s67
    %p79 = scmp.eq.s32.totalorder %s15, 1
    %p80 = por %p78, %p79
    %p82 = scmp.ne.s32.totalorder %s67, %s81
    %p83 = scmp.eq.s32.totalorder %s15, 0
    %p84 = por %p82, %p83
    %s85 = ssub.s32 %s9, %s16
    %p86 = scmp.eq.s32.totalorder %s85, 0
    %s88 = sadd.s32 %s87, 1
    %s89 = scalar_select %p86, %s87, %s88
    %p92 = pneg %p86
    %p93 = scmp.eq.s32.totalorder %s9, 1
    %p94 = por %p92, %p93
    %p95 = scmp.ne.s32.totalorder %s87, %s90
    %p96 = scmp.eq.s32.totalorder %s9, 0
    %p97 = por %p95, %p96
    %p98 = scmp.ne.s32.totalorder %s87, %s90
    %p99 = scmp.eq.s32.totalorder %s14, 1
    %p100 = por %p98, %p99
    %p101 = scmp.ne.s32.totalorder %s90, %s91
    %p102 = scmp.eq.s32.totalorder %s14, 0
    %p103 = por %p101, %p102
    %p104 = scmp.ne.s32.totalorder %s90, %s91
    %p105 = scmp.eq.s32.totalorder %s15, 1
    %p106 = por %p104, %p105
    %p108 = scmp.ne.s32.totalorder %s91, %s107
    %p109 = scmp.eq.s32.totalorder %s15, 0
    %p110 = por %p108, %p109
    %p111 = scmp.le.s32.totalorder 1, %s9
    %p112 = scmp.lt.s32.totalorder %s9, 3
    %p113 = pnand %p111, %p112
    %p114 = pneg %p113
    // Predicated region
    $region9: #{unet2d_forward.9} parent=5 // pred_check
      _
    $region10: #{unet2d_forward.9} parent=5 // pred_check_branch
      %116 = sbr.rel (%p113) target = $region12
    $region11: #{unet2d_forward.9} parent=5 // pred_region
      %s117 = ssub.s32 %s9, 1
      // Predicated region
      $region13: #{unet2d_forward.9} parent=11 // pred_check
        %p118 = pneg %p56
      $region14: #{unet2d_forward.9} parent=11 // pred_check_branch
        %120 = sbr.rel (%p118) target = $region16
      $region15: #{unet2d_forward.9} parent=11 // pred_region
        _
      $region16: #{unet2d_forward.9} parent=11 // pred_fallthru
        _
      // Predicated region
      $region17: #{unet2d_forward.9} parent=11 // pred_check
        %p121 = pneg %p77
      $region18: #{unet2d_forward.9} parent=11 // pred_check_branch
        %123 = sbr.rel (%p121) target = $region20
      $region19: #{unet2d_forward.9} parent=11 // pred_region
        _
      $region20: #{unet2d_forward.9} parent=11 // pred_fallthru
        _
    $region12: #{unet2d_forward.9} parent=5 // pred_fallthru
      _
    %p124 = scmp.lt.s32.totalorder %s9, 2
    // Predicated region
    $region21: #{unet2d_forward.9} parent=5 // pred_check
      %p125 = pneg %p124
    $region22: #{unet2d_forward.9} parent=5 // pred_check_branch
      %127 = sbr.rel (%p125) target = $region24
    $region23: #{unet2d_forward.9} parent=5 // pred_region
      // Predicated region
      $region25: #{unet2d_forward.9} parent=23 // pred_check
        %p128 = pneg %p29
      $region26: #{unet2d_forward.9} parent=23 // pred_check_branch
        %130 = sbr.rel (%p128) target = $region28
      $region27: #{unet2d_forward.9} parent=23 // pred_region
        %p131 = scmp.lt.s32.totalorder %s9, 1
        %s132 = scalar_select %p131, %s9, 1
        %s133 = smul.addr %s132, 3
        %s134 = smul.addr %s133, 8
        %s135 = scalar_lea.vmem %s0, %s134
      $region28: #{unet2d_forward.9} parent=23 // pred_fallthru
        _
    $region24: #{unet2d_forward.9} parent=5 // pred_fallthru
      _
    %p136 = scmp.le.s32.totalorder 1, %s9
    %p137 = scmp.lt.s32.totalorder %s9, 3
    %p138 = pnand %p136, %p137
    %p139 = pneg %p138
    // Predicated region
    $region29: #{unet2d_forward.9} parent=5 // pred_check
      _
    $region30: #{unet2d_forward.9} parent=5 // pred_check_branch
      %141 = sbr.rel (%p138) target = $region32
    $region31: #{unet2d_forward.9} parent=5 // pred_region
      %s142 = ssub.s32 %s9, 1
      %p143 = scmp.lt.s32.totalorder %s14, 1
      %s144 = scalar_select %p143, %s14, 1
      %s145 = smul.addr %s144, 3
      %s146 = smul.addr %s145, 8
      %s147 = scalar_lea.vmem %s0, %s146
      %p148 = pneg %p35
      %p149 = pneg %p32
      %p150 = pneg %p56
      %p151 = pneg %p53
      %p152 = pneg %p77
      %p153 = pneg %p74
      %p154 = pneg %p103
      %p155 = pneg %p100
      %p156 = scmp.lt.s32.totalorder %s14, 1
      %s157 = scalar_select %p156, %s14, 1
      %s158 = smul.addr %s157, 3
      %s159 = smul.addr %s158, 8
      %s160 = scalar_lea.vmem %s3, %s159
      %p161 = scmp.lt.s32.totalorder %s14, 1
      %s162 = scalar_select %p161, %s14, 1
      %s163 = smul.addr %s162, 3
      %s164 = smul.addr %s163, 8
      %s165 = scalar_lea.vmem %s0, %s164
      %p166 = scmp.lt.s32.totalorder %s14, 1
      %s167 = scalar_select %p166, %s14, 1
      %s168 = smul.addr %s167, 3
      %s169 = smul.addr %s168, 8
      %s170 = scalar_lea.vmem %s3, %s169
      %v171 = vld [vmem:[%s165] sm:$0xff]
      %v172 = vld [vmem:[%s165 + $0x8] sm:$0xff]
      %v173 = vld [vmem:[%s165 + $0x10] sm:$0xff]
      %174 = vst [vmem:[#allocation2] sm:$0xff] %v171
      %175 = vst [vmem:[#allocation2 + $0x8] sm:$0xff] %v172
      %176 = vst [vmem:[#allocation2 + $0x10] sm:$0xff] %v173
      %v177 = vld [vmem:[#allocation2] sm:$0xff]
      %v178 = vld [vmem:[#allocation2 + $0x8] sm:$0xff]
      %v179 = vld [vmem:[#allocation2 + $0x10] sm:$0xff]
      %180 = vst [vmem:[#allocation3] sm:$0xff] %v177
      %181 = vst [vmem:[#allocation3 + $0x8] sm:$0xff] %v178
      %vm182 = vcmask 261120
      %183 = vst.msk [vmem:[#allocation3 + $0x10] sm:$0xff] %vm182, %v179
      %v184 = vld [vmem:[#allocation2] sm:$0xff]
      %v185 = vld [vmem:[#allocation2 + $0x8] sm:$0xff]
      %v186 = vld [vmem:[#allocation2 + $0x10] sm:$0xff]
      %190 = vrot.lane.b32.xlu0 %v184, 127
      %v191 = vpop.permute.xlu0 %190
      %192 = vrot.lane.b32.xlu0 %v185, 127
      %v193 = vpop.permute.xlu0 %192
      %194 = vrot.lane.b32.xlu0 %v186, 127
      %v195 = vpop.permute.xlu0 %194
      %vm196 = vcmask 1039360
      %v197 = vsel %vm196, %v191, %v193
      %v198 = vsel %vm196, %v193, %v195
      %202 = vst [vmem:[#allocation3 + $0x18] sm:$0xff] %v197
      %203 = vst [vmem:[#allocation3 + $0x20] sm:$0xff] %v198
      %204 = vst.msk [vmem:[#allocation3 + $0x28] sm:$0xff] %vm182, %v195
      %v205 = vld [vmem:[#allocation2] sm:$0xff]
      %v206 = vld [vmem:[#allocation2 + $0x8] sm:$0xff]
      %v207 = vld [vmem:[#allocation2 + $0x10] sm:$0xff]
      %211 = vrot.lane.b32.xlu0 %v205, 126
      %v212 = vpop.permute.xlu0 %211
      %213 = vrot.lane.b32.xlu0 %v206, 126
      %v214 = vpop.permute.xlu0 %213
      %215 = vrot.lane.b32.xlu0 %v207, 126
      %v216 = vpop.permute.xlu0 %215
      %vm217 = vcmask 1031168
      %v218 = vsel %vm217, %v212, %v214
      %v219 = vsel %vm217, %v214, %v216
      %223 = vst [vmem:[#allocation3 + $0x30] sm:$0xff] %v218
      %224 = vst [vmem:[#allocation3 + $0x38] sm:$0xff] %v219
      %225 = vst.msk [vmem:[#allocation3 + $0x40] sm:$0xff] %vm182, %v216
      %v226 = vld [vmem:[#allocation2] sm:$0xff]
      %v227 = vld [vmem:[#allocation2 + $0x8] sm:$0xff]
      %v228 = vld [vmem:[#allocation2 + $0x10] sm:$0xff]
      %232 = vrot.lane.b32.xlu0 %v226, 110
      %v233 = vpop.permute.xlu0 %232
      %234 = vrot.lane.b32.xlu0 %v227, 110
      %v235 = vpop.permute.xlu0 %234
      %236 = vrot.lane.b32.xlu0 %v228, 110
      %v237 = vpop.permute.xlu0 %236
      %vm238 = vcmask 900096
      %v239 = vsel %vm238, %v233, %v235
      %v240 = vsel %vm238, %v235, %v237
      %244 = vst [vmem:[#allocation3 + $0x48] sm:$0xff] %v239
      %245 = vst [vmem:[#allocation3 + $0x50] sm:$0xff] %v240
      %246 = vst.msk [vmem:[#allocation3 + $0x58] sm:$0xff] %vm182, %v237
      %v247 = vld [vmem:[#allocation2] sm:$0xff]
      %v248 = vld [vmem:[#allocation2 + $0x8] sm:$0xff]
      %v249 = vld [vmem:[#allocation2 + $0x10] sm:$0xff]
      %253 = vrot.lane.b32.xlu0 %v247, 109
      %v254 = vpop.permute.xlu0 %253
      %255 = vrot.lane.b32.xlu0 %v248, 109
      %v256 = vpop.permute.xlu0 %255
      %257 = vrot.lane.b32.xlu0 %v249, 109
      %v258 = vpop.permute.xlu0 %257
      %vm259 = vcmask 891904
      %v260 = vsel %vm259, %v254, %v256
      %v261 = vsel %vm259, %v256, %v258
      %265 = vst [vmem:[#allocation3 + $0x60] sm:$0xff] %v260
      %266 = vst [vmem:[#allocation3 + $0x68] sm:$0xff] %v261
      %267 = vst.msk [vmem:[#allocation3 + $0x70] sm:$0xff] %vm182, %v258
      %v268 = vld [vmem:[#allocation2] sm:$0xff]
      %v269 = vld [vmem:[#allocation2 + $0x8] sm:$0xff]
      %v270 = vld [vmem:[#allocation2 + $0x10] sm:$0xff]
      %274 = vrot.lane.b32.xlu0 %v268, 108
      %v275 = vpop.permute.xlu0 %274
      %276 = vrot.lane.b32.xlu0 %v269, 108
      %v277 = vpop.permute.xlu0 %276
      %278 = vrot.lane.b32.xlu0 %v270, 108
      %v279 = vpop.permute.xlu0 %278
      %vm280 = vcmask 883712
      %v281 = vsel %vm280, %v275, %v277
      %v282 = vsel %vm280, %v277, %v279
      %286 = vst [vmem:[#allocation3 + $0x78] sm:$0xff] %v281
      %287 = vst [vmem:[#allocation3 + $0x80] sm:$0xff] %v282
      %288 = vst.msk [vmem:[#allocation3 + $0x88] sm:$0xff] %vm182, %v279
      %v289 = vld [vmem:[#allocation2] sm:$0xff]
      %v290 = vld [vmem:[#allocation2 + $0x8] sm:$0xff]
      %v291 = vld [vmem:[#allocation2 + $0x10] sm:$0xff]
      %295 = vrot.lane.b32.xlu0 %v289, 92
      %v296 = vpop.permute.xlu0 %295
      %297 = vrot.lane.b32.xlu0 %v290, 92
      %v298 = vpop.permute.xlu0 %297
      %299 = vrot.lane.b32.xlu0 %v291, 92
      %v300 = vpop.permute.xlu0 %299
      %vm301 = vcmask 752640
      %v302 = vsel %vm301, %v296, %v298
      %v303 = vsel %vm301, %v298, %v300
      %307 = vst [vmem:[#allocation3 + $0x90] sm:$0xff] %v302
      %308 = vst [vmem:[#allocation3 + $0x98] sm:$0xff] %v303
      %309 = vst.msk [vmem:[#allocation3 + $0xa0] sm:$0xff] %vm182, %v300
      %v310 = vld [vmem:[#allocation2] sm:$0xff]
      %v311 = vld [vmem:[#allocation2 + $0x8] sm:$0xff]
      %v312 = vld [vmem:[#allocation2 + $0x10] sm:$0xff]
      %316 = vrot.lane.b32.xlu0 %v310, 91
      %v317 = vpop.permute.xlu0 %316
      %318 = vrot.lane.b32.xlu0 %v311, 91
      %v319 = vpop.permute.xlu0 %318
      %320 = vrot.lane.b32.xlu0 %v312, 91
      %v321 = vpop.permute.xlu0 %320
      %vm322 = vcmask 744448
      %v323 = vsel %vm322, %v317, %v319
      %v324 = vsel %vm322, %v319, %v321
      %328 = vst [vmem:[#allocation3 + $0xa8] sm:$0xff] %v323
      %329 = vst [vmem:[#allocation3 + $0xb0] sm:$0xff] %v324
      %330 = vst.msk [vmem:[#allocation3 + $0xb8] sm:$0xff] %vm182, %v321
      %v331 = vld [vmem:[#allocation2] sm:$0xff]
      %v332 = vld [vmem:[#allocation2 + $0x8] sm:$0xff]
      %v333 = vld [vmem:[#allocation2 + $0x10] sm:$0xff]
      %337 = vrot.lane.b32.xlu0 %v331, 90
      %v338 = vpop.permute.xlu0 %337
      %339 = vrot.lane.b32.xlu0 %v332, 90
      %v340 = vpop.permute.xlu0 %339
      %341 = vrot.lane.b32.xlu0 %v333, 90
      %v342 = vpop.permute.xlu0 %341
      %vm343 = vcmask 736256
      %v344 = vsel %vm343, %v338, %v340
      %v345 = vsel %vm343, %v340, %v342
      %349 = vst [vmem:[#allocation3 + $0xc0] sm:$0xff] %v344
      %350 = vst [vmem:[#allocation3 + $0xc8] sm:$0xff] %v345
      %351 = vst.msk [vmem:[#allocation3 + $0xd0] sm:$0xff] %vm182, %v342
      %v352 = vld [vmem:[%s1] sm:$0xff]
      %v353 = vld [vmem:[#allocation3] sm:$0xff]
      %v354 = vld [vmem:[#allocation3 + $0x8] sm:$0xff]
      %v355 = vld [vmem:[#allocation3 + $0x10] sm:$0xff]
      %v356 = vld [vmem:[#allocation3 + $0x18] sm:$0xff]
      %v357 = vld [vmem:[#allocation3 + $0x20] sm:$0xff]
      %v358 = vld [vmem:[#allocation3 + $0x28] sm:$0xff]
      %v359 = vld [vmem:[#allocation3 + $0x30] sm:$0xff]
      %v360 = vld [vmem:[#allocation3 + $0x38] sm:$0xff]
      %v361 = vld [vmem:[#allocation3 + $0x40] sm:$0xff]
      %v362 = vld [vmem:[#allocation3 + $0x48] sm:$0xff]
      %v363 = vld [vmem:[#allocation3 + $0x50] sm:$0xff]
      %v364 = vld [vmem:[#allocation3 + $0x58] sm:$0xff]
      %v365 = vld [vmem:[#allocation3 + $0x60] sm:$0xff]
      %v366 = vld [vmem:[#allocation3 + $0x68] sm:$0xff]
      %v367 = vld [vmem:[#allocation3 + $0x70] sm:$0xff]
      %v368 = vld [vmem:[#allocation3 + $0x78] sm:$0xff]
      %v369 = vld [vmem:[#allocation3 + $0x80] sm:$0xff]
      %v370 = vld [vmem:[#allocation3 + $0x88] sm:$0xff]
      %v371 = vld [vmem:[#allocation3 + $0x90] sm:$0xff]
      %v372 = vld [vmem:[#allocation3 + $0x98] sm:$0xff]
      %v373 = vld [vmem:[#allocation3 + $0xa0] sm:$0xff]
      %v374 = vld [vmem:[#allocation3 + $0xa8] sm:$0xff]
      %v375 = vld [vmem:[#allocation3 + $0xb0] sm:$0xff]
      %v376 = vld [vmem:[#allocation3 + $0xb8] sm:$0xff]
      %v377 = vld [vmem:[#allocation3 + $0xc0] sm:$0xff]
      %v378 = vld [vmem:[#allocation3 + $0xc8] sm:$0xff]
      %v379 = vld [vmem:[#allocation3 + $0xd0] sm:$0xff]
      %vm380 = vcmask 588800
      %v382 = vsel %vm380, %v352, 0
      %384 = vmatpush.msra.mxu0 0.0
      %385 = vmatpush.msra.mxu0 0.0
      %386 = vmatpush.msra.mxu0 0.0
      %387 = vmatpush.msra.mxu0 0.0
      %388 = vmatpush.msra.mxu0 0.0
      %389 = vmatpush.msra.mxu0 0.0
      %390 = vmatpush.msra.mxu0 0.0
      %v391 = vand.u32 %v377, 4294901760
      %392 = vmatpush.msra.mxu0 %v391
      %v393 = vand.u32 %v374, 4294901760
      %394 = vmatpush.msra.mxu0 %v393
      %v395 = vand.u32 %v371, 4294901760
      %396 = vmatpush.msra.mxu0 %v395
      %v397 = vand.u32 %v368, 4294901760
      %398 = vmatpush.msra.mxu0 %v397
      %v399 = vand.u32 %v365, 4294901760
      %400 = vmatpush.msra.mxu0 %v399
      %v401 = vand.u32 %v362, 4294901760
      %402 = vmatpush.msra.mxu0 %v401
      %v403 = vand.u32 %v359, 4294901760
      %404 = vmatpush.msra.mxu0 %v403
      %v405 = vand.u32 %v356, 4294901760
      %406 = vmatpush.msra.mxu0 %v405
      %v407 = vand.u32 %v353, 4294901760
      %408 = vmatpush.msra.mxu0 %v407
      %v409 = vand.u32 %v382, 4294901760
      %v410 = vsub.f32 %v382, %v409
      %v411 = vand.u32 %v410, 4294901760
      %v412 = vsub.f32 %v410, %v411
      %v413 = vand.u32 %v412, 4294901760
      %414 = vmatmul.f32.gmra.mxu0 %v413
      %v415 = vpop.f32.mrf.mxu0
      %v416 = vadd.f32 0.0, %v415
      %417 = vdwg.mxu0
      %418 = vmatpush.msra.mxu0 0.0
      %419 = vmatpush.msra.mxu0 0.0
      %420 = vmatpush.msra.mxu0 0.0
      %421 = vmatpush.msra.mxu0 0.0
      %422 = vmatpush.msra.mxu0 0.0
      %423 = vmatpush.msra.mxu0 0.0
      %424 = vmatpush.msra.mxu0 0.0
      %v425 = vand.u32 %v377, 4294901760
      %v426 = vsub.f32 %v377, %v425
      %v427 = vand.u32 %v426, 4294901760
      %v428 = vsub.f32 %v426, %v427
      %v429 = vand.u32 %v428, 4294901760
      %430 = vmatpush.msra.mxu0 %v429
      %v431 = vand.u32 %v374, 4294901760
      %v432 = vsub.f32 %v374, %v431
      %v433 = vand.u32 %v432, 4294901760
      %v434 = vsub.f32 %v432, %v433
      %v435 = vand.u32 %v434, 4294901760
      %436 = vmatpush.msra.mxu0 %v435
      %v437 = vand.u32 %v371, 4294901760
      %v438 = vsub.f32 %v371, %v437
      %v439 = vand.u32 %v438, 4294901760
      %v440 = vsub.f32 %v438, %v439
      %v441 = vand.u32 %v440, 4294901760
      %442 = vmatpush.msra.mxu0 %v441
      %v443 = vand.u32 %v368, 4294901760
      %v444 = vsub.f32 %v368, %v443
      %v445 = vand.u32 %v444, 4294901760
      %v446 = vsub.f32 %v444, %v445
      %v447 = vand.u32 %v446, 4294901760
      %448 = vmatpush.msra.mxu0 %v447
      %v449 = vand.u32 %v365, 4294901760
      %v450 = vsub.f32 %v365, %v449
      %v451 = vand.u32 %v450, 4294901760
      %v452 = vsub.f32 %v450, %v451
      %v453 = vand.u32 %v452, 4294901760
      %454 = vmatpush.msra.mxu0 %v453
      %v455 = vand.u32 %v362, 4294901760
      %v456 = vsub.f32 %v362, %v455
      %v457 = vand.u32 %v456, 4294901760
      %v458 = vsub.f32 %v456, %v457
      %v459 = vand.u32 %v458, 4294901760
      %460 = vmatpush.msra.mxu0 %v459
      %v461 = vand.u32 %v359, 4294901760
      %v462 = vsub.f32 %v359, %v461
      %v463 = vand.u32 %v462, 4294901760
      %v464 = vsub.f32 %v462, %v463
      %v465 = vand.u32 %v464, 4294901760
      %466 = vmatpush.msra.mxu0 %v465
      %v467 = vand.u32 %v356, 4294901760
      %v468 = vsub.f32 %v356, %v467
      %v469 = vand.u32 %v468, 4294901760
      %v470 = vsub.f32 %v468, %v469
      %v471 = vand.u32 %v470, 4294901760
      %472 = vmatpush.msra.mxu0 %v471
      %v473 = vand.u32 %v353, 4294901760
      %v474 = vsub.f32 %v353, %v473
      %v475 = vand.u32 %v474, 4294901760
      %v476 = vsub.f32 %v474, %v475
      %v477 = vand.u32 %v476, 4294901760
      %478 = vmatpush.msra.mxu0 %v477
      %v479 = vand.u32 %v382, 4294901760
      %480 = vmatmul.f32.gmra.mxu0 %v479
      %v481 = vpop.f32.mrf.mxu0
      %v482 = vadd.f32 %v416, %v481
      %483 = vdwg.mxu0
      %484 = vmatpush.msra.mxu0 0.0
      %485 = vmatpush.msra.mxu0 0.0
      %486 = vmatpush.msra.mxu0 0.0
      %487 = vmatpush.msra.mxu0 0.0
      %488 = vmatpush.msra.mxu0 0.0
      %489 = vmatpush.msra.mxu0 0.0
      %490 = vmatpush.msra.mxu0 0.0
      %v491 = vand.u32 %v377, 4294901760
      %v492 = vsub.f32 %v377, %v491
      %493 = vmatpush.msra.mxu0 %v492
      %v494 = vand.u32 %v374, 4294901760
      %v495 = vsub.f32 %v374, %v494
      %496 = vmatpush.msra.mxu0 %v495
      %v497 = vand.u32 %v371, 4294901760
      %v498 = vsub.f32 %v371, %v497
      %499 = vmatpush.msra.mxu0 %v498
      %v500 = vand.u32 %v368, 4294901760
      %v501 = vsub.f32 %v368, %v500
      %502 = vmatpush.msra.mxu0 %v501
      %v503 = vand.u32 %v365, 4294901760
      %v504 = vsub.f32 %v365, %v503
      %505 = vmatpush.msra.mxu0 %v504
      %v506 = vand.u32 %v362, 4294901760
      %v507 = vsub.f32 %v362, %v506
      %508 = vmatpush.msra.mxu0 %v507
      %v509 = vand.u32 %v359, 4294901760
      %v510 = vsub.f32 %v359, %v509
      %511 = vmatpush.msra.mxu0 %v510
      %v512 = vand.u32 %v356, 4294901760
      %v513 = vsub.f32 %v356, %v512
      %514 = vmatpush.msra.mxu0 %v513
      %v515 = vand.u32 %v353, 4294901760
      %v516 = vsub.f32 %v353, %v515
      %517 = vmatpush.msra.mxu0 %v516
      %v518 = vand.u32 %v382, 4294901760
      %v519 = vsub.f32 %v382, %v518
      %520 = vmatmul.f32.gmra.mxu0 %v519
      %v521 = vpop.f32.mrf.mxu0
      %v522 = vadd.f32 %v482, %v521
      %523 = vdwg.mxu0
      %524 = vmatpush.msra.mxu0 0.0
      %525 = vmatpush.msra.mxu0 0.0
      %526 = vmatpush.msra.mxu0 0.0
      %527 = vmatpush.msra.mxu0 0.0
      %528 = vmatpush.msra.mxu0 0.0
      %529 = vmatpush.msra.mxu0 0.0
      %530 = vmatpush.msra.mxu0 0.0
      %v531 = vand.u32 %v377, 4294901760
      %532 = vmatpush.msra.mxu0 %v531
      %v533 = vand.u32 %v374, 4294901760
      %534 = vmatpush.msra.mxu0 %v533
      %v535 = vand.u32 %v371, 4294901760
      %536 = vmatpush.msra.mxu0 %v535
      %v537 = vand.u32 %v368, 4294901760
      %538 = vmatpush.msra.mxu0 %v537
      %v539 = vand.u32 %v365, 4294901760
      %540 = vmatpush.msra.mxu0 %v539
      %v541 = vand.u32 %v362, 4294901760
      %542 = vmatpush.msra.mxu0 %v541
      %v543 = vand.u32 %v359, 4294901760
      %544 = vmatpush.msra.mxu0 %v543
      %v545 = vand.u32 %v356, 4294901760
      %546 = vmatpush.msra.mxu0 %v545
      %v547 = vand.u32 %v353, 4294901760
      %548 = vmatpush.msra.mxu0 %v547
      %v549 = vand.u32 %v382, 4294901760
      %v550 = vsub.f32 %v382, %v549
      %v551 = vand.u32 %v550, 4294901760
      %552 = vmatmul.f32.gmra.mxu0 %v551
      %v553 = vpop.f32.mrf.mxu0
      %v554 = vadd.f32 %v522, %v553
      %555 = vdwg.mxu0
      %556 = vmatpush.msra.mxu0 0.0
      %557 = vmatpush.msra.mxu0 0.0
      %558 = vmatpush.msra.mxu0 0.0
      %559 = vmatpush.msra.mxu0 0.0
      %560 = vmatpush.msra.mxu0 0.0
      %561 = vmatpush.msra.mxu0 0.0
      %562 = vmatpush.msra.mxu0 0.0
      %v563 = vand.u32 %v377, 4294901760
      %v564 = vsub.f32 %v377, %v563
      %v565 = vand.u32 %v564, 4294901760
      %566 = vmatpush.msra.mxu0 %v565
      %v567 = vand.u32 %v374, 4294901760
      %v568 = vsub.f32 %v374, %v567
      %v569 = vand.u32 %v568, 4294901760
      %570 = vmatpush.msra.mxu0 %v569
      %v571 = vand.u32 %v371, 4294901760
      %v572 = vsub.f32 %v371, %v571
      %v573 = vand.u32 %v572, 4294901760
      %574 = vmatpush.msra.mxu0 %v573
      %v575 = vand.u32 %v368, 4294901760
      %v576 = vsub.f32 %v368, %v575
      %v577 = vand.u32 %v576, 4294901760
      %578 = vmatpush.msra.mxu0 %v577
      %v579 = vand.u32 %v365, 4294901760
      %v580 = vsub.f32 %v365, %v579
      %v581 = vand.u32 %v580, 4294901760
      %582 = vmatpush.msra.mxu0 %v581
      %v583 = vand.u32 %v362, 4294901760
      %v584 = vsub.f32 %v362, %v583
      %v585 = vand.u32 %v584, 4294901760
      %586 = vmatpush.msra.mxu0 %v585
      %v587 = vand.u32 %v359, 4294901760
      %v588 = vsub.f32 %v359, %v587
      %v589 = vand.u32 %v588, 4294901760
      %590 = vmatpush.msra.mxu0 %v589
      %v591 = vand.u32 %v356, 4294901760
      %v592 = vsub.f32 %v356, %v591
      %v593 = vand.u32 %v592, 4294901760
      %594 = vmatpush.msra.mxu0 %v593
      %v595 = vand.u32 %v353, 4294901760
      %v596 = vsub.f32 %v353, %v595
      %v597 = vand.u32 %v596, 4294901760
      %598 = vmatpush.msra.mxu0 %v597
      %v599 = vand.u32 %v382, 4294901760
      %600 = vmatmul.f32.gmra.mxu0 %v599
      %v601 = vpop.f32.mrf.mxu0
      %v602 = vadd.f32 %v554, %v601
      %603 = vdwg.mxu0
      %604 = vmatpush.msra.mxu0 0.0
      %605 = vmatpush.msra.mxu0 0.0
      %606 = vmatpush.msra.mxu0 0.0
      %607 = vmatpush.msra.mxu0 0.0
      %608 = vmatpush.msra.mxu0 0.0
      %609 = vmatpush.msra.mxu0 0.0
      %610 = vmatpush.msra.mxu0 0.0
      %v611 = vand.u32 %v377, 4294901760
      %612 = vmatpush.msra.mxu0 %v611
      %v613 = vand.u32 %v374, 4294901760
      %614 = vmatpush.msra.mxu0 %v613
      %v615 = vand.u32 %v371, 4294901760
      %616 = vmatpush.msra.mxu0 %v615
      %v617 = vand.u32 %v368, 4294901760
      %618 = vmatpush.msra.mxu0 %v617
      %v619 = vand.u32 %v365, 4294901760
      %620 = vmatpush.msra.mxu0 %v619
      %v621 = vand.u32 %v362, 4294901760
      %622 = vmatpush.msra.mxu0 %v621
      %v623 = vand.u32 %v359, 4294901760
      %624 = vmatpush.msra.mxu0 %v623
      %v625 = vand.u32 %v356, 4294901760
      %626 = vmatpush.msra.mxu0 %v625
      %v627 = vand.u32 %v353, 4294901760
      %628 = vmatpush.msra.mxu0 %v627
      %v629 = vand.u32 %v382, 4294901760
      %630 = vmatmul.f32.gmra.mxu0 %v629
      %v631 = vpop.f32.mrf.mxu0
      %v632 = vadd.f32 %v602, %v631
      %633 = vdwg.mxu0
      %634 = vmatpush.msra.mxu0 0.0
      %635 = vmatpush.msra.mxu0 0.0
      %636 = vmatpush.msra.mxu0 0.0
      %637 = vmatpush.msra.mxu0 0.0
      %638 = vmatpush.msra.mxu0 0.0
      %639 = vmatpush.msra.mxu0 0.0
      %640 = vmatpush.msra.mxu0 0.0
      %v641 = vand.u32 %v378, 4294901760
      %642 = vmatpush.msra.mxu0 %v641
      %v643 = vand.u32 %v375, 4294901760
      %644 = vmatpush.msra.mxu0 %v643
      %v645 = vand.u32 %v372, 4294901760
      %646 = vmatpush.msra.mxu0 %v645
      %v647 = vand.u32 %v369, 4294901760
      %648 = vmatpush.msra.mxu0 %v647
      %v649 = vand.u32 %v366, 4294901760
      %650 = vmatpush.msra.mxu0 %v649
      %v651 = vand.u32 %v363, 4294901760
      %652 = vmatpush.msra.mxu0 %v651
      %v653 = vand.u32 %v360, 4294901760
      %654 = vmatpush.msra.mxu0 %v653
      %v655 = vand.u32 %v357, 4294901760
      %656 = vmatpush.msra.mxu0 %v655
      %v657 = vand.u32 %v354, 4294901760
      %658 = vmatpush.msra.mxu0 %v657
      %v659 = vand.u32 %v382, 4294901760
      %v660 = vsub.f32 %v382, %v659
      %v661 = vand.u32 %v660, 4294901760
      %v662 = vsub.f32 %v660, %v661
      %v663 = vand.u32 %v662, 4294901760
      %664 = vmatmul.f32.gmra.mxu0 %v663
      %v665 = vpop.f32.mrf.mxu0
      %v666 = vadd.f32 0.0, %v665
      %667 = vdwg.mxu0
      %668 = vmatpush.msra.mxu0 0.0
      %669 = vmatpush.msra.mxu0 0.0
      %670 = vmatpush.msra.mxu0 0.0
      %671 = vmatpush.msra.mxu0 0.0
      %672 = vmatpush.msra.mxu0 0.0
      %673 = vmatpush.msra.mxu0 0.0
      %674 = vmatpush.msra.mxu0 0.0
      %v675 = vand.u32 %v378, 4294901760
      %v676 = vsub.f32 %v378, %v675
      %v677 = vand.u32 %v676, 4294901760
      %v678 = vsub.f32 %v676, %v677
      %v679 = vand.u32 %v678, 4294901760
      %680 = vmatpush.msra.mxu0 %v679
      %v681 = vand.u32 %v375, 4294901760
      %v682 = vsub.f32 %v375, %v681
      %v683 = vand.u32 %v682, 4294901760
      %v684 = vsub.f32 %v682, %v683
      %v685 = vand.u32 %v684, 4294901760
      %686 = vmatpush.msra.mxu0 %v685
      %v687 = vand.u32 %v372, 4294901760
      %v688 = vsub.f32 %v372, %v687
      %v689 = vand.u32 %v688, 4294901760
      %v690 = vsub.f32 %v688, %v689
      %v691 = vand.u32 %v690, 4294901760
      %692 = vmatpush.msra.mxu0 %v691
      %v693 = vand.u32 %v369, 4294901760
      %v694 = vsub.f32 %v369, %v693
      %v695 = vand.u32 %v694, 4294901760
      %v696 = vsub.f32 %v694, %v695
      %v697 = vand.u32 %v696, 4294901760
      %698 = vmatpush.msra.mxu0 %v697
      %v699 = vand.u32 %v366, 4294901760
      %v700 = vsub.f32 %v366, %v699
      %v701 = vand.u32 %v700, 4294901760
      %v702 = vsub.f32 %v700, %v701
      %v703 = vand.u32 %v702, 4294901760
      %704 = vmatpush.msra.mxu0 %v703
      %v705 = vand.u32 %v363, 4294901760
      %v706 = vsub.f32 %v363, %v705
      %v707 = vand.u32 %v706, 4294901760
      %v708 = vsub.f32 %v706, %v707
      %v709 = vand.u32 %v708, 4294901760
      %710 = vmatpush.msra.mxu0 %v709
      %v711 = vand.u32 %v360, 4294901760
      %v712 = vsub.f32 %v360, %v711
      %v713 = vand.u32 %v712, 4294901760
      %v714 = vsub.f32 %v712, %v713
      %v715 = vand.u32 %v714, 4294901760
      %716 = vmatpush.msra.mxu0 %v715
      %v717 = vand.u32 %v357, 4294901760
      %v718 = vsub.f32 %v357, %v717
      %v719 = vand.u32 %v718, 4294901760
      %v720 = vsub.f32 %v718, %v719
      %v721 = vand.u32 %v720, 4294901760
      %722 = vmatpush.msra.mxu0 %v721
      %v723 = vand.u32 %v354, 4294901760
      %v724 = vsub.f32 %v354, %v723
      %v725 = vand.u32 %v724, 4294901760
      %v726 = vsub.f32 %v724, %v725
      %v727 = vand.u32 %v726, 4294901760
      %728 = vmatpush.msra.mxu0 %v727
      %v729 = vand.u32 %v382, 4294901760
      %730 = vmatmul.f32.gmra.mxu0 %v729
      %v731 = vpop.f32.mrf.mxu0
      %v732 = vadd.f32 %v666, %v731
      %733 = vdwg.mxu0
      %734 = vmatpush.msra.mxu0 0.0
      %735 = vmatpush.msra.mxu0 0.0
      %736 = vmatpush.msra.mxu0 0.0
      %737 = vmatpush.msra.mxu0 0.0
      %738 = vmatpush.msra.mxu0 0.0
      %739 = vmatpush.msra.mxu0 0.0
      %740 = vmatpush.msra.mxu0 0.0
      %v741 = vand.u32 %v378, 4294901760
      %v742 = vsub.f32 %v378, %v741
      %743 = vmatpush.msra.mxu0 %v742
      %v744 = vand.u32 %v375, 4294901760
      %v745 = vsub.f32 %v375, %v744
      %746 = vmatpush.msra.mxu0 %v745
      %v747 = vand.u32 %v372, 4294901760
      %v748 = vsub.f32 %v372, %v747
      %749 = vmatpush.msra.mxu0 %v748
      %v750 = vand.u32 %v369, 4294901760
      %v751 = vsub.f32 %v369, %v750
      %752 = vmatpush.msra.mxu0 %v751
      %v753 = vand.u32 %v366, 4294901760
      %v754 = vsub.f32 %v366, %v753
      %755 = vmatpush.msra.mxu0 %v754
      %v756 = vand.u32 %v363, 4294901760
      %v757 = vsub.f32 %v363, %v756
      %758 = vmatpush.msra.mxu0 %v757
      %v759 = vand.u32 %v360, 4294901760
      %v760 = vsub.f32 %v360, %v759
      %761 = vmatpush.msra.mxu0 %v760
      %v762 = vand.u32 %v357, 4294901760
      %v763 = vsub.f32 %v357, %v762
      %764 = vmatpush.msra.mxu0 %v763
      %v765 = vand.u32 %v354, 4294901760
      %v766 = vsub.f32 %v354, %v765
      %767 = vmatpush.msra.mxu0 %v766
      %v768 = vand.u32 %v382, 4294901760
      %v769 = vsub.f32 %v382, %v768
      %770 = vmatmul.f32.gmra.mxu0 %v769
      %v771 = vpop.f32.mrf.mxu0
      %v772 = vadd.f32 %v732, %v771
      %773 = vdwg.mxu0
      %774 = vmatpush.msra.mxu0 0.0
      %775 = vmatpush.msra.mxu0 0.0
      %776 = vmatpush.msra.mxu0 0.0
      %777 = vmatpush.msra.mxu0 0.0
      %778 = vmatpush.msra.mxu0 0.0
      %779 = vmatpush.msra.mxu0 0.0
      %780 = vmatpush.msra.mxu0 0.0
      %v781 = vand.u32 %v378, 4294901760
      %782 = vmatpush.msra.mxu0 %v781
      %v783 = vand.u32 %v375, 4294901760
      %784 = vmatpush.msra.mxu0 %v783
      %v785 = vand.u32 %v372, 4294901760
      %786 = vmatpush.msra.mxu0 %v785
      %v787 = vand.u32 %v369, 4294901760
      %788 = vmatpush.msra.mxu0 %v787
      %v789 = vand.u32 %v366, 4294901760
      %790 = vmatpush.msra.mxu0 %v789
      %v791 = vand.u32 %v363, 4294901760
      %792 = vmatpush.msra.mxu0 %v791
      %v793 = vand.u32 %v360, 4294901760
      %794 = vmatpush.msra.mxu0 %v793
      %v795 = vand.u32 %v357, 4294901760
      %796 = vmatpush.msra.mxu0 %v795
      %v797 = vand.u32 %v354, 4294901760
      %798 = vmatpush.msra.mxu0 %v797
      %v799 = vand.u32 %v382, 4294901760
      %v800 = vsub.f32 %v382, %v799
      %v801 = vand.u32 %v800, 4294901760
      %802 = vmatmul.f32.gmra.mxu0 %v801
      %v803 = vpop.f32.mrf.mxu0
      %v804 = vadd.f32 %v772, %v803
      %805 = vdwg.mxu0
      %806 = vmatpush.msra.mxu0 0.0
      %807 = vmatpush.msra.mxu0 0.0
      %808 = vmatpush.msra.mxu0 0.0
      %809 = vmatpush.msra.mxu0 0.0
      %810 = vmatpush.msra.mxu0 0.0
      %811 = vmatpush.msra.mxu0 0.0
      %812 = vmatpush.msra.mxu0 0.0
      %v813 = vand.u32 %v378, 4294901760
      %v814 = vsub.f32 %v378, %v813
      %v815 = vand.u32 %v814, 4294901760
      %816 = vmatpush.msra.mxu0 %v815
      %v817 = vand.u32 %v375, 4294901760
      %v818 = vsub.f32 %v375, %v817
      %v819 = vand.u32 %v818, 4294901760
      %820 = vmatpush.msra.mxu0 %v819
      %v821 = vand.u32 %v372, 4294901760
      %v822 = vsub.f32 %v372, %v821
      %v823 = vand.u32 %v822, 4294901760
      %824 = vmatpush.msra.mxu0 %v823
      %v825 = vand.u32 %v369, 4294901760
      %v826 = vsub.f32 %v369, %v825
      %v827 = vand.u32 %v826, 4294901760
      %828 = vmatpush.msra.mxu0 %v827
      %v829 = vand.u32 %v366, 4294901760
      %v830 = vsub.f32 %v366, %v829
      %v831 = vand.u32 %v830, 4294901760
      %832 = vmatpush.msra.mxu0 %v831
      %v833 = vand.u32 %v363, 4294901760
      %v834 = vsub.f32 %v363, %v833
      %v835 = vand.u32 %v834, 4294901760
      %836 = vmatpush.msra.mxu0 %v835
      %v837 = vand.u32 %v360, 4294901760
      %v838 = vsub.f32 %v360, %v837
      %v839 = vand.u32 %v838, 4294901760
      %840 = vmatpush.msra.mxu0 %v839
      %v841 = vand.u32 %v357, 4294901760
      %v842 = vsub.f32 %v357, %v841
      %v843 = vand.u32 %v842, 4294901760
      %844 = vmatpush.msra.mxu0 %v843
      %v845 = vand.u32 %v354, 4294901760
      %v846 = vsub.f32 %v354, %v845
      %v847 = vand.u32 %v846, 4294901760
      %848 = vmatpush.msra.mxu0 %v847
      %v849 = vand.u32 %v382, 4294901760
      %850 = vmatmul.f32.gmra.mxu0 %v849
      %v851 = vpop.f32.mrf.mxu0
      %v852 = vadd.f32 %v804, %v851
      %853 = vdwg.mxu0
      %854 = vmatpush.msra.mxu0 0.0
      %855 = vmatpush.msra.mxu0 0.0
      %856 = vmatpush.msra.mxu0 0.0
      %857 = vmatpush.msra.mxu0 0.0
      %858 = vmatpush.msra.mxu0 0.0
      %859 = vmatpush.msra.mxu0 0.0
      %860 = vmatpush.msra.mxu0 0.0
      %v861 = vand.u32 %v378, 4294901760
      %862 = vmatpush.msra.mxu0 %v861
      %v863 = vand.u32 %v375, 4294901760
      %864 = vmatpush.msra.mxu0 %v863
      %v865 = vand.u32 %v372, 4294901760
      %866 = vmatpush.msra.mxu0 %v865
      %v867 = vand.u32 %v369, 4294901760
      %868 = vmatpush.msra.mxu0 %v867
      %v869 = vand.u32 %v366, 4294901760
      %870 = vmatpush.msra.mxu0 %v869
      %v871 = vand.u32 %v363, 4294901760
      %872 = vmatpush.msra.mxu0 %v871
      %v873 = vand.u32 %v360, 4294901760
      %874 = vmatpush.msra.mxu0 %v873
      %v875 = vand.u32 %v357, 4294901760
      %876 = vmatpush.msra.mxu0 %v875
      %v877 = vand.u32 %v354, 4294901760
      %878 = vmatpush.msra.mxu0 %v877
      %v879 = vand.u32 %v382, 4294901760
      %880 = vmatmul.f32.gmra.mxu0 %v879
      %v881 = vpop.f32.mrf.mxu0
      %v882 = vadd.f32 %v852, %v881
      %883 = vdwg.mxu0
      %884 = vmatpush.msra.mxu0 0.0
      %885 = vmatpush.msra.mxu0 0.0
      %886 = vmatpush.msra.mxu0 0.0
      %887 = vmatpush.msra.mxu0 0.0
      %888 = vmatpush.msra.mxu0 0.0
      %889 = vmatpush.msra.mxu0 0.0
      %890 = vmatpush.msra.mxu0 0.0
      %v891 = vand.u32 %v379, 4294901760
      %892 = vmatpush.msra.mxu0 %v891
      %v893 = vand.u32 %v376, 4294901760
      %894 = vmatpush.msra.mxu0 %v893
      %v895 = vand.u32 %v373, 4294901760
      %896 = vmatpush.msra.mxu0 %v895
      %v897 = vand.u32 %v370, 4294901760
      %898 = vmatpush.msra.mxu0 %v897
      %v899 = vand.u32 %v367, 4294901760
      %900 = vmatpush.msra.mxu0 %v899
      %v901 = vand.u32 %v364, 4294901760
      %902 = vmatpush.msra.mxu0 %v901
      %v903 = vand.u32 %v361, 4294901760
      %904 = vmatpush.msra.mxu0 %v903
      %v905 = vand.u32 %v358, 4294901760
      %906 = vmatpush.msra.mxu0 %v905
      %v907 = vand.u32 %v355, 4294901760
      %908 = vmatpush.msra.mxu0 %v907
      %v909 = vand.u32 %v382, 4294901760
      %v910 = vsub.f32 %v382, %v909
      %v911 = vand.u32 %v910, 4294901760
      %v912 = vsub.f32 %v910, %v911
      %v913 = vand.u32 %v912, 4294901760
      %914 = vmatmul.f32.gmra.mxu0 %v913
      %v915 = vpop.f32.mrf.mxu0
      %v916 = vadd.f32 0.0, %v915
      %917 = vdwg.mxu0
      %918 = vmatpush.msra.mxu0 0.0
      %919 = vmatpush.msra.mxu0 0.0
      %920 = vmatpush.msra.mxu0 0.0
      %921 = vmatpush.msra.mxu0 0.0
      %922 = vmatpush.msra.mxu0 0.0
      %923 = vmatpush.msra.mxu0 0.0
      %924 = vmatpush.msra.mxu0 0.0
      %v925 = vand.u32 %v379, 4294901760
      %v926 = vsub.f32 %v379, %v925
      %v927 = vand.u32 %v926, 4294901760
      %v928 = vsub.f32 %v926, %v927
      %v929 = vand.u32 %v928, 4294901760
      %930 = vmatpush.msra.mxu0 %v929
      %v931 = vand.u32 %v376, 4294901760
      %v932 = vsub.f32 %v376, %v931
      %v933 = vand.u32 %v932, 4294901760
      %v934 = vsub.f32 %v932, %v933
      %v935 = vand.u32 %v934, 4294901760
      %936 = vmatpush.msra.mxu0 %v935
      %v937 = vand.u32 %v373, 4294901760
      %v938 = vsub.f32 %v373, %v937
      %v939 = vand.u32 %v938, 4294901760
      %v940 = vsub.f32 %v938, %v939
      %v941 = vand.u32 %v940, 4294901760
      %942 = vmatpush.msra.mxu0 %v941
      %v943 = vand.u32 %v370, 4294901760
      %v944 = vsub.f32 %v370, %v943
      %v945 = vand.u32 %v944, 4294901760
      %v946 = vsub.f32 %v944, %v945
      %v947 = vand.u32 %v946, 4294901760
      %948 = vmatpush.msra.mxu0 %v947
      %v949 = vand.u32 %v367, 4294901760
      %v950 = vsub.f32 %v367, %v949
      %v951 = vand.u32 %v950, 4294901760
      %v952 = vsub.f32 %v950, %v951
      %v953 = vand.u32 %v952, 4294901760
      %954 = vmatpush.msra.mxu0 %v953
      %v955 = vand.u32 %v364, 4294901760
      %v956 = vsub.f32 %v364, %v955
      %v957 = vand.u32 %v956, 4294901760
      %v958 = vsub.f32 %v956, %v957
      %v959 = vand.u32 %v958, 4294901760
      %960 = vmatpush.msra.mxu0 %v959
      %v961 = vand.u32 %v361, 4294901760
      %v962 = vsub.f32 %v361, %v961
      %v963 = vand.u32 %v962, 4294901760
      %v964 = vsub.f32 %v962, %v963
      %v965 = vand.u32 %v964, 4294901760
      %966 = vmatpush.msra.mxu0 %v965
      %v967 = vand.u32 %v358, 4294901760
      %v968 = vsub.f32 %v358, %v967
      %v969 = vand.u32 %v968, 4294901760
      %v970 = vsub.f32 %v968, %v969
      %v971 = vand.u32 %v970, 4294901760
      %972 = vmatpush.msra.mxu0 %v971
      %v973 = vand.u32 %v355, 4294901760
      %v974 = vsub.f32 %v355, %v973
      %v975 = vand.u32 %v974, 4294901760
      %v976 = vsub.f32 %v974, %v975
      %v977 = vand.u32 %v976, 4294901760
      %978 = vmatpush.msra.mxu0 %v977
      %v979 = vand.u32 %v382, 4294901760
      %980 = vmatmul.f32.gmra.mxu0 %v979
      %v981 = vpop.f32.mrf.mxu0
      %v982 = vadd.f32 %v916, %v981
      %983 = vdwg.mxu0
      %984 = vmatpush.msra.mxu0 0.0
      %985 = vmatpush.msra.mxu0 0.0
      %986 = vmatpush.msra.mxu0 0.0
      %987 = vmatpush.msra.mxu0 0.0
      %988 = vmatpush.msra.mxu0 0.0
      %989 = vmatpush.msra.mxu0 0.0
      %990 = vmatpush.msra.mxu0 0.0
      %v991 = vand.u32 %v379, 4294901760
      %v992 = vsub.f32 %v379, %v991
      %993 = vmatpush.msra.mxu0 %v992
      %v994 = vand.u32 %v376, 4294901760
      %v995 = vsub.f32 %v376, %v994
      %996 = vmatpush.msra.mxu0 %v995
      %v997 = vand.u32 %v373, 4294901760
      %v998 = vsub.f32 %v373, %v997
      %999 = vmatpush.msra.mxu0 %v998
      %v1000 = vand.u32 %v370, 4294901760
      %v1001 = vsub.f32 %v370, %v1000
      %1002 = vmatpush.msra.mxu0 %v1001
      %v1003 = vand.u32 %v367, 4294901760
      %v1004 = vsub.f32 %v367, %v1003
      %1005 = vmatpush.msra.mxu0 %v1004
      %v1006 = vand.u32 %v364, 4294901760
      %v1007 = vsub.f32 %v364, %v1006
      %1008 = vmatpush.msra.mxu0 %v1007
      %v1009 = vand.u32 %v361, 4294901760
      %v1010 = vsub.f32 %v361, %v1009
      %1011 = vmatpush.msra.mxu0 %v1010
      %v1012 = vand.u32 %v358, 4294901760
      %v1013 = vsub.f32 %v358, %v1012
      %1014 = vmatpush.msra.mxu0 %v1013
      %v1015 = vand.u32 %v355, 4294901760
      %v1016 = vsub.f32 %v355, %v1015
      %1017 = vmatpush.msra.mxu0 %v1016
      %v1018 = vand.u32 %v382, 4294901760
      %v1019 = vsub.f32 %v382, %v1018
      %1020 = vmatmul.f32.gmra.mxu0 %v1019
      %v1021 = vpop.f32.mrf.mxu0
      %v1022 = vadd.f32 %v982, %v1021
      %1023 = vdwg.mxu0
      %1024 = vmatpush.msra.mxu0 0.0
      %1025 = vmatpush.msra.mxu0 0.0
      %1026 = vmatpush.msra.mxu0 0.0
      %1027 = vmatpush.msra.mxu0 0.0
      %1028 = vmatpush.msra.mxu0 0.0
      %1029 = vmatpush.msra.mxu0 0.0
      %1030 = vmatpush.msra.mxu0 0.0
      %v1031 = vand.u32 %v379, 4294901760
      %1032 = vmatpush.msra.mxu0 %v1031
      %v1033 = vand.u32 %v376, 4294901760
      %1034 = vmatpush.msra.mxu0 %v1033
      %v1035 = vand.u32 %v373, 4294901760
      %1036 = vmatpush.msra.mxu0 %v1035
      %v1037 = vand.u32 %v370, 4294901760
      %1038 = vmatpush.msra.mxu0 %v1037
      %v1039 = vand.u32 %v367, 4294901760
      %1040 = vmatpush.msra.mxu0 %v1039
      %v1041 = vand.u32 %v364, 4294901760
      %1042 = vmatpush.msra.mxu0 %v1041
      %v1043 = vand.u32 %v361, 4294901760
      %1044 = vmatpush.msra.mxu0 %v1043
      %v1045 = vand.u32 %v358, 4294901760
      %1046 = vmatpush.msra.mxu0 %v1045
      %v1047 = vand.u32 %v355, 4294901760
      %1048 = vmatpush.msra.mxu0 %v1047
      %v1049 = vand.u32 %v382, 4294901760
      %v1050 = vsub.f32 %v382, %v1049
      %v1051 = vand.u32 %v1050, 4294901760
      %1052 = vmatmul.f32.gmra.mxu0 %v1051
      %v1053 = vpop.f32.mrf.mxu0
      %v1054 = vadd.f32 %v1022, %v1053
      %1055 = vdwg.mxu0
      %1056 = vmatpush.msra.mxu0 0.0
      %1057 = vmatpush.msra.mxu0 0.0
      %1058 = vmatpush.msra.mxu0 0.0
      %1059 = vmatpush.msra.mxu0 0.0
      %1060 = vmatpush.msra.mxu0 0.0
      %1061 = vmatpush.msra.mxu0 0.0
      %1062 = vmatpush.msra.mxu0 0.0
      %v1063 = vand.u32 %v379, 4294901760
      %v1064 = vsub.f32 %v379, %v1063
      %v1065 = vand.u32 %v1064, 4294901760
      %1066 = vmatpush.msra.mxu0 %v1065
      %v1067 = vand.u32 %v376, 4294901760
      %v1068 = vsub.f32 %v376, %v1067
      %v1069 = vand.u32 %v1068, 4294901760
      %1070 = vmatpush.msra.mxu0 %v1069
      %v1071 = vand.u32 %v373, 4294901760
      %v1072 = vsub.f32 %v373, %v1071
      %v1073 = vand.u32 %v1072, 4294901760
      %1074 = vmatpush.msra.mxu0 %v1073
      %v1075 = vand.u32 %v370, 4294901760
      %v1076 = vsub.f32 %v370, %v1075
      %v1077 = vand.u32 %v1076, 4294901760
      %1078 = vmatpush.msra.mxu0 %v1077
      %v1079 = vand.u32 %v367, 4294901760
      %v1080 = vsub.f32 %v367, %v1079
      %v1081 = vand.u32 %v1080, 4294901760
      %1082 = vmatpush.msra.mxu0 %v1081
      %v1083 = vand.u32 %v364, 4294901760
      %v1084 = vsub.f32 %v364, %v1083
      %v1085 = vand.u32 %v1084, 4294901760
      %1086 = vmatpush.msra.mxu0 %v1085
      %v1087 = vand.u32 %v361, 4294901760
      %v1088 = vsub.f32 %v361, %v1087
      %v1089 = vand.u32 %v1088, 4294901760
      %1090 = vmatpush.msra.mxu0 %v1089
      %v1091 = vand.u32 %v358, 4294901760
      %v1092 = vsub.f32 %v358, %v1091
      %v1093 = vand.u32 %v1092, 4294901760
      %1094 = vmatpush.msra.mxu0 %v1093
      %v1095 = vand.u32 %v355, 4294901760
      %v1096 = vsub.f32 %v355, %v1095
      %v1097 = vand.u32 %v1096, 4294901760
      %1098 = vmatpush.msra.mxu0 %v1097
      %v1099 = vand.u32 %v382, 4294901760
      %1100 = vmatmul.f32.gmra.mxu0 %v1099
      %v1101 = vpop.f32.mrf.mxu0
      %v1102 = vadd.f32 %v1054, %v1101
      %1103 = vdwg.mxu0
      %1104 = vmatpush.msra.mxu0 0.0
      %1105 = vmatpush.msra.mxu0 0.0
      %1106 = vmatpush.msra.mxu0 0.0
      %1107 = vmatpush.msra.mxu0 0.0
      %1108 = vmatpush.msra.mxu0 0.0
      %1109 = vmatpush.msra.mxu0 0.0
      %1110 = vmatpush.msra.mxu0 0.0
      %v1111 = vand.u32 %v379, 4294901760
      %1112 = vmatpush.msra.mxu0 %v1111
      %v1113 = vand.u32 %v376, 4294901760
      %1114 = vmatpush.msra.mxu0 %v1113
      %v1115 = vand.u32 %v373, 4294901760
      %1116 = vmatpush.msra.mxu0 %v1115
      %v1117 = vand.u32 %v370, 4294901760
      %1118 = vmatpush.msra.mxu0 %v1117
      %v1119 = vand.u32 %v367, 4294901760
      %1120 = vmatpush.msra.mxu0 %v1119
      %v1121 = vand.u32 %v364, 4294901760
      %1122 = vmatpush.msra.mxu0 %v1121
      %v1123 = vand.u32 %v361, 4294901760
      %1124 = vmatpush.msra.mxu0 %v1123
      %v1125 = vand.u32 %v358, 4294901760
      %1126 = vmatpush.msra.mxu0 %v1125
      %v1127 = vand.u32 %v355, 4294901760
      %1128 = vmatpush.msra.mxu0 %v1127
      %v1129 = vand.u32 %v382, 4294901760
      %1130 = vmatmul.f32.gmra.mxu0 %v1129
      %v1131 = vpop.f32.mrf.mxu0
      %v1132 = vadd.f32 %v1102, %v1131
      %1133 = vdwg.mxu0
      %v1134 = vld [vmem:[%s2] sm:$0x7]
      %v1136 = vperm.slane %v1134, 0
      %v1137 = vperm.slane %v1134, 1
      %v1138 = vperm.slane %v1134, 2
      %1139 = vrot.lane.b32.xlu0 %v1136, 109
      %v1140 = vpop.permute.xlu0 %1139
      %1141 = vrot.lane.b32.xlu0 %v1137, 109
      %v1142 = vpop.permute.xlu0 %1141
      %1143 = vrot.lane.b32.xlu0 %v1138, 109
      %v1144 = vpop.permute.xlu0 %1143
      %v1145 = vsel %vm259, %v1140, %v1142
      %v1146 = vsel %vm259, %v1142, %v1144
      %v1150 = vmul.f32 %v632, %v1145
      %v1151 = vmul.f32 %v882, %v1146
      %v1152 = vmul.f32 %v1132, %v1144
      %1153 = vst [vmem:[%s170] sm:$0xff] 0.0
      %1154 = vst [vmem:[%s170 + $0x8] sm:$0xff] 0.0
      %1155 = vst [vmem:[%s170 + $0x10] sm:$0xff] 0.0
      %1159 = vrot.lane.b32.xlu0 %v1150, 19
      %v1160 = vpop.permute.xlu0 %1159
      %1161 = vrot.lane.b32.xlu0 %v1151, 19
      %v1162 = vpop.permute.xlu0 %1161
      %1163 = vrot.lane.b32.xlu0 %v1152, 19
      %v1164 = vpop.permute.xlu0 %1163
      %vm1165 = vcmask 154624
      %v1166 = vsel %vm1165, %v1160, %v1162
      %v1167 = vsel %vm1165, %v1162, %v1164
      %vm1171 = vcmask 1047704
      %1172 = vst.msk [vmem:[%s170] sm:$0xff] %vm1171, %v1160
      %1173 = vst [vmem:[%s170 + $0x8] sm:$0xff] %v1166
      %vm1174 = vcmask 416768
      %1175 = vst.msk [vmem:[%s170 + $0x10] sm:$0xff] %vm1174, %v1167
      %p1176 = scmp.lt.s32.totalorder %s14, 1
      %s1177 = scalar_select %p1176, %s14, 1
      %s1178 = smul.addr %s1177, 3
      %s1179 = smul.addr %s1178, 8
      %s1180 = scalar_lea.vmem %s3, %s1179
      // Predicated region
      $region33: #{unet2d_forward.9} parent=31 // pred_check
        %p1181 = pneg %p100
      $region34: #{unet2d_forward.9} parent=31 // pred_check_branch
        %1183 = sbr.rel (%p1181) target = $region36
      $region35: #{unet2d_forward.9} parent=31 // pred_region
        _
      $region36: #{unet2d_forward.9} parent=31 // pred_fallthru
        _
    $region32: #{unet2d_forward.9} parent=5 // pred_fallthru
      _
    %p1184 = scmp.le.s32.totalorder 2, %s9
    // Predicated region
    $region37: #{unet2d_forward.9} parent=5 // pred_check
      %p1185 = pneg %p1184
    $region38: #{unet2d_forward.9} parent=5 // pred_check_branch
      %1187 = sbr.rel (%p1185) target = $region40
    $region39: #{unet2d_forward.9} parent=5 // pred_region
      %s1188 = ssub.s32 %s9, 2
      // Predicated region
      $region41: #{unet2d_forward.9} parent=39 // pred_check
        %p1189 = pneg %p106
      $region42: #{unet2d_forward.9} parent=39 // pred_check_branch
        %1191 = sbr.rel (%p1189) target = $region44
      $region43: #{unet2d_forward.9} parent=39 // pred_region
        %p1192 = scmp.lt.s32.totalorder %s15, 1
        %s1193 = scalar_select %p1192, %s15, 1
        %s1194 = smul.addr %s1193, 3
        %s1195 = smul.addr %s1194, 8
        %s1196 = scalar_lea.vmem %s3, %s1195
      $region44: #{unet2d_forward.9} parent=39 // pred_fallthru
        _
    $region40: #{unet2d_forward.9} parent=5 // pred_fallthru
      _
  $region6: #{unet2d_forward.9} parent=0 // loop_footer
    %s13 = sadd.s32 1, %s9
  $region7: #{unet2d_forward.9} parent=0 // loop_footer_branch
    %8 = sbr.rel target = $region3
  $region8: #{unet2d_forward.9} parent=0 // loop_exit
    _

// kernel: unet2d_forward.10
$region0: #{unet2d_forward.10}
  #allocation0 [shape = 'u32[]', space=smem, size = 0x4, offset = 0x4, fixed_abs, tag = 'smem constant byte address 0x4 - core index']
  #allocation1 [shape = 'u32[72,128]{1,0:T(1,128)}', space=vmem, size = 0x9000, scoped, tag = 'internal scratch']
  #allocation2 [shape = 'f32[8,384]{1,0:T(8,128)}', space=vmem, size = 0x3000, scoped, tag = 'scratch operand']
  #allocation3 [shape = 'f32[72,288]{1,0:T(8,128)}', space=vmem, size = 0x1b000, scoped, tag = 'scratch operand']
  %s0 = inlined_call_operand.vmem [shape: f32[2,8,384], index: 0, kind: input, shape index: {}]
  %s1 = inlined_call_operand.vmem [shape: f32[8,72], index: 1, kind: input, shape index: {}]
  %s2 = inlined_call_operand.vmem [shape: f32[1,384], index: 2, kind: input, shape index: {}]
  %s3 = inlined_call_operand.vmem [shape: f32[2,8,384], index: 3, kind: output, shape index: {0}]
  %s4 = inlined_call_operand.vmem [shape: f32[2,2,8,1], index: 4, kind: output, shape index: {1}]
  %5 = xla_tuple %s3, %s4
  %s6 = sld [smem:[#allocation0]]
  $region53: #{unet2d_forward.10} parent=0
    _
  %s8 = ssub.s32 1, %s6
  %s9 = scalar_select 0, %s8, %s6
  loop: start=0, step=1, limit=4
  $region2: #{unet2d_forward.10} parent=0 // loop_pre_header
    _
  $region3: #{unet2d_forward.10} parent=0 // loop_header
    %s11 = sphi 0, %s15
    %p12 = scmp.ge.s32.totalorder %s11, 4
    %s21 = sphi 0, %s23
    %s24 = sphi 0, %s21
    %s25 = sphi 0, %s24
    %s41 = sphi 0, %s25
    %s45 = sphi 0, %s45
    %s47 = sphi 0, %s45
    %s48 = sphi 0, %s47
    %s62 = sphi 0, %s48
    %s66 = sphi 0, %s66
    %s68 = sphi 0, %s66
    %s69 = sphi 0, %s68
    %s83 = sphi 0, %s69
    %s89 = sphi 0, %s91
    %s92 = sphi 0, %s89
    %s93 = sphi 0, %s92
    %s109 = sphi 0, %s93
    %s115 = sphi 0, %s117
    %s118 = sphi 0, %s115
    %s119 = sphi 0, %s118
    %s135 = sphi 0, %s119
  $region4: #{unet2d_forward.10} parent=0 // loop_header_branch
    %14 = sbr.rel (%p12) target = $region8
  $region5: #{unet2d_forward.10} parent=0 // loop_body
    %s16 = ssub.s32 %s11, 1
    %s17 = ssub.s32 %s11, 2
    %s18 = sadd.s32 %s11, 1
    %s19 = ssub.s32 %s11, %s18
    %p20 = scmp.eq.s32.totalorder %s19, 0
    %s22 = sadd.s32 %s21, 1
    %s23 = scalar_select %p20, %s21, %s22
    %p26 = pneg %p20
    %p27 = scmp.eq.s32.totalorder %s11, 1
    %p28 = por %p26, %p27
    %p29 = scmp.ne.s32.totalorder %s21, %s24
    %p30 = scmp.eq.s32.totalorder %s11, 0
    %p31 = por %p29, %p30
    %p32 = scmp.ne.s32.totalorder %s21, %s24
    %p33 = scmp.eq.s32.totalorder %s16, 1
    %p34 = por %p32, %p33
    %p35 = scmp.ne.s32.totalorder %s24, %s25
    %p36 = scmp.eq.s32.totalorder %s16, 0
    %p37 = por %p35, %p36
    %p38 = scmp.ne.s32.totalorder %s24, %s25
    %p39 = scmp.eq.s32.totalorder %s17, 1
    %p40 = por %p38, %p39
    %p42 = scmp.ne.s32.totalorder %s25, %s41
    %p43 = scmp.eq.s32.totalorder %s17, 0
    %p44 = por %p42, %p43
    %s46 = sadd.s32 %s45, 1
    %p49 = scmp.eq.s32.totalorder %s11, 1
    %p50 = scmp.ne.s32.totalorder %s45, %s47
    %p51 = scmp.eq.s32.totalorder %s11, 0
    %p52 = por %p50, %p51
    %p53 = scmp.ne.s32.totalorder %s45, %s47
    %p54 = scmp.eq.s32.totalorder %s16, 1
    %p55 = por %p53, %p54
    %p56 = scmp.ne.s32.totalorder %s47, %s48
    %p57 = scmp.eq.s32.totalorder %s16, 0
    %p58 = por %p56, %p57
    %p59 = scmp.ne.s32.totalorder %s47, %s48
    %p60 = scmp.eq.s32.totalorder %s17, 1
    %p61 = por %p59, %p60
    %p63 = scmp.ne.s32.totalorder %s48, %s62
    %p64 = scmp.eq.s32.totalorder %s17, 0
    %p65 = por %p63, %p64
    %s67 = sadd.s32 %s66, 1
    %p70 = scmp.eq.s32.totalorder %s11, 1
    %p71 = scmp.ne.s32.totalorder %s66, %s68
    %p72 = scmp.eq.s32.totalorder %s11, 0
    %p73 = por %p71, %p72
    %p74 = scmp.ne.s32.totalorder %s66, %s68
    %p75 = scmp.eq.s32.totalorder %s16, 1
    %p76 = por %p74, %p75
    %p77 = scmp.ne.s32.totalorder %s68, %s69
    %p78 = scmp.eq.s32.totalorder %s16, 0
    %p79 = por %p77, %p78
    %p80 = scmp.ne.s32.totalorder %s68, %s69
    %p81 = scmp.eq.s32.totalorder %s17, 1
    %p82 = por %p80, %p81
    %p84 = scmp.ne.s32.totalorder %s69, %s83
    %p85 = scmp.eq.s32.totalorder %s17, 0
    %p86 = por %p84, %p85
    %s87 = ssub.s32 %s11, %s18
    %p88 = scmp.eq.s32.totalorder %s87, 0
    %s90 = sadd.s32 %s89, 1
    %s91 = scalar_select %p88, %s89, %s90
    %p94 = pneg %p88
    %p95 = scmp.eq.s32.totalorder %s11, 1
    %p96 = por %p94, %p95
    %p97 = scmp.ne.s32.totalorder %s89, %s92
    %p98 = scmp.eq.s32.totalorder %s11, 0
    %p99 = por %p97, %p98
    %p100 = scmp.ne.s32.totalorder %s89, %s92
    %p101 = scmp.eq.s32.totalorder %s16, 1
    %p102 = por %p100, %p101
    %p103 = scmp.ne.s32.totalorder %s92, %s93
    %p104 = scmp.eq.s32.totalorder %s16, 0
    %p105 = por %p103, %p104
    %p106 = scmp.ne.s32.totalorder %s92, %s93
    %p107 = scmp.eq.s32.totalorder %s17, 1
    %p108 = por %p106, %p107
    %p110 = scmp.ne.s32.totalorder %s93, %s109
    %p111 = scmp.eq.s32.totalorder %s17, 0
    %p112 = por %p110, %p111
    %s113 = ssub.s32 %s11, %s18
    %p114 = scmp.eq.s32.totalorder %s113, 0
    %s116 = sadd.s32 %s115, 1
    %s117 = scalar_select %p114, %s115, %s116
    %p120 = pneg %p114
    %p121 = scmp.eq.s32.totalorder %s11, 1
    %p122 = por %p120, %p121
    %p123 = scmp.ne.s32.totalorder %s115, %s118
    %p124 = scmp.eq.s32.totalorder %s11, 0
    %p125 = por %p123, %p124
    %p126 = scmp.ne.s32.totalorder %s115, %s118
    %p127 = scmp.eq.s32.totalorder %s16, 1
    %p128 = por %p126, %p127
    %p129 = scmp.ne.s32.totalorder %s118, %s119
    %p130 = scmp.eq.s32.totalorder %s16, 0
    %p131 = por %p129, %p130
    %p132 = scmp.ne.s32.totalorder %s118, %s119
    %p133 = scmp.eq.s32.totalorder %s17, 1
    %p134 = por %p132, %p133
    %p136 = scmp.ne.s32.totalorder %s119, %s135
    %p137 = scmp.eq.s32.totalorder %s17, 0
    %p138 = por %p136, %p137
    %p139 = scmp.le.s32.totalorder 1, %s11
    %p140 = scmp.lt.s32.totalorder %s11, 3
    %p141 = pnand %p139, %p140
    %p142 = pneg %p141
    // Predicated region
    $region9: #{unet2d_forward.10} parent=5 // pred_check
      _
    $region10: #{unet2d_forward.10} parent=5 // pred_check_branch
      %144 = sbr.rel (%p141) target = $region12
    $region11: #{unet2d_forward.10} parent=5 // pred_region
      %s145 = ssub.s32 %s11, 1
      // Predicated region
      $region13: #{unet2d_forward.10} parent=11 // pred_check
        %p146 = pneg %p58
      $region14: #{unet2d_forward.10} parent=11 // pred_check_branch
        %148 = sbr.rel (%p146) target = $region16
      $region15: #{unet2d_forward.10} parent=11 // pred_region
        _
      $region16: #{unet2d_forward.10} parent=11 // pred_fallthru
        _
      // Predicated region
      $region17: #{unet2d_forward.10} parent=11 // pred_check
        %p149 = pneg %p79
      $region18: #{unet2d_forward.10} parent=11 // pred_check_branch
        %151 = sbr.rel (%p149) target = $region20
      $region19: #{unet2d_forward.10} parent=11 // pred_region
        _
      $region20: #{unet2d_forward.10} parent=11 // pred_fallthru
        _
    $region12: #{unet2d_forward.10} parent=5 // pred_fallthru
      _
    %p152 = scmp.lt.s32.totalorder %s11, 2
    // Predicated region
    $region21: #{unet2d_forward.10} parent=5 // pred_check
      %p153 = pneg %p152
    $region22: #{unet2d_forward.10} parent=5 // pred_check_branch
      %155 = sbr.rel (%p153) target = $region24
    $region23: #{unet2d_forward.10} parent=5 // pred_region
      // Predicated region
      $region25: #{unet2d_forward.10} parent=23 // pred_check
        %p156 = pneg %p31
      $region26: #{unet2d_forward.10} parent=23 // pred_check_branch
        %158 = sbr.rel (%p156) target = $region28
      $region27: #{unet2d_forward.10} parent=23 // pred_region
        %p159 = scmp.lt.s32.totalorder %s11, 1
        %s160 = scalar_select %p159, %s11, 1
        %s161 = smul.addr %s160, 3
        %s162 = smul.addr %s161, 8
        %s163 = scalar_lea.vmem %s0, %s162
      $region28: #{unet2d_forward.10} parent=23 // pred_fallthru
        _
    $region24: #{unet2d_forward.10} parent=5 // pred_fallthru
      _
    %p164 = scmp.le.s32.totalorder 1, %s11
    %p165 = scmp.lt.s32.totalorder %s11, 3
    %p166 = pnand %p164, %p165
    %p167 = pneg %p166
    // Predicated region
    $region29: #{unet2d_forward.10} parent=5 // pred_check
      _
    $region30: #{unet2d_forward.10} parent=5 // pred_check_branch
      %169 = sbr.rel (%p166) target = $region32
    $region31: #{unet2d_forward.10} parent=5 // pred_region
      %s170 = ssub.s32 %s11, 1
      %p171 = scmp.lt.s32.totalorder %s16, 1
      %s172 = scalar_select %p171, %s16, 1
      %s173 = smul.addr %s172, 3
      %s174 = smul.addr %s173, 8
      %s175 = scalar_lea.vmem %s0, %s174
      %p176 = pneg %p37
      %p177 = pneg %p34
      %p178 = pneg %p58
      %p179 = pneg %p55
      %p180 = pneg %p79
      %p181 = pneg %p76
      %p182 = pneg %p105
      %p183 = pneg %p102
      %p184 = scmp.lt.s32.totalorder %s16, 1
      %s185 = scalar_select %p184, %s16, 1
      %s186 = smul.addr %s185, 3
      %s187 = smul.addr %s186, 8
      %s188 = scalar_lea.vmem %s3, %s187
      %p189 = pneg %p131
      %p190 = pneg %p128
      %p191 = scmp.lt.s32.totalorder %s16, 1
      %s192 = scalar_select %p191, %s16, 1
      %s193 = smul.addr %s192, 2
      %s194 = smul.addr %s193, 8
      %s195 = scalar_lea.vmem %s4, %s194
      %p196 = scmp.lt.s32.totalorder %s16, 1
      %s197 = scalar_select %p196, %s16, 1
      %s198 = smul.addr %s197, 3
      %s199 = smul.addr %s198, 8
      %s200 = scalar_lea.vmem %s0, %s199
      %p201 = scmp.lt.s32.totalorder %s16, 1
      %s202 = scalar_select %p201, %s16, 1
      %s203 = smul.addr %s202, 3
      %s204 = smul.addr %s203, 8
      %s205 = scalar_lea.vmem %s3, %s204
      %p206 = scmp.lt.s32.totalorder %s16, 1
      %s207 = scalar_select %p206, %s16, 1
      %s208 = smul.addr %s207, 2
      %s209 = smul.addr %s208, 8
      %s210 = scalar_lea.vmem %s4, %s209
      %v211 = vld [vmem:[%s200] sm:$0xff]
      %v212 = vld [vmem:[%s200 + $0x8] sm:$0xff]
      %v213 = vld [vmem:[%s200 + $0x10] sm:$0xff]
      %214 = vst [vmem:[#allocation2] sm:$0xff] %v211
      %215 = vst [vmem:[#allocation2 + $0x8] sm:$0xff] %v212
      %216 = vst [vmem:[#allocation2 + $0x10] sm:$0xff] %v213
      %v217 = vld [vmem:[#allocation2] sm:$0xff]
      %v218 = vld [vmem:[#allocation2 + $0x8] sm:$0xff]
      %v219 = vld [vmem:[#allocation2 + $0x10] sm:$0xff]
      %220 = vst [vmem:[#allocation3] sm:$0xff] %v217
      %221 = vst [vmem:[#allocation3 + $0x8] sm:$0xff] %v218
      %vm222 = vcmask 261120
      %223 = vst.msk [vmem:[#allocation3 + $0x10] sm:$0xff] %vm222, %v219
      %v224 = vld [vmem:[#allocation2] sm:$0xff]
      %v225 = vld [vmem:[#allocation2 + $0x8] sm:$0xff]
      %v226 = vld [vmem:[#allocation2 + $0x10] sm:$0xff]
      %230 = vrot.lane.b32.xlu0 %v224, 127
      %v231 = vpop.permute.xlu0 %230
      %232 = vrot.lane.b32.xlu0 %v225, 127
      %v233 = vpop.permute.xlu0 %232
      %234 = vrot.lane.b32.xlu0 %v226, 127
      %v235 = vpop.permute.xlu0 %234
      %vm236 = vcmask 1039360
      %v237 = vsel %vm236, %v231, %v233
      %v238 = vsel %vm236, %v233, %v235
      %242 = vst [vmem:[#allocation3 + $0x18] sm:$0xff] %v237
      %243 = vst [vmem:[#allocation3 + $0x20] sm:$0xff] %v238
      %244 = vst.msk [vmem:[#allocation3 + $0x28] sm:$0xff] %vm222, %v235
      %v245 = vld [vmem:[#allocation2] sm:$0xff]
      %v246 = vld [vmem:[#allocation2 + $0x8] sm:$0xff]
      %v247 = vld [vmem:[#allocation2 + $0x10] sm:$0xff]
      %251 = vrot.lane.b32.xlu0 %v245, 126
      %v252 = vpop.permute.xlu0 %251
      %253 = vrot.lane.b32.xlu0 %v246, 126
      %v254 = vpop.permute.xlu0 %253
      %255 = vrot.lane.b32.xlu0 %v247, 126
      %v256 = vpop.permute.xlu0 %255
      %vm257 = vcmask 1031168
      %v258 = vsel %vm257, %v252, %v254
      %v259 = vsel %vm257, %v254, %v256
      %263 = vst [vmem:[#allocation3 + $0x30] sm:$0xff] %v258
      %264 = vst [vmem:[#allocation3 + $0x38] sm:$0xff] %v259
      %265 = vst.msk [vmem:[#allocation3 + $0x40] sm:$0xff] %vm222, %v256
      %v266 = vld [vmem:[#allocation2] sm:$0xff]
      %v267 = vld [vmem:[#allocation2 + $0x8] sm:$0xff]
      %v268 = vld [vmem:[#allocation2 + $0x10] sm:$0xff]
      %272 = vrot.lane.b32.xlu0 %v266, 110
      %v273 = vpop.permute.xlu0 %272
      %274 = vrot.lane.b32.xlu0 %v267, 110
      %v275 = vpop.permute.xlu0 %274
      %276 = vrot.lane.b32.xlu0 %v268, 110
      %v277 = vpop.permute.xlu0 %276
      %vm278 = vcmask 900096
      %v279 = vsel %vm278, %v273, %v275
      %v280 = vsel %vm278, %v275, %v277
      %284 = vst [vmem:[#allocation3 + $0x48] sm:$0xff] %v279
      %285 = vst [vmem:[#allocation3 + $0x50] sm:$0xff] %v280
      %286 = vst.msk [vmem:[#allocation3 + $0x58] sm:$0xff] %vm222, %v277
      %v287 = vld [vmem:[#allocation2] sm:$0xff]
      %v288 = vld [vmem:[#allocation2 + $0x8] sm:$0xff]
      %v289 = vld [vmem:[#allocation2 + $0x10] sm:$0xff]
      %293 = vrot.lane.b32.xlu0 %v287, 109
      %v294 = vpop.permute.xlu0 %293
      %295 = vrot.lane.b32.xlu0 %v288, 109
      %v296 = vpop.permute.xlu0 %295
      %297 = vrot.lane.b32.xlu0 %v289, 109
      %v298 = vpop.permute.xlu0 %297
      %vm299 = vcmask 891904
      %v300 = vsel %vm299, %v294, %v296
      %v301 = vsel %vm299, %v296, %v298
      %305 = vst [vmem:[#allocation3 + $0x60] sm:$0xff] %v300
      %306 = vst [vmem:[#allocation3 + $0x68] sm:$0xff] %v301
      %307 = vst.msk [vmem:[#allocation3 + $0x70] sm:$0xff] %vm222, %v298
      %v308 = vld [vmem:[#allocation2] sm:$0xff]
      %v309 = vld [vmem:[#allocation2 + $0x8] sm:$0xff]
      %v310 = vld [vmem:[#allocation2 + $0x10] sm:$0xff]
      %314 = vrot.lane.b32.xlu0 %v308, 108
      %v315 = vpop.permute.xlu0 %314
      %316 = vrot.lane.b32.xlu0 %v309, 108
      %v317 = vpop.permute.xlu0 %316
      %318 = vrot.lane.b32.xlu0 %v310, 108
      %v319 = vpop.permute.xlu0 %318
      %vm320 = vcmask 883712
      %v321 = vsel %vm320, %v315, %v317
      %v322 = vsel %vm320, %v317, %v319
      %326 = vst [vmem:[#allocation3 + $0x78] sm:$0xff] %v321
      %327 = vst [vmem:[#allocation3 + $0x80] sm:$0xff] %v322
      %328 = vst.msk [vmem:[#allocation3 + $0x88] sm:$0xff] %vm222, %v319
      %v329 = vld [vmem:[#allocation2] sm:$0xff]
      %v330 = vld [vmem:[#allocation2 + $0x8] sm:$0xff]
      %v331 = vld [vmem:[#allocation2 + $0x10] sm:$0xff]
      %335 = vrot.lane.b32.xlu0 %v329, 92
      %v336 = vpop.permute.xlu0 %335
      %337 = vrot.lane.b32.xlu0 %v330, 92
      %v338 = vpop.permute.xlu0 %337
      %339 = vrot.lane.b32.xlu0 %v331, 92
      %v340 = vpop.permute.xlu0 %339
      %vm341 = vcmask 752640
      %v342 = vsel %vm341, %v336, %v338
      %v343 = vsel %vm341, %v338, %v340
      %347 = vst [vmem:[#allocation3 + $0x90] sm:$0xff] %v342
      %348 = vst [vmem:[#allocation3 + $0x98] sm:$0xff] %v343
      %349 = vst.msk [vmem:[#allocation3 + $0xa0] sm:$0xff] %vm222, %v340
      %v350 = vld [vmem:[#allocation2] sm:$0xff]
      %v351 = vld [vmem:[#allocation2 + $0x8] sm:$0xff]
      %v352 = vld [vmem:[#allocation2 + $0x10] sm:$0xff]
      %356 = vrot.lane.b32.xlu0 %v350, 91
      %v357 = vpop.permute.xlu0 %356
      %358 = vrot.lane.b32.xlu0 %v351, 91
      %v359 = vpop.permute.xlu0 %358
      %360 = vrot.lane.b32.xlu0 %v352, 91
      %v361 = vpop.permute.xlu0 %360
      %vm362 = vcmask 744448
      %v363 = vsel %vm362, %v357, %v359
      %v364 = vsel %vm362, %v359, %v361
      %368 = vst [vmem:[#allocation3 + $0xa8] sm:$0xff] %v363
      %369 = vst [vmem:[#allocation3 + $0xb0] sm:$0xff] %v364
      %370 = vst.msk [vmem:[#allocation3 + $0xb8] sm:$0xff] %vm222, %v361
      %v371 = vld [vmem:[#allocation2] sm:$0xff]
      %v372 = vld [vmem:[#allocation2 + $0x8] sm:$0xff]
      %v373 = vld [vmem:[#allocation2 + $0x10] sm:$0xff]
      %377 = vrot.lane.b32.xlu0 %v371, 90
      %v378 = vpop.permute.xlu0 %377
      %379 = vrot.lane.b32.xlu0 %v372, 90
      %v380 = vpop.permute.xlu0 %379
      %381 = vrot.lane.b32.xlu0 %v373, 90
      %v382 = vpop.permute.xlu0 %381
      %vm383 = vcmask 736256
      %v384 = vsel %vm383, %v378, %v380
      %v385 = vsel %vm383, %v380, %v382
      %389 = vst [vmem:[#allocation3 + $0xc0] sm:$0xff] %v384
      %390 = vst [vmem:[#allocation3 + $0xc8] sm:$0xff] %v385
      %391 = vst.msk [vmem:[#allocation3 + $0xd0] sm:$0xff] %vm222, %v382
      %v392 = vld [vmem:[%s1] sm:$0xff]
      %v393 = vld [vmem:[#allocation3] sm:$0xff]
      %v394 = vld [vmem:[#allocation3 + $0x8] sm:$0xff]
      %v395 = vld [vmem:[#allocation3 + $0x10] sm:$0xff]
      %v396 = vld [vmem:[#allocation3 + $0x18] sm:$0xff]
      %v397 = vld [vmem:[#allocation3 + $0x20] sm:$0xff]
      %v398 = vld [vmem:[#allocation3 + $0x28] sm:$0xff]
      %v399 = vld [vmem:[#allocation3 + $0x30] sm:$0xff]
      %v400 = vld [vmem:[#allocation3 + $0x38] sm:$0xff]
      %v401 = vld [vmem:[#allocation3 + $0x40] sm:$0xff]
      %v402 = vld [vmem:[#allocation3 + $0x48] sm:$0xff]
      %v403 = vld [vmem:[#allocation3 + $0x50] sm:$0xff]
      %v404 = vld [vmem:[#allocation3 + $0x58] sm:$0xff]
      %v405 = vld [vmem:[#allocation3 + $0x60] sm:$0xff]
      %v406 = vld [vmem:[#allocation3 + $0x68] sm:$0xff]
      %v407 = vld [vmem:[#allocation3 + $0x70] sm:$0xff]
      %v408 = vld [vmem:[#allocation3 + $0x78] sm:$0xff]
      %v409 = vld [vmem:[#allocation3 + $0x80] sm:$0xff]
      %v410 = vld [vmem:[#allocation3 + $0x88] sm:$0xff]
      %v411 = vld [vmem:[#allocation3 + $0x90] sm:$0xff]
      %v412 = vld [vmem:[#allocation3 + $0x98] sm:$0xff]
      %v413 = vld [vmem:[#allocation3 + $0xa0] sm:$0xff]
      %v414 = vld [vmem:[#allocation3 + $0xa8] sm:$0xff]
      %v415 = vld [vmem:[#allocation3 + $0xb0] sm:$0xff]
      %v416 = vld [vmem:[#allocation3 + $0xb8] sm:$0xff]
      %v417 = vld [vmem:[#allocation3 + $0xc0] sm:$0xff]
      %v418 = vld [vmem:[#allocation3 + $0xc8] sm:$0xff]
      %v419 = vld [vmem:[#allocation3 + $0xd0] sm:$0xff]
      %vm420 = vcmask 588800
      %v422 = vsel %vm420, %v392, 0
      %424 = vmatpush.msra.mxu0 0.0
      %425 = vmatpush.msra.mxu0 0.0
      %426 = vmatpush.msra.mxu0 0.0
      %427 = vmatpush.msra.mxu0 0.0
      %428 = vmatpush.msra.mxu0 0.0
      %429 = vmatpush.msra.mxu0 0.0
      %430 = vmatpush.msra.mxu0 0.0
      %v431 = vand.u32 %v417, 4294901760
      %432 = vmatpush.msra.mxu0 %v431
      %v433 = vand.u32 %v414, 4294901760
      %434 = vmatpush.msra.mxu0 %v433
      %v435 = vand.u32 %v411, 4294901760
      %436 = vmatpush.msra.mxu0 %v435
      %v437 = vand.u32 %v408, 4294901760
      %438 = vmatpush.msra.mxu0 %v437
      %v439 = vand.u32 %v405, 4294901760
      %440 = vmatpush.msra.mxu0 %v439
      %v441 = vand.u32 %v402, 4294901760
      %442 = vmatpush.msra.mxu0 %v441
      %v443 = vand.u32 %v399, 4294901760
      %444 = vmatpush.msra.mxu0 %v443
      %v445 = vand.u32 %v396, 4294901760
      %446 = vmatpush.msra.mxu0 %v445
      %v447 = vand.u32 %v393, 4294901760
      %448 = vmatpush.msra.mxu0 %v447
      %v449 = vand.u32 %v422, 4294901760
      %v450 = vsub.f32 %v422, %v449
      %v451 = vand.u32 %v450, 4294901760
      %v452 = vsub.f32 %v450, %v451
      %v453 = vand.u32 %v452, 4294901760
      %454 = vmatmul.f32.gmra.mxu0 %v453
      %v455 = vpop.f32.mrf.mxu0
      %v456 = vadd.f32 0.0, %v455
      %457 = vdwg.mxu0
      %458 = vmatpush.msra.mxu0 0.0
      %459 = vmatpush.msra.mxu0 0.0
      %460 = vmatpush.msra.mxu0 0.0
      %461 = vmatpush.msra.mxu0 0.0
      %462 = vmatpush.msra.mxu0 0.0
      %463 = vmatpush.msra.mxu0 0.0
      %464 = vmatpush.msra.mxu0 0.0
      %v465 = vand.u32 %v417, 4294901760
      %v466 = vsub.f32 %v417, %v465
      %v467 = vand.u32 %v466, 4294901760
      %v468 = vsub.f32 %v466, %v467
      %v469 = vand.u32 %v468, 4294901760
      %470 = vmatpush.msra.mxu0 %v469
      %v471 = vand.u32 %v414, 4294901760
      %v472 = vsub.f32 %v414, %v471
      %v473 = vand.u32 %v472, 4294901760
      %v474 = vsub.f32 %v472, %v473
      %v475 = vand.u32 %v474, 4294901760
      %476 = vmatpush.msra.mxu0 %v475
      %v477 = vand.u32 %v411, 4294901760
      %v478 = vsub.f32 %v411, %v477
      %v479 = vand.u32 %v478, 4294901760
      %v480 = vsub.f32 %v478, %v479
      %v481 = vand.u32 %v480, 4294901760
      %482 = vmatpush.msra.mxu0 %v481
      %v483 = vand.u32 %v408, 4294901760
      %v484 = vsub.f32 %v408, %v483
      %v485 = vand.u32 %v484, 4294901760
      %v486 = vsub.f32 %v484, %v485
      %v487 = vand.u32 %v486, 4294901760
      %488 = vmatpush.msra.mxu0 %v487
      %v489 = vand.u32 %v405, 4294901760
      %v490 = vsub.f32 %v405, %v489
      %v491 = vand.u32 %v490, 4294901760
      %v492 = vsub.f32 %v490, %v491
      %v493 = vand.u32 %v492, 4294901760
      %494 = vmatpush.msra.mxu0 %v493
      %v495 = vand.u32 %v402, 4294901760
      %v496 = vsub.f32 %v402, %v495
      %v497 = vand.u32 %v496, 4294901760
      %v498 = vsub.f32 %v496, %v497
      %v499 = vand.u32 %v498, 4294901760
      %500 = vmatpush.msra.mxu0 %v499
      %v501 = vand.u32 %v399, 4294901760
      %v502 = vsub.f32 %v399, %v501
      %v503 = vand.u32 %v502, 4294901760
      %v504 = vsub.f32 %v502, %v503
      %v505 = vand.u32 %v504, 4294901760
      %506 = vmatpush.msra.mxu0 %v505
      %v507 = vand.u32 %v396, 4294901760
      %v508 = vsub.f32 %v396, %v507
      %v509 = vand.u32 %v508, 4294901760
      %v510 = vsub.f32 %v508, %v509
      %v511 = vand.u32 %v510, 4294901760
      %512 = vmatpush.msra.mxu0 %v511
      %v513 = vand.u32 %v393, 4294901760
      %v514 = vsub.f32 %v393, %v513
      %v515 = vand.u32 %v514, 4294901760
      %v516 = vsub.f32 %v514, %v515
      %v517 = vand.u32 %v516, 4294901760
      %518 = vmatpush.msra.mxu0 %v517
      %v519 = vand.u32 %v422, 4294901760
      %520 = vmatmul.f32.gmra.mxu0 %v519
      %v521 = vpop.f32.mrf.mxu0
      %v522 = vadd.f32 %v456, %v521
      %523 = vdwg.mxu0
      %524 = vmatpush.msra.mxu0 0.0
      %525 = vmatpush.msra.mxu0 0.0
      %526 = vmatpush.msra.mxu0 0.0
      %527 = vmatpush.msra.mxu0 0.0
      %528 = vmatpush.msra.mxu0 0.0
      %529 = vmatpush.msra.mxu0 0.0
      %530 = vmatpush.msra.mxu0 0.0
      %v531 = vand.u32 %v417, 4294901760
      %v532 = vsub.f32 %v417, %v531
      %533 = vmatpush.msra.mxu0 %v532
      %v534 = vand.u32 %v414, 4294901760
      %v535 = vsub.f32 %v414, %v534
      %536 = vmatpush.msra.mxu0 %v535
      %v537 = vand.u32 %v411, 4294901760
      %v538 = vsub.f32 %v411, %v537
      %539 = vmatpush.msra.mxu0 %v538
      %v540 = vand.u32 %v408, 4294901760
      %v541 = vsub.f32 %v408, %v540
      %542 = vmatpush.msra.mxu0 %v541
      %v543 = vand.u32 %v405, 4294901760
      %v544 = vsub.f32 %v405, %v543
      %545 = vmatpush.msra.mxu0 %v544
      %v546 = vand.u32 %v402, 4294901760
      %v547 = vsub.f32 %v402, %v546
      %548 = vmatpush.msra.mxu0 %v547
      %v549 = vand.u32 %v399, 4294901760
      %v550 = vsub.f32 %v399, %v549
      %551 = vmatpush.msra.mxu0 %v550
      %v552 = vand.u32 %v396, 4294901760
      %v553 = vsub.f32 %v396, %v552
      %554 = vmatpush.msra.mxu0 %v553
      %v555 = vand.u32 %v393, 4294901760
      %v556 = vsub.f32 %v393, %v555
      %557 = vmatpush.msra.mxu0 %v556
      %v558 = vand.u32 %v422, 4294901760
      %v559 = vsub.f32 %v422, %v558
      %560 = vmatmul.f32.gmra.mxu0 %v559
      %v561 = vpop.f32.mrf.mxu0
      %v562 = vadd.f32 %v522, %v561
      %563 = vdwg.mxu0
      %564 = vmatpush.msra.mxu0 0.0
      %565 = vmatpush.msra.mxu0 0.0
      %566 = vmatpush.msra.mxu0 0.0
      %567 = vmatpush.msra.mxu0 0.0
      %568 = vmatpush.msra.mxu0 0.0
      %569 = vmatpush.msra.mxu0 0.0
      %570 = vmatpush.msra.mxu0 0.0
      %v571 = vand.u32 %v417, 4294901760
      %572 = vmatpush.msra.mxu0 %v571
      %v573 = vand.u32 %v414, 4294901760
      %574 = vmatpush.msra.mxu0 %v573
      %v575 = vand.u32 %v411, 4294901760
      %576 = vmatpush.msra.mxu0 %v575
      %v577 = vand.u32 %v408, 4294901760
      %578 = vmatpush.msra.mxu0 %v577
      %v579 = vand.u32 %v405, 4294901760
      %580 = vmatpush.msra.mxu0 %v579
      %v581 = vand.u32 %v402, 4294901760
      %582 = vmatpush.msra.mxu0 %v581
      %v583 = vand.u32 %v399, 4294901760
      %584 = vmatpush.msra.mxu0 %v583
      %v585 = vand.u32 %v396, 4294901760
      %586 = vmatpush.msra.mxu0 %v585
      %v587 = vand.u32 %v393, 4294901760
      %588 = vmatpush.msra.mxu0 %v587
      %v589 = vand.u32 %v422, 4294901760
      %v590 = vsub.f32 %v422, %v589
      %v591 = vand.u32 %v590, 4294901760
      %592 = vmatmul.f32.gmra.mxu0 %v591
      %v593 = vpop.f32.mrf.mxu0
      %v594 = vadd.f32 %v562, %v593
      %595 = vdwg.mxu0
      %596 = vmatpush.msra.mxu0 0.0
      %597 = vmatpush.msra.mxu0 0.0
      %598 = vmatpush.msra.mxu0 0.0
      %599 = vmatpush.msra.mxu0 0.0
      %600 = vmatpush.msra.mxu0 0.0
      %601 = vmatpush.msra.mxu0 0.0
      %602 = vmatpush.msra.mxu0 0.0
      %v603 = vand.u32 %v417, 4294901760
      %v604 = vsub.f32 %v417, %v603
      %v605 = vand.u32 %v604, 4294901760
      %606 = vmatpush.msra.mxu0 %v605
      %v607 = vand.u32 %v414, 4294901760
      %v608 = vsub.f32 %v414, %v607
      %v609 = vand.u32 %v608, 4294901760
      %610 = vmatpush.msra.mxu0 %v609
      %v611 = vand.u32 %v411, 4294901760
      %v612 = vsub.f32 %v411, %v611
      %v613 = vand.u32 %v612, 4294901760
      %614 = vmatpush.msra.mxu0 %v613
      %v615 = vand.u32 %v408, 4294901760
      %v616 = vsub.f32 %v408, %v615
      %v617 = vand.u32 %v616, 4294901760
      %618 = vmatpush.msra.mxu0 %v617
      %v619 = vand.u32 %v405, 4294901760
      %v620 = vsub.f32 %v405, %v619
      %v621 = vand.u32 %v620, 4294901760
      %622 = vmatpush.msra.mxu0 %v621
      %v623 = vand.u32 %v402, 4294901760
      %v624 = vsub.f32 %v402, %v623
      %v625 = vand.u32 %v624, 4294901760
      %626 = vmatpush.msra.mxu0 %v625
      %v627 = vand.u32 %v399, 4294901760
      %v628 = vsub.f32 %v399, %v627
      %v629 = vand.u32 %v628, 4294901760
      %630 = vmatpush.msra.mxu0 %v629
      %v631 = vand.u32 %v396, 4294901760
      %v632 = vsub.f32 %v396, %v631
      %v633 = vand.u32 %v632, 4294901760
      %634 = vmatpush.msra.mxu0 %v633
      %v635 = vand.u32 %v393, 4294901760
      %v636 = vsub.f32 %v393, %v635
      %v637 = vand.u32 %v636, 4294901760
      %638 = vmatpush.msra.mxu0 %v637
      %v639 = vand.u32 %v422, 4294901760
      %640 = vmatmul.f32.gmra.mxu0 %v639
      %v641 = vpop.f32.mrf.mxu0
      %v642 = vadd.f32 %v594, %v641
      %643 = vdwg.mxu0
      %644 = vmatpush.msra.mxu0 0.0
      %645 = vmatpush.msra.mxu0 0.0
      %646 = vmatpush.msra.mxu0 0.0
      %647 = vmatpush.msra.mxu0 0.0
      %648 = vmatpush.msra.mxu0 0.0
      %649 = vmatpush.msra.mxu0 0.0
      %650 = vmatpush.msra.mxu0 0.0
      %v651 = vand.u32 %v417, 4294901760
      %652 = vmatpush.msra.mxu0 %v651
      %v653 = vand.u32 %v414, 4294901760
      %654 = vmatpush.msra.mxu0 %v653
      %v655 = vand.u32 %v411, 4294901760
      %656 = vmatpush.msra.mxu0 %v655
      %v657 = vand.u32 %v408, 4294901760
      %658 = vmatpush.msra.mxu0 %v657
      %v659 = vand.u32 %v405, 4294901760
      %660 = vmatpush.msra.mxu0 %v659
      %v661 = vand.u32 %v402, 4294901760
      %662 = vmatpush.msra.mxu0 %v661
      %v663 = vand.u32 %v399, 4294901760
      %664 = vmatpush.msra.mxu0 %v663
      %v665 = vand.u32 %v396, 4294901760
      %666 = vmatpush.msra.mxu0 %v665
      %v667 = vand.u32 %v393, 4294901760
      %668 = vmatpush.msra.mxu0 %v667
      %v669 = vand.u32 %v422, 4294901760
      %670 = vmatmul.f32.gmra.mxu0 %v669
      %v671 = vpop.f32.mrf.mxu0
      %v672 = vadd.f32 %v642, %v671
      %673 = vdwg.mxu0
      %674 = vmatpush.msra.mxu0 0.0
      %675 = vmatpush.msra.mxu0 0.0
      %676 = vmatpush.msra.mxu0 0.0
      %677 = vmatpush.msra.mxu0 0.0
      %678 = vmatpush.msra.mxu0 0.0
      %679 = vmatpush.msra.mxu0 0.0
      %680 = vmatpush.msra.mxu0 0.0
      %v681 = vand.u32 %v418, 4294901760
      %682 = vmatpush.msra.mxu0 %v681
      %v683 = vand.u32 %v415, 4294901760
      %684 = vmatpush.msra.mxu0 %v683
      %v685 = vand.u32 %v412, 4294901760
      %686 = vmatpush.msra.mxu0 %v685
      %v687 = vand.u32 %v409, 4294901760
      %688 = vmatpush.msra.mxu0 %v687
      %v689 = vand.u32 %v406, 4294901760
      %690 = vmatpush.msra.mxu0 %v689
      %v691 = vand.u32 %v403, 4294901760
      %692 = vmatpush.msra.mxu0 %v691
      %v693 = vand.u32 %v400, 4294901760
      %694 = vmatpush.msra.mxu0 %v693
      %v695 = vand.u32 %v397, 4294901760
      %696 = vmatpush.msra.mxu0 %v695
      %v697 = vand.u32 %v394, 4294901760
      %698 = vmatpush.msra.mxu0 %v697
      %v699 = vand.u32 %v422, 4294901760
      %v700 = vsub.f32 %v422, %v699
      %v701 = vand.u32 %v700, 4294901760
      %v702 = vsub.f32 %v700, %v701
      %v703 = vand.u32 %v702, 4294901760
      %704 = vmatmul.f32.gmra.mxu0 %v703
      %v705 = vpop.f32.mrf.mxu0
      %v706 = vadd.f32 0.0, %v705
      %707 = vdwg.mxu0
      %708 = vmatpush.msra.mxu0 0.0
      %709 = vmatpush.msra.mxu0 0.0
      %710 = vmatpush.msra.mxu0 0.0
      %711 = vmatpush.msra.mxu0 0.0
      %712 = vmatpush.msra.mxu0 0.0
      %713 = vmatpush.msra.mxu0 0.0
      %714 = vmatpush.msra.mxu0 0.0
      %v715 = vand.u32 %v418, 4294901760
      %v716 = vsub.f32 %v418, %v715
      %v717 = vand.u32 %v716, 4294901760
      %v718 = vsub.f32 %v716, %v717
      %v719 = vand.u32 %v718, 4294901760
      %720 = vmatpush.msra.mxu0 %v719
      %v721 = vand.u32 %v415, 4294901760
      %v722 = vsub.f32 %v415, %v721
      %v723 = vand.u32 %v722, 4294901760
      %v724 = vsub.f32 %v722, %v723
      %v725 = vand.u32 %v724, 4294901760
      %726 = vmatpush.msra.mxu0 %v725
      %v727 = vand.u32 %v412, 4294901760
      %v728 = vsub.f32 %v412, %v727
      %v729 = vand.u32 %v728, 4294901760
      %v730 = vsub.f32 %v728, %v729
      %v731 = vand.u32 %v730, 4294901760
      %732 = vmatpush.msra.mxu0 %v731
      %v733 = vand.u32 %v409, 4294901760
      %v734 = vsub.f32 %v409, %v733
      %v735 = vand.u32 %v734, 4294901760
      %v736 = vsub.f32 %v734, %v735
      %v737 = vand.u32 %v736, 4294901760
      %738 = vmatpush.msra.mxu0 %v737
      %v739 = vand.u32 %v406, 4294901760
      %v740 = vsub.f32 %v406, %v739
      %v741 = vand.u32 %v740, 4294901760
      %v742 = vsub.f32 %v740, %v741
      %v743 = vand.u32 %v742, 4294901760
      %744 = vmatpush.msra.mxu0 %v743
      %v745 = vand.u32 %v403, 4294901760
      %v746 = vsub.f32 %v403, %v745
      %v747 = vand.u32 %v746, 4294901760
      %v748 = vsub.f32 %v746, %v747
      %v749 = vand.u32 %v748, 4294901760
      %750 = vmatpush.msra.mxu0 %v749
      %v751 = vand.u32 %v400, 4294901760
      %v752 = vsub.f32 %v400, %v751
      %v753 = vand.u32 %v752, 4294901760
      %v754 = vsub.f32 %v752, %v753
      %v755 = vand.u32 %v754, 4294901760
      %756 = vmatpush.msra.mxu0 %v755
      %v757 = vand.u32 %v397, 4294901760
      %v758 = vsub.f32 %v397, %v757
      %v759 = vand.u32 %v758, 4294901760
      %v760 = vsub.f32 %v758, %v759
      %v761 = vand.u32 %v760, 4294901760
      %762 = vmatpush.msra.mxu0 %v761
      %v763 = vand.u32 %v394, 4294901760
      %v764 = vsub.f32 %v394, %v763
      %v765 = vand.u32 %v764, 4294901760
      %v766 = vsub.f32 %v764, %v765
      %v767 = vand.u32 %v766, 4294901760
      %768 = vmatpush.msra.mxu0 %v767
      %v769 = vand.u32 %v422, 4294901760
      %770 = vmatmul.f32.gmra.mxu0 %v769
      %v771 = vpop.f32.mrf.mxu0
      %v772 = vadd.f32 %v706, %v771
      %773 = vdwg.mxu0
      %774 = vmatpush.msra.mxu0 0.0
      %775 = vmatpush.msra.mxu0 0.0
      %776 = vmatpush.msra.mxu0 0.0
      %777 = vmatpush.msra.mxu0 0.0
      %778 = vmatpush.msra.mxu0 0.0
      %779 = vmatpush.msra.mxu0 0.0
      %780 = vmatpush.msra.mxu0 0.0
      %v781 = vand.u32 %v418, 4294901760
      %v782 = vsub.f32 %v418, %v781
      %783 = vmatpush.msra.mxu0 %v782
      %v784 = vand.u32 %v415, 4294901760
      %v785 = vsub.f32 %v415, %v784
      %786 = vmatpush.msra.mxu0 %v785
      %v787 = vand.u32 %v412, 4294901760
      %v788 = vsub.f32 %v412, %v787
      %789 = vmatpush.msra.mxu0 %v788
      %v790 = vand.u32 %v409, 4294901760
      %v791 = vsub.f32 %v409, %v790
      %792 = vmatpush.msra.mxu0 %v791
      %v793 = vand.u32 %v406, 4294901760
      %v794 = vsub.f32 %v406, %v793
      %795 = vmatpush.msra.mxu0 %v794
      %v796 = vand.u32 %v403, 4294901760
      %v797 = vsub.f32 %v403, %v796
      %798 = vmatpush.msra.mxu0 %v797
      %v799 = vand.u32 %v400, 4294901760
      %v800 = vsub.f32 %v400, %v799
      %801 = vmatpush.msra.mxu0 %v800
      %v802 = vand.u32 %v397, 4294901760
      %v803 = vsub.f32 %v397, %v802
      %804 = vmatpush.msra.mxu0 %v803
      %v805 = vand.u32 %v394, 4294901760
      %v806 = vsub.f32 %v394, %v805
      %807 = vmatpush.msra.mxu0 %v806
      %v808 = vand.u32 %v422, 4294901760
      %v809 = vsub.f32 %v422, %v808
      %810 = vmatmul.f32.gmra.mxu0 %v809
      %v811 = vpop.f32.mrf.mxu0
      %v812 = vadd.f32 %v772, %v811
      %813 = vdwg.mxu0
      %814 = vmatpush.msra.mxu0 0.0
      %815 = vmatpush.msra.mxu0 0.0
      %816 = vmatpush.msra.mxu0 0.0
      %817 = vmatpush.msra.mxu0 0.0
      %818 = vmatpush.msra.mxu0 0.0
      %819 = vmatpush.msra.mxu0 0.0
      %820 = vmatpush.msra.mxu0 0.0
      %v821 = vand.u32 %v418, 4294901760
      %822 = vmatpush.msra.mxu0 %v821
      %v823 = vand.u32 %v415, 4294901760
      %824 = vmatpush.msra.mxu0 %v823
      %v825 = vand.u32 %v412, 4294901760
      %826 = vmatpush.msra.mxu0 %v825
      %v827 = vand.u32 %v409, 4294901760
      %828 = vmatpush.msra.mxu0 %v827
      %v829 = vand.u32 %v406, 4294901760
      %830 = vmatpush.msra.mxu0 %v829
      %v831 = vand.u32 %v403, 4294901760
      %832 = vmatpush.msra.mxu0 %v831
      %v833 = vand.u32 %v400, 4294901760
      %834 = vmatpush.msra.mxu0 %v833
      %v835 = vand.u32 %v397, 4294901760
      %836 = vmatpush.msra.mxu0 %v835
      %v837 = vand.u32 %v394, 4294901760
      %838 = vmatpush.msra.mxu0 %v837
      %v839 = vand.u32 %v422, 4294901760
      %v840 = vsub.f32 %v422, %v839
      %v841 = vand.u32 %v840, 4294901760
      %842 = vmatmul.f32.gmra.mxu0 %v841
      %v843 = vpop.f32.mrf.mxu0
      %v844 = vadd.f32 %v812, %v843
      %845 = vdwg.mxu0
      %846 = vmatpush.msra.mxu0 0.0
      %847 = vmatpush.msra.mxu0 0.0
      %848 = vmatpush.msra.mxu0 0.0
      %849 = vmatpush.msra.mxu0 0.0
      %850 = vmatpush.msra.mxu0 0.0
      %851 = vmatpush.msra.mxu0 0.0
      %852 = vmatpush.msra.mxu0 0.0
      %v853 = vand.u32 %v418, 4294901760
      %v854 = vsub.f32 %v418, %v853
      %v855 = vand.u32 %v854, 4294901760
      %856 = vmatpush.msra.mxu0 %v855
      %v857 = vand.u32 %v415, 4294901760
      %v858 = vsub.f32 %v415, %v857
      %v859 = vand.u32 %v858, 4294901760
      %860 = vmatpush.msra.mxu0 %v859
      %v861 = vand.u32 %v412, 4294901760
      %v862 = vsub.f32 %v412, %v861
      %v863 = vand.u32 %v862, 4294901760
      %864 = vmatpush.msra.mxu0 %v863
      %v865 = vand.u32 %v409, 4294901760
      %v866 = vsub.f32 %v409, %v865
      %v867 = vand.u32 %v866, 4294901760
      %868 = vmatpush.msra.mxu0 %v867
      %v869 = vand.u32 %v406, 4294901760
      %v870 = vsub.f32 %v406, %v869
      %v871 = vand.u32 %v870, 4294901760
      %872 = vmatpush.msra.mxu0 %v871
      %v873 = vand.u32 %v403, 4294901760
      %v874 = vsub.f32 %v403, %v873
      %v875 = vand.u32 %v874, 4294901760
      %876 = vmatpush.msra.mxu0 %v875
      %v877 = vand.u32 %v400, 4294901760
      %v878 = vsub.f32 %v400, %v877
      %v879 = vand.u32 %v878, 4294901760
      %880 = vmatpush.msra.mxu0 %v879
      %v881 = vand.u32 %v397, 4294901760
      %v882 = vsub.f32 %v397, %v881
      %v883 = vand.u32 %v882, 4294901760
      %884 = vmatpush.msra.mxu0 %v883
      %v885 = vand.u32 %v394, 4294901760
      %v886 = vsub.f32 %v394, %v885
      %v887 = vand.u32 %v886, 4294901760
      %888 = vmatpush.msra.mxu0 %v887
      %v889 = vand.u32 %v422, 4294901760
      %890 = vmatmul.f32.gmra.mxu0 %v889
      %v891 = vpop.f32.mrf.mxu0
      %v892 = vadd.f32 %v844, %v891
      %893 = vdwg.mxu0
      %894 = vmatpush.msra.mxu0 0.0
      %895 = vmatpush.msra.mxu0 0.0
      %896 = vmatpush.msra.mxu0 0.0
      %897 = vmatpush.msra.mxu0 0.0
      %898 = vmatpush.msra.mxu0 0.0
      %899 = vmatpush.msra.mxu0 0.0
      %900 = vmatpush.msra.mxu0 0.0
      %v901 = vand.u32 %v418, 4294901760
      %902 = vmatpush.msra.mxu0 %v901
      %v903 = vand.u32 %v415, 4294901760
      %904 = vmatpush.msra.mxu0 %v903
      %v905 = vand.u32 %v412, 4294901760
      %906 = vmatpush.msra.mxu0 %v905
      %v907 = vand.u32 %v409, 4294901760
      %908 = vmatpush.msra.mxu0 %v907
      %v909 = vand.u32 %v406, 4294901760
      %910 = vmatpush.msra.mxu0 %v909
      %v911 = vand.u32 %v403, 4294901760
      %912 = vmatpush.msra.mxu0 %v911
      %v913 = vand.u32 %v400, 4294901760
      %914 = vmatpush.msra.mxu0 %v913
      %v915 = vand.u32 %v397, 4294901760
      %916 = vmatpush.msra.mxu0 %v915
      %v917 = vand.u32 %v394, 4294901760
      %918 = vmatpush.msra.mxu0 %v917
      %v919 = vand.u32 %v422, 4294901760
      %920 = vmatmul.f32.gmra.mxu0 %v919
      %v921 = vpop.f32.mrf.mxu0
      %v922 = vadd.f32 %v892, %v921
      %923 = vdwg.mxu0
      %924 = vmatpush.msra.mxu0 0.0
      %925 = vmatpush.msra.mxu0 0.0
      %926 = vmatpush.msra.mxu0 0.0
      %927 = vmatpush.msra.mxu0 0.0
      %928 = vmatpush.msra.mxu0 0.0
      %929 = vmatpush.msra.mxu0 0.0
      %930 = vmatpush.msra.mxu0 0.0
      %v931 = vand.u32 %v419, 4294901760
      %932 = vmatpush.msra.mxu0 %v931
      %v933 = vand.u32 %v416, 4294901760
      %934 = vmatpush.msra.mxu0 %v933
      %v935 = vand.u32 %v413, 4294901760
      %936 = vmatpush.msra.mxu0 %v935
      %v937 = vand.u32 %v410, 4294901760
      %938 = vmatpush.msra.mxu0 %v937
      %v939 = vand.u32 %v407, 4294901760
      %940 = vmatpush.msra.mxu0 %v939
      %v941 = vand.u32 %v404, 4294901760
      %942 = vmatpush.msra.mxu0 %v941
      %v943 = vand.u32 %v401, 4294901760
      %944 = vmatpush.msra.mxu0 %v943
      %v945 = vand.u32 %v398, 4294901760
      %946 = vmatpush.msra.mxu0 %v945
      %v947 = vand.u32 %v395, 4294901760
      %948 = vmatpush.msra.mxu0 %v947
      %v949 = vand.u32 %v422, 4294901760
      %v950 = vsub.f32 %v422, %v949
      %v951 = vand.u32 %v950, 4294901760
      %v952 = vsub.f32 %v950, %v951
      %v953 = vand.u32 %v952, 4294901760
      %954 = vmatmul.f32.gmra.mxu0 %v953
      %v955 = vpop.f32.mrf.mxu0
      %v956 = vadd.f32 0.0, %v955
      %957 = vdwg.mxu0
      %958 = vmatpush.msra.mxu0 0.0
      %959 = vmatpush.msra.mxu0 0.0
      %960 = vmatpush.msra.mxu0 0.0
      %961 = vmatpush.msra.mxu0 0.0
      %962 = vmatpush.msra.mxu0 0.0
      %963 = vmatpush.msra.mxu0 0.0
      %964 = vmatpush.msra.mxu0 0.0
      %v965 = vand.u32 %v419, 4294901760
      %v966 = vsub.f32 %v419, %v965
      %v967 = vand.u32 %v966, 4294901760
      %v968 = vsub.f32 %v966, %v967
      %v969 = vand.u32 %v968, 4294901760
      %970 = vmatpush.msra.mxu0 %v969
      %v971 = vand.u32 %v416, 4294901760
      %v972 = vsub.f32 %v416, %v971
      %v973 = vand.u32 %v972, 4294901760
      %v974 = vsub.f32 %v972, %v973
      %v975 = vand.u32 %v974, 4294901760
      %976 = vmatpush.msra.mxu0 %v975
      %v977 = vand.u32 %v413, 4294901760
      %v978 = vsub.f32 %v413, %v977
      %v979 = vand.u32 %v978, 4294901760
      %v980 = vsub.f32 %v978, %v979
      %v981 = vand.u32 %v980, 4294901760
      %982 = vmatpush.msra.mxu0 %v981
      %v983 = vand.u32 %v410, 4294901760
      %v984 = vsub.f32 %v410, %v983
      %v985 = vand.u32 %v984, 4294901760
      %v986 = vsub.f32 %v984, %v985
      %v987 = vand.u32 %v986, 4294901760
      %988 = vmatpush.msra.mxu0 %v987
      %v989 = vand.u32 %v407, 4294901760
      %v990 = vsub.f32 %v407, %v989
      %v991 = vand.u32 %v990, 4294901760
      %v992 = vsub.f32 %v990, %v991
      %v993 = vand.u32 %v992, 4294901760
      %994 = vmatpush.msra.mxu0 %v993
      %v995 = vand.u32 %v404, 4294901760
      %v996 = vsub.f32 %v404, %v995
      %v997 = vand.u32 %v996, 4294901760
      %v998 = vsub.f32 %v996, %v997
      %v999 = vand.u32 %v998, 4294901760
      %1000 = vmatpush.msra.mxu0 %v999
      %v1001 = vand.u32 %v401, 4294901760
      %v1002 = vsub.f32 %v401, %v1001
      %v1003 = vand.u32 %v1002, 4294901760
      %v1004 = vsub.f32 %v1002, %v1003
      %v1005 = vand.u32 %v1004, 4294901760
      %1006 = vmatpush.msra.mxu0 %v1005
      %v1007 = vand.u32 %v398, 4294901760
      %v1008 = vsub.f32 %v398, %v1007
      %v1009 = vand.u32 %v1008, 4294901760
      %v1010 = vsub.f32 %v1008, %v1009
      %v1011 = vand.u32 %v1010, 4294901760
      %1012 = vmatpush.msra.mxu0 %v1011
      %v1013 = vand.u32 %v395, 4294901760
      %v1014 = vsub.f32 %v395, %v1013
      %v1015 = vand.u32 %v1014, 4294901760
      %v1016 = vsub.f32 %v1014, %v1015
      %v1017 = vand.u32 %v1016, 4294901760
      %1018 = vmatpush.msra.mxu0 %v1017
      %v1019 = vand.u32 %v422, 4294901760
      %1020 = vmatmul.f32.gmra.mxu0 %v1019
      %v1021 = vpop.f32.mrf.mxu0
      %v1022 = vadd.f32 %v956, %v1021
      %1023 = vdwg.mxu0
      %1024 = vmatpush.msra.mxu0 0.0
      %1025 = vmatpush.msra.mxu0 0.0
      %1026 = vmatpush.msra.mxu0 0.0
      %1027 = vmatpush.msra.mxu0 0.0
      %1028 = vmatpush.msra.mxu0 0.0
      %1029 = vmatpush.msra.mxu0 0.0
      %1030 = vmatpush.msra.mxu0 0.0
      %v1031 = vand.u32 %v419, 4294901760
      %v1032 = vsub.f32 %v419, %v1031
      %1033 = vmatpush.msra.mxu0 %v1032
      %v1034 = vand.u32 %v416, 4294901760
      %v1035 = vsub.f32 %v416, %v1034
      %1036 = vmatpush.msra.mxu0 %v1035
      %v1037 = vand.u32 %v413, 4294901760
      %v1038 = vsub.f32 %v413, %v1037
      %1039 = vmatpush.msra.mxu0 %v1038
      %v1040 = vand.u32 %v410, 4294901760
      %v1041 = vsub.f32 %v410, %v1040
      %1042 = vmatpush.msra.mxu0 %v1041
      %v1043 = vand.u32 %v407, 4294901760
      %v1044 = vsub.f32 %v407, %v1043
      %1045 = vmatpush.msra.mxu0 %v1044
      %v1046 = vand.u32 %v404, 4294901760
      %v1047 = vsub.f32 %v404, %v1046
      %1048 = vmatpush.msra.mxu0 %v1047
      %v1049 = vand.u32 %v401, 4294901760
      %v1050 = vsub.f32 %v401, %v1049
      %1051 = vmatpush.msra.mxu0 %v1050
      %v1052 = vand.u32 %v398, 4294901760
      %v1053 = vsub.f32 %v398, %v1052
      %1054 = vmatpush.msra.mxu0 %v1053
      %v1055 = vand.u32 %v395, 4294901760
      %v1056 = vsub.f32 %v395, %v1055
      %1057 = vmatpush.msra.mxu0 %v1056
      %v1058 = vand.u32 %v422, 4294901760
      %v1059 = vsub.f32 %v422, %v1058
      %1060 = vmatmul.f32.gmra.mxu0 %v1059
      %v1061 = vpop.f32.mrf.mxu0
      %v1062 = vadd.f32 %v1022, %v1061
      %1063 = vdwg.mxu0
      %1064 = vmatpush.msra.mxu0 0.0
      %1065 = vmatpush.msra.mxu0 0.0
      %1066 = vmatpush.msra.mxu0 0.0
      %1067 = vmatpush.msra.mxu0 0.0
      %1068 = vmatpush.msra.mxu0 0.0
      %1069 = vmatpush.msra.mxu0 0.0
      %1070 = vmatpush.msra.mxu0 0.0
      %v1071 = vand.u32 %v419, 4294901760
      %1072 = vmatpush.msra.mxu0 %v1071
      %v1073 = vand.u32 %v416, 4294901760
      %1074 = vmatpush.msra.mxu0 %v1073
      %v1075 = vand.u32 %v413, 4294901760
      %1076 = vmatpush.msra.mxu0 %v1075
      %v1077 = vand.u32 %v410, 4294901760
      %1078 = vmatpush.msra.mxu0 %v1077
      %v1079 = vand.u32 %v407, 4294901760
      %1080 = vmatpush.msra.mxu0 %v1079
      %v1081 = vand.u32 %v404, 4294901760
      %1082 = vmatpush.msra.mxu0 %v1081
      %v1083 = vand.u32 %v401, 4294901760
      %1084 = vmatpush.msra.mxu0 %v1083
      %v1085 = vand.u32 %v398, 4294901760
      %1086 = vmatpush.msra.mxu0 %v1085
      %v1087 = vand.u32 %v395, 4294901760
      %1088 = vmatpush.msra.mxu0 %v1087
      %v1089 = vand.u32 %v422, 4294901760
      %v1090 = vsub.f32 %v422, %v1089
      %v1091 = vand.u32 %v1090, 4294901760
      %1092 = vmatmul.f32.gmra.mxu0 %v1091
      %v1093 = vpop.f32.mrf.mxu0
      %v1094 = vadd.f32 %v1062, %v1093
      %1095 = vdwg.mxu0
      %1096 = vmatpush.msra.mxu0 0.0
      %1097 = vmatpush.msra.mxu0 0.0
      %1098 = vmatpush.msra.mxu0 0.0
      %1099 = vmatpush.msra.mxu0 0.0
      %1100 = vmatpush.msra.mxu0 0.0
      %1101 = vmatpush.msra.mxu0 0.0
      %1102 = vmatpush.msra.mxu0 0.0
      %v1103 = vand.u32 %v419, 4294901760
      %v1104 = vsub.f32 %v419, %v1103
      %v1105 = vand.u32 %v1104, 4294901760
      %1106 = vmatpush.msra.mxu0 %v1105
      %v1107 = vand.u32 %v416, 4294901760
      %v1108 = vsub.f32 %v416, %v1107
      %v1109 = vand.u32 %v1108, 4294901760
      %1110 = vmatpush.msra.mxu0 %v1109
      %v1111 = vand.u32 %v413, 4294901760
      %v1112 = vsub.f32 %v413, %v1111
      %v1113 = vand.u32 %v1112, 4294901760
      %1114 = vmatpush.msra.mxu0 %v1113
      %v1115 = vand.u32 %v410, 4294901760
      %v1116 = vsub.f32 %v410, %v1115
      %v1117 = vand.u32 %v1116, 4294901760
      %1118 = vmatpush.msra.mxu0 %v1117
      %v1119 = vand.u32 %v407, 4294901760
      %v1120 = vsub.f32 %v407, %v1119
      %v1121 = vand.u32 %v1120, 4294901760
      %1122 = vmatpush.msra.mxu0 %v1121
      %v1123 = vand.u32 %v404, 4294901760
      %v1124 = vsub.f32 %v404, %v1123
      %v1125 = vand.u32 %v1124, 4294901760
      %1126 = vmatpush.msra.mxu0 %v1125
      %v1127 = vand.u32 %v401, 4294901760
      %v1128 = vsub.f32 %v401, %v1127
      %v1129 = vand.u32 %v1128, 4294901760
      %1130 = vmatpush.msra.mxu0 %v1129
      %v1131 = vand.u32 %v398, 4294901760
      %v1132 = vsub.f32 %v398, %v1131
      %v1133 = vand.u32 %v1132, 4294901760
      %1134 = vmatpush.msra.mxu0 %v1133
      %v1135 = vand.u32 %v395, 4294901760
      %v1136 = vsub.f32 %v395, %v1135
      %v1137 = vand.u32 %v1136, 4294901760
      %1138 = vmatpush.msra.mxu0 %v1137
      %v1139 = vand.u32 %v422, 4294901760
      %1140 = vmatmul.f32.gmra.mxu0 %v1139
      %v1141 = vpop.f32.mrf.mxu0
      %v1142 = vadd.f32 %v1094, %v1141
      %1143 = vdwg.mxu0
      %1144 = vmatpush.msra.mxu0 0.0
      %1145 = vmatpush.msra.mxu0 0.0
      %1146 = vmatpush.msra.mxu0 0.0
      %1147 = vmatpush.msra.mxu0 0.0
      %1148 = vmatpush.msra.mxu0 0.0
      %1149 = vmatpush.msra.mxu0 0.0
      %1150 = vmatpush.msra.mxu0 0.0
      %v1151 = vand.u32 %v419, 4294901760
      %1152 = vmatpush.msra.mxu0 %v1151
      %v1153 = vand.u32 %v416, 4294901760
      %1154 = vmatpush.msra.mxu0 %v1153
      %v1155 = vand.u32 %v413, 4294901760
      %1156 = vmatpush.msra.mxu0 %v1155
      %v1157 = vand.u32 %v410, 4294901760
      %1158 = vmatpush.msra.mxu0 %v1157
      %v1159 = vand.u32 %v407, 4294901760
      %1160 = vmatpush.msra.mxu0 %v1159
      %v1161 = vand.u32 %v404, 4294901760
      %1162 = vmatpush.msra.mxu0 %v1161
      %v1163 = vand.u32 %v401, 4294901760
      %1164 = vmatpush.msra.mxu0 %v1163
      %v1165 = vand.u32 %v398, 4294901760
      %1166 = vmatpush.msra.mxu0 %v1165
      %v1167 = vand.u32 %v395, 4294901760
      %1168 = vmatpush.msra.mxu0 %v1167
      %v1169 = vand.u32 %v422, 4294901760
      %1170 = vmatmul.f32.gmra.mxu0 %v1169
      %v1171 = vpop.f32.mrf.mxu0
      %v1172 = vadd.f32 %v1142, %v1171
      %1173 = vdwg.mxu0
      %v1174 = vld [vmem:[%s2] sm:$0x7]
      %v1176 = vperm.slane %v1174, 0
      %v1177 = vperm.slane %v1174, 1
      %v1178 = vperm.slane %v1174, 2
      %1179 = vrot.lane.b32.xlu0 %v1176, 109
      %v1180 = vpop.permute.xlu0 %1179
      %1181 = vrot.lane.b32.xlu0 %v1177, 109
      %v1182 = vpop.permute.xlu0 %1181
      %1183 = vrot.lane.b32.xlu0 %v1178, 109
      %v1184 = vpop.permute.xlu0 %1183
      %v1185 = vsel %vm299, %v1180, %v1182
      %v1186 = vsel %vm299, %v1182, %v1184
      %v1190 = vmul.f32 %v672, %v1185
      %v1191 = vmul.f32 %v922, %v1186
      %v1192 = vmul.f32 %v1172, %v1184
      %1193 = vst [vmem:[%s205] sm:$0xff] 0.0
      %1194 = vst [vmem:[%s205 + $0x8] sm:$0xff] 0.0
      %1195 = vst [vmem:[%s205 + $0x10] sm:$0xff] 0.0
      %1199 = vrot.lane.b32.xlu0 %v1190, 19
      %v1200 = vpop.permute.xlu0 %1199
      %1201 = vrot.lane.b32.xlu0 %v1191, 19
      %v1202 = vpop.permute.xlu0 %1201
      %1203 = vrot.lane.b32.xlu0 %v1192, 19
      %v1204 = vpop.permute.xlu0 %1203
      %vm1205 = vcmask 154624
      %v1206 = vsel %vm1205, %v1200, %v1202
      %v1207 = vsel %vm1205, %v1202, %v1204
      %vm1211 = vcmask 1047704
      %1212 = vst.msk [vmem:[%s205] sm:$0xff] %vm1211, %v1200
      %1213 = vst [vmem:[%s205 + $0x8] sm:$0xff] %v1206
      %vm1214 = vcmask 416768
      %1215 = vst.msk [vmem:[%s205 + $0x10] sm:$0xff] %vm1214, %v1207
      %v1216 = vadd.f32 %v1190, %v1191
      %v1217 = vsel %vm222, %v1192, 0.0
      %v1218 = vadd.f32 %v1216, %v1217
      %1219 = vadd.xlane.f32.xlu0 %v1218
      %v1220 = vpop.xlane.xlu0 %1219
      %vm1221 = vcmask 7168
      %1222 = vst.msk [vmem:[%s210] sm:$0xff] %vm1221, %v1220
      %v1223 = vmul.f32 %v1190, %v1190
      %v1224 = vmul.f32 %v1191, %v1191
      %v1225 = vmul.f32 %v1192, %v1192
      %v1226 = vadd.f32 %v1223, %v1224
      %v1227 = vsel %vm222, %v1225, 0.0
      %v1228 = vadd.f32 %v1226, %v1227
      %1229 = vadd.xlane.f32.xlu0 %v1228
      %v1230 = vpop.xlane.xlu0 %1229
      %s1231 = scalar_lea.vmem %s210, 8
      %1232 = vst.msk [vmem:[%s1231] sm:$0xff] %vm1221, %v1230
      %p1233 = scmp.lt.s32.totalorder %s16, 1
      %s1234 = scalar_select %p1233, %s16, 1
      %s1235 = smul.addr %s1234, 3
      %s1236 = smul.addr %s1235, 8
      %s1237 = scalar_lea.vmem %s3, %s1236
      %p1238 = scmp.lt.s32.totalorder %s16, 1
      %s1239 = scalar_select %p1238, %s16, 1
      %s1240 = smul.addr %s1239, 2
      %s1241 = smul.addr %s1240, 8
      %s1242 = scalar_lea.vmem %s4, %s1241
      // Predicated region
      $region33: #{unet2d_forward.10} parent=31 // pred_check
        %p1243 = pneg %p102
      $region34: #{unet2d_forward.10} parent=31 // pred_check_branch
        %1245 = sbr.rel (%p1243) target = $region36
      $region35: #{unet2d_forward.10} parent=31 // pred_region
        _
      $region36: #{unet2d_forward.10} parent=31 // pred_fallthru
        _
      // Predicated region
      $region37: #{unet2d_forward.10} parent=31 // pred_check
        %p1246 = pneg %p128
      $region38: #{unet2d_forward.10} parent=31 // pred_check_branch
        %1248 = sbr.rel (%p1246) target = $region40
      $region39: #{unet2d_forward.10} parent=31 // pred_region
        _
      $region40: #{unet2d_forward.10} parent=31 // pred_fallthru
        _
    $region32: #{unet2d_forward.10} parent=5 // pred_fallthru
      _
    %p1249 = scmp.le.s32.totalorder 2, %s11
    // Predicated region
    $region41: #{unet2d_forward.10} parent=5 // pred_check
      %p1250 = pneg %p1249
    $region42: #{unet2d_forward.10} parent=5 // pred_check_branch
      %1252 = sbr.rel (%p1250) target = $region44
    $region43: #{unet2d_forward.10} parent=5 // pred_region
      %s1253 = ssub.s32 %s11, 2
      // Predicated region
      $region45: #{unet2d_forward.10} parent=43 // pred_check
        %p1254 = pneg %p108
      $region46: #{unet2d_forward.10} parent=43 // pred_check_branch
        %1256 = sbr.rel (%p1254) target = $region48
      $region47: #{unet2d_forward.10} parent=43 // pred_region
        %p1257 = scmp.lt.s32.totalorder %s17, 1
        %s1258 = scalar_select %p1257, %s17, 1
        %s1259 = smul.addr %s1258, 3
        %s1260 = smul.addr %s1259, 8
        %s1261 = scalar_lea.vmem %s3, %s1260
      $region48: #{unet2d_forward.10} parent=43 // pred_fallthru
        _
      // Predicated region
      $region49: #{unet2d_forward.10} parent=43 // pred_check
        %p1262 = pneg %p134
      $region50: #{unet2d_forward.10} parent=43 // pred_check_branch
        %1264 = sbr.rel (%p1262) target = $region52
      $region51: #{unet2d_forward.10} parent=43 // pred_region
        %p1265 = scmp.lt.s32.totalorder %s17, 1
        %s1266 = scalar_select %p1265, %s17, 1
        %s1267 = smul.addr %s1266, 2
        %s1268 = smul.addr %s1267, 8
        %s1269 = scalar_lea.vmem %s4, %s1268
      $region52: #{unet2d_forward.10} parent=43 // pred_fallthru
        _
    $region44: #{unet2d_forward.10} parent=5 // pred_fallthru
      _
  $region6: #{unet2d_forward.10} parent=0 // loop_footer
    %s15 = sadd.s32 1, %s11
  $region7: #{unet2d_forward.10} parent=0 // loop_footer_branch
    %10 = sbr.rel target = $region3
  $region8: #{unet2d_forward.10} parent=0 // loop_exit
    _

// kernel: unet2d_forward.12
$region0: #{unet2d_forward.12}
  #allocation0 [shape = 'u32[]', space=smem, size = 0x4, offset = 0x4, fixed_abs, tag = 'smem constant byte address 0x4 - core index']
  #allocation1 [shape = 'u32[72,128]{1,0:T(1,128)}', space=vmem, size = 0x9000, scoped, tag = 'internal scratch']
  #allocation2 [shape = 'f32[8,384]{1,0:T(8,128)}', space=vmem, size = 0x3000, scoped, tag = 'scratch operand']
  #allocation3 [shape = 'f32[72,288]{1,0:T(8,128)}', space=vmem, size = 0x1b000, scoped, tag = 'scratch operand']
  %s0 = inlined_call_operand.vmem [shape: f32[2,8,384], index: 0, kind: input, shape index: {}]
  %s1 = inlined_call_operand.vmem [shape: f32[2,8,1], index: 1, kind: input, shape index: {}]
  %s2 = inlined_call_operand.vmem [shape: f32[8,72], index: 2, kind: input, shape index: {}]
  %s3 = inlined_call_operand.vmem [shape: f32[1,384], index: 3, kind: input, shape index: {}]
  %s4 = inlined_call_operand.vmem [shape: f32[2,8,384], index: 4, kind: output, shape index: {}]
  %s5 = sld [smem:[#allocation0]]
  $region49: #{unet2d_forward.12} parent=0
    _
  %s7 = ssub.s32 1, %s5
  %s8 = scalar_select 0, %s7, %s5
  loop: start=0, step=1, limit=4
  $region2: #{unet2d_forward.12} parent=0 // loop_pre_header
    _
  $region3: #{unet2d_forward.12} parent=0 // loop_header
    %s10 = sphi 0, %s14
    %p11 = scmp.ge.s32.totalorder %s10, 4
    %s20 = sphi 0, %s22
    %s23 = sphi 0, %s20
    %s24 = sphi 0, %s23
    %s40 = sphi 0, %s24
    %s44 = sphi 0, %s44
    %s46 = sphi 0, %s44
    %s47 = sphi 0, %s46
    %s61 = sphi 0, %s47
    %s65 = sphi 0, %s65
    %s67 = sphi 0, %s65
    %s68 = sphi 0, %s67
    %s82 = sphi 0, %s68
    %s86 = sphi 0, %s86
    %s88 = sphi 0, %s86
    %s89 = sphi 0, %s88
    %s103 = sphi 0, %s89
    %s109 = sphi 0, %s111
    %s112 = sphi 0, %s109
    %s113 = sphi 0, %s112
    %s129 = sphi 0, %s113
  $region4: #{unet2d_forward.12} parent=0 // loop_header_branch
    %13 = sbr.rel (%p11) target = $region8
  $region5: #{unet2d_forward.12} parent=0 // loop_body
    %s15 = ssub.s32 %s10, 1
    %s16 = ssub.s32 %s10, 2
    %s17 = sadd.s32 %s10, 1
    %s18 = ssub.s32 %s10, %s17
    %p19 = scmp.eq.s32.totalorder %s18, 0
    %s21 = sadd.s32 %s20, 1
    %s22 = scalar_select %p19, %s20, %s21
    %p25 = pneg %p19
    %p26 = scmp.eq.s32.totalorder %s10, 1
    %p27 = por %p25, %p26
    %p28 = scmp.ne.s32.totalorder %s20, %s23
    %p29 = scmp.eq.s32.totalorder %s10, 0
    %p30 = por %p28, %p29
    %p31 = scmp.ne.s32.totalorder %s20, %s23
    %p32 = scmp.eq.s32.totalorder %s15, 1
    %p33 = por %p31, %p32
    %p34 = scmp.ne.s32.totalorder %s23, %s24
    %p35 = scmp.eq.s32.totalorder %s15, 0
    %p36 = por %p34, %p35
    %p37 = scmp.ne.s32.totalorder %s23, %s24
    %p38 = scmp.eq.s32.totalorder %s16, 1
    %p39 = por %p37, %p38
    %p41 = scmp.ne.s32.totalorder %s24, %s40
    %p42 = scmp.eq.s32.totalorder %s16, 0
    %p43 = por %p41, %p42
    %s45 = sadd.s32 %s44, 1
    %p48 = scmp.eq.s32.totalorder %s10, 1
    %p49 = scmp.ne.s32.totalorder %s44, %s46
    %p50 = scmp.eq.s32.totalorder %s10, 0
    %p51 = por %p49, %p50
    %p52 = scmp.ne.s32.totalorder %s44, %s46
    %p53 = scmp.eq.s32.totalorder %s15, 1
    %p54 = por %p52, %p53
    %p55 = scmp.ne.s32.totalorder %s46, %s47
    %p56 = scmp.eq.s32.totalorder %s15, 0
    %p57 = por %p55, %p56
    %p58 = scmp.ne.s32.totalorder %s46, %s47
    %p59 = scmp.eq.s32.totalorder %s16, 1
    %p60 = por %p58, %p59
    %p62 = scmp.ne.s32.totalorder %s47, %s61
    %p63 = scmp.eq.s32.totalorder %s16, 0
    %p64 = por %p62, %p63
    %s66 = sadd.s32 %s65, 1
    %p69 = scmp.eq.s32.totalorder %s10, 1
    %p70 = scmp.ne.s32.totalorder %s65, %s67
    %p71 = scmp.eq.s32.totalorder %s10, 0
    %p72 = por %p70, %p71
    %p73 = scmp.ne.s32.totalorder %s65, %s67
    %p74 = scmp.eq.s32.totalorder %s15, 1
    %p75 = por %p73, %p74
    %p76 = scmp.ne.s32.totalorder %s67, %s68
    %p77 = scmp.eq.s32.totalorder %s15, 0
    %p78 = por %p76, %p77
    %p79 = scmp.ne.s32.totalorder %s67, %s68
    %p80 = scmp.eq.s32.totalorder %s16, 1
    %p81 = por %p79, %p80
    %p83 = scmp.ne.s32.totalorder %s68, %s82
    %p84 = scmp.eq.s32.totalorder %s16, 0
    %p85 = por %p83, %p84
    %s87 = sadd.s32 %s86, 1
    %p90 = scmp.eq.s32.totalorder %s10, 1
    %p91 = scmp.ne.s32.totalorder %s86, %s88
    %p92 = scmp.eq.s32.totalorder %s10, 0
    %p93 = por %p91, %p92
    %p94 = scmp.ne.s32.totalorder %s86, %s88
    %p95 = scmp.eq.s32.totalorder %s15, 1
    %p96 = por %p94, %p95
    %p97 = scmp.ne.s32.totalorder %s88, %s89
    %p98 = scmp.eq.s32.totalorder %s15, 0
    %p99 = por %p97, %p98
    %p100 = scmp.ne.s32.totalorder %s88, %s89
    %p101 = scmp.eq.s32.totalorder %s16, 1
    %p102 = por %p100, %p101
    %p104 = scmp.ne.s32.totalorder %s89, %s103
    %p105 = scmp.eq.s32.totalorder %s16, 0
    %p106 = por %p104, %p105
    %s107 = ssub.s32 %s10, %s17
    %p108 = scmp.eq.s32.totalorder %s107, 0
    %s110 = sadd.s32 %s109, 1
    %s111 = scalar_select %p108, %s109, %s110
    %p114 = pneg %p108
    %p115 = scmp.eq.s32.totalorder %s10, 1
    %p116 = por %p114, %p115
    %p117 = scmp.ne.s32.totalorder %s109, %s112
    %p118 = scmp.eq.s32.totalorder %s10, 0
    %p119 = por %p117, %p118
    %p120 = scmp.ne.s32.totalorder %s109, %s112
    %p121 = scmp.eq.s32.totalorder %s15, 1
    %p122 = por %p120, %p121
    %p123 = scmp.ne.s32.totalorder %s112, %s113
    %p124 = scmp.eq.s32.totalorder %s15, 0
    %p125 = por %p123, %p124
    %p126 = scmp.ne.s32.totalorder %s112, %s113
    %p127 = scmp.eq.s32.totalorder %s16, 1
    %p128 = por %p126, %p127
    %p130 = scmp.ne.s32.totalorder %s113, %s129
    %p131 = scmp.eq.s32.totalorder %s16, 0
    %p132 = por %p130, %p131
    %p133 = scmp.le.s32.totalorder 1, %s10
    %p134 = scmp.lt.s32.totalorder %s10, 3
    %p135 = pnand %p133, %p134
    %p136 = pneg %p135
    // Predicated region
    $region9: #{unet2d_forward.12} parent=5 // pred_check
      _
    $region10: #{unet2d_forward.12} parent=5 // pred_check_branch
      %138 = sbr.rel (%p135) target = $region12
    $region11: #{unet2d_forward.12} parent=5 // pred_region
      %s139 = ssub.s32 %s10, 1
      // Predicated region
      $region13: #{unet2d_forward.12} parent=11 // pred_check
        %p140 = pneg %p57
      $region14: #{unet2d_forward.12} parent=11 // pred_check_branch
        %142 = sbr.rel (%p140) target = $region16
      $region15: #{unet2d_forward.12} parent=11 // pred_region
        _
      $region16: #{unet2d_forward.12} parent=11 // pred_fallthru
        _
      // Predicated region
      $region17: #{unet2d_forward.12} parent=11 // pred_check
        %p143 = pneg %p78
      $region18: #{unet2d_forward.12} parent=11 // pred_check_branch
        %145 = sbr.rel (%p143) target = $region20
      $region19: #{unet2d_forward.12} parent=11 // pred_region
        _
      $region20: #{unet2d_forward.12} parent=11 // pred_fallthru
        _
      // Predicated region
      $region21: #{unet2d_forward.12} parent=11 // pred_check
        %p146 = pneg %p99
      $region22: #{unet2d_forward.12} parent=11 // pred_check_branch
        %148 = sbr.rel (%p146) target = $region24
      $region23: #{unet2d_forward.12} parent=11 // pred_region
        _
      $region24: #{unet2d_forward.12} parent=11 // pred_fallthru
        _
    $region12: #{unet2d_forward.12} parent=5 // pred_fallthru
      _
    %p149 = scmp.lt.s32.totalorder %s10, 2
    // Predicated region
    $region25: #{unet2d_forward.12} parent=5 // pred_check
      %p150 = pneg %p149
    $region26: #{unet2d_forward.12} parent=5 // pred_check_branch
      %152 = sbr.rel (%p150) target = $region28
    $region27: #{unet2d_forward.12} parent=5 // pred_region
      // Predicated region
      $region29: #{unet2d_forward.12} parent=27 // pred_check
        %p153 = pneg %p30
      $region30: #{unet2d_forward.12} parent=27 // pred_check_branch
        %155 = sbr.rel (%p153) target = $region32
      $region31: #{unet2d_forward.12} parent=27 // pred_region
        %p156 = scmp.lt.s32.totalorder %s10, 1
        %s157 = scalar_select %p156, %s10, 1
        %s158 = smul.addr %s157, 3
        %s159 = smul.addr %s158, 8
        %s160 = scalar_lea.vmem %s0, %s159
      $region32: #{unet2d_forward.12} parent=27 // pred_fallthru
        _
    $region28: #{unet2d_forward.12} parent=5 // pred_fallthru
      _
    %p161 = scmp.le.s32.totalorder 1, %s10
    %p162 = scmp.lt.s32.totalorder %s10, 3
    %p163 = pnand %p161, %p162
    %p164 = pneg %p163
    // Predicated region
    $region33: #{unet2d_forward.12} parent=5 // pred_check
      _
    $region34: #{unet2d_forward.12} parent=5 // pred_check_branch
      %166 = sbr.rel (%p163) target = $region36
    $region35: #{unet2d_forward.12} parent=5 // pred_region
      %s167 = ssub.s32 %s10, 1
      %p168 = scmp.lt.s32.totalorder %s15, 1
      %s169 = scalar_select %p168, %s15, 1
      %s170 = smul.addr %s169, 3
      %s171 = smul.addr %s170, 8
      %s172 = scalar_lea.vmem %s0, %s171
      %p173 = pneg %p36
      %p174 = pneg %p33
      %p175 = pneg %p57
      %p176 = pneg %p54
      %p177 = pneg %p78
      %p178 = pneg %p75
      %p179 = pneg %p99
      %p180 = pneg %p96
      %p181 = pneg %p125
      %p182 = pneg %p122
      %p183 = scmp.lt.s32.totalorder %s15, 1
      %s184 = scalar_select %p183, %s15, 1
      %s185 = smul.addr %s184, 3
      %s186 = smul.addr %s185, 8
      %s187 = scalar_lea.vmem %s4, %s186
      %p188 = scmp.lt.s32.totalorder %s15, 1
      %s189 = scalar_select %p188, %s15, 1
      %s190 = smul.addr %s189, 3
      %s191 = smul.addr %s190, 8
      %s192 = scalar_lea.vmem %s0, %s191
      %p193 = scmp.lt.s32.totalorder %s15, 1
      %s194 = scalar_select %p193, %s15, 1
      %s195 = smul.addr %s194, 3
      %s196 = smul.addr %s195, 8
      %s197 = scalar_lea.vmem %s4, %s196
      %v198 = vld [vmem:[%s3] sm:$0x7]
      %v199 = vld [vmem:[%s192] sm:$0xff]
      %v200 = vld [vmem:[%s192 + $0x8] sm:$0xff]
      %v201 = vld [vmem:[%s192 + $0x10] sm:$0xff]
      %v202 = vld [vmem:[%s1] sm:$0xff]
      %204 = vset.pattern.permute.xlu0 0
      %205 = vperm.xlu0 %204, %v202
      %v206 = vpop.permute.xlu0 %205
      %v208 = vmul.f32 %v199, %v206
      %v209 = vmul.f32 %v200, %v206
      %v210 = vmul.f32 %v201, %v206
      %s211 = scalar_lea.vmem %s1, 8
      %v212 = vld [vmem:[%s211] sm:$0xff]
      %214 = vset.pattern.permute.xlu0 0
      %215 = vperm.xlu0 %214, %v212
      %v216 = vpop.permute.xlu0 %215
      %v218 = vadd.f32 %v208, %v216
      %v219 = vadd.f32 %v209, %v216
      %v220 = vadd.f32 %v210, %v216
      %vm221 = vcmp.ge.f32.partialorder %v218, 0.0
      %vm222 = vcmp.ge.f32.partialorder %v219, 0.0
      %vm223 = vcmp.ge.f32.partialorder %v220, 0.0
      %v224 = vmul.f32 %v218, 0.2
      %v225 = vmul.f32 %v219, 0.2
      %v226 = vmul.f32 %v220, 0.2
      %v227 = vsel %vm221, %v218, %v224
      %v228 = vsel %vm222, %v219, %v225
      %v229 = vsel %vm223, %v220, %v226
      %v231 = vperm.slane %v198, 0
      %v232 = vperm.slane %v198, 1
      %v233 = vperm.slane %v198, 2
      %v237 = vmul.f32 %v227, %v231
      %v238 = vmul.f32 %v228, %v232
      %v239 = vmul.f32 %v229, %v233
      %240 = vst [vmem:[#allocation2] sm:$0xff] %v237
      %241 = vst [vmem:[#allocation2 + $0x8] sm:$0xff] %v238
      %242 = vst [vmem:[#allocation2 + $0x10] sm:$0xff] %v239
      %v243 = vld [vmem:[#allocation2] sm:$0xff]
      %v244 = vld [vmem:[#allocation2 + $0x8] sm:$0xff]
      %v245 = vld [vmem:[#allocation2 + $0x10] sm:$0xff]
      %246 = vst [vmem:[#allocation3] sm:$0xff] %v243
      %247 = vst [vmem:[#allocation3 + $0x8] sm:$0xff] %v244
      %vm248 = vcmask 261120
      %249 = vst.msk [vmem:[#allocation3 + $0x10] sm:$0xff] %vm248, %v245
      %v250 = vld [vmem:[#allocation2] sm:$0xff]
      %v251 = vld [vmem:[#allocation2 + $0x8] sm:$0xff]
      %v252 = vld [vmem:[#allocation2 + $0x10] sm:$0xff]
      %256 = vrot.lane.b32.xlu0 %v250, 127
      %v257 = vpop.permute.xlu0 %256
      %258 = vrot.lane.b32.xlu0 %v251, 127
      %v259 = vpop.permute.xlu0 %258
      %260 = vrot.lane.b32.xlu0 %v252, 127
      %v261 = vpop.permute.xlu0 %260
      %vm262 = vcmask 1039360
      %v263 = vsel %vm262, %v257, %v259
      %v264 = vsel %vm262, %v259, %v261
      %268 = vst [vmem:[#allocation3 + $0x18] sm:$0xff] %v263
      %269 = vst [vmem:[#allocation3 + $0x20] sm:$0xff] %v264
      %270 = vst.msk [vmem:[#allocation3 + $0x28] sm:$0xff] %vm248, %v261
      %v271 = vld [vmem:[#allocation2] sm:$0xff]
      %v272 = vld [vmem:[#allocation2 + $0x8] sm:$0xff]
      %v273 = vld [vmem:[#allocation2 + $0x10] sm:$0xff]
      %277 = vrot.lane.b32.xlu0 %v271, 126
      %v278 = vpop.permute.xlu0 %277
      %279 = vrot.lane.b32.xlu0 %v272, 126
      %v280 = vpop.permute.xlu0 %279
      %281 = vrot.lane.b32.xlu0 %v273, 126
      %v282 = vpop.permute.xlu0 %281
      %vm283 = vcmask 1031168
      %v284 = vsel %vm283, %v278, %v280
      %v285 = vsel %vm283, %v280, %v282
      %289 = vst [vmem:[#allocation3 + $0x30] sm:$0xff] %v284
      %290 = vst [vmem:[#allocation3 + $0x38] sm:$0xff] %v285
      %291 = vst.msk [vmem:[#allocation3 + $0x40] sm:$0xff] %vm248, %v282
      %v292 = vld [vmem:[#allocation2] sm:$0xff]
      %v293 = vld [vmem:[#allocation2 + $0x8] sm:$0xff]
      %v294 = vld [vmem:[#allocation2 + $0x10] sm:$0xff]
      %298 = vrot.lane.b32.xlu0 %v292, 110
      %v299 = vpop.permute.xlu0 %298
      %300 = vrot.lane.b32.xlu0 %v293, 110
      %v301 = vpop.permute.xlu0 %300
      %302 = vrot.lane.b32.xlu0 %v294, 110
      %v303 = vpop.permute.xlu0 %302
      %vm304 = vcmask 900096
      %v305 = vsel %vm304, %v299, %v301
      %v306 = vsel %vm304, %v301, %v303
      %310 = vst [vmem:[#allocation3 + $0x48] sm:$0xff] %v305
      %311 = vst [vmem:[#allocation3 + $0x50] sm:$0xff] %v306
      %312 = vst.msk [vmem:[#allocation3 + $0x58] sm:$0xff] %vm248, %v303
      %v313 = vld [vmem:[#allocation2] sm:$0xff]
      %v314 = vld [vmem:[#allocation2 + $0x8] sm:$0xff]
      %v315 = vld [vmem:[#allocation2 + $0x10] sm:$0xff]
      %319 = vrot.lane.b32.xlu0 %v313, 109
      %v320 = vpop.permute.xlu0 %319
      %321 = vrot.lane.b32.xlu0 %v314, 109
      %v322 = vpop.permute.xlu0 %321
      %323 = vrot.lane.b32.xlu0 %v315, 109
      %v324 = vpop.permute.xlu0 %323
      %vm325 = vcmask 891904
      %v326 = vsel %vm325, %v320, %v322
      %v327 = vsel %vm325, %v322, %v324
      %331 = vst [vmem:[#allocation3 + $0x60] sm:$0xff] %v326
      %332 = vst [vmem:[#allocation3 + $0x68] sm:$0xff] %v327
      %333 = vst.msk [vmem:[#allocation3 + $0x70] sm:$0xff] %vm248, %v324
      %v334 = vld [vmem:[#allocation2] sm:$0xff]
      %v335 = vld [vmem:[#allocation2 + $0x8] sm:$0xff]
      %v336 = vld [vmem:[#allocation2 + $0x10] sm:$0xff]
      %340 = vrot.lane.b32.xlu0 %v334, 108
      %v341 = vpop.permute.xlu0 %340
      %342 = vrot.lane.b32.xlu0 %v335, 108
      %v343 = vpop.permute.xlu0 %342
      %344 = vrot.lane.b32.xlu0 %v336, 108
      %v345 = vpop.permute.xlu0 %344
      %vm346 = vcmask 883712
      %v347 = vsel %vm346, %v341, %v343
      %v348 = vsel %vm346, %v343, %v345
      %352 = vst [vmem:[#allocation3 + $0x78] sm:$0xff] %v347
      %353 = vst [vmem:[#allocation3 + $0x80] sm:$0xff] %v348
      %354 = vst.msk [vmem:[#allocation3 + $0x88] sm:$0xff] %vm248, %v345
      %v355 = vld [vmem:[#allocation2] sm:$0xff]
      %v356 = vld [vmem:[#allocation2 + $0x8] sm:$0xff]
      %v357 = vld [vmem:[#allocation2 + $0x10] sm:$0xff]
      %361 = vrot.lane.b32.xlu0 %v355, 92
      %v362 = vpop.permute.xlu0 %361
      %363 = vrot.lane.b32.xlu0 %v356, 92
      %v364 = vpop.permute.xlu0 %363
      %365 = vrot.lane.b32.xlu0 %v357, 92
      %v366 = vpop.permute.xlu0 %365
      %vm367 = vcmask 752640
      %v368 = vsel %vm367, %v362, %v364
      %v369 = vsel %vm367, %v364, %v366
      %373 = vst [vmem:[#allocation3 + $0x90] sm:$0xff] %v368
      %374 = vst [vmem:[#allocation3 + $0x98] sm:$0xff] %v369
      %375 = vst.msk [vmem:[#allocation3 + $0xa0] sm:$0xff] %vm248, %v366
      %v376 = vld [vmem:[#allocation2] sm:$0xff]
      %v377 = vld [vmem:[#allocation2 + $0x8] sm:$0xff]
      %v378 = vld [vmem:[#allocation2 + $0x10] sm:$0xff]
      %382 = vrot.lane.b32.xlu0 %v376, 91
      %v383 = vpop.permute.xlu0 %382
      %384 = vrot.lane.b32.xlu0 %v377, 91
      %v385 = vpop.permute.xlu0 %384
      %386 = vrot.lane.b32.xlu0 %v378, 91
      %v387 = vpop.permute.xlu0 %386
      %vm388 = vcmask 744448
      %v389 = vsel %vm388, %v383, %v385
      %v390 = vsel %vm388, %v385, %v387
      %394 = vst [vmem:[#allocation3 + $0xa8] sm:$0xff] %v389
      %395 = vst [vmem:[#allocation3 + $0xb0] sm:$0xff] %v390
      %396 = vst.msk [vmem:[#allocation3 + $0xb8] sm:$0xff] %vm248, %v387
      %v397 = vld [vmem:[#allocation2] sm:$0xff]
      %v398 = vld [vmem:[#allocation2 + $0x8] sm:$0xff]
      %v399 = vld [vmem:[#allocation2 + $0x10] sm:$0xff]
      %403 = vrot.lane.b32.xlu0 %v397, 90
      %v404 = vpop.permute.xlu0 %403
      %405 = vrot.lane.b32.xlu0 %v398, 90
      %v406 = vpop.permute.xlu0 %405
      %407 = vrot.lane.b32.xlu0 %v399, 90
      %v408 = vpop.permute.xlu0 %407
      %vm409 = vcmask 736256
      %v410 = vsel %vm409, %v404, %v406
      %v411 = vsel %vm409, %v406, %v408
      %415 = vst [vmem:[#allocation3 + $0xc0] sm:$0xff] %v410
      %416 = vst [vmem:[#allocation3 + $0xc8] sm:$0xff] %v411
      %417 = vst.msk [vmem:[#allocation3 + $0xd0] sm:$0xff] %vm248, %v408
      %v418 = vld [vmem:[%s2] sm:$0xff]
      %v419 = vld [vmem:[#allocation3] sm:$0xff]
      %v420 = vld [vmem:[#allocation3 + $0x8] sm:$0xff]
      %v421 = vld [vmem:[#allocation3 + $0x10] sm:$0xff]
      %v422 = vld [vmem:[#allocation3 + $0x18] sm:$0xff]
      %v423 = vld [vmem:[#allocation3 + $0x20] sm:$0xff]
      %v424 = vld [vmem:[#allocation3 + $0x28] sm:$0xff]
      %v425 = vld [vmem:[#allocation3 + $0x30] sm:$0xff]
      %v426 = vld [vmem:[#allocation3 + $0x38] sm:$0xff]
      %v427 = vld [vmem:[#allocation3 + $0x40] sm:$0xff]
      %v428 = vld [vmem:[#allocation3 + $0x48] sm:$0xff]
      %v429 = vld [vmem:[#allocation3 + $0x50] sm:$0xff]
      %v430 = vld [vmem:[#allocation3 + $0x58] sm:$0xff]
      %v431 = vld [vmem:[#allocation3 + $0x60] sm:$0xff]
      %v432 = vld [vmem:[#allocation3 + $0x68] sm:$0xff]
      %v433 = vld [vmem:[#allocation3 + $0x70] sm:$0xff]
      %v434 = vld [vmem:[#allocation3 + $0x78] sm:$0xff]
      %v435 = vld [vmem:[#allocation3 + $0x80] sm:$0xff]
      %v436 = vld [vmem:[#allocation3 + $0x88] sm:$0xff]
      %v437 = vld [vmem:[#allocation3 + $0x90] sm:$0xff]
      %v438 = vld [vmem:[#allocation3 + $0x98] sm:$0xff]
      %v439 = vld [vmem:[#allocation3 + $0xa0] sm:$0xff]
      %v440 = vld [vmem:[#allocation3 + $0xa8] sm:$0xff]
      %v441 = vld [vmem:[#allocation3 + $0xb0] sm:$0xff]
      %v442 = vld [vmem:[#allocation3 + $0xb8] sm:$0xff]
      %v443 = vld [vmem:[#allocation3 + $0xc0] sm:$0xff]
      %v444 = vld [vmem:[#allocation3 + $0xc8] sm:$0xff]
      %v445 = vld [vmem:[#allocation3 + $0xd0] sm:$0xff]
      %vm446 = vcmask 588800
      %v448 = vsel %vm446, %v418, 0
      %450 = vmatpush.msra.mxu0 0.0
      %451 = vmatpush.msra.mxu0 0.0
      %452 = vmatpush.msra.mxu0 0.0
      %453 = vmatpush.msra.mxu0 0.0
      %454 = vmatpush.msra.mxu0 0.0
      %455 = vmatpush.msra.mxu0 0.0
      %456 = vmatpush.msra.mxu0 0.0
      %v457 = vand.u32 %v443, 4294901760
      %458 = vmatpush.msra.mxu0 %v457
      %v459 = vand.u32 %v440, 4294901760
      %460 = vmatpush.msra.mxu0 %v459
      %v461 = vand.u32 %v437, 4294901760
      %462 = vmatpush.msra.mxu0 %v461
      %v463 = vand.u32 %v434, 4294901760
      %464 = vmatpush.msra.mxu0 %v463
      %v465 = vand.u32 %v431, 4294901760
      %466 = vmatpush.msra.mxu0 %v465
      %v467 = vand.u32 %v428, 4294901760
      %468 = vmatpush.msra.mxu0 %v467
      %v469 = vand.u32 %v425, 4294901760
      %470 = vmatpush.msra.mxu0 %v469
      %v471 = vand.u32 %v422, 4294901760
      %472 = vmatpush.msra.mxu0 %v471
      %v473 = vand.u32 %v419, 4294901760
      %474 = vmatpush.msra.mxu0 %v473
      %v475 = vand.u32 %v448, 4294901760
      %v476 = vsub.f32 %v448, %v475
      %v477 = vand.u32 %v476, 4294901760
      %v478 = vsub.f32 %v476, %v477
      %v479 = vand.u32 %v478, 4294901760
      %480 = vmatmul.f32.gmra.mxu0 %v479
      %v481 = vpop.f32.mrf.mxu0
      %v482 = vadd.f32 0.0, %v481
      %483 = vdwg.mxu0
      %484 = vmatpush.msra.mxu0 0.0
      %485 = vmatpush.msra.mxu0 0.0
      %486 = vmatpush.msra.mxu0 0.0
      %487 = vmatpush.msra.mxu0 0.0
      %488 = vmatpush.msra.mxu0 0.0
      %489 = vmatpush.msra.mxu0 0.0
      %490 = vmatpush.msra.mxu0 0.0
      %v491 = vand.u32 %v443, 4294901760
      %v492 = vsub.f32 %v443, %v491
      %v493 = vand.u32 %v492, 4294901760
      %v494 = vsub.f32 %v492, %v493
      %v495 = vand.u32 %v494, 4294901760
      %496 = vmatpush.msra.mxu0 %v495
      %v497 = vand.u32 %v440, 4294901760
      %v498 = vsub.f32 %v440, %v497
      %v499 = vand.u32 %v498, 4294901760
      %v500 = vsub.f32 %v498, %v499
      %v501 = vand.u32 %v500, 4294901760
      %502 = vmatpush.msra.mxu0 %v501
      %v503 = vand.u32 %v437, 4294901760
      %v504 = vsub.f32 %v437, %v503
      %v505 = vand.u32 %v504, 4294901760
      %v506 = vsub.f32 %v504, %v505
      %v507 = vand.u32 %v506, 4294901760
      %508 = vmatpush.msra.mxu0 %v507
      %v509 = vand.u32 %v434, 4294901760
      %v510 = vsub.f32 %v434, %v509
      %v511 = vand.u32 %v510, 4294901760
      %v512 = vsub.f32 %v510, %v511
      %v513 = vand.u32 %v512, 4294901760
      %514 = vmatpush.msra.mxu0 %v513
      %v515 = vand.u32 %v431, 4294901760
      %v516 = vsub.f32 %v431, %v515
      %v517 = vand.u32 %v516, 4294901760
      %v518 = vsub.f32 %v516, %v517
      %v519 = vand.u32 %v518, 4294901760
      %520 = vmatpush.msra.mxu0 %v519
      %v521 = vand.u32 %v428, 4294901760
      %v522 = vsub.f32 %v428, %v521
      %v523 = vand.u32 %v522, 4294901760
      %v524 = vsub.f32 %v522, %v523
      %v525 = vand.u32 %v524, 4294901760
      %526 = vmatpush.msra.mxu0 %v525
      %v527 = vand.u32 %v425, 4294901760
      %v528 = vsub.f32 %v425, %v527
      %v529 = vand.u32 %v528, 4294901760
      %v530 = vsub.f32 %v528, %v529
      %v531 = vand.u32 %v530, 4294901760
      %532 = vmatpush.msra.mxu0 %v531
      %v533 = vand.u32 %v422, 4294901760
      %v534 = vsub.f32 %v422, %v533
      %v535 = vand.u32 %v534, 4294901760
      %v536 = vsub.f32 %v534, %v535
      %v537 = vand.u32 %v536, 4294901760
      %538 = vmatpush.msra.mxu0 %v537
      %v539 = vand.u32 %v419, 4294901760
      %v540 = vsub.f32 %v419, %v539
      %v541 = vand.u32 %v540, 4294901760
      %v542 = vsub.f32 %v540, %v541
      %v543 = vand.u32 %v542, 4294901760
      %544 = vmatpush.msra.mxu0 %v543
      %v545 = vand.u32 %v448, 4294901760
      %546 = vmatmul.f32.gmra.mxu0 %v545
      %v547 = vpop.f32.mrf.mxu0
      %v548 = vadd.f32 %v482, %v547
      %549 = vdwg.mxu0
      %550 = vmatpush.msra.mxu0 0.0
      %551 = vmatpush.msra.mxu0 0.0
      %552 = vmatpush.msra.mxu0 0.0
      %553 = vmatpush.msra.mxu0 0.0
      %554 = vmatpush.msra.mxu0 0.0
      %555 = vmatpush.msra.mxu0 0.0
      %556 = vmatpush.msra.mxu0 0.0
      %v557 = vand.u32 %v443, 4294901760
      %v558 = vsub.f32 %v443, %v557
      %559 = vmatpush.msra.mxu0 %v558
      %v560 = vand.u32 %v440, 4294901760
      %v561 = vsub.f32 %v440, %v560
      %562 = vmatpush.msra.mxu0 %v561
      %v563 = vand.u32 %v437, 4294901760
      %v564 = vsub.f32 %v437, %v563
      %565 = vmatpush.msra.mxu0 %v564
      %v566 = vand.u32 %v434, 4294901760
      %v567 = vsub.f32 %v434, %v566
      %568 = vmatpush.msra.mxu0 %v567
      %v569 = vand.u32 %v431, 4294901760
      %v570 = vsub.f32 %v431, %v569
      %571 = vmatpush.msra.mxu0 %v570
      %v572 = vand.u32 %v428, 4294901760
      %v573 = vsub.f32 %v428, %v572
      %574 = vmatpush.msra.mxu0 %v573
      %v575 = vand.u32 %v425, 4294901760
      %v576 = vsub.f32 %v425, %v575
      %577 = vmatpush.msra.mxu0 %v576
      %v578 = vand.u32 %v422, 4294901760
      %v579 = vsub.f32 %v422, %v578
      %580 = vmatpush.msra.mxu0 %v579
      %v581 = vand.u32 %v419, 4294901760
      %v582 = vsub.f32 %v419, %v581
      %583 = vmatpush.msra.mxu0 %v582
      %v584 = vand.u32 %v448, 4294901760
      %v585 = vsub.f32 %v448, %v584
      %586 = vmatmul.f32.gmra.mxu0 %v585
      %v587 = vpop.f32.mrf.mxu0
      %v588 = vadd.f32 %v548, %v587
      %589 = vdwg.mxu0
      %590 = vmatpush.msra.mxu0 0.0
      %591 = vmatpush.msra.mxu0 0.0
      %592 = vmatpush.msra.mxu0 0.0
      %593 = vmatpush.msra.mxu0 0.0
      %594 = vmatpush.msra.mxu0 0.0
      %595 = vmatpush.msra.mxu0 0.0
      %596 = vmatpush.msra.mxu0 0.0
      %v597 = vand.u32 %v443, 4294901760
      %598 = vmatpush.msra.mxu0 %v597
      %v599 = vand.u32 %v440, 4294901760
      %600 = vmatpush.msra.mxu0 %v599
      %v601 = vand.u32 %v437, 4294901760
      %602 = vmatpush.msra.mxu0 %v601
      %v603 = vand.u32 %v434, 4294901760
      %604 = vmatpush.msra.mxu0 %v603
      %v605 = vand.u32 %v431, 4294901760
      %606 = vmatpush.msra.mxu0 %v605
      %v607 = vand.u32 %v428, 4294901760
      %608 = vmatpush.msra.mxu0 %v607
      %v609 = vand.u32 %v425, 4294901760
      %610 = vmatpush.msra.mxu0 %v609
      %v611 = vand.u32 %v422, 4294901760
      %612 = vmatpush.msra.mxu0 %v611
      %v613 = vand.u32 %v419, 4294901760
      %614 = vmatpush.msra.mxu0 %v613
      %v615 = vand.u32 %v448, 4294901760
      %v616 = vsub.f32 %v448, %v615
      %v617 = vand.u32 %v616, 4294901760
      %618 = vmatmul.f32.gmra.mxu0 %v617
      %v619 = vpop.f32.mrf.mxu0
      %v620 = vadd.f32 %v588, %v619
      %621 = vdwg.mxu0
      %622 = vmatpush.msra.mxu0 0.0
      %623 = vmatpush.msra.mxu0 0.0
      %624 = vmatpush.msra.mxu0 0.0
      %625 = vmatpush.msra.mxu0 0.0
      %626 = vmatpush.msra.mxu0 0.0
      %627 = vmatpush.msra.mxu0 0.0
      %628 = vmatpush.msra.mxu0 0.0
      %v629 = vand.u32 %v443, 4294901760
      %v630 = vsub.f32 %v443, %v629
      %v631 = vand.u32 %v630, 4294901760
      %632 = vmatpush.msra.mxu0 %v631
      %v633 = vand.u32 %v440, 4294901760
      %v634 = vsub.f32 %v440, %v633
      %v635 = vand.u32 %v634, 4294901760
      %636 = vmatpush.msra.mxu0 %v635
      %v637 = vand.u32 %v437, 4294901760
      %v638 = vsub.f32 %v437, %v637
      %v639 = vand.u32 %v638, 4294901760
      %640 = vmatpush.msra.mxu0 %v639
      %v641 = vand.u32 %v434, 4294901760
      %v642 = vsub.f32 %v434, %v641
      %v643 = vand.u32 %v642, 4294901760
      %644 = vmatpush.msra.mxu0 %v643
      %v645 = vand.u32 %v431, 4294901760
      %v646 = vsub.f32 %v431, %v645
      %v647 = vand.u32 %v646, 4294901760
      %648 = vmatpush.msra.mxu0 %v647
      %v649 = vand.u32 %v428, 4294901760
      %v650 = vsub.f32 %v428, %v649
      %v651 = vand.u32 %v650, 4294901760
      %652 = vmatpush.msra.mxu0 %v651
      %v653 = vand.u32 %v425, 4294901760
      %v654 = vsub.f32 %v425, %v653
      %v655 = vand.u32 %v654, 4294901760
      %656 = vmatpush.msra.mxu0 %v655
      %v657 = vand.u32 %v422, 4294901760
      %v658 = vsub.f32 %v422, %v657
      %v659 = vand.u32 %v658, 4294901760
      %660 = vmatpush.msra.mxu0 %v659
      %v661 = vand.u32 %v419, 4294901760
      %v662 = vsub.f32 %v419, %v661
      %v663 = vand.u32 %v662, 4294901760
      %664 = vmatpush.msra.mxu0 %v663
      %v665 = vand.u32 %v448, 4294901760
      %666 = vmatmul.f32.gmra.mxu0 %v665
      %v667 = vpop.f32.mrf.mxu0
      %v668 = vadd.f32 %v620, %v667
      %669 = vdwg.mxu0
      %670 = vmatpush.msra.mxu0 0.0
      %671 = vmatpush.msra.mxu0 0.0
      %672 = vmatpush.msra.mxu0 0.0
      %673 = vmatpush.msra.mxu0 0.0
      %674 = vmatpush.msra.mxu0 0.0
      %675 = vmatpush.msra.mxu0 0.0
      %676 = vmatpush.msra.mxu0 0.0
      %v677 = vand.u32 %v443, 4294901760
      %678 = vmatpush.msra.mxu0 %v677
      %v679 = vand.u32 %v440, 4294901760
      %680 = vmatpush.msra.mxu0 %v679
      %v681 = vand.u32 %v437, 4294901760
      %682 = vmatpush.msra.mxu0 %v681
      %v683 = vand.u32 %v434, 4294901760
      %684 = vmatpush.msra.mxu0 %v683
      %v685 = vand.u32 %v431, 4294901760
      %686 = vmatpush.msra.mxu0 %v685
      %v687 = vand.u32 %v428, 4294901760
      %688 = vmatpush.msra.mxu0 %v687
      %v689 = vand.u32 %v425, 4294901760
      %690 = vmatpush.msra.mxu0 %v689
      %v691 = vand.u32 %v422, 4294901760
      %692 = vmatpush.msra.mxu0 %v691
      %v693 = vand.u32 %v419, 4294901760
      %694 = vmatpush.msra.mxu0 %v693
      %v695 = vand.u32 %v448, 4294901760
      %696 = vmatmul.f32.gmra.mxu0 %v695
      %v697 = vpop.f32.mrf.mxu0
      %v698 = vadd.f32 %v668, %v697
      %699 = vdwg.mxu0
      %700 = vmatpush.msra.mxu0 0.0
      %701 = vmatpush.msra.mxu0 0.0
      %702 = vmatpush.msra.mxu0 0.0
      %703 = vmatpush.msra.mxu0 0.0
      %704 = vmatpush.msra.mxu0 0.0
      %705 = vmatpush.msra.mxu0 0.0
      %706 = vmatpush.msra.mxu0 0.0
      %v707 = vand.u32 %v444, 4294901760
      %708 = vmatpush.msra.mxu0 %v707
      %v709 = vand.u32 %v441, 4294901760
      %710 = vmatpush.msra.mxu0 %v709
      %v711 = vand.u32 %v438, 4294901760
      %712 = vmatpush.msra.mxu0 %v711
      %v713 = vand.u32 %v435, 4294901760
      %714 = vmatpush.msra.mxu0 %v713
      %v715 = vand.u32 %v432, 4294901760
      %716 = vmatpush.msra.mxu0 %v715
      %v717 = vand.u32 %v429, 4294901760
      %718 = vmatpush.msra.mxu0 %v717
      %v719 = vand.u32 %v426, 4294901760
      %720 = vmatpush.msra.mxu0 %v719
      %v721 = vand.u32 %v423, 4294901760
      %722 = vmatpush.msra.mxu0 %v721
      %v723 = vand.u32 %v420, 4294901760
      %724 = vmatpush.msra.mxu0 %v723
      %v725 = vand.u32 %v448, 4294901760
      %v726 = vsub.f32 %v448, %v725
      %v727 = vand.u32 %v726, 4294901760
      %v728 = vsub.f32 %v726, %v727
      %v729 = vand.u32 %v728, 4294901760
      %730 = vmatmul.f32.gmra.mxu0 %v729
      %v731 = vpop.f32.mrf.mxu0
      %v732 = vadd.f32 0.0, %v731
      %733 = vdwg.mxu0
      %734 = vmatpush.msra.mxu0 0.0
      %735 = vmatpush.msra.mxu0 0.0
      %736 = vmatpush.msra.mxu0 0.0
      %737 = vmatpush.msra.mxu0 0.0
      %738 = vmatpush.msra.mxu0 0.0
      %739 = vmatpush.msra.mxu0 0.0
      %740 = vmatpush.msra.mxu0 0.0
      %v741 = vand.u32 %v444, 4294901760
      %v742 = vsub.f32 %v444, %v741
      %v743 = vand.u32 %v742, 4294901760
      %v744 = vsub.f32 %v742, %v743
      %v745 = vand.u32 %v744, 4294901760
      %746 = vmatpush.msra.mxu0 %v745
      %v747 = vand.u32 %v441, 4294901760
      %v748 = vsub.f32 %v441, %v747
      %v749 = vand.u32 %v748, 4294901760
      %v750 = vsub.f32 %v748, %v749
      %v751 = vand.u32 %v750, 4294901760
      %752 = vmatpush.msra.mxu0 %v751
      %v753 = vand.u32 %v438, 4294901760
      %v754 = vsub.f32 %v438, %v753
      %v755 = vand.u32 %v754, 4294901760
      %v756 = vsub.f32 %v754, %v755
      %v757 = vand.u32 %v756, 4294901760
      %758 = vmatpush.msra.mxu0 %v757
      %v759 = vand.u32 %v435, 4294901760
      %v760 = vsub.f32 %v435, %v759
      %v761 = vand.u32 %v760, 4294901760
      %v762 = vsub.f32 %v760, %v761
      %v763 = vand.u32 %v762, 4294901760
      %764 = vmatpush.msra.mxu0 %v763
      %v765 = vand.u32 %v432, 4294901760
      %v766 = vsub.f32 %v432, %v765
      %v767 = vand.u32 %v766, 4294901760
      %v768 = vsub.f32 %v766, %v767
      %v769 = vand.u32 %v768, 4294901760
      %770 = vmatpush.msra.mxu0 %v769
      %v771 = vand.u32 %v429, 4294901760
      %v772 = vsub.f32 %v429, %v771
      %v773 = vand.u32 %v772, 4294901760
      %v774 = vsub.f32 %v772, %v773
      %v775 = vand.u32 %v774, 4294901760
      %776 = vmatpush.msra.mxu0 %v775
      %v777 = vand.u32 %v426, 4294901760
      %v778 = vsub.f32 %v426, %v777
      %v779 = vand.u32 %v778, 4294901760
      %v780 = vsub.f32 %v778, %v779
      %v781 = vand.u32 %v780, 4294901760
      %782 = vmatpush.msra.mxu0 %v781
      %v783 = vand.u32 %v423, 4294901760
      %v784 = vsub.f32 %v423, %v783
      %v785 = vand.u32 %v784, 4294901760
      %v786 = vsub.f32 %v784, %v785
      %v787 = vand.u32 %v786, 4294901760
      %788 = vmatpush.msra.mxu0 %v787
      %v789 = vand.u32 %v420, 4294901760
      %v790 = vsub.f32 %v420, %v789
      %v791 = vand.u32 %v790, 4294901760
      %v792 = vsub.f32 %v790, %v791
      %v793 = vand.u32 %v792, 4294901760
      %794 = vmatpush.msra.mxu0 %v793
      %v795 = vand.u32 %v448, 4294901760
      %796 = vmatmul.f32.gmra.mxu0 %v795
      %v797 = vpop.f32.mrf.mxu0
      %v798 = vadd.f32 %v732, %v797
      %799 = vdwg.mxu0
      %800 = vmatpush.msra.mxu0 0.0
      %801 = vmatpush.msra.mxu0 0.0
      %802 = vmatpush.msra.mxu0 0.0
      %803 = vmatpush.msra.mxu0 0.0
      %804 = vmatpush.msra.mxu0 0.0
      %805 = vmatpush.msra.mxu0 0.0
      %806 = vmatpush.msra.mxu0 0.0
      %v807 = vand.u32 %v444, 4294901760
      %v808 = vsub.f32 %v444, %v807
      %809 = vmatpush.msra.mxu0 %v808
      %v810 = vand.u32 %v441, 4294901760
      %v811 = vsub.f32 %v441, %v810
      %812 = vmatpush.msra.mxu0 %v811
      %v813 = vand.u32 %v438, 4294901760
      %v814 = vsub.f32 %v438, %v813
      %815 = vmatpush.msra.mxu0 %v814
      %v816 = vand.u32 %v435, 4294901760
      %v817 = vsub.f32 %v435, %v816
      %818 = vmatpush.msra.mxu0 %v817
      %v819 = vand.u32 %v432, 4294901760
      %v820 = vsub.f32 %v432, %v819
      %821 = vmatpush.msra.mxu0 %v820
      %v822 = vand.u32 %v429, 4294901760
      %v823 = vsub.f32 %v429, %v822
      %824 = vmatpush.msra.mxu0 %v823
      %v825 = vand.u32 %v426, 4294901760
      %v826 = vsub.f32 %v426, %v825
      %827 = vmatpush.msra.mxu0 %v826
      %v828 = vand.u32 %v423, 4294901760
      %v829 = vsub.f32 %v423, %v828
      %830 = vmatpush.msra.mxu0 %v829
      %v831 = vand.u32 %v420, 4294901760
      %v832 = vsub.f32 %v420, %v831
      %833 = vmatpush.msra.mxu0 %v832
      %v834 = vand.u32 %v448, 4294901760
      %v835 = vsub.f32 %v448, %v834
      %836 = vmatmul.f32.gmra.mxu0 %v835
      %v837 = vpop.f32.mrf.mxu0
      %v838 = vadd.f32 %v798, %v837
      %839 = vdwg.mxu0
      %840 = vmatpush.msra.mxu0 0.0
      %841 = vmatpush.msra.mxu0 0.0
      %842 = vmatpush.msra.mxu0 0.0
      %843 = vmatpush.msra.mxu0 0.0
      %844 = vmatpush.msra.mxu0 0.0
      %845 = vmatpush.msra.mxu0 0.0
      %846 = vmatpush.msra.mxu0 0.0
      %v847 = vand.u32 %v444, 4294901760
      %848 = vmatpush.msra.mxu0 %v847
      %v849 = vand.u32 %v441, 4294901760
      %850 = vmatpush.msra.mxu0 %v849
      %v851 = vand.u32 %v438, 4294901760
      %852 = vmatpush.msra.mxu0 %v851
      %v853 = vand.u32 %v435, 4294901760
      %854 = vmatpush.msra.mxu0 %v853
      %v855 = vand.u32 %v432, 4294901760
      %856 = vmatpush.msra.mxu0 %v855
      %v857 = vand.u32 %v429, 4294901760
      %858 = vmatpush.msra.mxu0 %v857
      %v859 = vand.u32 %v426, 4294901760
      %860 = vmatpush.msra.mxu0 %v859
      %v861 = vand.u32 %v423, 4294901760
      %862 = vmatpush.msra.mxu0 %v861
      %v863 = vand.u32 %v420, 4294901760
      %864 = vmatpush.msra.mxu0 %v863
      %v865 = vand.u32 %v448, 4294901760
      %v866 = vsub.f32 %v448, %v865
      %v867 = vand.u32 %v866, 4294901760
      %868 = vmatmul.f32.gmra.mxu0 %v867
      %v869 = vpop.f32.mrf.mxu0
      %v870 = vadd.f32 %v838, %v869
      %871 = vdwg.mxu0
      %872 = vmatpush.msra.mxu0 0.0
      %873 = vmatpush.msra.mxu0 0.0
      %874 = vmatpush.msra.mxu0 0.0
      %875 = vmatpush.msra.mxu0 0.0
      %876 = vmatpush.msra.mxu0 0.0
      %877 = vmatpush.msra.mxu0 0.0
      %878 = vmatpush.msra.mxu0 0.0
      %v879 = vand.u32 %v444, 4294901760
      %v880 = vsub.f32 %v444, %v879
      %v881 = vand.u32 %v880, 4294901760
      %882 = vmatpush.msra.mxu0 %v881
      %v883 = vand.u32 %v441, 4294901760
      %v884 = vsub.f32 %v441, %v883
      %v885 = vand.u32 %v884, 4294901760
      %886 = vmatpush.msra.mxu0 %v885
      %v887 = vand.u32 %v438, 4294901760
      %v888 = vsub.f32 %v438, %v887
      %v889 = vand.u32 %v888, 4294901760
      %890 = vmatpush.msra.mxu0 %v889
      %v891 = vand.u32 %v435, 4294901760
      %v892 = vsub.f32 %v435, %v891
      %v893 = vand.u32 %v892, 4294901760
      %894 = vmatpush.msra.mxu0 %v893
      %v895 = vand.u32 %v432, 4294901760
      %v896 = vsub.f32 %v432, %v895
      %v897 = vand.u32 %v896, 4294901760
      %898 = vmatpush.msra.mxu0 %v897
      %v899 = vand.u32 %v429, 4294901760
      %v900 = vsub.f32 %v429, %v899
      %v901 = vand.u32 %v900, 4294901760
      %902 = vmatpush.msra.mxu0 %v901
      %v903 = vand.u32 %v426, 4294901760
      %v904 = vsub.f32 %v426, %v903
      %v905 = vand.u32 %v904, 4294901760
      %906 = vmatpush.msra.mxu0 %v905
      %v907 = vand.u32 %v423, 4294901760
      %v908 = vsub.f32 %v423, %v907
      %v909 = vand.u32 %v908, 4294901760
      %910 = vmatpush.msra.mxu0 %v909
      %v911 = vand.u32 %v420, 4294901760
      %v912 = vsub.f32 %v420, %v911
      %v913 = vand.u32 %v912, 4294901760
      %914 = vmatpush.msra.mxu0 %v913
      %v915 = vand.u32 %v448, 4294901760
      %916 = vmatmul.f32.gmra.mxu0 %v915
      %v917 = vpop.f32.mrf.mxu0
      %v918 = vadd.f32 %v870, %v917
      %919 = vdwg.mxu0
      %920 = vmatpush.msra.mxu0 0.0
      %921 = vmatpush.msra.mxu0 0.0
      %922 = vmatpush.msra.mxu0 0.0
      %923 = vmatpush.msra.mxu0 0.0
      %924 = vmatpush.msra.mxu0 0.0
      %925 = vmatpush.msra.mxu0 0.0
      %926 = vmatpush.msra.mxu0 0.0
      %v927 = vand.u32 %v444, 4294901760
      %928 = vmatpush.msra.mxu0 %v927
      %v929 = vand.u32 %v441, 4294901760
      %930 = vmatpush.msra.mxu0 %v929
      %v931 = vand.u32 %v438, 4294901760
      %932 = vmatpush.msra.mxu0 %v931
      %v933 = vand.u32 %v435, 4294901760
      %934 = vmatpush.msra.mxu0 %v933
      %v935 = vand.u32 %v432, 4294901760
      %936 = vmatpush.msra.mxu0 %v935
      %v937 = vand.u32 %v429, 4294901760
      %938 = vmatpush.msra.mxu0 %v937
      %v939 = vand.u32 %v426, 4294901760
      %940 = vmatpush.msra.mxu0 %v939
      %v941 = vand.u32 %v423, 4294901760
      %942 = vmatpush.msra.mxu0 %v941
      %v943 = vand.u32 %v420, 4294901760
      %944 = vmatpush.msra.mxu0 %v943
      %v945 = vand.u32 %v448, 4294901760
      %946 = vmatmul.f32.gmra.mxu0 %v945
      %v947 = vpop.f32.mrf.mxu0
      %v948 = vadd.f32 %v918, %v947
      %949 = vdwg.mxu0
      %950 = vmatpush.msra.mxu0 0.0
      %951 = vmatpush.msra.mxu0 0.0
      %952 = vmatpush.msra.mxu0 0.0
      %953 = vmatpush.msra.mxu0 0.0
      %954 = vmatpush.msra.mxu0 0.0
      %955 = vmatpush.msra.mxu0 0.0
      %956 = vmatpush.msra.mxu0 0.0
      %v957 = vand.u32 %v445, 4294901760
      %958 = vmatpush.msra.mxu0 %v957
      %v959 = vand.u32 %v442, 4294901760
      %960 = vmatpush.msra.mxu0 %v959
      %v961 = vand.u32 %v439, 4294901760
      %962 = vmatpush.msra.mxu0 %v961
      %v963 = vand.u32 %v436, 4294901760
      %964 = vmatpush.msra.mxu0 %v963
      %v965 = vand.u32 %v433, 4294901760
      %966 = vmatpush.msra.mxu0 %v965
      %v967 = vand.u32 %v430, 4294901760
      %968 = vmatpush.msra.mxu0 %v967
      %v969 = vand.u32 %v427, 4294901760
      %970 = vmatpush.msra.mxu0 %v969
      %v971 = vand.u32 %v424, 4294901760
      %972 = vmatpush.msra.mxu0 %v971
      %v973 = vand.u32 %v421, 4294901760
      %974 = vmatpush.msra.mxu0 %v973
      %v975 = vand.u32 %v448, 4294901760
      %v976 = vsub.f32 %v448, %v975
      %v977 = vand.u32 %v976, 4294901760
      %v978 = vsub.f32 %v976, %v977
      %v979 = vand.u32 %v978, 4294901760
      %980 = vmatmul.f32.gmra.mxu0 %v979
      %v981 = vpop.f32.mrf.mxu0
      %v982 = vadd.f32 0.0, %v981
      %983 = vdwg.mxu0
      %984 = vmatpush.msra.mxu0 0.0
      %985 = vmatpush.msra.mxu0 0.0
      %986 = vmatpush.msra.mxu0 0.0
      %987 = vmatpush.msra.mxu0 0.0
      %988 = vmatpush.msra.mxu0 0.0
      %989 = vmatpush.msra.mxu0 0.0
      %990 = vmatpush.msra.mxu0 0.0
      %v991 = vand.u32 %v445, 4294901760
      %v992 = vsub.f32 %v445, %v991
      %v993 = vand.u32 %v992, 4294901760
      %v994 = vsub.f32 %v992, %v993
      %v995 = vand.u32 %v994, 4294901760
      %996 = vmatpush.msra.mxu0 %v995
      %v997 = vand.u32 %v442, 4294901760
      %v998 = vsub.f32 %v442, %v997
      %v999 = vand.u32 %v998, 4294901760
      %v1000 = vsub.f32 %v998, %v999
      %v1001 = vand.u32 %v1000, 4294901760
      %1002 = vmatpush.msra.mxu0 %v1001
      %v1003 = vand.u32 %v439, 4294901760
      %v1004 = vsub.f32 %v439, %v1003
      %v1005 = vand.u32 %v1004, 4294901760
      %v1006 = vsub.f32 %v1004, %v1005
      %v1007 = vand.u32 %v1006, 4294901760
      %1008 = vmatpush.msra.mxu0 %v1007
      %v1009 = vand.u32 %v436, 4294901760
      %v1010 = vsub.f32 %v436, %v1009
      %v1011 = vand.u32 %v1010, 4294901760
      %v1012 = vsub.f32 %v1010, %v1011
      %v1013 = vand.u32 %v1012, 4294901760
      %1014 = vmatpush.msra.mxu0 %v1013
      %v1015 = vand.u32 %v433, 4294901760
      %v1016 = vsub.f32 %v433, %v1015
      %v1017 = vand.u32 %v1016, 4294901760
      %v1018 = vsub.f32 %v1016, %v1017
      %v1019 = vand.u32 %v1018, 4294901760
      %1020 = vmatpush.msra.mxu0 %v1019
      %v1021 = vand.u32 %v430, 4294901760
      %v1022 = vsub.f32 %v430, %v1021
      %v1023 = vand.u32 %v1022, 4294901760
      %v1024 = vsub.f32 %v1022, %v1023
      %v1025 = vand.u32 %v1024, 4294901760
      %1026 = vmatpush.msra.mxu0 %v1025
      %v1027 = vand.u32 %v427, 4294901760
      %v1028 = vsub.f32 %v427, %v1027
      %v1029 = vand.u32 %v1028, 4294901760
      %v1030 = vsub.f32 %v1028, %v1029
      %v1031 = vand.u32 %v1030, 4294901760
      %1032 = vmatpush.msra.mxu0 %v1031
      %v1033 = vand.u32 %v424, 4294901760
      %v1034 = vsub.f32 %v424, %v1033
      %v1035 = vand.u32 %v1034, 4294901760
      %v1036 = vsub.f32 %v1034, %v1035
      %v1037 = vand.u32 %v1036, 4294901760
      %1038 = vmatpush.msra.mxu0 %v1037
      %v1039 = vand.u32 %v421, 4294901760
      %v1040 = vsub.f32 %v421, %v1039
      %v1041 = vand.u32 %v1040, 4294901760
      %v1042 = vsub.f32 %v1040, %v1041
      %v1043 = vand.u32 %v1042, 4294901760
      %1044 = vmatpush.msra.mxu0 %v1043
      %v1045 = vand.u32 %v448, 4294901760
      %1046 = vmatmul.f32.gmra.mxu0 %v1045
      %v1047 = vpop.f32.mrf.mxu0
      %v1048 = vadd.f32 %v982, %v1047
      %1049 = vdwg.mxu0
      %1050 = vmatpush.msra.mxu0 0.0
      %1051 = vmatpush.msra.mxu0 0.0
      %1052 = vmatpush.msra.mxu0 0.0
      %1053 = vmatpush.msra.mxu0 0.0
      %1054 = vmatpush.msra.mxu0 0.0
      %1055 = vmatpush.msra.mxu0 0.0
      %1056 = vmatpush.msra.mxu0 0.0
      %v1057 = vand.u32 %v445, 4294901760
      %v1058 = vsub.f32 %v445, %v1057
      %1059 = vmatpush.msra.mxu0 %v1058
      %v1060 = vand.u32 %v442, 4294901760
      %v1061 = vsub.f32 %v442, %v1060
      %1062 = vmatpush.msra.mxu0 %v1061
      %v1063 = vand.u32 %v439, 4294901760
      %v1064 = vsub.f32 %v439, %v1063
      %1065 = vmatpush.msra.mxu0 %v1064
      %v1066 = vand.u32 %v436, 4294901760
      %v1067 = vsub.f32 %v436, %v1066
      %1068 = vmatpush.msra.mxu0 %v1067
      %v1069 = vand.u32 %v433, 4294901760
      %v1070 = vsub.f32 %v433, %v1069
      %1071 = vmatpush.msra.mxu0 %v1070
      %v1072 = vand.u32 %v430, 4294901760
      %v1073 = vsub.f32 %v430, %v1072
      %1074 = vmatpush.msra.mxu0 %v1073
      %v1075 = vand.u32 %v427, 4294901760
      %v1076 = vsub.f32 %v427, %v1075
      %1077 = vmatpush.msra.mxu0 %v1076
      %v1078 = vand.u32 %v424, 4294901760
      %v1079 = vsub.f32 %v424, %v1078
      %1080 = vmatpush.msra.mxu0 %v1079
      %v1081 = vand.u32 %v421, 4294901760
      %v1082 = vsub.f32 %v421, %v1081
      %1083 = vmatpush.msra.mxu0 %v1082
      %v1084 = vand.u32 %v448, 4294901760
      %v1085 = vsub.f32 %v448, %v1084
      %1086 = vmatmul.f32.gmra.mxu0 %v1085
      %v1087 = vpop.f32.mrf.mxu0
      %v1088 = vadd.f32 %v1048, %v1087
      %1089 = vdwg.mxu0
      %1090 = vmatpush.msra.mxu0 0.0
      %1091 = vmatpush.msra.mxu0 0.0
      %1092 = vmatpush.msra.mxu0 0.0
      %1093 = vmatpush.msra.mxu0 0.0
      %1094 = vmatpush.msra.mxu0 0.0
      %1095 = vmatpush.msra.mxu0 0.0
      %1096 = vmatpush.msra.mxu0 0.0
      %v1097 = vand.u32 %v445, 4294901760
      %1098 = vmatpush.msra.mxu0 %v1097
      %v1099 = vand.u32 %v442, 4294901760
      %1100 = vmatpush.msra.mxu0 %v1099
      %v1101 = vand.u32 %v439, 4294901760
      %1102 = vmatpush.msra.mxu0 %v1101
      %v1103 = vand.u32 %v436, 4294901760
      %1104 = vmatpush.msra.mxu0 %v1103
      %v1105 = vand.u32 %v433, 4294901760
      %1106 = vmatpush.msra.mxu0 %v1105
      %v1107 = vand.u32 %v430, 4294901760
      %1108 = vmatpush.msra.mxu0 %v1107
      %v1109 = vand.u32 %v427, 4294901760
      %1110 = vmatpush.msra.mxu0 %v1109
      %v1111 = vand.u32 %v424, 4294901760
      %1112 = vmatpush.msra.mxu0 %v1111
      %v1113 = vand.u32 %v421, 4294901760
      %1114 = vmatpush.msra.mxu0 %v1113
      %v1115 = vand.u32 %v448, 4294901760
      %v1116 = vsub.f32 %v448, %v1115
      %v1117 = vand.u32 %v1116, 4294901760
      %1118 = vmatmul.f32.gmra.mxu0 %v1117
      %v1119 = vpop.f32.mrf.mxu0
      %v1120 = vadd.f32 %v1088, %v1119
      %1121 = vdwg.mxu0
      %1122 = vmatpush.msra.mxu0 0.0
      %1123 = vmatpush.msra.mxu0 0.0
      %1124 = vmatpush.msra.mxu0 0.0
      %1125 = vmatpush.msra.mxu0 0.0
      %1126 = vmatpush.msra.mxu0 0.0
      %1127 = vmatpush.msra.mxu0 0.0
      %1128 = vmatpush.msra.mxu0 0.0
      %v1129 = vand.u32 %v445, 4294901760
      %v1130 = vsub.f32 %v445, %v1129
      %v1131 = vand.u32 %v1130, 4294901760
      %1132 = vmatpush.msra.mxu0 %v1131
      %v1133 = vand.u32 %v442, 4294901760
      %v1134 = vsub.f32 %v442, %v1133
      %v1135 = vand.u32 %v1134, 4294901760
      %1136 = vmatpush.msra.mxu0 %v1135
      %v1137 = vand.u32 %v439, 4294901760
      %v1138 = vsub.f32 %v439, %v1137
      %v1139 = vand.u32 %v1138, 4294901760
      %1140 = vmatpush.msra.mxu0 %v1139
      %v1141 = vand.u32 %v436, 4294901760
      %v1142 = vsub.f32 %v436, %v1141
      %v1143 = vand.u32 %v1142, 4294901760
      %1144 = vmatpush.msra.mxu0 %v1143
      %v1145 = vand.u32 %v433, 4294901760
      %v1146 = vsub.f32 %v433, %v1145
      %v1147 = vand.u32 %v1146, 4294901760
      %1148 = vmatpush.msra.mxu0 %v1147
      %v1149 = vand.u32 %v430, 4294901760
      %v1150 = vsub.f32 %v430, %v1149
      %v1151 = vand.u32 %v1150, 4294901760
      %1152 = vmatpush.msra.mxu0 %v1151
      %v1153 = vand.u32 %v427, 4294901760
      %v1154 = vsub.f32 %v427, %v1153
      %v1155 = vand.u32 %v1154, 4294901760
      %1156 = vmatpush.msra.mxu0 %v1155
      %v1157 = vand.u32 %v424, 4294901760
      %v1158 = vsub.f32 %v424, %v1157
      %v1159 = vand.u32 %v1158, 4294901760
      %1160 = vmatpush.msra.mxu0 %v1159
      %v1161 = vand.u32 %v421, 4294901760
      %v1162 = vsub.f32 %v421, %v1161
      %v1163 = vand.u32 %v1162, 4294901760
      %1164 = vmatpush.msra.mxu0 %v1163
      %v1165 = vand.u32 %v448, 4294901760
      %1166 = vmatmul.f32.gmra.mxu0 %v1165
      %v1167 = vpop.f32.mrf.mxu0
      %v1168 = vadd.f32 %v1120, %v1167
      %1169 = vdwg.mxu0
      %1170 = vmatpush.msra.mxu0 0.0
      %1171 = vmatpush.msra.mxu0 0.0
      %1172 = vmatpush.msra.mxu0 0.0
      %1173 = vmatpush.msra.mxu0 0.0
      %1174 = vmatpush.msra.mxu0 0.0
      %1175 = vmatpush.msra.mxu0 0.0
      %1176 = vmatpush.msra.mxu0 0.0
      %v1177 = vand.u32 %v445, 4294901760
      %1178 = vmatpush.msra.mxu0 %v1177
      %v1179 = vand.u32 %v442, 4294901760
      %1180 = vmatpush.msra.mxu0 %v1179
      %v1181 = vand.u32 %v439, 4294901760
      %1182 = vmatpush.msra.mxu0 %v1181
      %v1183 = vand.u32 %v436, 4294901760
      %1184 = vmatpush.msra.mxu0 %v1183
      %v1185 = vand.u32 %v433, 4294901760
      %1186 = vmatpush.msra.mxu0 %v1185
      %v1187 = vand.u32 %v430, 4294901760
      %1188 = vmatpush.msra.mxu0 %v1187
      %v1189 = vand.u32 %v427, 4294901760
      %1190 = vmatpush.msra.mxu0 %v1189
      %v1191 = vand.u32 %v424, 4294901760
      %1192 = vmatpush.msra.mxu0 %v1191
      %v1193 = vand.u32 %v421, 4294901760
      %1194 = vmatpush.msra.mxu0 %v1193
      %v1195 = vand.u32 %v448, 4294901760
      %1196 = vmatmul.f32.gmra.mxu0 %v1195
      %v1197 = vpop.f32.mrf.mxu0
      %v1198 = vadd.f32 %v1168, %v1197
      %1199 = vdwg.mxu0
      %v1200 = vld [vmem:[%s3] sm:$0x7]
      %v1202 = vperm.slane %v1200, 0
      %v1203 = vperm.slane %v1200, 1
      %v1204 = vperm.slane %v1200, 2
      %1205 = vrot.lane.b32.xlu0 %v1202, 109
      %v1206 = vpop.permute.xlu0 %1205
      %1207 = vrot.lane.b32.xlu0 %v1203, 109
      %v1208 = vpop.permute.xlu0 %1207
      %1209 = vrot.lane.b32.xlu0 %v1204, 109
      %v1210 = vpop.permute.xlu0 %1209
      %v1211 = vsel %vm325, %v1206, %v1208
      %v1212 = vsel %vm325, %v1208, %v1210
      %v1216 = vmul.f32 %v698, %v1211
      %v1217 = vmul.f32 %v948, %v1212
      %v1218 = vmul.f32 %v1198, %v1210
      %1219 = vst [vmem:[%s197] sm:$0xff] 0.0
      %1220 = vst [vmem:[%s197 + $0x8] sm:$0xff] 0.0
      %1221 = vst [vmem:[%s197 + $0x10] sm:$0xff] 0.0
      %1225 = vrot.lane.b32.xlu0 %v1216, 19
      %v1226 = vpop.permute.xlu0 %1225
      %1227 = vrot.lane.b32.xlu0 %v1217, 19
      %v1228 = vpop.permute.xlu0 %1227
      %1229 = vrot.lane.b32.xlu0 %v1218, 19
      %v1230 = vpop.permute.xlu0 %1229
      %vm1231 = vcmask 154624
      %v1232 = vsel %vm1231, %v1226, %v1228
      %v1233 = vsel %vm1231, %v1228, %v1230
      %vm1237 = vcmask 1047704
      %1238 = vst.msk [vmem:[%s197] sm:$0xff] %vm1237, %v1226
      %1239 = vst [vmem:[%s197 + $0x8] sm:$0xff] %v1232
      %vm1240 = vcmask 416768
      %1241 = vst.msk [vmem:[%s197 + $0x10] sm:$0xff] %vm1240, %v1233
      %p1242 = scmp.lt.s32.totalorder %s15, 1
      %s1243 = scalar_select %p1242, %s15, 1
      %s1244 = smul.addr %s1243, 3
      %s1245 = smul.addr %s1244, 8
      %s1246 = scalar_lea.vmem %s4, %s1245
      // Predicated region
      $region37: #{unet2d_forward.12} parent=35 // pred_check
        %p1247 = pneg %p122
      $region38: #{unet2d_forward.12} parent=35 // pred_check_branch
        %1249 = sbr.rel (%p1247) target = $region40
      $region39: #{unet2d_forward.12} parent=35 // pred_region
        _
      $region40: #{unet2d_forward.12} parent=35 // pred_fallthru
        _
    $region36: #{unet2d_forward.12} parent=5 // pred_fallthru
      _
    %p1250 = scmp.le.s32.totalorder 2, %s10
    // Predicated region
    $region41: #{unet2d_forward.12} parent=5 // pred_check
      %p1251 = pneg %p1250
    $region42: #{unet2d_forward.12} parent=5 // pred_check_branch
      %1253 = sbr.rel (%p1251) target = $region44
    $region43: #{unet2d_forward.12} parent=5 // pred_region
      %s1254 = ssub.s32 %s10, 2
      // Predicated region
      $region45: #{unet2d_forward.12} parent=43 // pred_check
        %p1255 = pneg %p128
      $region46: #{unet2d_forward.12} parent=43 // pred_check_branch
        %1257 = sbr.rel (%p1255) target = $region48
      $region47: #{unet2d_forward.12} parent=43 // pred_region
        %p1258 = scmp.lt.s32.totalorder %s16, 1
        %s1259 = scalar_select %p1258, %s16, 1
        %s1260 = smul.addr %s1259, 3
        %s1261 = smul.addr %s1260, 8
        %s1262 = scalar_lea.vmem %s4, %s1261
      $region48: #{unet2d_forward.12} parent=43 // pred_fallthru
        _
    $region44: #{unet2d_forward.12} parent=5 // pred_fallthru
      _
  $region6: #{unet2d_forward.12} parent=0 // loop_footer
    %s14 = sadd.s32 1, %s10
  $region7: #{unet2d_forward.12} parent=0 // loop_footer_branch
    %9 = sbr.rel target = $region3
  $region8: #{unet2d_forward.12} parent=0 // loop_exit
    _

// kernel: unet2d_forward.11
$region0: #{unet2d_forward.11}
  #allocation0 [shape = 'u32[]', space=smem, size = 0x4, offset = 0x4, fixed_abs, tag = 'smem constant byte address 0x4 - core index']
  #allocation1 [shape = 'u32[72,128]{1,0:T(1,128)}', space=vmem, size = 0x9000, scoped, tag = 'internal scratch']
  #allocation2 [shape = 'f32[8,384]{1,0:T(8,128)}', space=vmem, size = 0x3000, scoped, tag = 'scratch operand']
  #allocation3 [shape = 'f32[72,288]{1,0:T(8,128)}', space=vmem, size = 0x1b000, scoped, tag = 'scratch operand']
  %s0 = inlined_call_operand.vmem [shape: f32[2,8,384], index: 0, kind: input, shape index: {}]
  %s1 = inlined_call_operand.vmem [shape: f32[2,8,1], index: 1, kind: input, shape index: {}]
  %s2 = inlined_call_operand.vmem [shape: f32[8,72], index: 2, kind: input, shape index: {}]
  %s3 = inlined_call_operand.vmem [shape: f32[1,384], index: 3, kind: input, shape index: {}]
  %s4 = inlined_call_operand.vmem [shape: f32[2,8,384], index: 4, kind: output, shape index: {0}]
  %s5 = inlined_call_operand.vmem [shape: f32[2,2,8,1], index: 5, kind: output, shape index: {1}]
  %6 = xla_tuple %s4, %s5
  %s7 = sld [smem:[#allocation0]]
  $region57: #{unet2d_forward.11} parent=0
    _
  %s9 = ssub.s32 1, %s7
  %s10 = scalar_select 0, %s9, %s7
  loop: start=0, step=1, limit=4
  $region2: #{unet2d_forward.11} parent=0 // loop_pre_header
    _
  $region3: #{unet2d_forward.11} parent=0 // loop_header
    %s12 = sphi 0, %s16
    %p13 = scmp.ge.s32.totalorder %s12, 4
    %s22 = sphi 0, %s24
    %s25 = sphi 0, %s22
    %s26 = sphi 0, %s25
    %s42 = sphi 0, %s26
    %s46 = sphi 0, %s46
    %s48 = sphi 0, %s46
    %s49 = sphi 0, %s48
    %s63 = sphi 0, %s49
    %s67 = sphi 0, %s67
    %s69 = sphi 0, %s67
    %s70 = sphi 0, %s69
    %s84 = sphi 0, %s70
    %s88 = sphi 0, %s88
    %s90 = sphi 0, %s88
    %s91 = sphi 0, %s90
    %s105 = sphi 0, %s91
    %s111 = sphi 0, %s113
    %s114 = sphi 0, %s111
    %s115 = sphi 0, %s114
    %s131 = sphi 0, %s115
    %s137 = sphi 0, %s139
    %s140 = sphi 0, %s137
    %s141 = sphi 0, %s140
    %s157 = sphi 0, %s141
  $region4: #{unet2d_forward.11} parent=0 // loop_header_branch
    %15 = sbr.rel (%p13) target = $region8
  $region5: #{unet2d_forward.11} parent=0 // loop_body
    %s17 = ssub.s32 %s12, 1
    %s18 = ssub.s32 %s12, 2
    %s19 = sadd.s32 %s12, 1
    %s20 = ssub.s32 %s12, %s19
    %p21 = scmp.eq.s32.totalorder %s20, 0
    %s23 = sadd.s32 %s22, 1
    %s24 = scalar_select %p21, %s22, %s23
    %p27 = pneg %p21
    %p28 = scmp.eq.s32.totalorder %s12, 1
    %p29 = por %p27, %p28
    %p30 = scmp.ne.s32.totalorder %s22, %s25
    %p31 = scmp.eq.s32.totalorder %s12, 0
    %p32 = por %p30, %p31
    %p33 = scmp.ne.s32.totalorder %s22, %s25
    %p34 = scmp.eq.s32.totalorder %s17, 1
    %p35 = por %p33, %p34
    %p36 = scmp.ne.s32.totalorder %s25, %s26
    %p37 = scmp.eq.s32.totalorder %s17, 0
    %p38 = por %p36, %p37
    %p39 = scmp.ne.s32.totalorder %s25, %s26
    %p40 = scmp.eq.s32.totalorder %s18, 1
    %p41 = por %p39, %p40
    %p43 = scmp.ne.s32.totalorder %s26, %s42
    %p44 = scmp.eq.s32.totalorder %s18, 0
    %p45 = por %p43, %p44
    %s47 = sadd.s32 %s46, 1
    %p50 = scmp.eq.s32.totalorder %s12, 1
    %p51 = scmp.ne.s32.totalorder %s46, %s48
    %p52 = scmp.eq.s32.totalorder %s12, 0
    %p53 = por %p51, %p52
    %p54 = scmp.ne.s32.totalorder %s46, %s48
    %p55 = scmp.eq.s32.totalorder %s17, 1
    %p56 = por %p54, %p55
    %p57 = scmp.ne.s32.totalorder %s48, %s49
    %p58 = scmp.eq.s32.totalorder %s17, 0
    %p59 = por %p57, %p58
    %p60 = scmp.ne.s32.totalorder %s48, %s49
    %p61 = scmp.eq.s32.totalorder %s18, 1
    %p62 = por %p60, %p61
    %p64 = scmp.ne.s32.totalorder %s49, %s63
    %p65 = scmp.eq.s32.totalorder %s18, 0
    %p66 = por %p64, %p65
    %s68 = sadd.s32 %s67, 1
    %p71 = scmp.eq.s32.totalorder %s12, 1
    %p72 = scmp.ne.s32.totalorder %s67, %s69
    %p73 = scmp.eq.s32.totalorder %s12, 0
    %p74 = por %p72, %p73
    %p75 = scmp.ne.s32.totalorder %s67, %s69
    %p76 = scmp.eq.s32.totalorder %s17, 1
    %p77 = por %p75, %p76
    %p78 = scmp.ne.s32.totalorder %s69, %s70
    %p79 = scmp.eq.s32.totalorder %s17, 0
    %p80 = por %p78, %p79
    %p81 = scmp.ne.s32.totalorder %s69, %s70
    %p82 = scmp.eq.s32.totalorder %s18, 1
    %p83 = por %p81, %p82
    %p85 = scmp.ne.s32.totalorder %s70, %s84
    %p86 = scmp.eq.s32.totalorder %s18, 0
    %p87 = por %p85, %p86
    %s89 = sadd.s32 %s88, 1
    %p92 = scmp.eq.s32.totalorder %s12, 1
    %p93 = scmp.ne.s32.totalorder %s88, %s90
    %p94 = scmp.eq.s32.totalorder %s12, 0
    %p95 = por %p93, %p94
    %p96 = scmp.ne.s32.totalorder %s88, %s90
    %p97 = scmp.eq.s32.totalorder %s17, 1
    %p98 = por %p96, %p97
    %p99 = scmp.ne.s32.totalorder %s90, %s91
    %p100 = scmp.eq.s32.totalorder %s17, 0
    %p101 = por %p99, %p100
    %p102 = scmp.ne.s32.totalorder %s90, %s91
    %p103 = scmp.eq.s32.totalorder %s18, 1
    %p104 = por %p102, %p103
    %p106 = scmp.ne.s32.totalorder %s91, %s105
    %p107 = scmp.eq.s32.totalorder %s18, 0
    %p108 = por %p106, %p107
    %s109 = ssub.s32 %s12, %s19
    %p110 = scmp.eq.s32.totalorder %s109, 0
    %s112 = sadd.s32 %s111, 1
    %s113 = scalar_select %p110, %s111, %s112
    %p116 = pneg %p110
    %p117 = scmp.eq.s32.totalorder %s12, 1
    %p118 = por %p116, %p117
    %p119 = scmp.ne.s32.totalorder %s111, %s114
    %p120 = scmp.eq.s32.totalorder %s12, 0
    %p121 = por %p119, %p120
    %p122 = scmp.ne.s32.totalorder %s111, %s114
    %p123 = scmp.eq.s32.totalorder %s17, 1
    %p124 = por %p122, %p123
    %p125 = scmp.ne.s32.totalorder %s114, %s115
    %p126 = scmp.eq.s32.totalorder %s17, 0
    %p127 = por %p125, %p126
    %p128 = scmp.ne.s32.totalorder %s114, %s115
    %p129 = scmp.eq.s32.totalorder %s18, 1
    %p130 = por %p128, %p129
    %p132 = scmp.ne.s32.totalorder %s115, %s131
    %p133 = scmp.eq.s32.totalorder %s18, 0
    %p134 = por %p132, %p133
    %s135 = ssub.s32 %s12, %s19
    %p136 = scmp.eq.s32.totalorder %s135, 0
    %s138 = sadd.s32 %s137, 1
    %s139 = scalar_select %p136, %s137, %s138
    %p142 = pneg %p136
    %p143 = scmp.eq.s32.totalorder %s12, 1
    %p144 = por %p142, %p143
    %p145 = scmp.ne.s32.totalorder %s137, %s140
    %p146 = scmp.eq.s32.totalorder %s12, 0
    %p147 = por %p145, %p146
    %p148 = scmp.ne.s32.totalorder %s137, %s140
    %p149 = scmp.eq.s32.totalorder %s17, 1
    %p150 = por %p148, %p149
    %p151 = scmp.ne.s32.totalorder %s140, %s141
    %p152 = scmp.eq.s32.totalorder %s17, 0
    %p153 = por %p151, %p152
    %p154 = scmp.ne.s32.totalorder %s140, %s141
    %p155 = scmp.eq.s32.totalorder %s18, 1
    %p156 = por %p154, %p155
    %p158 = scmp.ne.s32.totalorder %s141, %s157
    %p159 = scmp.eq.s32.totalorder %s18, 0
    %p160 = por %p158, %p159
    %p161 = scmp.le.s32.totalorder 1, %s12
    %p162 = scmp.lt.s32.totalorder %s12, 3
    %p163 = pnand %p161, %p162
    %p164 = pneg %p163
    // Predicated region
    $region9: #{unet2d_forward.11} parent=5 // pred_check
      _
    $region10: #{unet2d_forward.11} parent=5 // pred_check_branch
      %166 = sbr.rel (%p163) target = $region12
    $region11: #{unet2d_forward.11} parent=5 // pred_region
      %s167 = ssub.s32 %s12, 1
      // Predicated region
      $region13: #{unet2d_forward.11} parent=11 // pred_check
        %p168 = pneg %p59
      $region14: #{unet2d_forward.11} parent=11 // pred_check_branch
        %170 = sbr.rel (%p168) target = $region16
      $region15: #{unet2d_forward.11} parent=11 // pred_region
        _
      $region16: #{unet2d_forward.11} parent=11 // pred_fallthru
        _
      // Predicated region
      $region17: #{unet2d_forward.11} parent=11 // pred_check
        %p171 = pneg %p80
      $region18: #{unet2d_forward.11} parent=11 // pred_check_branch
        %173 = sbr.rel (%p171) target = $region20
      $region19: #{unet2d_forward.11} parent=11 // pred_region
        _
      $region20: #{unet2d_forward.11} parent=11 // pred_fallthru
        _
      // Predicated region
      $region21: #{unet2d_forward.11} parent=11 // pred_check
        %p174 = pneg %p101
      $region22: #{unet2d_forward.11} parent=11 // pred_check_branch
        %176 = sbr.rel (%p174) target = $region24
      $region23: #{unet2d_forward.11} parent=11 // pred_region
        _
      $region24: #{unet2d_forward.11} parent=11 // pred_fallthru
        _
    $region12: #{unet2d_forward.11} parent=5 // pred_fallthru
      _
    %p177 = scmp.lt.s32.totalorder %s12, 2
    // Predicated region
    $region25: #{unet2d_forward.11} parent=5 // pred_check
      %p178 = pneg %p177
    $region26: #{unet2d_forward.11} parent=5 // pred_check_branch
      %180 = sbr.rel (%p178) target = $region28
    $region27: #{unet2d_forward.11} parent=5 // pred_region
      // Predicated region
      $region29: #{unet2d_forward.11} parent=27 // pred_check
        %p181 = pneg %p32
      $region30: #{unet2d_forward.11} parent=27 // pred_check_branch
        %183 = sbr.rel (%p181) target = $region32
      $region31: #{unet2d_forward.11} parent=27 // pred_region
        %p184 = scmp.lt.s32.totalorder %s12, 1
        %s185 = scalar_select %p184, %s12, 1
        %s186 = smul.addr %s185, 3
        %s187 = smul.addr %s186, 8
        %s188 = scalar_lea.vmem %s0, %s187
      $region32: #{unet2d_forward.11} parent=27 // pred_fallthru
        _
    $region28: #{unet2d_forward.11} parent=5 // pred_fallthru
      _
    %p189 = scmp.le.s32.totalorder 1, %s12
    %p190 = scmp.lt.s32.totalorder %s12, 3
    %p191 = pnand %p189, %p190
    %p192 = pneg %p191
    // Predicated region
    $region33: #{unet2d_forward.11} parent=5 // pred_check
      _
    $region34: #{unet2d_forward.11} parent=5 // pred_check_branch
      %194 = sbr.rel (%p191) target = $region36
    $region35: #{unet2d_forward.11} parent=5 // pred_region
      %s195 = ssub.s32 %s12, 1
      %p196 = scmp.lt.s32.totalorder %s17, 1
      %s197 = scalar_select %p196, %s17, 1
      %s198 = smul.addr %s197, 3
      %s199 = smul.addr %s198, 8
      %s200 = scalar_lea.vmem %s0, %s199
      %p201 = pneg %p38
      %p202 = pneg %p35
      %p203 = pneg %p59
      %p204 = pneg %p56
      %p205 = pneg %p80
      %p206 = pneg %p77
      %p207 = pneg %p101
      %p208 = pneg %p98
      %p209 = pneg %p127
      %p210 = pneg %p124
      %p211 = scmp.lt.s32.totalorder %s17, 1
      %s212 = scalar_select %p211, %s17, 1
      %s213 = smul.addr %s212, 3
      %s214 = smul.addr %s213, 8
      %s215 = scalar_lea.vmem %s4, %s214
      %p216 = pneg %p153
      %p217 = pneg %p150
      %p218 = scmp.lt.s32.totalorder %s17, 1
      %s219 = scalar_select %p218, %s17, 1
      %s220 = smul.addr %s219, 2
      %s221 = smul.addr %s220, 8
      %s222 = scalar_lea.vmem %s5, %s221
      %p223 = scmp.lt.s32.totalorder %s17, 1
      %s224 = scalar_select %p223, %s17, 1
      %s225 = smul.addr %s224, 3
      %s226 = smul.addr %s225, 8
      %s227 = scalar_lea.vmem %s0, %s226
      %p228 = scmp.lt.s32.totalorder %s17, 1
      %s229 = scalar_select %p228, %s17, 1
      %s230 = smul.addr %s229, 3
      %s231 = smul.addr %s230, 8
      %s232 = scalar_lea.vmem %s4, %s231
      %p233 = scmp.lt.s32.totalorder %s17, 1
      %s234 = scalar_select %p233, %s17, 1
      %s235 = smul.addr %s234, 2
      %s236 = smul.addr %s235, 8
      %s237 = scalar_lea.vmem %s5, %s236
      %v238 = vld [vmem:[%s3] sm:$0x7]
      %v239 = vld [vmem:[%s227] sm:$0xff]
      %v240 = vld [vmem:[%s227 + $0x8] sm:$0xff]
      %v241 = vld [vmem:[%s227 + $0x10] sm:$0xff]
      %v242 = vld [vmem:[%s1] sm:$0xff]
      %244 = vset.pattern.permute.xlu0 0
      %245 = vperm.xlu0 %244, %v242
      %v246 = vpop.permute.xlu0 %245
      %v248 = vmul.f32 %v239, %v246
      %v249 = vmul.f32 %v240, %v246
      %v250 = vmul.f32 %v241, %v246
      %s251 = scalar_lea.vmem %s1, 8
      %v252 = vld [vmem:[%s251] sm:$0xff]
      %254 = vset.pattern.permute.xlu0 0
      %255 = vperm.xlu0 %254, %v252
      %v256 = vpop.permute.xlu0 %255
      %v258 = vadd.f32 %v248, %v256
      %v259 = vadd.f32 %v249, %v256
      %v260 = vadd.f32 %v250, %v256
      %vm261 = vcmp.ge.f32.partialorder %v258, 0.0
      %vm262 = vcmp.ge.f32.partialorder %v259, 0.0
      %vm263 = vcmp.ge.f32.partialorder %v260, 0.0
      %v264 = vmul.f32 %v258, 0.2
      %v265 = vmul.f32 %v259, 0.2
      %v266 = vmul.f32 %v260, 0.2
      %v267 = vsel %vm261, %v258, %v264
      %v268 = vsel %vm262, %v259, %v265
      %v269 = vsel %vm263, %v260, %v266
      %v271 = vperm.slane %v238, 0
      %v272 = vperm.slane %v238, 1
      %v273 = vperm.slane %v238, 2
      %v277 = vmul.f32 %v267, %v271
      %v278 = vmul.f32 %v268, %v272
      %v279 = vmul.f32 %v269, %v273
      %280 = vst [vmem:[#allocation2] sm:$0xff] %v277
      %281 = vst [vmem:[#allocation2 + $0x8] sm:$0xff] %v278
      %282 = vst [vmem:[#allocation2 + $0x10] sm:$0xff] %v279
      %v283 = vld [vmem:[#allocation2] sm:$0xff]
      %v284 = vld [vmem:[#allocation2 + $0x8] sm:$0xff]
      %v285 = vld [vmem:[#allocation2 + $0x10] sm:$0xff]
      %286 = vst [vmem:[#allocation3] sm:$0xff] %v283
      %287 = vst [vmem:[#allocation3 + $0x8] sm:$0xff] %v284
      %vm288 = vcmask 261120
      %289 = vst.msk [vmem:[#allocation3 + $0x10] sm:$0xff] %vm288, %v285
      %v290 = vld [vmem:[#allocation2] sm:$0xff]
      %v291 = vld [vmem:[#allocation2 + $0x8] sm:$0xff]
      %v292 = vld [vmem:[#allocation2 + $0x10] sm:$0xff]
      %296 = vrot.lane.b32.xlu0 %v290, 127
      %v297 = vpop.permute.xlu0 %296
      %298 = vrot.lane.b32.xlu0 %v291, 127
      %v299 = vpop.permute.xlu0 %298
      %300 = vrot.lane.b32.xlu0 %v292, 127
      %v301 = vpop.permute.xlu0 %300
      %vm302 = vcmask 1039360
      %v303 = vsel %vm302, %v297, %v299
      %v304 = vsel %vm302, %v299, %v301
      %308 = vst [vmem:[#allocation3 + $0x18] sm:$0xff] %v303
      %309 = vst [vmem:[#allocation3 + $0x20] sm:$0xff] %v304
      %310 = vst.msk [vmem:[#allocation3 + $0x28] sm:$0xff] %vm288, %v301
      %v311 = vld [vmem:[#allocation2] sm:$0xff]
      %v312 = vld [vmem:[#allocation2 + $0x8] sm:$0xff]
      %v313 = vld [vmem:[#allocation2 + $0x10] sm:$0xff]
      %317 = vrot.lane.b32.xlu0 %v311, 126
      %v318 = vpop.permute.xlu0 %317
      %319 = vrot.lane.b32.xlu0 %v312, 126
      %v320 = vpop.permute.xlu0 %319
      %321 = vrot.lane.b32.xlu0 %v313, 126
      %v322 = vpop.permute.xlu0 %321
      %vm323 = vcmask 1031168
      %v324 = vsel %vm323, %v318, %v320
      %v325 = vsel %vm323, %v320, %v322
      %329 = vst [vmem:[#allocation3 + $0x30] sm:$0xff] %v324
      %330 = vst [vmem:[#allocation3 + $0x38] sm:$0xff] %v325
      %331 = vst.msk [vmem:[#allocation3 + $0x40] sm:$0xff] %vm288, %v322
      %v332 = vld [vmem:[#allocation2] sm:$0xff]
      %v333 = vld [vmem:[#allocation2 + $0x8] sm:$0xff]
      %v334 = vld [vmem:[#allocation2 + $0x10] sm:$0xff]
      %338 = vrot.lane.b32.xlu0 %v332, 110
      %v339 = vpop.permute.xlu0 %338
      %340 = vrot.lane.b32.xlu0 %v333, 110
      %v341 = vpop.permute.xlu0 %340
      %342 = vrot.lane.b32.xlu0 %v334, 110
      %v343 = vpop.permute.xlu0 %342
      %vm344 = vcmask 900096
      %v345 = vsel %vm344, %v339, %v341
      %v346 = vsel %vm344, %v341, %v343
      %350 = vst [vmem:[#allocation3 + $0x48] sm:$0xff] %v345
      %351 = vst [vmem:[#allocation3 + $0x50] sm:$0xff] %v346
      %352 = vst.msk [vmem:[#allocation3 + $0x58] sm:$0xff] %vm288, %v343
      %v353 = vld [vmem:[#allocation2] sm:$0xff]
      %v354 = vld [vmem:[#allocation2 + $0x8] sm:$0xff]
      %v355 = vld [vmem:[#allocation2 + $0x10] sm:$0xff]
      %359 = vrot.lane.b32.xlu0 %v353, 109
      %v360 = vpop.permute.xlu0 %359
      %361 = vrot.lane.b32.xlu0 %v354, 109
      %v362 = vpop.permute.xlu0 %361
      %363 = vrot.lane.b32.xlu0 %v355, 109
      %v364 = vpop.permute.xlu0 %363
      %vm365 = vcmask 891904
      %v366 = vsel %vm365, %v360, %v362
      %v367 = vsel %vm365, %v362, %v364
      %371 = vst [vmem:[#allocation3 + $0x60] sm:$0xff] %v366
      %372 = vst [vmem:[#allocation3 + $0x68] sm:$0xff] %v367
      %373 = vst.msk [vmem:[#allocation3 + $0x70] sm:$0xff] %vm288, %v364
      %v374 = vld [vmem:[#allocation2] sm:$0xff]
      %v375 = vld [vmem:[#allocation2 + $0x8] sm:$0xff]
      %v376 = vld [vmem:[#allocation2 + $0x10] sm:$0xff]
      %380 = vrot.lane.b32.xlu0 %v374, 108
      %v381 = vpop.permute.xlu0 %380
      %382 = vrot.lane.b32.xlu0 %v375, 108
      %v383 = vpop.permute.xlu0 %382
      %384 = vrot.lane.b32.xlu0 %v376, 108
      %v385 = vpop.permute.xlu0 %384
      %vm386 = vcmask 883712
      %v387 = vsel %vm386, %v381, %v383
      %v388 = vsel %vm386, %v383, %v385
      %392 = vst [vmem:[#allocation3 + $0x78] sm:$0xff] %v387
      %393 = vst [vmem:[#allocation3 + $0x80] sm:$0xff] %v388
      %394 = vst.msk [vmem:[#allocation3 + $0x88] sm:$0xff] %vm288, %v385
      %v395 = vld [vmem:[#allocation2] sm:$0xff]
      %v396 = vld [vmem:[#allocation2 + $0x8] sm:$0xff]
      %v397 = vld [vmem:[#allocation2 + $0x10] sm:$0xff]
      %401 = vrot.lane.b32.xlu0 %v395, 92
      %v402 = vpop.permute.xlu0 %401
      %403 = vrot.lane.b32.xlu0 %v396, 92
      %v404 = vpop.permute.xlu0 %403
      %405 = vrot.lane.b32.xlu0 %v397, 92
      %v406 = vpop.permute.xlu0 %405
      %vm407 = vcmask 752640
      %v408 = vsel %vm407, %v402, %v404
      %v409 = vsel %vm407, %v404, %v406
      %413 = vst [vmem:[#allocation3 + $0x90] sm:$0xff] %v408
      %414 = vst [vmem:[#allocation3 + $0x98] sm:$0xff] %v409
      %415 = vst.msk [vmem:[#allocation3 + $0xa0] sm:$0xff] %vm288, %v406
      %v416 = vld [vmem:[#allocation2] sm:$0xff]
      %v417 = vld [vmem:[#allocation2 + $0x8] sm:$0xff]
      %v418 = vld [vmem:[#allocation2 + $0x10] sm:$0xff]
      %422 = vrot.lane.b32.xlu0 %v416, 91
      %v423 = vpop.permute.xlu0 %422
      %424 = vrot.lane.b32.xlu0 %v417, 91
      %v425 = vpop.permute.xlu0 %424
      %426 = vrot.lane.b32.xlu0 %v418, 91
      %v427 = vpop.permute.xlu0 %426
      %vm428 = vcmask 744448
      %v429 = vsel %vm428, %v423, %v425
      %v430 = vsel %vm428, %v425, %v427
      %434 = vst [vmem:[#allocation3 + $0xa8] sm:$0xff] %v429
      %435 = vst [vmem:[#allocation3 + $0xb0] sm:$0xff] %v430
      %436 = vst.msk [vmem:[#allocation3 + $0xb8] sm:$0xff] %vm288, %v427
      %v437 = vld [vmem:[#allocation2] sm:$0xff]
      %v438 = vld [vmem:[#allocation2 + $0x8] sm:$0xff]
      %v439 = vld [vmem:[#allocation2 + $0x10] sm:$0xff]
      %443 = vrot.lane.b32.xlu0 %v437, 90
      %v444 = vpop.permute.xlu0 %443
      %445 = vrot.lane.b32.xlu0 %v438, 90
      %v446 = vpop.permute.xlu0 %445
      %447 = vrot.lane.b32.xlu0 %v439, 90
      %v448 = vpop.permute.xlu0 %447
      %vm449 = vcmask 736256
      %v450 = vsel %vm449, %v444, %v446
      %v451 = vsel %vm449, %v446, %v448
      %455 = vst [vmem:[#allocation3 + $0xc0] sm:$0xff] %v450
      %456 = vst [vmem:[#allocation3 + $0xc8] sm:$0xff] %v451
      %457 = vst.msk [vmem:[#allocation3 + $0xd0] sm:$0xff] %vm288, %v448
      %v458 = vld [vmem:[%s2] sm:$0xff]
      %v459 = vld [vmem:[#allocation3] sm:$0xff]
      %v460 = vld [vmem:[#allocation3 + $0x8] sm:$0xff]
      %v461 = vld [vmem:[#allocation3 + $0x10] sm:$0xff]
      %v462 = vld [vmem:[#allocation3 + $0x18] sm:$0xff]
      %v463 = vld [vmem:[#allocation3 + $0x20] sm:$0xff]
      %v464 = vld [vmem:[#allocation3 + $0x28] sm:$0xff]
      %v465 = vld [vmem:[#allocation3 + $0x30] sm:$0xff]
      %v466 = vld [vmem:[#allocation3 + $0x38] sm:$0xff]
      %v467 = vld [vmem:[#allocation3 + $0x40] sm:$0xff]
      %v468 = vld [vmem:[#allocation3 + $0x48] sm:$0xff]
      %v469 = vld [vmem:[#allocation3 + $0x50] sm:$0xff]
      %v470 = vld [vmem:[#allocation3 + $0x58] sm:$0xff]
      %v471 = vld [vmem:[#allocation3 + $0x60] sm:$0xff]
      %v472 = vld [vmem:[#allocation3 + $0x68] sm:$0xff]
      %v473 = vld [vmem:[#allocation3 + $0x70] sm:$0xff]
      %v474 = vld [vmem:[#allocation3 + $0x78] sm:$0xff]
      %v475 = vld [vmem:[#allocation3 + $0x80] sm:$0xff]
      %v476 = vld [vmem:[#allocation3 + $0x88] sm:$0xff]
      %v477 = vld [vmem:[#allocation3 + $0x90] sm:$0xff]
      %v478 = vld [vmem:[#allocation3 + $0x98] sm:$0xff]
      %v479 = vld [vmem:[#allocation3 + $0xa0] sm:$0xff]
      %v480 = vld [vmem:[#allocation3 + $0xa8] sm:$0xff]
      %v481 = vld [vmem:[#allocation3 + $0xb0] sm:$0xff]
      %v482 = vld [vmem:[#allocation3 + $0xb8] sm:$0xff]
      %v483 = vld [vmem:[#allocation3 + $0xc0] sm:$0xff]
      %v484 = vld [vmem:[#allocation3 + $0xc8] sm:$0xff]
      %v485 = vld [vmem:[#allocation3 + $0xd0] sm:$0xff]
      %vm486 = vcmask 588800
      %v488 = vsel %vm486, %v458, 0
      %490 = vmatpush.msra.mxu0 0.0
      %491 = vmatpush.msra.mxu0 0.0
      %492 = vmatpush.msra.mxu0 0.0
      %493 = vmatpush.msra.mxu0 0.0
      %494 = vmatpush.msra.mxu0 0.0
      %495 = vmatpush.msra.mxu0 0.0
      %496 = vmatpush.msra.mxu0 0.0
      %v497 = vand.u32 %v483, 4294901760
      %498 = vmatpush.msra.mxu0 %v497
      %v499 = vand.u32 %v480, 4294901760
      %500 = vmatpush.msra.mxu0 %v499
      %v501 = vand.u32 %v477, 4294901760
      %502 = vmatpush.msra.mxu0 %v501
      %v503 = vand.u32 %v474, 4294901760
      %504 = vmatpush.msra.mxu0 %v503
      %v505 = vand.u32 %v471, 4294901760
      %506 = vmatpush.msra.mxu0 %v505
      %v507 = vand.u32 %v468, 4294901760
      %508 = vmatpush.msra.mxu0 %v507
      %v509 = vand.u32 %v465, 4294901760
      %510 = vmatpush.msra.mxu0 %v509
      %v511 = vand.u32 %v462, 4294901760
      %512 = vmatpush.msra.mxu0 %v511
      %v513 = vand.u32 %v459, 4294901760
      %514 = vmatpush.msra.mxu0 %v513
      %v515 = vand.u32 %v488, 4294901760
      %v516 = vsub.f32 %v488, %v515
      %v517 = vand.u32 %v516, 4294901760
      %v518 = vsub.f32 %v516, %v517
      %v519 = vand.u32 %v518, 4294901760
      %520 = vmatmul.f32.gmra.mxu0 %v519
      %v521 = vpop.f32.mrf.mxu0
      %v522 = vadd.f32 0.0, %v521
      %523 = vdwg.mxu0
      %524 = vmatpush.msra.mxu0 0.0
      %525 = vmatpush.msra.mxu0 0.0
      %526 = vmatpush.msra.mxu0 0.0
      %527 = vmatpush.msra.mxu0 0.0
      %528 = vmatpush.msra.mxu0 0.0
      %529 = vmatpush.msra.mxu0 0.0
      %530 = vmatpush.msra.mxu0 0.0
      %v531 = vand.u32 %v483, 4294901760
      %v532 = vsub.f32 %v483, %v531
      %v533 = vand.u32 %v532, 4294901760
      %v534 = vsub.f32 %v532, %v533
      %v535 = vand.u32 %v534, 4294901760
      %536 = vmatpush.msra.mxu0 %v535
      %v537 = vand.u32 %v480, 4294901760
      %v538 = vsub.f32 %v480, %v537
      %v539 = vand.u32 %v538, 4294901760
      %v540 = vsub.f32 %v538, %v539
      %v541 = vand.u32 %v540, 4294901760
      %542 = vmatpush.msra.mxu0 %v541
      %v543 = vand.u32 %v477, 4294901760
      %v544 = vsub.f32 %v477, %v543
      %v545 = vand.u32 %v544, 4294901760
      %v546 = vsub.f32 %v544, %v545
      %v547 = vand.u32 %v546, 4294901760
      %548 = vmatpush.msra.mxu0 %v547
      %v549 = vand.u32 %v474, 4294901760
      %v550 = vsub.f32 %v474, %v549
      %v551 = vand.u32 %v550, 4294901760
      %v552 = vsub.f32 %v550, %v551
      %v553 = vand.u32 %v552, 4294901760
      %554 = vmatpush.msra.mxu0 %v553
      %v555 = vand.u32 %v471, 4294901760
      %v556 = vsub.f32 %v471, %v555
      %v557 = vand.u32 %v556, 4294901760
      %v558 = vsub.f32 %v556, %v557
      %v559 = vand.u32 %v558, 4294901760
      %560 = vmatpush.msra.mxu0 %v559
      %v561 = vand.u32 %v468, 4294901760
      %v562 = vsub.f32 %v468, %v561
      %v563 = vand.u32 %v562, 4294901760
      %v564 = vsub.f32 %v562, %v563
      %v565 = vand.u32 %v564, 4294901760
      %566 = vmatpush.msra.mxu0 %v565
      %v567 = vand.u32 %v465, 4294901760
      %v568 = vsub.f32 %v465, %v567
      %v569 = vand.u32 %v568, 4294901760
      %v570 = vsub.f32 %v568, %v569
      %v571 = vand.u32 %v570, 4294901760
      %572 = vmatpush.msra.mxu0 %v571
      %v573 = vand.u32 %v462, 4294901760
      %v574 = vsub.f32 %v462, %v573
      %v575 = vand.u32 %v574, 4294901760
      %v576 = vsub.f32 %v574, %v575
      %v577 = vand.u32 %v576, 4294901760
      %578 = vmatpush.msra.mxu0 %v577
      %v579 = vand.u32 %v459, 4294901760
      %v580 = vsub.f32 %v459, %v579
      %v581 = vand.u32 %v580, 4294901760
      %v582 = vsub.f32 %v580, %v581
      %v583 = vand.u32 %v582, 4294901760
      %584 = vmatpush.msra.mxu0 %v583
      %v585 = vand.u32 %v488, 4294901760
      %586 = vmatmul.f32.gmra.mxu0 %v585
      %v587 = vpop.f32.mrf.mxu0
      %v588 = vadd.f32 %v522, %v587
      %589 = vdwg.mxu0
      %590 = vmatpush.msra.mxu0 0.0
      %591 = vmatpush.msra.mxu0 0.0
      %592 = vmatpush.msra.mxu0 0.0
      %593 = vmatpush.msra.mxu0 0.0
      %594 = vmatpush.msra.mxu0 0.0
      %595 = vmatpush.msra.mxu0 0.0
      %596 = vmatpush.msra.mxu0 0.0
      %v597 = vand.u32 %v483, 4294901760
      %v598 = vsub.f32 %v483, %v597
      %599 = vmatpush.msra.mxu0 %v598
      %v600 = vand.u32 %v480, 4294901760
      %v601 = vsub.f32 %v480, %v600
      %602 = vmatpush.msra.mxu0 %v601
      %v603 = vand.u32 %v477, 4294901760
      %v604 = vsub.f32 %v477, %v603
      %605 = vmatpush.msra.mxu0 %v604
      %v606 = vand.u32 %v474, 4294901760
      %v607 = vsub.f32 %v474, %v606
      %608 = vmatpush.msra.mxu0 %v607
      %v609 = vand.u32 %v471, 4294901760
      %v610 = vsub.f32 %v471, %v609
      %611 = vmatpush.msra.mxu0 %v610
      %v612 = vand.u32 %v468, 4294901760
      %v613 = vsub.f32 %v468, %v612
      %614 = vmatpush.msra.mxu0 %v613
      %v615 = vand.u32 %v465, 4294901760
      %v616 = vsub.f32 %v465, %v615
      %617 = vmatpush.msra.mxu0 %v616
      %v618 = vand.u32 %v462, 4294901760
      %v619 = vsub.f32 %v462, %v618
      %620 = vmatpush.msra.mxu0 %v619
      %v621 = vand.u32 %v459, 4294901760
      %v622 = vsub.f32 %v459, %v621
      %623 = vmatpush.msra.mxu0 %v622
      %v624 = vand.u32 %v488, 4294901760
      %v625 = vsub.f32 %v488, %v624
      %626 = vmatmul.f32.gmra.mxu0 %v625
      %v627 = vpop.f32.mrf.mxu0
      %v628 = vadd.f32 %v588, %v627
      %629 = vdwg.mxu0
      %630 = vmatpush.msra.mxu0 0.0
      %631 = vmatpush.msra.mxu0 0.0
      %632 = vmatpush.msra.mxu0 0.0
      %633 = vmatpush.msra.mxu0 0.0
      %634 = vmatpush.msra.mxu0 0.0
      %635 = vmatpush.msra.mxu0 0.0
      %636 = vmatpush.msra.mxu0 0.0
      %v637 = vand.u32 %v483, 4294901760
      %638 = vmatpush.msra.mxu0 %v637
      %v639 = vand.u32 %v480, 4294901760
      %640 = vmatpush.msra.mxu0 %v639
      %v641 = vand.u32 %v477, 4294901760
      %642 = vmatpush.msra.mxu0 %v641
      %v643 = vand.u32 %v474, 4294901760
      %644 = vmatpush.msra.mxu0 %v643
      %v645 = vand.u32 %v471, 4294901760
      %646 = vmatpush.msra.mxu0 %v645
      %v647 = vand.u32 %v468, 4294901760
      %648 = vmatpush.msra.mxu0 %v647
      %v649 = vand.u32 %v465, 4294901760
      %650 = vmatpush.msra.mxu0 %v649
      %v651 = vand.u32 %v462, 4294901760
      %652 = vmatpush.msra.mxu0 %v651
      %v653 = vand.u32 %v459, 4294901760
      %654 = vmatpush.msra.mxu0 %v653
      %v655 = vand.u32 %v488, 4294901760
      %v656 = vsub.f32 %v488, %v655
      %v657 = vand.u32 %v656, 4294901760
      %658 = vmatmul.f32.gmra.mxu0 %v657
      %v659 = vpop.f32.mrf.mxu0
      %v660 = vadd.f32 %v628, %v659
      %661 = vdwg.mxu0
      %662 = vmatpush.msra.mxu0 0.0
      %663 = vmatpush.msra.mxu0 0.0
      %664 = vmatpush.msra.mxu0 0.0
      %665 = vmatpush.msra.mxu0 0.0
      %666 = vmatpush.msra.mxu0 0.0
      %667 = vmatpush.msra.mxu0 0.0
      %668 = vmatpush.msra.mxu0 0.0
      %v669 = vand.u32 %v483, 4294901760
      %v670 = vsub.f32 %v483, %v669
      %v671 = vand.u32 %v670, 4294901760
      %672 = vmatpush.msra.mxu0 %v671
      %v673 = vand.u32 %v480, 4294901760
      %v674 = vsub.f32 %v480, %v673
      %v675 = vand.u32 %v674, 4294901760
      %676 = vmatpush.msra.mxu0 %v675
      %v677 = vand.u32 %v477, 4294901760
      %v678 = vsub.f32 %v477, %v677
      %v679 = vand.u32 %v678, 4294901760
      %680 = vmatpush.msra.mxu0 %v679
      %v681 = vand.u32 %v474, 4294901760
      %v682 = vsub.f32 %v474, %v681
      %v683 = vand.u32 %v682, 4294901760
      %684 = vmatpush.msra.mxu0 %v683
      %v685 = vand.u32 %v471, 4294901760
      %v686 = vsub.f32 %v471, %v685
      %v687 = vand.u32 %v686, 4294901760
      %688 = vmatpush.msra.mxu0 %v687
      %v689 = vand.u32 %v468, 4294901760
      %v690 = vsub.f32 %v468, %v689
      %v691 = vand.u32 %v690, 4294901760
      %692 = vmatpush.msra.mxu0 %v691
      %v693 = vand.u32 %v465, 4294901760
      %v694 = vsub.f32 %v465, %v693
      %v695 = vand.u32 %v694, 4294901760
      %696 = vmatpush.msra.mxu0 %v695
      %v697 = vand.u32 %v462, 4294901760
      %v698 = vsub.f32 %v462, %v697
      %v699 = vand.u32 %v698, 4294901760
      %700 = vmatpush.msra.mxu0 %v699
      %v701 = vand.u32 %v459, 4294901760
      %v702 = vsub.f32 %v459, %v701
      %v703 = vand.u32 %v702, 4294901760
      %704 = vmatpush.msra.mxu0 %v703
      %v705 = vand.u32 %v488, 4294901760
      %706 = vmatmul.f32.gmra.mxu0 %v705
      %v707 = vpop.f32.mrf.mxu0
      %v708 = vadd.f32 %v660, %v707
      %709 = vdwg.mxu0
      %710 = vmatpush.msra.mxu0 0.0
      %711 = vmatpush.msra.mxu0 0.0
      %712 = vmatpush.msra.mxu0 0.0
      %713 = vmatpush.msra.mxu0 0.0
      %714 = vmatpush.msra.mxu0 0.0
      %715 = vmatpush.msra.mxu0 0.0
      %716 = vmatpush.msra.mxu0 0.0
      %v717 = vand.u32 %v483, 4294901760
      %718 = vmatpush.msra.mxu0 %v717
      %v719 = vand.u32 %v480, 4294901760
      %720 = vmatpush.msra.mxu0 %v719
      %v721 = vand.u32 %v477, 4294901760
      %722 = vmatpush.msra.mxu0 %v721
      %v723 = vand.u32 %v474, 4294901760
      %724 = vmatpush.msra.mxu0 %v723
      %v725 = vand.u32 %v471, 4294901760
      %726 = vmatpush.msra.mxu0 %v725
      %v727 = vand.u32 %v468, 4294901760
      %728 = vmatpush.msra.mxu0 %v727
      %v729 = vand.u32 %v465, 4294901760
      %730 = vmatpush.msra.mxu0 %v729
      %v731 = vand.u32 %v462, 4294901760
      %732 = vmatpush.msra.mxu0 %v731
      %v733 = vand.u32 %v459, 4294901760
      %734 = vmatpush.msra.mxu0 %v733
      %v735 = vand.u32 %v488, 4294901760
      %736 = vmatmul.f32.gmra.mxu0 %v735
      %v737 = vpop.f32.mrf.mxu0
      %v738 = vadd.f32 %v708, %v737
      %739 = vdwg.mxu0
      %740 = vmatpush.msra.mxu0 0.0
      %741 = vmatpush.msra.mxu0 0.0
      %742 = vmatpush.msra.mxu0 0.0
      %743 = vmatpush.msra.mxu0 0.0
      %744 = vmatpush.msra.mxu0 0.0
      %745 = vmatpush.msra.mxu0 0.0
      %746 = vmatpush.msra.mxu0 0.0
      %v747 = vand.u32 %v484, 4294901760
      %748 = vmatpush.msra.mxu0 %v747
      %v749 = vand.u32 %v481, 4294901760
      %750 = vmatpush.msra.mxu0 %v749
      %v751 = vand.u32 %v478, 4294901760
      %752 = vmatpush.msra.mxu0 %v751
      %v753 = vand.u32 %v475, 4294901760
      %754 = vmatpush.msra.mxu0 %v753
      %v755 = vand.u32 %v472, 4294901760
      %756 = vmatpush.msra.mxu0 %v755
      %v757 = vand.u32 %v469, 4294901760
      %758 = vmatpush.msra.mxu0 %v757
      %v759 = vand.u32 %v466, 4294901760
      %760 = vmatpush.msra.mxu0 %v759
      %v761 = vand.u32 %v463, 4294901760
      %762 = vmatpush.msra.mxu0 %v761
      %v763 = vand.u32 %v460, 4294901760
      %764 = vmatpush.msra.mxu0 %v763
      %v765 = vand.u32 %v488, 4294901760
      %v766 = vsub.f32 %v488, %v765
      %v767 = vand.u32 %v766, 4294901760
      %v768 = vsub.f32 %v766, %v767
      %v769 = vand.u32 %v768, 4294901760
      %770 = vmatmul.f32.gmra.mxu0 %v769
      %v771 = vpop.f32.mrf.mxu0
      %v772 = vadd.f32 0.0, %v771
      %773 = vdwg.mxu0
      %774 = vmatpush.msra.mxu0 0.0
      %775 = vmatpush.msra.mxu0 0.0
      %776 = vmatpush.msra.mxu0 0.0
      %777 = vmatpush.msra.mxu0 0.0
      %778 = vmatpush.msra.mxu0 0.0
      %779 = vmatpush.msra.mxu0 0.0
      %780 = vmatpush.msra.mxu0 0.0
      %v781 = vand.u32 %v484, 4294901760
      %v782 = vsub.f32 %v484, %v781
      %v783 = vand.u32 %v782, 4294901760
      %v784 = vsub.f32 %v782, %v783
      %v785 = vand.u32 %v784, 4294901760
      %786 = vmatpush.msra.mxu0 %v785
      %v787 = vand.u32 %v481, 4294901760
      %v788 = vsub.f32 %v481, %v787
      %v789 = vand.u32 %v788, 4294901760
      %v790 = vsub.f32 %v788, %v789
      %v791 = vand.u32 %v790, 4294901760
      %792 = vmatpush.msra.mxu0 %v791
      %v793 = vand.u32 %v478, 4294901760
      %v794 = vsub.f32 %v478, %v793
      %v795 = vand.u32 %v794, 4294901760
      %v796 = vsub.f32 %v794, %v795
      %v797 = vand.u32 %v796, 4294901760
      %798 = vmatpush.msra.mxu0 %v797
      %v799 = vand.u32 %v475, 4294901760
      %v800 = vsub.f32 %v475, %v799
      %v801 = vand.u32 %v800, 4294901760
      %v802 = vsub.f32 %v800, %v801
      %v803 = vand.u32 %v802, 4294901760
      %804 = vmatpush.msra.mxu0 %v803
      %v805 = vand.u32 %v472, 4294901760
      %v806 = vsub.f32 %v472, %v805
      %v807 = vand.u32 %v806, 4294901760
      %v808 = vsub.f32 %v806, %v807
      %v809 = vand.u32 %v808, 4294901760
      %810 = vmatpush.msra.mxu0 %v809
      %v811 = vand.u32 %v469, 4294901760
      %v812 = vsub.f32 %v469, %v811
      %v813 = vand.u32 %v812, 4294901760
      %v814 = vsub.f32 %v812, %v813
      %v815 = vand.u32 %v814, 4294901760
      %816 = vmatpush.msra.mxu0 %v815
      %v817 = vand.u32 %v466, 4294901760
      %v818 = vsub.f32 %v466, %v817
      %v819 = vand.u32 %v818, 4294901760
      %v820 = vsub.f32 %v818, %v819
      %v821 = vand.u32 %v820, 4294901760
      %822 = vmatpush.msra.mxu0 %v821
      %v823 = vand.u32 %v463, 4294901760
      %v824 = vsub.f32 %v463, %v823
      %v825 = vand.u32 %v824, 4294901760
      %v826 = vsub.f32 %v824, %v825
      %v827 = vand.u32 %v826, 4294901760
      %828 = vmatpush.msra.mxu0 %v827
      %v829 = vand.u32 %v460, 4294901760
      %v830 = vsub.f32 %v460, %v829
      %v831 = vand.u32 %v830, 4294901760
      %v832 = vsub.f32 %v830, %v831
      %v833 = vand.u32 %v832, 4294901760
      %834 = vmatpush.msra.mxu0 %v833
      %v835 = vand.u32 %v488, 4294901760
      %836 = vmatmul.f32.gmra.mxu0 %v835
      %v837 = vpop.f32.mrf.mxu0
      %v838 = vadd.f32 %v772, %v837
      %839 = vdwg.mxu0
      %840 = vmatpush.msra.mxu0 0.0
      %841 = vmatpush.msra.mxu0 0.0
      %842 = vmatpush.msra.mxu0 0.0
      %843 = vmatpush.msra.mxu0 0.0
      %844 = vmatpush.msra.mxu0 0.0
      %845 = vmatpush.msra.mxu0 0.0
      %846 = vmatpush.msra.mxu0 0.0
      %v847 = vand.u32 %v484, 4294901760
      %v848 = vsub.f32 %v484, %v847
      %849 = vmatpush.msra.mxu0 %v848
      %v850 = vand.u32 %v481, 4294901760
      %v851 = vsub.f32 %v481, %v850
      %852 = vmatpush.msra.mxu0 %v851
      %v853 = vand.u32 %v478, 4294901760
      %v854 = vsub.f32 %v478, %v853
      %855 = vmatpush.msra.mxu0 %v854
      %v856 = vand.u32 %v475, 4294901760
      %v857 = vsub.f32 %v475, %v856
      %858 = vmatpush.msra.mxu0 %v857
      %v859 = vand.u32 %v472, 4294901760
      %v860 = vsub.f32 %v472, %v859
      %861 = vmatpush.msra.mxu0 %v860
      %v862 = vand.u32 %v469, 4294901760
      %v863 = vsub.f32 %v469, %v862
      %864 = vmatpush.msra.mxu0 %v863
      %v865 = vand.u32 %v466, 4294901760
      %v866 = vsub.f32 %v466, %v865
      %867 = vmatpush.msra.mxu0 %v866
      %v868 = vand.u32 %v463, 4294901760
      %v869 = vsub.f32 %v463, %v868
      %870 = vmatpush.msra.mxu0 %v869
      %v871 = vand.u32 %v460, 4294901760
      %v872 = vsub.f32 %v460, %v871
      %873 = vmatpush.msra.mxu0 %v872
      %v874 = vand.u32 %v488, 4294901760
      %v875 = vsub.f32 %v488, %v874
      %876 = vmatmul.f32.gmra.mxu0 %v875
      %v877 = vpop.f32.mrf.mxu0
      %v878 = vadd.f32 %v838, %v877
      %879 = vdwg.mxu0
      %880 = vmatpush.msra.mxu0 0.0
      %881 = vmatpush.msra.mxu0 0.0
      %882 = vmatpush.msra.mxu0 0.0
      %883 = vmatpush.msra.mxu0 0.0
      %884 = vmatpush.msra.mxu0 0.0
      %885 = vmatpush.msra.mxu0 0.0
      %886 = vmatpush.msra.mxu0 0.0
      %v887 = vand.u32 %v484, 4294901760
      %888 = vmatpush.msra.mxu0 %v887
      %v889 = vand.u32 %v481, 4294901760
      %890 = vmatpush.msra.mxu0 %v889
      %v891 = vand.u32 %v478, 4294901760
      %892 = vmatpush.msra.mxu0 %v891
      %v893 = vand.u32 %v475, 4294901760
      %894 = vmatpush.msra.mxu0 %v893
      %v895 = vand.u32 %v472, 4294901760
      %896 = vmatpush.msra.mxu0 %v895
      %v897 = vand.u32 %v469, 4294901760
      %898 = vmatpush.msra.mxu0 %v897
      %v899 = vand.u32 %v466, 4294901760
      %900 = vmatpush.msra.mxu0 %v899
      %v901 = vand.u32 %v463, 4294901760
      %902 = vmatpush.msra.mxu0 %v901
      %v903 = vand.u32 %v460, 4294901760
      %904 = vmatpush.msra.mxu0 %v903
      %v905 = vand.u32 %v488, 4294901760
      %v906 = vsub.f32 %v488, %v905
      %v907 = vand.u32 %v906, 4294901760
      %908 = vmatmul.f32.gmra.mxu0 %v907
      %v909 = vpop.f32.mrf.mxu0
      %v910 = vadd.f32 %v878, %v909
      %911 = vdwg.mxu0
      %912 = vmatpush.msra.mxu0 0.0
      %913 = vmatpush.msra.mxu0 0.0
      %914 = vmatpush.msra.mxu0 0.0
      %915 = vmatpush.msra.mxu0 0.0
      %916 = vmatpush.msra.mxu0 0.0
      %917 = vmatpush.msra.mxu0 0.0
      %918 = vmatpush.msra.mxu0 0.0
      %v919 = vand.u32 %v484, 4294901760
      %v920 = vsub.f32 %v484, %v919
      %v921 = vand.u32 %v920, 4294901760
      %922 = vmatpush.msra.mxu0 %v921
      %v923 = vand.u32 %v481, 4294901760
      %v924 = vsub.f32 %v481, %v923
      %v925 = vand.u32 %v924, 4294901760
      %926 = vmatpush.msra.mxu0 %v925
      %v927 = vand.u32 %v478, 4294901760
      %v928 = vsub.f32 %v478, %v927
      %v929 = vand.u32 %v928, 4294901760
      %930 = vmatpush.msra.mxu0 %v929
      %v931 = vand.u32 %v475, 4294901760
      %v932 = vsub.f32 %v475, %v931
      %v933 = vand.u32 %v932, 4294901760
      %934 = vmatpush.msra.mxu0 %v933
      %v935 = vand.u32 %v472, 4294901760
      %v936 = vsub.f32 %v472, %v935
      %v937 = vand.u32 %v936, 4294901760
      %938 = vmatpush.msra.mxu0 %v937
      %v939 = vand.u32 %v469, 4294901760
      %v940 = vsub.f32 %v469, %v939
      %v941 = vand.u32 %v940, 4294901760
      %942 = vmatpush.msra.mxu0 %v941
      %v943 = vand.u32 %v466, 4294901760
      %v944 = vsub.f32 %v466, %v943
      %v945 = vand.u32 %v944, 4294901760
      %946 = vmatpush.msra.mxu0 %v945
      %v947 = vand.u32 %v463, 4294901760
      %v948 = vsub.f32 %v463, %v947
      %v949 = vand.u32 %v948, 4294901760
      %950 = vmatpush.msra.mxu0 %v949
      %v951 = vand.u32 %v460, 4294901760
      %v952 = vsub.f32 %v460, %v951
      %v953 = vand.u32 %v952, 4294901760
      %954 = vmatpush.msra.mxu0 %v953
      %v955 = vand.u32 %v488, 4294901760
      %956 = vmatmul.f32.gmra.mxu0 %v955
      %v957 = vpop.f32.mrf.mxu0
      %v958 = vadd.f32 %v910, %v957
      %959 = vdwg.mxu0
      %960 = vmatpush.msra.mxu0 0.0
      %961 = vmatpush.msra.mxu0 0.0
      %962 = vmatpush.msra.mxu0 0.0
      %963 = vmatpush.msra.mxu0 0.0
      %964 = vmatpush.msra.mxu0 0.0
      %965 = vmatpush.msra.mxu0 0.0
      %966 = vmatpush.msra.mxu0 0.0
      %v967 = vand.u32 %v484, 4294901760
      %968 = vmatpush.msra.mxu0 %v967
      %v969 = vand.u32 %v481, 4294901760
      %970 = vmatpush.msra.mxu0 %v969
      %v971 = vand.u32 %v478, 4294901760
      %972 = vmatpush.msra.mxu0 %v971
      %v973 = vand.u32 %v475, 4294901760
      %974 = vmatpush.msra.mxu0 %v973
      %v975 = vand.u32 %v472, 4294901760
      %976 = vmatpush.msra.mxu0 %v975
      %v977 = vand.u32 %v469, 4294901760
      %978 = vmatpush.msra.mxu0 %v977
      %v979 = vand.u32 %v466, 4294901760
      %980 = vmatpush.msra.mxu0 %v979
      %v981 = vand.u32 %v463, 4294901760
      %982 = vmatpush.msra.mxu0 %v981
      %v983 = vand.u32 %v460, 4294901760
      %984 = vmatpush.msra.mxu0 %v983
      %v985 = vand.u32 %v488, 4294901760
      %986 = vmatmul.f32.gmra.mxu0 %v985
      %v987 = vpop.f32.mrf.mxu0
      %v988 = vadd.f32 %v958, %v987
      %989 = vdwg.mxu0
      %990 = vmatpush.msra.mxu0 0.0
      %991 = vmatpush.msra.mxu0 0.0
      %992 = vmatpush.msra.mxu0 0.0
      %993 = vmatpush.msra.mxu0 0.0
      %994 = vmatpush.msra.mxu0 0.0
      %995 = vmatpush.msra.mxu0 0.0
      %996 = vmatpush.msra.mxu0 0.0
      %v997 = vand.u32 %v485, 4294901760
      %998 = vmatpush.msra.mxu0 %v997
      %v999 = vand.u32 %v482, 4294901760
      %1000 = vmatpush.msra.mxu0 %v999
      %v1001 = vand.u32 %v479, 4294901760
      %1002 = vmatpush.msra.mxu0 %v1001
      %v1003 = vand.u32 %v476, 4294901760
      %1004 = vmatpush.msra.mxu0 %v1003
      %v1005 = vand.u32 %v473, 4294901760
      %1006 = vmatpush.msra.mxu0 %v1005
      %v1007 = vand.u32 %v470, 4294901760
      %1008 = vmatpush.msra.mxu0 %v1007
      %v1009 = vand.u32 %v467, 4294901760
      %1010 = vmatpush.msra.mxu0 %v1009
      %v1011 = vand.u32 %v464, 4294901760
      %1012 = vmatpush.msra.mxu0 %v1011
      %v1013 = vand.u32 %v461, 4294901760
      %1014 = vmatpush.msra.mxu0 %v1013
      %v1015 = vand.u32 %v488, 4294901760
      %v1016 = vsub.f32 %v488, %v1015
      %v1017 = vand.u32 %v1016, 4294901760
      %v1018 = vsub.f32 %v1016, %v1017
      %v1019 = vand.u32 %v1018, 4294901760
      %1020 = vmatmul.f32.gmra.mxu0 %v1019
      %v1021 = vpop.f32.mrf.mxu0
      %v1022 = vadd.f32 0.0, %v1021
      %1023 = vdwg.mxu0
      %1024 = vmatpush.msra.mxu0 0.0
      %1025 = vmatpush.msra.mxu0 0.0
      %1026 = vmatpush.msra.mxu0 0.0
      %1027 = vmatpush.msra.mxu0 0.0
      %1028 = vmatpush.msra.mxu0 0.0
      %1029 = vmatpush.msra.mxu0 0.0
      %1030 = vmatpush.msra.mxu0 0.0
      %v1031 = vand.u32 %v485, 4294901760
      %v1032 = vsub.f32 %v485, %v1031
      %v1033 = vand.u32 %v1032, 4294901760
      %v1034 = vsub.f32 %v1032, %v1033
      %v1035 = vand.u32 %v1034, 4294901760
      %1036 = vmatpush.msra.mxu0 %v1035
      %v1037 = vand.u32 %v482, 4294901760
      %v1038 = vsub.f32 %v482, %v1037
      %v1039 = vand.u32 %v1038, 4294901760
      %v1040 = vsub.f32 %v1038, %v1039
      %v1041 = vand.u32 %v1040, 4294901760
      %1042 = vmatpush.msra.mxu0 %v1041
      %v1043 = vand.u32 %v479, 4294901760
      %v1044 = vsub.f32 %v479, %v1043
      %v1045 = vand.u32 %v1044, 4294901760
      %v1046 = vsub.f32 %v1044, %v1045
      %v1047 = vand.u32 %v1046, 4294901760
      %1048 = vmatpush.msra.mxu0 %v1047
      %v1049 = vand.u32 %v476, 4294901760
      %v1050 = vsub.f32 %v476, %v1049
      %v1051 = vand.u32 %v1050, 4294901760
      %v1052 = vsub.f32 %v1050, %v1051
      %v1053 = vand.u32 %v1052, 4294901760
      %1054 = vmatpush.msra.mxu0 %v1053
      %v1055 = vand.u32 %v473, 4294901760
      %v1056 = vsub.f32 %v473, %v1055
      %v1057 = vand.u32 %v1056, 4294901760
      %v1058 = vsub.f32 %v1056, %v1057
      %v1059 = vand.u32 %v1058, 4294901760
      %1060 = vmatpush.msra.mxu0 %v1059
      %v1061 = vand.u32 %v470, 4294901760
      %v1062 = vsub.f32 %v470, %v1061
      %v1063 = vand.u32 %v1062, 4294901760
      %v1064 = vsub.f32 %v1062, %v1063
      %v1065 = vand.u32 %v1064, 4294901760
      %1066 = vmatpush.msra.mxu0 %v1065
      %v1067 = vand.u32 %v467, 4294901760
      %v1068 = vsub.f32 %v467, %v1067
      %v1069 = vand.u32 %v1068, 4294901760
      %v1070 = vsub.f32 %v1068, %v1069
      %v1071 = vand.u32 %v1070, 4294901760
      %1072 = vmatpush.msra.mxu0 %v1071
      %v1073 = vand.u32 %v464, 4294901760
      %v1074 = vsub.f32 %v464, %v1073
      %v1075 = vand.u32 %v1074, 4294901760
      %v1076 = vsub.f32 %v1074, %v1075
      %v1077 = vand.u32 %v1076, 4294901760
      %1078 = vmatpush.msra.mxu0 %v1077
      %v1079 = vand.u32 %v461, 4294901760
      %v1080 = vsub.f32 %v461, %v1079
      %v1081 = vand.u32 %v1080, 4294901760
      %v1082 = vsub.f32 %v1080, %v1081
      %v1083 = vand.u32 %v1082, 4294901760
      %1084 = vmatpush.msra.mxu0 %v1083
      %v1085 = vand.u32 %v488, 4294901760
      %1086 = vmatmul.f32.gmra.mxu0 %v1085
      %v1087 = vpop.f32.mrf.mxu0
      %v1088 = vadd.f32 %v1022, %v1087
      %1089 = vdwg.mxu0
      %1090 = vmatpush.msra.mxu0 0.0
      %1091 = vmatpush.msra.mxu0 0.0
      %1092 = vmatpush.msra.mxu0 0.0
      %1093 = vmatpush.msra.mxu0 0.0
      %1094 = vmatpush.msra.mxu0 0.0
      %1095 = vmatpush.msra.mxu0 0.0
      %1096 = vmatpush.msra.mxu0 0.0
      %v1097 = vand.u32 %v485, 4294901760
      %v1098 = vsub.f32 %v485, %v1097
      %1099 = vmatpush.msra.mxu0 %v1098
      %v1100 = vand.u32 %v482, 4294901760
      %v1101 = vsub.f32 %v482, %v1100
      %1102 = vmatpush.msra.mxu0 %v1101
      %v1103 = vand.u32 %v479, 4294901760
      %v1104 = vsub.f32 %v479, %v1103
      %1105 = vmatpush.msra.mxu0 %v1104
      %v1106 = vand.u32 %v476, 4294901760
      %v1107 = vsub.f32 %v476, %v1106
      %1108 = vmatpush.msra.mxu0 %v1107
      %v1109 = vand.u32 %v473, 4294901760
      %v1110 = vsub.f32 %v473, %v1109
      %1111 = vmatpush.msra.mxu0 %v1110
      %v1112 = vand.u32 %v470, 4294901760
      %v1113 = vsub.f32 %v470, %v1112
      %1114 = vmatpush.msra.mxu0 %v1113
      %v1115 = vand.u32 %v467, 4294901760
      %v1116 = vsub.f32 %v467, %v1115
      %1117 = vmatpush.msra.mxu0 %v1116
      %v1118 = vand.u32 %v464, 4294901760
      %v1119 = vsub.f32 %v464, %v1118
      %1120 = vmatpush.msra.mxu0 %v1119
      %v1121 = vand.u32 %v461, 4294901760
      %v1122 = vsub.f32 %v461, %v1121
      %1123 = vmatpush.msra.mxu0 %v1122
      %v1124 = vand.u32 %v488, 4294901760
      %v1125 = vsub.f32 %v488, %v1124
      %1126 = vmatmul.f32.gmra.mxu0 %v1125
      %v1127 = vpop.f32.mrf.mxu0
      %v1128 = vadd.f32 %v1088, %v1127
      %1129 = vdwg.mxu0
      %1130 = vmatpush.msra.mxu0 0.0
      %1131 = vmatpush.msra.mxu0 0.0
      %1132 = vmatpush.msra.mxu0 0.0
      %1133 = vmatpush.msra.mxu0 0.0
      %1134 = vmatpush.msra.mxu0 0.0
      %1135 = vmatpush.msra.mxu0 0.0
      %1136 = vmatpush.msra.mxu0 0.0
      %v1137 = vand.u32 %v485, 4294901760
      %1138 = vmatpush.msra.mxu0 %v1137
      %v1139 = vand.u32 %v482, 4294901760
      %1140 = vmatpush.msra.mxu0 %v1139
      %v1141 = vand.u32 %v479, 4294901760
      %1142 = vmatpush.msra.mxu0 %v1141
      %v1143 = vand.u32 %v476, 4294901760
      %1144 = vmatpush.msra.mxu0 %v1143
      %v1145 = vand.u32 %v473, 4294901760
      %1146 = vmatpush.msra.mxu0 %v1145
      %v1147 = vand.u32 %v470, 4294901760
      %1148 = vmatpush.msra.mxu0 %v1147
      %v1149 = vand.u32 %v467, 4294901760
      %1150 = vmatpush.msra.mxu0 %v1149
      %v1151 = vand.u32 %v464, 4294901760
      %1152 = vmatpush.msra.mxu0 %v1151
      %v1153 = vand.u32 %v461, 4294901760
      %1154 = vmatpush.msra.mxu0 %v1153
      %v1155 = vand.u32 %v488, 4294901760
      %v1156 = vsub.f32 %v488, %v1155
      %v1157 = vand.u32 %v1156, 4294901760
      %1158 = vmatmul.f32.gmra.mxu0 %v1157
      %v1159 = vpop.f32.mrf.mxu0
      %v1160 = vadd.f32 %v1128, %v1159
      %1161 = vdwg.mxu0
      %1162 = vmatpush.msra.mxu0 0.0
      %1163 = vmatpush.msra.mxu0 0.0
      %1164 = vmatpush.msra.mxu0 0.0
      %1165 = vmatpush.msra.mxu0 0.0
      %1166 = vmatpush.msra.mxu0 0.0
      %1167 = vmatpush.msra.mxu0 0.0
      %1168 = vmatpush.msra.mxu0 0.0
      %v1169 = vand.u32 %v485, 4294901760
      %v1170 = vsub.f32 %v485, %v1169
      %v1171 = vand.u32 %v1170, 4294901760
      %1172 = vmatpush.msra.mxu0 %v1171
      %v1173 = vand.u32 %v482, 4294901760
      %v1174 = vsub.f32 %v482, %v1173
      %v1175 = vand.u32 %v1174, 4294901760
      %1176 = vmatpush.msra.mxu0 %v1175
      %v1177 = vand.u32 %v479, 4294901760
      %v1178 = vsub.f32 %v479, %v1177
      %v1179 = vand.u32 %v1178, 4294901760
      %1180 = vmatpush.msra.mxu0 %v1179
      %v1181 = vand.u32 %v476, 4294901760
      %v1182 = vsub.f32 %v476, %v1181
      %v1183 = vand.u32 %v1182, 4294901760
      %1184 = vmatpush.msra.mxu0 %v1183
      %v1185 = vand.u32 %v473, 4294901760
      %v1186 = vsub.f32 %v473, %v1185
      %v1187 = vand.u32 %v1186, 4294901760
      %1188 = vmatpush.msra.mxu0 %v1187
      %v1189 = vand.u32 %v470, 4294901760
      %v1190 = vsub.f32 %v470, %v1189
      %v1191 = vand.u32 %v1190, 4294901760
      %1192 = vmatpush.msra.mxu0 %v1191
      %v1193 = vand.u32 %v467, 4294901760
      %v1194 = vsub.f32 %v467, %v1193
      %v1195 = vand.u32 %v1194, 4294901760
      %1196 = vmatpush.msra.mxu0 %v1195
      %v1197 = vand.u32 %v464, 4294901760
      %v1198 = vsub.f32 %v464, %v1197
      %v1199 = vand.u32 %v1198, 4294901760
      %1200 = vmatpush.msra.mxu0 %v1199
      %v1201 = vand.u32 %v461, 4294901760
      %v1202 = vsub.f32 %v461, %v1201
      %v1203 = vand.u32 %v1202, 4294901760
      %1204 = vmatpush.msra.mxu0 %v1203
      %v1205 = vand.u32 %v488, 4294901760
      %1206 = vmatmul.f32.gmra.mxu0 %v1205
      %v1207 = vpop.f32.mrf.mxu0
      %v1208 = vadd.f32 %v1160, %v1207
      %1209 = vdwg.mxu0
      %1210 = vmatpush.msra.mxu0 0.0
      %1211 = vmatpush.msra.mxu0 0.0
      %1212 = vmatpush.msra.mxu0 0.0
      %1213 = vmatpush.msra.mxu0 0.0
      %1214 = vmatpush.msra.mxu0 0.0
      %1215 = vmatpush.msra.mxu0 0.0
      %1216 = vmatpush.msra.mxu0 0.0
      %v1217 = vand.u32 %v485, 4294901760
      %1218 = vmatpush.msra.mxu0 %v1217
      %v1219 = vand.u32 %v482, 4294901760
      %1220 = vmatpush.msra.mxu0 %v1219
      %v1221 = vand.u32 %v479, 4294901760
      %1222 = vmatpush.msra.mxu0 %v1221
      %v1223 = vand.u32 %v476, 4294901760
      %1224 = vmatpush.msra.mxu0 %v1223
      %v1225 = vand.u32 %v473, 4294901760
      %1226 = vmatpush.msra.mxu0 %v1225
      %v1227 = vand.u32 %v470, 4294901760
      %1228 = vmatpush.msra.mxu0 %v1227
      %v1229 = vand.u32 %v467, 4294901760
      %1230 = vmatpush.msra.mxu0 %v1229
      %v1231 = vand.u32 %v464, 4294901760
      %1232 = vmatpush.msra.mxu0 %v1231
      %v1233 = vand.u32 %v461, 4294901760
      %1234 = vmatpush.msra.mxu0 %v1233
      %v1235 = vand.u32 %v488, 4294901760
      %1236 = vmatmul.f32.gmra.mxu0 %v1235
      %v1237 = vpop.f32.mrf.mxu0
      %v1238 = vadd.f32 %v1208, %v1237
      %1239 = vdwg.mxu0
      %v1240 = vld [vmem:[%s3] sm:$0x7]
      %v1242 = vperm.slane %v1240, 0
      %v1243 = vperm.slane %v1240, 1
      %v1244 = vperm.slane %v1240, 2
      %1245 = vrot.lane.b32.xlu0 %v1242, 109
      %v1246 = vpop.permute.xlu0 %1245
      %1247 = vrot.lane.b32.xlu0 %v1243, 109
      %v1248 = vpop.permute.xlu0 %1247
      %1249 = vrot.lane.b32.xlu0 %v1244, 109
      %v1250 = vpop.permute.xlu0 %1249
      %v1251 = vsel %vm365, %v1246, %v1248
      %v1252 = vsel %vm365, %v1248, %v1250
      %v1256 = vmul.f32 %v738, %v1251
      %v1257 = vmul.f32 %v988, %v1252
      %v1258 = vmul.f32 %v1238, %v1250
      %1259 = vst [vmem:[%s232] sm:$0xff] 0.0
      %1260 = vst [vmem:[%s232 + $0x8] sm:$0xff] 0.0
      %1261 = vst [vmem:[%s232 + $0x10] sm:$0xff] 0.0
      %1265 = vrot.lane.b32.xlu0 %v1256, 19
      %v1266 = vpop.permute.xlu0 %1265
      %1267 = vrot.lane.b32.xlu0 %v1257, 19
      %v1268 = vpop.permute.xlu0 %1267
      %1269 = vrot.lane.b32.xlu0 %v1258, 19
      %v1270 = vpop.permute.xlu0 %1269
      %vm1271 = vcmask 154624
      %v1272 = vsel %vm1271, %v1266, %v1268
      %v1273 = vsel %vm1271, %v1268, %v1270
      %vm1277 = vcmask 1047704
      %1278 = vst.msk [vmem:[%s232] sm:$0xff] %vm1277, %v1266
      %1279 = vst [vmem:[%s232 + $0x8] sm:$0xff] %v1272
      %vm1280 = vcmask 416768
      %1281 = vst.msk [vmem:[%s232 + $0x10] sm:$0xff] %vm1280, %v1273
      %v1282 = vadd.f32 %v1256, %v1257
      %v1283 = vsel %vm288, %v1258, 0.0
      %v1284 = vadd.f32 %v1282, %v1283
      %1285 = vadd.xlane.f32.xlu0 %v1284
      %v1286 = vpop.xlane.xlu0 %1285
      %vm1287 = vcmask 7168
      %1288 = vst.msk [vmem:[%s237] sm:$0xff] %vm1287, %v1286
      %v1289 = vmul.f32 %v1256, %v1256
      %v1290 = vmul.f32 %v1257, %v1257
      %v1291 = vmul.f32 %v1258, %v1258
      %v1292 = vadd.f32 %v1289, %v1290
      %v1293 = vsel %vm288, %v1291, 0.0
      %v1294 = vadd.f32 %v1292, %v1293
      %1295 = vadd.xlane.f32.xlu0 %v1294
      %v1296 = vpop.xlane.xlu0 %1295
      %s1297 = scalar_lea.vmem %s237, 8
      %1298 = vst.msk [vmem:[%s1297] sm:$0xff] %vm1287, %v1296
      %p1299 = scmp.lt.s32.totalorder %s17, 1
      %s1300 = scalar_select %p1299, %s17, 1
      %s1301 = smul.addr %s1300, 3
      %s1302 = smul.addr %s1301, 8
      %s1303 = scalar_lea.vmem %s4, %s1302
      %p1304 = scmp.lt.s32.totalorder %s17, 1
      %s1305 = scalar_select %p1304, %s17, 1
      %s1306 = smul.addr %s1305, 2
      %s1307 = smul.addr %s1306, 8
      %s1308 = scalar_lea.vmem %s5, %s1307
      // Predicated region
      $region37: #{unet2d_forward.11} parent=35 // pred_check
        %p1309 = pneg %p124
      $region38: #{unet2d_forward.11} parent=35 // pred_check_branch
        %1311 = sbr.rel (%p1309) target = $region40
      $region39: #{unet2d_forward.11} parent=35 // pred_region
        _
      $region40: #{unet2d_forward.11} parent=35 // pred_fallthru
        _
      // Predicated region
      $region41: #{unet2d_forward.11} parent=35 // pred_check
        %p1312 = pneg %p150
      $region42: #{unet2d_forward.11} parent=35 // pred_check_branch
        %1314 = sbr.rel (%p1312) target = $region44
      $region43: #{unet2d_forward.11} parent=35 // pred_region
        _
      $region44: #{unet2d_forward.11} parent=35 // pred_fallthru
        _
    $region36: #{unet2d_forward.11} parent=5 // pred_fallthru
      _
    %p1315 = scmp.le.s32.totalorder 2, %s12
    // Predicated region
    $region45: #{unet2d_forward.11} parent=5 // pred_check
      %p1316 = pneg %p1315
    $region46: #{unet2d_forward.11} parent=5 // pred_check_branch
      %1318 = sbr.rel (%p1316) target = $region48
    $region47: #{unet2d_forward.11} parent=5 // pred_region
      %s1319 = ssub.s32 %s12, 2
      // Predicated region
      $region49: #{unet2d_forward.11} parent=47 // pred_check
        %p1320 = pneg %p130
      $region50: #{unet2d_forward.11} parent=47 // pred_check_branch
        %1322 = sbr.rel (%p1320) target = $region52
      $region51: #{unet2d_forward.11} parent=47 // pred_region
        %p1323 = scmp.lt.s32.totalorder %s18, 1
        %s1324 = scalar_select %p1323, %s18, 1
        %s1325 = smul.addr %s1324, 3
        %s1326 = smul.addr %s1325, 8
        %s1327 = scalar_lea.vmem %s4, %s1326
      $region52: #{unet2d_forward.11} parent=47 // pred_fallthru
        _
      // Predicated region
      $region53: #{unet2d_forward.11} parent=47 // pred_check
        %p1328 = pneg %p156
      $region54: #{unet2d_forward.11} parent=47 // pred_check_branch
        %1330 = sbr.rel (%p1328) target = $region56
      $region55: #{unet2d_forward.11} parent=47 // pred_region
        %p1331 = scmp.lt.s32.totalorder %s18, 1
        %s1332 = scalar_select %p1331, %s18, 1
        %s1333 = smul.addr %s1332, 2
        %s1334 = smul.addr %s1333, 8
        %s1335 = scalar_lea.vmem %s5, %s1334
      $region56: #{unet2d_forward.11} parent=47 // pred_fallthru
        _
    $region48: #{unet2d_forward.11} parent=5 // pred_fallthru
      _
  $region6: #{unet2d_forward.11} parent=0 // loop_footer
    %s16 = sadd.s32 1, %s12
  $region7: #{unet2d_forward.11} parent=0 // loop_footer_branch
    %11 = sbr.rel target = $region3
  $region8: #{unet2d_forward.11} parent=0 // loop_exit
    _

// kernel: unet2d_forward.14
$region0: #{unet2d_forward.14}
  #allocation0 [shape = 'u32[]', space=smem, size = 0x4, offset = 0x4, fixed_abs, tag = 'smem constant byte address 0x4 - core index']
  #allocation1 [shape = 'u32[72,128]{1,0:T(1,128)}', space=vmem, size = 0x9000, scoped, tag = 'internal scratch']
  #allocation2 [shape = 'f32[8,384]{1,0:T(8,128)}', space=vmem, size = 0x3000, scoped, tag = 'scratch operand']
  #allocation3 [shape = 'f32[72,288]{1,0:T(8,128)}', space=vmem, size = 0x1b000, scoped, tag = 'scratch operand']
  %s0 = inlined_call_operand.vmem [shape: f32[2,8,384], index: 0, kind: input, shape index: {}]
  %s1 = inlined_call_operand.vmem [shape: f32[2,8,384], index: 1, kind: input, shape index: {}]
  %s2 = inlined_call_operand.vmem [shape: f32[2,8,1], index: 2, kind: input, shape index: {}]
  %s3 = inlined_call_operand.vmem [shape: f32[8,72], index: 3, kind: input, shape index: {}]
  %s4 = inlined_call_operand.vmem [shape: f32[1,384], index: 4, kind: input, shape index: {}]
  %s5 = inlined_call_operand.vmem [shape: f32[2,8,384], index: 5, kind: output, shape index: {}]
  %s6 = sld [smem:[#allocation0]]
  $region53: #{unet2d_forward.14} parent=0
    _
  %s8 = ssub.s32 1, %s6
  %s9 = scalar_select 0, %s8, %s6
  loop: start=0, step=1, limit=4
  $region2: #{unet2d_forward.14} parent=0 // loop_pre_header
    _
  $region3: #{unet2d_forward.14} parent=0 // loop_header
    %s11 = sphi 0, %s15
    %p12 = scmp.ge.s32.totalorder %s11, 4
    %s21 = sphi 0, %s23
    %s24 = sphi 0, %s21
    %s25 = sphi 0, %s24
    %s41 = sphi 0, %s25
    %s47 = sphi 0, %s49
    %s50 = sphi 0, %s47
    %s51 = sphi 0, %s50
    %s67 = sphi 0, %s51
    %s71 = sphi 0, %s71
    %s73 = sphi 0, %s71
    %s74 = sphi 0, %s73
    %s88 = sphi 0, %s74
    %s92 = sphi 0, %s92
    %s94 = sphi 0, %s92
    %s95 = sphi 0, %s94
    %s109 = sphi 0, %s95
    %s113 = sphi 0, %s113
    %s115 = sphi 0, %s113
    %s116 = sphi 0, %s115
    %s130 = sphi 0, %s116
    %s136 = sphi 0, %s138
    %s139 = sphi 0, %s136
    %s140 = sphi 0, %s139
    %s156 = sphi 0, %s140
  $region4: #{unet2d_forward.14} parent=0 // loop_header_branch
    %14 = sbr.rel (%p12) target = $region8
  $region5: #{unet2d_forward.14} parent=0 // loop_body
    %s16 = ssub.s32 %s11, 1
    %s17 = ssub.s32 %s11, 2
    %s18 = sadd.s32 %s11, 1
    %s19 = ssub.s32 %s11, %s18
    %p20 = scmp.eq.s32.totalorder %s19, 0
    %s22 = sadd.s32 %s21, 1
    %s23 = scalar_select %p20, %s21, %s22
    %p26 = pneg %p20
    %p27 = scmp.eq.s32.totalorder %s11, 1
    %p28 = por %p26, %p27
    %p29 = scmp.ne.s32.totalorder %s21, %s24
    %p30 = scmp.eq.s32.totalorder %s11, 0
    %p31 = por %p29, %p30
    %p32 = scmp.ne.s32.totalorder %s21, %s24
    %p33 = scmp.eq.s32.totalorder %s16, 1
    %p34 = por %p32, %p33
    %p35 = scmp.ne.s32.totalorder %s24, %s25
    %p36 = scmp.eq.s32.totalorder %s16, 0
    %p37 = por %p35, %p36
    %p38 = scmp.ne.s32.totalorder %s24, %s25
    %p39 = scmp.eq.s32.totalorder %s17, 1
    %p40 = por %p38, %p39
    %p42 = scmp.ne.s32.totalorder %s25, %s41
    %p43 = scmp.eq.s32.totalorder %s17, 0
    %p44 = por %p42, %p43
    %s45 = ssub.s32 %s11, %s18
    %p46 = scmp.eq.s32.totalorder %s45, 0
    %s48 = sadd.s32 %s47, 1
    %s49 = scalar_select %p46, %s47, %s48
    %p52 = pneg %p46
    %p53 = scmp.eq.s32.totalorder %s11, 1
    %p54 = por %p52, %p53
    %p55 = scmp.ne.s32.totalorder %s47, %s50
    %p56 = scmp.eq.s32.totalorder %s11, 0
    %p57 = por %p55, %p56
    %p58 = scmp.ne.s32.totalorder %s47, %s50
    %p59 = scmp.eq.s32.totalorder %s16, 1
    %p60 = por %p58, %p59
    %p61 = scmp.ne.s32.totalorder %s50, %s51
    %p62 = scmp.eq.s32.totalorder %s16, 0
    %p63 = por %p61, %p62
    %p64 = scmp.ne.s32.totalorder %s50, %s51
    %p65 = scmp.eq.s32.totalorder %s17, 1
    %p66 = por %p64, %p65
    %p68 = scmp.ne.s32.totalorder %s51, %s67
    %p69 = scmp.eq.s32.totalorder %s17, 0
    %p70 = por %p68, %p69
    %s72 = sadd.s32 %s71, 1
    %p75 = scmp.eq.s32.totalorder %s11, 1
    %p76 = scmp.ne.s32.totalorder %s71, %s73
    %p77 = scmp.eq.s32.totalorder %s11, 0
    %p78 = por %p76, %p77
    %p79 = scmp.ne.s32.totalorder %s71, %s73
    %p80 = scmp.eq.s32.totalorder %s16, 1
    %p81 = por %p79, %p80
    %p82 = scmp.ne.s32.totalorder %s73, %s74
    %p83 = scmp.eq.s32.totalorder %s16, 0
    %p84 = por %p82, %p83
    %p85 = scmp.ne.s32.totalorder %s73, %s74
    %p86 = scmp.eq.s32.totalorder %s17, 1
    %p87 = por %p85, %p86
    %p89 = scmp.ne.s32.totalorder %s74, %s88
    %p90 = scmp.eq.s32.totalorder %s17, 0
    %p91 = por %p89, %p90
    %s93 = sadd.s32 %s92, 1
    %p96 = scmp.eq.s32.totalorder %s11, 1
    %p97 = scmp.ne.s32.totalorder %s92, %s94
    %p98 = scmp.eq.s32.totalorder %s11, 0
    %p99 = por %p97, %p98
    %p100 = scmp.ne.s32.totalorder %s92, %s94
    %p101 = scmp.eq.s32.totalorder %s16, 1
    %p102 = por %p100, %p101
    %p103 = scmp.ne.s32.totalorder %s94, %s95
    %p104 = scmp.eq.s32.totalorder %s16, 0
    %p105 = por %p103, %p104
    %p106 = scmp.ne.s32.totalorder %s94, %s95
    %p107 = scmp.eq.s32.totalorder %s17, 1
    %p108 = por %p106, %p107
    %p110 = scmp.ne.s32.totalorder %s95, %s109
    %p111 = scmp.eq.s32.totalorder %s17, 0
    %p112 = por %p110, %p111
    %s114 = sadd.s32 %s113, 1
    %p117 = scmp.eq.s32.totalorder %s11, 1
    %p118 = scmp.ne.s32.totalorder %s113, %s115
    %p119 = scmp.eq.s32.totalorder %s11, 0
    %p120 = por %p118, %p119
    %p121 = scmp.ne.s32.totalorder %s113, %s115
    %p122 = scmp.eq.s32.totalorder %s16, 1
    %p123 = por %p121, %p122
    %p124 = scmp.ne.s32.totalorder %s115, %s116
    %p125 = scmp.eq.s32.totalorder %s16, 0
    %p126 = por %p124, %p125
    %p127 = scmp.ne.s32.totalorder %s115, %s116
    %p128 = scmp.eq.s32.totalorder %s17, 1
    %p129 = por %p127, %p128
    %p131 = scmp.ne.s32.totalorder %s116, %s130
    %p132 = scmp.eq.s32.totalorder %s17, 0
    %p133 = por %p131, %p132
    %s134 = ssub.s32 %s11, %s18
    %p135 = scmp.eq.s32.totalorder %s134, 0
    %s137 = sadd.s32 %s136, 1
    %s138 = scalar_select %p135, %s136, %s137
    %p141 = pneg %p135
    %p142 = scmp.eq.s32.totalorder %s11, 1
    %p143 = por %p141, %p142
    %p144 = scmp.ne.s32.totalorder %s136, %s139
    %p145 = scmp.eq.s32.totalorder %s11, 0
    %p146 = por %p144, %p145
    %p147 = scmp.ne.s32.totalorder %s136, %s139
    %p148 = scmp.eq.s32.totalorder %s16, 1
    %p149 = por %p147, %p148
    %p150 = scmp.ne.s32.totalorder %s139, %s140
    %p151 = scmp.eq.s32.totalorder %s16, 0
    %p152 = por %p150, %p151
    %p153 = scmp.ne.s32.totalorder %s139, %s140
    %p154 = scmp.eq.s32.totalorder %s17, 1
    %p155 = por %p153, %p154
    %p157 = scmp.ne.s32.totalorder %s140, %s156
    %p158 = scmp.eq.s32.totalorder %s17, 0
    %p159 = por %p157, %p158
    %p160 = scmp.le.s32.totalorder 1, %s11
    %p161 = scmp.lt.s32.totalorder %s11, 3
    %p162 = pnand %p160, %p161
    %p163 = pneg %p162
    // Predicated region
    $region9: #{unet2d_forward.14} parent=5 // pred_check
      _
    $region10: #{unet2d_forward.14} parent=5 // pred_check_branch
      %165 = sbr.rel (%p162) target = $region12
    $region11: #{unet2d_forward.14} parent=5 // pred_region
      %s166 = ssub.s32 %s11, 1
      // Predicated region
      $region13: #{unet2d_forward.14} parent=11 // pred_check
        %p167 = pneg %p84
      $region14: #{unet2d_forward.14} parent=11 // pred_check_branch
        %169 = sbr.rel (%p167) target = $region16
      $region15: #{unet2d_forward.14} parent=11 // pred_region
        _
      $region16: #{unet2d_forward.14} parent=11 // pred_fallthru
        _
      // Predicated region
      $region17: #{unet2d_forward.14} parent=11 // pred_check
        %p170 = pneg %p105
      $region18: #{unet2d_forward.14} parent=11 // pred_check_branch
        %172 = sbr.rel (%p170) target = $region20
      $region19: #{unet2d_forward.14} parent=11 // pred_region
        _
      $region20: #{unet2d_forward.14} parent=11 // pred_fallthru
        _
      // Predicated region
      $region21: #{unet2d_forward.14} parent=11 // pred_check
        %p173 = pneg %p126
      $region22: #{unet2d_forward.14} parent=11 // pred_check_branch
        %175 = sbr.rel (%p173) target = $region24
      $region23: #{unet2d_forward.14} parent=11 // pred_region
        _
      $region24: #{unet2d_forward.14} parent=11 // pred_fallthru
        _
    $region12: #{unet2d_forward.14} parent=5 // pred_fallthru
      _
    %p176 = scmp.lt.s32.totalorder %s11, 2
    // Predicated region
    $region25: #{unet2d_forward.14} parent=5 // pred_check
      %p177 = pneg %p176
    $region26: #{unet2d_forward.14} parent=5 // pred_check_branch
      %179 = sbr.rel (%p177) target = $region28
    $region27: #{unet2d_forward.14} parent=5 // pred_region
      // Predicated region
      $region29: #{unet2d_forward.14} parent=27 // pred_check
        %p180 = pneg %p31
      $region30: #{unet2d_forward.14} parent=27 // pred_check_branch
        %182 = sbr.rel (%p180) target = $region32
      $region31: #{unet2d_forward.14} parent=27 // pred_region
        %p183 = scmp.lt.s32.totalorder %s11, 1
        %s184 = scalar_select %p183, %s11, 1
        %s185 = smul.addr %s184, 3
        %s186 = smul.addr %s185, 8
        %s187 = scalar_lea.vmem %s0, %s186
      $region32: #{unet2d_forward.14} parent=27 // pred_fallthru
        _
      // Predicated region
      $region33: #{unet2d_forward.14} parent=27 // pred_check
        %p188 = pneg %p57
      $region34: #{unet2d_forward.14} parent=27 // pred_check_branch
        %190 = sbr.rel (%p188) target = $region36
      $region35: #{unet2d_forward.14} parent=27 // pred_region
        %p191 = scmp.lt.s32.totalorder %s11, 1
        %s192 = scalar_select %p191, %s11, 1
        %s193 = smul.addr %s192, 3
        %s194 = smul.addr %s193, 8
        %s195 = scalar_lea.vmem %s1, %s194
      $region36: #{unet2d_forward.14} parent=27 // pred_fallthru
        _
    $region28: #{unet2d_forward.14} parent=5 // pred_fallthru
      _
    %p196 = scmp.le.s32.totalorder 1, %s11
    %p197 = scmp.lt.s32.totalorder %s11, 3
    %p198 = pnand %p196, %p197
    %p199 = pneg %p198
    // Predicated region
    $region37: #{unet2d_forward.14} parent=5 // pred_check
      _
    $region38: #{unet2d_forward.14} parent=5 // pred_check_branch
      %201 = sbr.rel (%p198) target = $region40
    $region39: #{unet2d_forward.14} parent=5 // pred_region
      %s202 = ssub.s32 %s11, 1
      %p203 = scmp.lt.s32.totalorder %s16, 1
      %s204 = scalar_select %p203, %s16, 1
      %s205 = smul.addr %s204, 3
      %s206 = smul.addr %s205, 8
      %s207 = scalar_lea.vmem %s0, %s206
      %p208 = pneg %p37
      %p209 = pneg %p34
      %p210 = scmp.lt.s32.totalorder %s16, 1
      %s211 = scalar_select %p210, %s16, 1
      %s212 = smul.addr %s211, 3
      %s213 = smul.addr %s212, 8
      %s214 = scalar_lea.vmem %s1, %s213
      %p215 = pneg %p63
      %p216 = pneg %p60
      %p217 = pneg %p84
      %p218 = pneg %p81
      %p219 = pneg %p105
      %p220 = pneg %p102
      %p221 = pneg %p126
      %p222 = pneg %p123
      %p223 = pneg %p152
      %p224 = pneg %p149
      %p225 = scmp.lt.s32.totalorder %s16, 1
      %s226 = scalar_select %p225, %s16, 1
      %s227 = smul.addr %s226, 3
      %s228 = smul.addr %s227, 8
      %s229 = scalar_lea.vmem %s5, %s228
      %p230 = scmp.lt.s32.totalorder %s16, 1
      %s231 = scalar_select %p230, %s16, 1
      %s232 = smul.addr %s231, 3
      %s233 = smul.addr %s232, 8
      %s234 = scalar_lea.vmem %s0, %s233
      %p235 = scmp.lt.s32.totalorder %s16, 1
      %s236 = scalar_select %p235, %s16, 1
      %s237 = smul.addr %s236, 3
      %s238 = smul.addr %s237, 8
      %s239 = scalar_lea.vmem %s1, %s238
      %p240 = scmp.lt.s32.totalorder %s16, 1
      %s241 = scalar_select %p240, %s16, 1
      %s242 = smul.addr %s241, 3
      %s243 = smul.addr %s242, 8
      %s244 = scalar_lea.vmem %s5, %s243
      %v245 = vld [vmem:[%s4] sm:$0x7]
      %v246 = vld [vmem:[%s234] sm:$0xff]
      %v247 = vld [vmem:[%s234 + $0x8] sm:$0xff]
      %v248 = vld [vmem:[%s234 + $0x10] sm:$0xff]
      %v249 = vld [vmem:[%s2] sm:$0xff]
      %251 = vset.pattern.permute.xlu0 0
      %252 = vperm.xlu0 %251, %v249
      %v253 = vpop.permute.xlu0 %252
      %v255 = vmul.f32 %v246, %v253
      %v256 = vmul.f32 %v247, %v253
      %v257 = vmul.f32 %v248, %v253
      %s258 = scalar_lea.vmem %s2, 8
      %v259 = vld [vmem:[%s258] sm:$0xff]
      %261 = vset.pattern.permute.xlu0 0
      %262 = vperm.xlu0 %261, %v259
      %v263 = vpop.permute.xlu0 %262
      %v265 = vadd.f32 %v255, %v263
      %v266 = vadd.f32 %v256, %v263
      %v267 = vadd.f32 %v257, %v263
      %vm268 = vcmp.ge.f32.partialorder %v265, 0.0
      %vm269 = vcmp.ge.f32.partialorder %v266, 0.0
      %vm270 = vcmp.ge.f32.partialorder %v267, 0.0
      %v271 = vmul.f32 %v265, 0.2
      %v272 = vmul.f32 %v266, 0.2
      %v273 = vmul.f32 %v267, 0.2
      %v274 = vsel %vm268, %v265, %v271
      %v275 = vsel %vm269, %v266, %v272
      %v276 = vsel %vm270, %v267, %v273
      %v278 = vperm.slane %v245, 0
      %v279 = vperm.slane %v245, 1
      %v280 = vperm.slane %v245, 2
      %v284 = vmul.f32 %v274, %v278
      %v285 = vmul.f32 %v275, %v279
      %v286 = vmul.f32 %v276, %v280
      %v287 = vld [vmem:[%s239] sm:$0xff]
      %v288 = vld [vmem:[%s239 + $0x8] sm:$0xff]
      %v289 = vld [vmem:[%s239 + $0x10] sm:$0xff]
      %v290 = vadd.f32 %v284, %v287
      %v291 = vadd.f32 %v285, %v288
      %v292 = vadd.f32 %v286, %v289
      %293 = vst [vmem:[#allocation2] sm:$0xff] %v290
      %294 = vst [vmem:[#allocation2 + $0x8] sm:$0xff] %v291
      %295 = vst [vmem:[#allocation2 + $0x10] sm:$0xff] %v292
      %v296 = vld [vmem:[#allocation2] sm:$0xff]
      %v297 = vld [vmem:[#allocation2 + $0x8] sm:$0xff]
      %v298 = vld [vmem:[#allocation2 + $0x10] sm:$0xff]
      %299 = vst [vmem:[#allocation3] sm:$0xff] %v296
      %300 = vst [vmem:[#allocation3 + $0x8] sm:$0xff] %v297
      %vm301 = vcmask 261120
      %302 = vst.msk [vmem:[#allocation3 + $0x10] sm:$0xff] %vm301, %v298
      %v303 = vld [vmem:[#allocation2] sm:$0xff]
      %v304 = vld [vmem:[#allocation2 + $0x8] sm:$0xff]
      %v305 = vld [vmem:[#allocation2 + $0x10] sm:$0xff]
      %309 = vrot.lane.b32.xlu0 %v303, 127
      %v310 = vpop.permute.xlu0 %309
      %311 = vrot.lane.b32.xlu0 %v304, 127
      %v312 = vpop.permute.xlu0 %311
      %313 = vrot.lane.b32.xlu0 %v305, 127
      %v314 = vpop.permute.xlu0 %313
      %vm315 = vcmask 1039360
      %v316 = vsel %vm315, %v310, %v312
      %v317 = vsel %vm315, %v312, %v314
      %321 = vst [vmem:[#allocation3 + $0x18] sm:$0xff] %v316
      %322 = vst [vmem:[#allocation3 + $0x20] sm:$0xff] %v317
      %323 = vst.msk [vmem:[#allocation3 + $0x28] sm:$0xff] %vm301, %v314
      %v324 = vld [vmem:[#allocation2] sm:$0xff]
      %v325 = vld [vmem:[#allocation2 + $0x8] sm:$0xff]
      %v326 = vld [vmem:[#allocation2 + $0x10] sm:$0xff]
      %330 = vrot.lane.b32.xlu0 %v324, 126
      %v331 = vpop.permute.xlu0 %330
      %332 = vrot.lane.b32.xlu0 %v325, 126
      %v333 = vpop.permute.xlu0 %332
      %334 = vrot.lane.b32.xlu0 %v326, 126
      %v335 = vpop.permute.xlu0 %334
      %vm336 = vcmask 1031168
      %v337 = vsel %vm336, %v331, %v333
      %v338 = vsel %vm336, %v333, %v335
      %342 = vst [vmem:[#allocation3 + $0x30] sm:$0xff] %v337
      %343 = vst [vmem:[#allocation3 + $0x38] sm:$0xff] %v338
      %344 = vst.msk [vmem:[#allocation3 + $0x40] sm:$0xff] %vm301, %v335
      %v345 = vld [vmem:[#allocation2] sm:$0xff]
      %v346 = vld [vmem:[#allocation2 + $0x8] sm:$0xff]
      %v347 = vld [vmem:[#allocation2 + $0x10] sm:$0xff]
      %351 = vrot.lane.b32.xlu0 %v345, 110
      %v352 = vpop.permute.xlu0 %351
      %353 = vrot.lane.b32.xlu0 %v346, 110
      %v354 = vpop.permute.xlu0 %353
      %355 = vrot.lane.b32.xlu0 %v347, 110
      %v356 = vpop.permute.xlu0 %355
      %vm357 = vcmask 900096
      %v358 = vsel %vm357, %v352, %v354
      %v359 = vsel %vm357, %v354, %v356
      %363 = vst [vmem:[#allocation3 + $0x48] sm:$0xff] %v358
      %364 = vst [vmem:[#allocation3 + $0x50] sm:$0xff] %v359
      %365 = vst.msk [vmem:[#allocation3 + $0x58] sm:$0xff] %vm301, %v356
      %v366 = vld [vmem:[#allocation2] sm:$0xff]
      %v367 = vld [vmem:[#allocation2 + $0x8] sm:$0xff]
      %v368 = vld [vmem:[#allocation2 + $0x10] sm:$0xff]
      %372 = vrot.lane.b32.xlu0 %v366, 109
      %v373 = vpop.permute.xlu0 %372
      %374 = vrot.lane.b32.xlu0 %v367, 109
      %v375 = vpop.permute.xlu0 %374
      %376 = vrot.lane.b32.xlu0 %v368, 109
      %v377 = vpop.permute.xlu0 %376
      %vm378 = vcmask 891904
      %v379 = vsel %vm378, %v373, %v375
      %v380 = vsel %vm378, %v375, %v377
      %384 = vst [vmem:[#allocation3 + $0x60] sm:$0xff] %v379
      %385 = vst [vmem:[#allocation3 + $0x68] sm:$0xff] %v380
      %386 = vst.msk [vmem:[#allocation3 + $0x70] sm:$0xff] %vm301, %v377
      %v387 = vld [vmem:[#allocation2] sm:$0xff]
      %v388 = vld [vmem:[#allocation2 + $0x8] sm:$0xff]
      %v389 = vld [vmem:[#allocation2 + $0x10] sm:$0xff]
      %393 = vrot.lane.b32.xlu0 %v387, 108
      %v394 = vpop.permute.xlu0 %393
      %395 = vrot.lane.b32.xlu0 %v388, 108
      %v396 = vpop.permute.xlu0 %395
      %397 = vrot.lane.b32.xlu0 %v389, 108
      %v398 = vpop.permute.xlu0 %397
      %vm399 = vcmask 883712
      %v400 = vsel %vm399, %v394, %v396
      %v401 = vsel %vm399, %v396, %v398
      %405 = vst [vmem:[#allocation3 + $0x78] sm:$0xff] %v400
      %406 = vst [vmem:[#allocation3 + $0x80] sm:$0xff] %v401
      %407 = vst.msk [vmem:[#allocation3 + $0x88] sm:$0xff] %vm301, %v398
      %v408 = vld [vmem:[#allocation2] sm:$0xff]
      %v409 = vld [vmem:[#allocation2 + $0x8] sm:$0xff]
      %v410 = vld [vmem:[#allocation2 + $0x10] sm:$0xff]
      %414 = vrot.lane.b32.xlu0 %v408, 92
      %v415 = vpop.permute.xlu0 %414
      %416 = vrot.lane.b32.xlu0 %v409, 92
      %v417 = vpop.permute.xlu0 %416
      %418 = vrot.lane.b32.xlu0 %v410, 92
      %v419 = vpop.permute.xlu0 %418
      %vm420 = vcmask 752640
      %v421 = vsel %vm420, %v415, %v417
      %v422 = vsel %vm420, %v417, %v419
      %426 = vst [vmem:[#allocation3 + $0x90] sm:$0xff] %v421
      %427 = vst [vmem:[#allocation3 + $0x98] sm:$0xff] %v422
      %428 = vst.msk [vmem:[#allocation3 + $0xa0] sm:$0xff] %vm301, %v419
      %v429 = vld [vmem:[#allocation2] sm:$0xff]
      %v430 = vld [vmem:[#allocation2 + $0x8] sm:$0xff]
      %v431 = vld [vmem:[#allocation2 + $0x10] sm:$0xff]
      %435 = vrot.lane.b32.xlu0 %v429, 91
      %v436 = vpop.permute.xlu0 %435
      %437 = vrot.lane.b32.xlu0 %v430, 91
      %v438 = vpop.permute.xlu0 %437
      %439 = vrot.lane.b32.xlu0 %v431, 91
      %v440 = vpop.permute.xlu0 %439
      %vm441 = vcmask 744448
      %v442 = vsel %vm441, %v436, %v438
      %v443 = vsel %vm441, %v438, %v440
      %447 = vst [vmem:[#allocation3 + $0xa8] sm:$0xff] %v442
      %448 = vst [vmem:[#allocation3 + $0xb0] sm:$0xff] %v443
      %449 = vst.msk [vmem:[#allocation3 + $0xb8] sm:$0xff] %vm301, %v440
      %v450 = vld [vmem:[#allocation2] sm:$0xff]
      %v451 = vld [vmem:[#allocation2 + $0x8] sm:$0xff]
      %v452 = vld [vmem:[#allocation2 + $0x10] sm:$0xff]
      %456 = vrot.lane.b32.xlu0 %v450, 90
      %v457 = vpop.permute.xlu0 %456
      %458 = vrot.lane.b32.xlu0 %v451, 90
      %v459 = vpop.permute.xlu0 %458
      %460 = vrot.lane.b32.xlu0 %v452, 90
      %v461 = vpop.permute.xlu0 %460
      %vm462 = vcmask 736256
      %v463 = vsel %vm462, %v457, %v459
      %v464 = vsel %vm462, %v459, %v461
      %468 = vst [vmem:[#allocation3 + $0xc0] sm:$0xff] %v463
      %469 = vst [vmem:[#allocation3 + $0xc8] sm:$0xff] %v464
      %470 = vst.msk [vmem:[#allocation3 + $0xd0] sm:$0xff] %vm301, %v461
      %v471 = vld [vmem:[%s3] sm:$0xff]
      %v472 = vld [vmem:[#allocation3] sm:$0xff]
      %v473 = vld [vmem:[#allocation3 + $0x8] sm:$0xff]
      %v474 = vld [vmem:[#allocation3 + $0x10] sm:$0xff]
      %v475 = vld [vmem:[#allocation3 + $0x18] sm:$0xff]
      %v476 = vld [vmem:[#allocation3 + $0x20] sm:$0xff]
      %v477 = vld [vmem:[#allocation3 + $0x28] sm:$0xff]
      %v478 = vld [vmem:[#allocation3 + $0x30] sm:$0xff]
      %v479 = vld [vmem:[#allocation3 + $0x38] sm:$0xff]
      %v480 = vld [vmem:[#allocation3 + $0x40] sm:$0xff]
      %v481 = vld [vmem:[#allocation3 + $0x48] sm:$0xff]
      %v482 = vld [vmem:[#allocation3 + $0x50] sm:$0xff]
      %v483 = vld [vmem:[#allocation3 + $0x58] sm:$0xff]
      %v484 = vld [vmem:[#allocation3 + $0x60] sm:$0xff]
      %v485 = vld [vmem:[#allocation3 + $0x68] sm:$0xff]
      %v486 = vld [vmem:[#allocation3 + $0x70] sm:$0xff]
      %v487 = vld [vmem:[#allocation3 + $0x78] sm:$0xff]
      %v488 = vld [vmem:[#allocation3 + $0x80] sm:$0xff]
      %v489 = vld [vmem:[#allocation3 + $0x88] sm:$0xff]
      %v490 = vld [vmem:[#allocation3 + $0x90] sm:$0xff]
      %v491 = vld [vmem:[#allocation3 + $0x98] sm:$0xff]
      %v492 = vld [vmem:[#allocation3 + $0xa0] sm:$0xff]
      %v493 = vld [vmem:[#allocation3 + $0xa8] sm:$0xff]
      %v494 = vld [vmem:[#allocation3 + $0xb0] sm:$0xff]
      %v495 = vld [vmem:[#allocation3 + $0xb8] sm:$0xff]
      %v496 = vld [vmem:[#allocation3 + $0xc0] sm:$0xff]
      %v497 = vld [vmem:[#allocation3 + $0xc8] sm:$0xff]
      %v498 = vld [vmem:[#allocation3 + $0xd0] sm:$0xff]
      %vm499 = vcmask 588800
      %v501 = vsel %vm499, %v471, 0
      %503 = vmatpush.msra.mxu0 0.0
      %504 = vmatpush.msra.mxu0 0.0
      %505 = vmatpush.msra.mxu0 0.0
      %506 = vmatpush.msra.mxu0 0.0
      %507 = vmatpush.msra.mxu0 0.0
      %508 = vmatpush.msra.mxu0 0.0
      %509 = vmatpush.msra.mxu0 0.0
      %v510 = vand.u32 %v496, 4294901760
      %511 = vmatpush.msra.mxu0 %v510
      %v512 = vand.u32 %v493, 4294901760
      %513 = vmatpush.msra.mxu0 %v512
      %v514 = vand.u32 %v490, 4294901760
      %515 = vmatpush.msra.mxu0 %v514
      %v516 = vand.u32 %v487, 4294901760
      %517 = vmatpush.msra.mxu0 %v516
      %v518 = vand.u32 %v484, 4294901760
      %519 = vmatpush.msra.mxu0 %v518
      %v520 = vand.u32 %v481, 4294901760
      %521 = vmatpush.msra.mxu0 %v520
      %v522 = vand.u32 %v478, 4294901760
      %523 = vmatpush.msra.mxu0 %v522
      %v524 = vand.u32 %v475, 4294901760
      %525 = vmatpush.msra.mxu0 %v524
      %v526 = vand.u32 %v472, 4294901760
      %527 = vmatpush.msra.mxu0 %v526
      %v528 = vand.u32 %v501, 4294901760
      %v529 = vsub.f32 %v501, %v528
      %v530 = vand.u32 %v529, 4294901760
      %v531 = vsub.f32 %v529, %v530
      %v532 = vand.u32 %v531, 4294901760
      %533 = vmatmul.f32.gmra.mxu0 %v532
      %v534 = vpop.f32.mrf.mxu0
      %v535 = vadd.f32 0.0, %v534
      %536 = vdwg.mxu0
      %537 = vmatpush.msra.mxu0 0.0
      %538 = vmatpush.msra.mxu0 0.0
      %539 = vmatpush.msra.mxu0 0.0
      %540 = vmatpush.msra.mxu0 0.0
      %541 = vmatpush.msra.mxu0 0.0
      %542 = vmatpush.msra.mxu0 0.0
      %543 = vmatpush.msra.mxu0 0.0
      %v544 = vand.u32 %v496, 4294901760
      %v545 = vsub.f32 %v496, %v544
      %v546 = vand.u32 %v545, 4294901760
      %v547 = vsub.f32 %v545, %v546
      %v548 = vand.u32 %v547, 4294901760
      %549 = vmatpush.msra.mxu0 %v548
      %v550 = vand.u32 %v493, 4294901760
      %v551 = vsub.f32 %v493, %v550
      %v552 = vand.u32 %v551, 4294901760
      %v553 = vsub.f32 %v551, %v552
      %v554 = vand.u32 %v553, 4294901760
      %555 = vmatpush.msra.mxu0 %v554
      %v556 = vand.u32 %v490, 4294901760
      %v557 = vsub.f32 %v490, %v556
      %v558 = vand.u32 %v557, 4294901760
      %v559 = vsub.f32 %v557, %v558
      %v560 = vand.u32 %v559, 4294901760
      %561 = vmatpush.msra.mxu0 %v560
      %v562 = vand.u32 %v487, 4294901760
      %v563 = vsub.f32 %v487, %v562
      %v564 = vand.u32 %v563, 4294901760
      %v565 = vsub.f32 %v563, %v564
      %v566 = vand.u32 %v565, 4294901760
      %567 = vmatpush.msra.mxu0 %v566
      %v568 = vand.u32 %v484, 4294901760
      %v569 = vsub.f32 %v484, %v568
      %v570 = vand.u32 %v569, 4294901760
      %v571 = vsub.f32 %v569, %v570
      %v572 = vand.u32 %v571, 4294901760
      %573 = vmatpush.msra.mxu0 %v572
      %v574 = vand.u32 %v481, 4294901760
      %v575 = vsub.f32 %v481, %v574
      %v576 = vand.u32 %v575, 4294901760
      %v577 = vsub.f32 %v575, %v576
      %v578 = vand.u32 %v577, 4294901760
      %579 = vmatpush.msra.mxu0 %v578
      %v580 = vand.u32 %v478, 4294901760
      %v581 = vsub.f32 %v478, %v580
      %v582 = vand.u32 %v581, 4294901760
      %v583 = vsub.f32 %v581, %v582
      %v584 = vand.u32 %v583, 4294901760
      %585 = vmatpush.msra.mxu0 %v584
      %v586 = vand.u32 %v475, 4294901760
      %v587 = vsub.f32 %v475, %v586
      %v588 = vand.u32 %v587, 4294901760
      %v589 = vsub.f32 %v587, %v588
      %v590 = vand.u32 %v589, 4294901760
      %591 = vmatpush.msra.mxu0 %v590
      %v592 = vand.u32 %v472, 4294901760
      %v593 = vsub.f32 %v472, %v592
      %v594 = vand.u32 %v593, 4294901760
      %v595 = vsub.f32 %v593, %v594
      %v596 = vand.u32 %v595, 4294901760
      %597 = vmatpush.msra.mxu0 %v596
      %v598 = vand.u32 %v501, 4294901760
      %599 = vmatmul.f32.gmra.mxu0 %v598
      %v600 = vpop.f32.mrf.mxu0
      %v601 = vadd.f32 %v535, %v600
      %602 = vdwg.mxu0
      %603 = vmatpush.msra.mxu0 0.0
      %604 = vmatpush.msra.mxu0 0.0
      %605 = vmatpush.msra.mxu0 0.0
      %606 = vmatpush.msra.mxu0 0.0
      %607 = vmatpush.msra.mxu0 0.0
      %608 = vmatpush.msra.mxu0 0.0
      %609 = vmatpush.msra.mxu0 0.0
      %v610 = vand.u32 %v496, 4294901760
      %v611 = vsub.f32 %v496, %v610
      %612 = vmatpush.msra.mxu0 %v611
      %v613 = vand.u32 %v493, 4294901760
      %v614 = vsub.f32 %v493, %v613
      %615 = vmatpush.msra.mxu0 %v614
      %v616 = vand.u32 %v490, 4294901760
      %v617 = vsub.f32 %v490, %v616
      %618 = vmatpush.msra.mxu0 %v617
      %v619 = vand.u32 %v487, 4294901760
      %v620 = vsub.f32 %v487, %v619
      %621 = vmatpush.msra.mxu0 %v620
      %v622 = vand.u32 %v484, 4294901760
      %v623 = vsub.f32 %v484, %v622
      %624 = vmatpush.msra.mxu0 %v623
      %v625 = vand.u32 %v481, 4294901760
      %v626 = vsub.f32 %v481, %v625
      %627 = vmatpush.msra.mxu0 %v626
      %v628 = vand.u32 %v478, 4294901760
      %v629 = vsub.f32 %v478, %v628
      %630 = vmatpush.msra.mxu0 %v629
      %v631 = vand.u32 %v475, 4294901760
      %v632 = vsub.f32 %v475, %v631
      %633 = vmatpush.msra.mxu0 %v632
      %v634 = vand.u32 %v472, 4294901760
      %v635 = vsub.f32 %v472, %v634
      %636 = vmatpush.msra.mxu0 %v635
      %v637 = vand.u32 %v501, 4294901760
      %v638 = vsub.f32 %v501, %v637
      %639 = vmatmul.f32.gmra.mxu0 %v638
      %v640 = vpop.f32.mrf.mxu0
      %v641 = vadd.f32 %v601, %v640
      %642 = vdwg.mxu0
      %643 = vmatpush.msra.mxu0 0.0
      %644 = vmatpush.msra.mxu0 0.0
      %645 = vmatpush.msra.mxu0 0.0
      %646 = vmatpush.msra.mxu0 0.0
      %647 = vmatpush.msra.mxu0 0.0
      %648 = vmatpush.msra.mxu0 0.0
      %649 = vmatpush.msra.mxu0 0.0
      %v650 = vand.u32 %v496, 4294901760
      %651 = vmatpush.msra.mxu0 %v650
      %v652 = vand.u32 %v493, 4294901760
      %653 = vmatpush.msra.mxu0 %v652
      %v654 = vand.u32 %v490, 4294901760
      %655 = vmatpush.msra.mxu0 %v654
      %v656 = vand.u32 %v487, 4294901760
      %657 = vmatpush.msra.mxu0 %v656
      %v658 = vand.u32 %v484, 4294901760
      %659 = vmatpush.msra.mxu0 %v658
      %v660 = vand.u32 %v481, 4294901760
      %661 = vmatpush.msra.mxu0 %v660
      %v662 = vand.u32 %v478, 4294901760
      %663 = vmatpush.msra.mxu0 %v662
      %v664 = vand.u32 %v475, 4294901760
      %665 = vmatpush.msra.mxu0 %v664
      %v666 = vand.u32 %v472, 4294901760
      %667 = vmatpush.msra.mxu0 %v666
      %v668 = vand.u32 %v501, 4294901760
      %v669 = vsub.f32 %v501, %v668
      %v670 = vand.u32 %v669, 4294901760
      %671 = vmatmul.f32.gmra.mxu0 %v670
      %v672 = vpop.f32.mrf.mxu0
      %v673 = vadd.f32 %v641, %v672
      %674 = vdwg.mxu0
      %675 = vmatpush.msra.mxu0 0.0
      %676 = vmatpush.msra.mxu0 0.0
      %677 = vmatpush.msra.mxu0 0.0
      %678 = vmatpush.msra.mxu0 0.0
      %679 = vmatpush.msra.mxu0 0.0
      %680 = vmatpush.msra.mxu0 0.0
      %681 = vmatpush.msra.mxu0 0.0
      %v682 = vand.u32 %v496, 4294901760
      %v683 = vsub.f32 %v496, %v682
      %v684 = vand.u32 %v683, 4294901760
      %685 = vmatpush.msra.mxu0 %v684
      %v686 = vand.u32 %v493, 4294901760
      %v687 = vsub.f32 %v493, %v686
      %v688 = vand.u32 %v687, 4294901760
      %689 = vmatpush.msra.mxu0 %v688
      %v690 = vand.u32 %v490, 4294901760
      %v691 = vsub.f32 %v490, %v690
      %v692 = vand.u32 %v691, 4294901760
      %693 = vmatpush.msra.mxu0 %v692
      %v694 = vand.u32 %v487, 4294901760
      %v695 = vsub.f32 %v487, %v694
      %v696 = vand.u32 %v695, 4294901760
      %697 = vmatpush.msra.mxu0 %v696
      %v698 = vand.u32 %v484, 4294901760
      %v699 = vsub.f32 %v484, %v698
      %v700 = vand.u32 %v699, 4294901760
      %701 = vmatpush.msra.mxu0 %v700
      %v702 = vand.u32 %v481, 4294901760
      %v703 = vsub.f32 %v481, %v702
      %v704 = vand.u32 %v703, 4294901760
      %705 = vmatpush.msra.mxu0 %v704
      %v706 = vand.u32 %v478, 4294901760
      %v707 = vsub.f32 %v478, %v706
      %v708 = vand.u32 %v707, 4294901760
      %709 = vmatpush.msra.mxu0 %v708
      %v710 = vand.u32 %v475, 4294901760
      %v711 = vsub.f32 %v475, %v710
      %v712 = vand.u32 %v711, 4294901760
      %713 = vmatpush.msra.mxu0 %v712
      %v714 = vand.u32 %v472, 4294901760
      %v715 = vsub.f32 %v472, %v714
      %v716 = vand.u32 %v715, 4294901760
      %717 = vmatpush.msra.mxu0 %v716
      %v718 = vand.u32 %v501, 4294901760
      %719 = vmatmul.f32.gmra.mxu0 %v718
      %v720 = vpop.f32.mrf.mxu0
      %v721 = vadd.f32 %v673, %v720
      %722 = vdwg.mxu0
      %723 = vmatpush.msra.mxu0 0.0
      %724 = vmatpush.msra.mxu0 0.0
      %725 = vmatpush.msra.mxu0 0.0
      %726 = vmatpush.msra.mxu0 0.0
      %727 = vmatpush.msra.mxu0 0.0
      %728 = vmatpush.msra.mxu0 0.0
      %729 = vmatpush.msra.mxu0 0.0
      %v730 = vand.u32 %v496, 4294901760
      %731 = vmatpush.msra.mxu0 %v730
      %v732 = vand.u32 %v493, 4294901760
      %733 = vmatpush.msra.mxu0 %v732
      %v734 = vand.u32 %v490, 4294901760
      %735 = vmatpush.msra.mxu0 %v734
      %v736 = vand.u32 %v487, 4294901760
      %737 = vmatpush.msra.mxu0 %v736
      %v738 = vand.u32 %v484, 4294901760
      %739 = vmatpush.msra.mxu0 %v738
      %v740 = vand.u32 %v481, 4294901760
      %741 = vmatpush.msra.mxu0 %v740
      %v742 = vand.u32 %v478, 4294901760
      %743 = vmatpush.msra.mxu0 %v742
      %v744 = vand.u32 %v475, 4294901760
      %745 = vmatpush.msra.mxu0 %v744
      %v746 = vand.u32 %v472, 4294901760
      %747 = vmatpush.msra.mxu0 %v746
      %v748 = vand.u32 %v501, 4294901760
      %749 = vmatmul.f32.gmra.mxu0 %v748
      %v750 = vpop.f32.mrf.mxu0
      %v751 = vadd.f32 %v721, %v750
      %752 = vdwg.mxu0
      %753 = vmatpush.msra.mxu0 0.0
      %754 = vmatpush.msra.mxu0 0.0
      %755 = vmatpush.msra.mxu0 0.0
      %756 = vmatpush.msra.mxu0 0.0
      %757 = vmatpush.msra.mxu0 0.0
      %758 = vmatpush.msra.mxu0 0.0
      %759 = vmatpush.msra.mxu0 0.0
      %v760 = vand.u32 %v497, 4294901760
      %761 = vmatpush.msra.mxu0 %v760
      %v762 = vand.u32 %v494, 4294901760
      %763 = vmatpush.msra.mxu0 %v762
      %v764 = vand.u32 %v491, 4294901760
      %765 = vmatpush.msra.mxu0 %v764
      %v766 = vand.u32 %v488, 4294901760
      %767 = vmatpush.msra.mxu0 %v766
      %v768 = vand.u32 %v485, 4294901760
      %769 = vmatpush.msra.mxu0 %v768
      %v770 = vand.u32 %v482, 4294901760
      %771 = vmatpush.msra.mxu0 %v770
      %v772 = vand.u32 %v479, 4294901760
      %773 = vmatpush.msra.mxu0 %v772
      %v774 = vand.u32 %v476, 4294901760
      %775 = vmatpush.msra.mxu0 %v774
      %v776 = vand.u32 %v473, 4294901760
      %777 = vmatpush.msra.mxu0 %v776
      %v778 = vand.u32 %v501, 4294901760
      %v779 = vsub.f32 %v501, %v778
      %v780 = vand.u32 %v779, 4294901760
      %v781 = vsub.f32 %v779, %v780
      %v782 = vand.u32 %v781, 4294901760
      %783 = vmatmul.f32.gmra.mxu0 %v782
      %v784 = vpop.f32.mrf.mxu0
      %v785 = vadd.f32 0.0, %v784
      %786 = vdwg.mxu0
      %787 = vmatpush.msra.mxu0 0.0
      %788 = vmatpush.msra.mxu0 0.0
      %789 = vmatpush.msra.mxu0 0.0
      %790 = vmatpush.msra.mxu0 0.0
      %791 = vmatpush.msra.mxu0 0.0
      %792 = vmatpush.msra.mxu0 0.0
      %793 = vmatpush.msra.mxu0 0.0
      %v794 = vand.u32 %v497, 4294901760
      %v795 = vsub.f32 %v497, %v794
      %v796 = vand.u32 %v795, 4294901760
      %v797 = vsub.f32 %v795, %v796
      %v798 = vand.u32 %v797, 4294901760
      %799 = vmatpush.msra.mxu0 %v798
      %v800 = vand.u32 %v494, 4294901760
      %v801 = vsub.f32 %v494, %v800
      %v802 = vand.u32 %v801, 4294901760
      %v803 = vsub.f32 %v801, %v802
      %v804 = vand.u32 %v803, 4294901760
      %805 = vmatpush.msra.mxu0 %v804
      %v806 = vand.u32 %v491, 4294901760
      %v807 = vsub.f32 %v491, %v806
      %v808 = vand.u32 %v807, 4294901760
      %v809 = vsub.f32 %v807, %v808
      %v810 = vand.u32 %v809, 4294901760
      %811 = vmatpush.msra.mxu0 %v810
      %v812 = vand.u32 %v488, 4294901760
      %v813 = vsub.f32 %v488, %v812
      %v814 = vand.u32 %v813, 4294901760
      %v815 = vsub.f32 %v813, %v814
      %v816 = vand.u32 %v815, 4294901760
      %817 = vmatpush.msra.mxu0 %v816
      %v818 = vand.u32 %v485, 4294901760
      %v819 = vsub.f32 %v485, %v818
      %v820 = vand.u32 %v819, 4294901760
      %v821 = vsub.f32 %v819, %v820
      %v822 = vand.u32 %v821, 4294901760
      %823 = vmatpush.msra.mxu0 %v822
      %v824 = vand.u32 %v482, 4294901760
      %v825 = vsub.f32 %v482, %v824
      %v826 = vand.u32 %v825, 4294901760
      %v827 = vsub.f32 %v825, %v826
      %v828 = vand.u32 %v827, 4294901760
      %829 = vmatpush.msra.mxu0 %v828
      %v830 = vand.u32 %v479, 4294901760
      %v831 = vsub.f32 %v479, %v830
      %v832 = vand.u32 %v831, 4294901760
      %v833 = vsub.f32 %v831, %v832
      %v834 = vand.u32 %v833, 4294901760
      %835 = vmatpush.msra.mxu0 %v834
      %v836 = vand.u32 %v476, 4294901760
      %v837 = vsub.f32 %v476, %v836
      %v838 = vand.u32 %v837, 4294901760
      %v839 = vsub.f32 %v837, %v838
      %v840 = vand.u32 %v839, 4294901760
      %841 = vmatpush.msra.mxu0 %v840
      %v842 = vand.u32 %v473, 4294901760
      %v843 = vsub.f32 %v473, %v842
      %v844 = vand.u32 %v843, 4294901760
      %v845 = vsub.f32 %v843, %v844
      %v846 = vand.u32 %v845, 4294901760
      %847 = vmatpush.msra.mxu0 %v846
      %v848 = vand.u32 %v501, 4294901760
      %849 = vmatmul.f32.gmra.mxu0 %v848
      %v850 = vpop.f32.mrf.mxu0
      %v851 = vadd.f32 %v785, %v850
      %852 = vdwg.mxu0
      %853 = vmatpush.msra.mxu0 0.0
      %854 = vmatpush.msra.mxu0 0.0
      %855 = vmatpush.msra.mxu0 0.0
      %856 = vmatpush.msra.mxu0 0.0
      %857 = vmatpush.msra.mxu0 0.0
      %858 = vmatpush.msra.mxu0 0.0
      %859 = vmatpush.msra.mxu0 0.0
      %v860 = vand.u32 %v497, 4294901760
      %v861 = vsub.f32 %v497, %v860
      %862 = vmatpush.msra.mxu0 %v861
      %v863 = vand.u32 %v494, 4294901760
      %v864 = vsub.f32 %v494, %v863
      %865 = vmatpush.msra.mxu0 %v864
      %v866 = vand.u32 %v491, 4294901760
      %v867 = vsub.f32 %v491, %v866
      %868 = vmatpush.msra.mxu0 %v867
      %v869 = vand.u32 %v488, 4294901760
      %v870 = vsub.f32 %v488, %v869
      %871 = vmatpush.msra.mxu0 %v870
      %v872 = vand.u32 %v485, 4294901760
      %v873 = vsub.f32 %v485, %v872
      %874 = vmatpush.msra.mxu0 %v873
      %v875 = vand.u32 %v482, 4294901760
      %v876 = vsub.f32 %v482, %v875
      %877 = vmatpush.msra.mxu0 %v876
      %v878 = vand.u32 %v479, 4294901760
      %v879 = vsub.f32 %v479, %v878
      %880 = vmatpush.msra.mxu0 %v879
      %v881 = vand.u32 %v476, 4294901760
      %v882 = vsub.f32 %v476, %v881
      %883 = vmatpush.msra.mxu0 %v882
      %v884 = vand.u32 %v473, 4294901760
      %v885 = vsub.f32 %v473, %v884
      %886 = vmatpush.msra.mxu0 %v885
      %v887 = vand.u32 %v501, 4294901760
      %v888 = vsub.f32 %v501, %v887
      %889 = vmatmul.f32.gmra.mxu0 %v888
      %v890 = vpop.f32.mrf.mxu0
      %v891 = vadd.f32 %v851, %v890
      %892 = vdwg.mxu0
      %893 = vmatpush.msra.mxu0 0.0
      %894 = vmatpush.msra.mxu0 0.0
      %895 = vmatpush.msra.mxu0 0.0
      %896 = vmatpush.msra.mxu0 0.0
      %897 = vmatpush.msra.mxu0 0.0
      %898 = vmatpush.msra.mxu0 0.0
      %899 = vmatpush.msra.mxu0 0.0
      %v900 = vand.u32 %v497, 4294901760
      %901 = vmatpush.msra.mxu0 %v900
      %v902 = vand.u32 %v494, 4294901760
      %903 = vmatpush.msra.mxu0 %v902
      %v904 = vand.u32 %v491, 4294901760
      %905 = vmatpush.msra.mxu0 %v904
      %v906 = vand.u32 %v488, 4294901760
      %907 = vmatpush.msra.mxu0 %v906
      %v908 = vand.u32 %v485, 4294901760
      %909 = vmatpush.msra.mxu0 %v908
      %v910 = vand.u32 %v482, 4294901760
      %911 = vmatpush.msra.mxu0 %v910
      %v912 = vand.u32 %v479, 4294901760
      %913 = vmatpush.msra.mxu0 %v912
      %v914 = vand.u32 %v476, 4294901760
      %915 = vmatpush.msra.mxu0 %v914
      %v916 = vand.u32 %v473, 4294901760
      %917 = vmatpush.msra.mxu0 %v916
      %v918 = vand.u32 %v501, 4294901760
      %v919 = vsub.f32 %v501, %v918
      %v920 = vand.u32 %v919, 4294901760
      %921 = vmatmul.f32.gmra.mxu0 %v920
      %v922 = vpop.f32.mrf.mxu0
      %v923 = vadd.f32 %v891, %v922
      %924 = vdwg.mxu0
      %925 = vmatpush.msra.mxu0 0.0
      %926 = vmatpush.msra.mxu0 0.0
      %927 = vmatpush.msra.mxu0 0.0
      %928 = vmatpush.msra.mxu0 0.0
      %929 = vmatpush.msra.mxu0 0.0
      %930 = vmatpush.msra.mxu0 0.0
      %931 = vmatpush.msra.mxu0 0.0
      %v932 = vand.u32 %v497, 4294901760
      %v933 = vsub.f32 %v497, %v932
      %v934 = vand.u32 %v933, 4294901760
      %935 = vmatpush.msra.mxu0 %v934
      %v936 = vand.u32 %v494, 4294901760
      %v937 = vsub.f32 %v494, %v936
      %v938 = vand.u32 %v937, 4294901760
      %939 = vmatpush.msra.mxu0 %v938
      %v940 = vand.u32 %v491, 4294901760
      %v941 = vsub.f32 %v491, %v940
      %v942 = vand.u32 %v941, 4294901760
      %943 = vmatpush.msra.mxu0 %v942
      %v944 = vand.u32 %v488, 4294901760
      %v945 = vsub.f32 %v488, %v944
      %v946 = vand.u32 %v945, 4294901760
      %947 = vmatpush.msra.mxu0 %v946
      %v948 = vand.u32 %v485, 4294901760
      %v949 = vsub.f32 %v485, %v948
      %v950 = vand.u32 %v949, 4294901760
      %951 = vmatpush.msra.mxu0 %v950
      %v952 = vand.u32 %v482, 4294901760
      %v953 = vsub.f32 %v482, %v952
      %v954 = vand.u32 %v953, 4294901760
      %955 = vmatpush.msra.mxu0 %v954
      %v956 = vand.u32 %v479, 4294901760
      %v957 = vsub.f32 %v479, %v956
      %v958 = vand.u32 %v957, 4294901760
      %959 = vmatpush.msra.mxu0 %v958
      %v960 = vand.u32 %v476, 4294901760
      %v961 = vsub.f32 %v476, %v960
      %v962 = vand.u32 %v961, 4294901760
      %963 = vmatpush.msra.mxu0 %v962
      %v964 = vand.u32 %v473, 4294901760
      %v965 = vsub.f32 %v473, %v964
      %v966 = vand.u32 %v965, 4294901760
      %967 = vmatpush.msra.mxu0 %v966
      %v968 = vand.u32 %v501, 4294901760
      %969 = vmatmul.f32.gmra.mxu0 %v968
      %v970 = vpop.f32.mrf.mxu0
      %v971 = vadd.f32 %v923, %v970
      %972 = vdwg.mxu0
      %973 = vmatpush.msra.mxu0 0.0
      %974 = vmatpush.msra.mxu0 0.0
      %975 = vmatpush.msra.mxu0 0.0
      %976 = vmatpush.msra.mxu0 0.0
      %977 = vmatpush.msra.mxu0 0.0
      %978 = vmatpush.msra.mxu0 0.0
      %979 = vmatpush.msra.mxu0 0.0
      %v980 = vand.u32 %v497, 4294901760
      %981 = vmatpush.msra.mxu0 %v980
      %v982 = vand.u32 %v494, 4294901760
      %983 = vmatpush.msra.mxu0 %v982
      %v984 = vand.u32 %v491, 4294901760
      %985 = vmatpush.msra.mxu0 %v984
      %v986 = vand.u32 %v488, 4294901760
      %987 = vmatpush.msra.mxu0 %v986
      %v988 = vand.u32 %v485, 4294901760
      %989 = vmatpush.msra.mxu0 %v988
      %v990 = vand.u32 %v482, 4294901760
      %991 = vmatpush.msra.mxu0 %v990
      %v992 = vand.u32 %v479, 4294901760
      %993 = vmatpush.msra.mxu0 %v992
      %v994 = vand.u32 %v476, 4294901760
      %995 = vmatpush.msra.mxu0 %v994
      %v996 = vand.u32 %v473, 4294901760
      %997 = vmatpush.msra.mxu0 %v996
      %v998 = vand.u32 %v501, 4294901760
      %999 = vmatmul.f32.gmra.mxu0 %v998
      %v1000 = vpop.f32.mrf.mxu0
      %v1001 = vadd.f32 %v971, %v1000
      %1002 = vdwg.mxu0
      %1003 = vmatpush.msra.mxu0 0.0
      %1004 = vmatpush.msra.mxu0 0.0
      %1005 = vmatpush.msra.mxu0 0.0
      %1006 = vmatpush.msra.mxu0 0.0
      %1007 = vmatpush.msra.mxu0 0.0
      %1008 = vmatpush.msra.mxu0 0.0
      %1009 = vmatpush.msra.mxu0 0.0
      %v1010 = vand.u32 %v498, 4294901760
      %1011 = vmatpush.msra.mxu0 %v1010
      %v1012 = vand.u32 %v495, 4294901760
      %1013 = vmatpush.msra.mxu0 %v1012
      %v1014 = vand.u32 %v492, 4294901760
      %1015 = vmatpush.msra.mxu0 %v1014
      %v1016 = vand.u32 %v489, 4294901760
      %1017 = vmatpush.msra.mxu0 %v1016
      %v1018 = vand.u32 %v486, 4294901760
      %1019 = vmatpush.msra.mxu0 %v1018
      %v1020 = vand.u32 %v483, 4294901760
      %1021 = vmatpush.msra.mxu0 %v1020
      %v1022 = vand.u32 %v480, 4294901760
      %1023 = vmatpush.msra.mxu0 %v1022
      %v1024 = vand.u32 %v477, 4294901760
      %1025 = vmatpush.msra.mxu0 %v1024
      %v1026 = vand.u32 %v474, 4294901760
      %1027 = vmatpush.msra.mxu0 %v1026
      %v1028 = vand.u32 %v501, 4294901760
      %v1029 = vsub.f32 %v501, %v1028
      %v1030 = vand.u32 %v1029, 4294901760
      %v1031 = vsub.f32 %v1029, %v1030
      %v1032 = vand.u32 %v1031, 4294901760
      %1033 = vmatmul.f32.gmra.mxu0 %v1032
      %v1034 = vpop.f32.mrf.mxu0
      %v1035 = vadd.f32 0.0, %v1034
      %1036 = vdwg.mxu0
      %1037 = vmatpush.msra.mxu0 0.0
      %1038 = vmatpush.msra.mxu0 0.0
      %1039 = vmatpush.msra.mxu0 0.0
      %1040 = vmatpush.msra.mxu0 0.0
      %1041 = vmatpush.msra.mxu0 0.0
      %1042 = vmatpush.msra.mxu0 0.0
      %1043 = vmatpush.msra.mxu0 0.0
      %v1044 = vand.u32 %v498, 4294901760
      %v1045 = vsub.f32 %v498, %v1044
      %v1046 = vand.u32 %v1045, 4294901760
      %v1047 = vsub.f32 %v1045, %v1046
      %v1048 = vand.u32 %v1047, 4294901760
      %1049 = vmatpush.msra.mxu0 %v1048
      %v1050 = vand.u32 %v495, 4294901760
      %v1051 = vsub.f32 %v495, %v1050
      %v1052 = vand.u32 %v1051, 4294901760
      %v1053 = vsub.f32 %v1051, %v1052
      %v1054 = vand.u32 %v1053, 4294901760
      %1055 = vmatpush.msra.mxu0 %v1054
      %v1056 = vand.u32 %v492, 4294901760
      %v1057 = vsub.f32 %v492, %v1056
      %v1058 = vand.u32 %v1057, 4294901760
      %v1059 = vsub.f32 %v1057, %v1058
      %v1060 = vand.u32 %v1059, 4294901760
      %1061 = vmatpush.msra.mxu0 %v1060
      %v1062 = vand.u32 %v489, 4294901760
      %v1063 = vsub.f32 %v489, %v1062
      %v1064 = vand.u32 %v1063, 4294901760
      %v1065 = vsub.f32 %v1063, %v1064
      %v1066 = vand.u32 %v1065, 4294901760
      %1067 = vmatpush.msra.mxu0 %v1066
      %v1068 = vand.u32 %v486, 4294901760
      %v1069 = vsub.f32 %v486, %v1068
      %v1070 = vand.u32 %v1069, 4294901760
      %v1071 = vsub.f32 %v1069, %v1070
      %v1072 = vand.u32 %v1071, 4294901760
      %1073 = vmatpush.msra.mxu0 %v1072
      %v1074 = vand.u32 %v483, 4294901760
      %v1075 = vsub.f32 %v483, %v1074
      %v1076 = vand.u32 %v1075, 4294901760
      %v1077 = vsub.f32 %v1075, %v1076
      %v1078 = vand.u32 %v1077, 4294901760
      %1079 = vmatpush.msra.mxu0 %v1078
      %v1080 = vand.u32 %v480, 4294901760
      %v1081 = vsub.f32 %v480, %v1080
      %v1082 = vand.u32 %v1081, 4294901760
      %v1083 = vsub.f32 %v1081, %v1082
      %v1084 = vand.u32 %v1083, 4294901760
      %1085 = vmatpush.msra.mxu0 %v1084
      %v1086 = vand.u32 %v477, 4294901760
      %v1087 = vsub.f32 %v477, %v1086
      %v1088 = vand.u32 %v1087, 4294901760
      %v1089 = vsub.f32 %v1087, %v1088
      %v1090 = vand.u32 %v1089, 4294901760
      %1091 = vmatpush.msra.mxu0 %v1090
      %v1092 = vand.u32 %v474, 4294901760
      %v1093 = vsub.f32 %v474, %v1092
      %v1094 = vand.u32 %v1093, 4294901760
      %v1095 = vsub.f32 %v1093, %v1094
      %v1096 = vand.u32 %v1095, 4294901760
      %1097 = vmatpush.msra.mxu0 %v1096
      %v1098 = vand.u32 %v501, 4294901760
      %1099 = vmatmul.f32.gmra.mxu0 %v1098
      %v1100 = vpop.f32.mrf.mxu0
      %v1101 = vadd.f32 %v1035, %v1100
      %1102 = vdwg.mxu0
      %1103 = vmatpush.msra.mxu0 0.0
      %1104 = vmatpush.msra.mxu0 0.0
      %1105 = vmatpush.msra.mxu0 0.0
      %1106 = vmatpush.msra.mxu0 0.0
      %1107 = vmatpush.msra.mxu0 0.0
      %1108 = vmatpush.msra.mxu0 0.0
      %1109 = vmatpush.msra.mxu0 0.0
      %v1110 = vand.u32 %v498, 4294901760
      %v1111 = vsub.f32 %v498, %v1110
      %1112 = vmatpush.msra.mxu0 %v1111
      %v1113 = vand.u32 %v495, 4294901760
      %v1114 = vsub.f32 %v495, %v1113
      %1115 = vmatpush.msra.mxu0 %v1114
      %v1116 = vand.u32 %v492, 4294901760
      %v1117 = vsub.f32 %v492, %v1116
      %1118 = vmatpush.msra.mxu0 %v1117
      %v1119 = vand.u32 %v489, 4294901760
      %v1120 = vsub.f32 %v489, %v1119
      %1121 = vmatpush.msra.mxu0 %v1120
      %v1122 = vand.u32 %v486, 4294901760
      %v1123 = vsub.f32 %v486, %v1122
      %1124 = vmatpush.msra.mxu0 %v1123
      %v1125 = vand.u32 %v483, 4294901760
      %v1126 = vsub.f32 %v483, %v1125
      %1127 = vmatpush.msra.mxu0 %v1126
      %v1128 = vand.u32 %v480, 4294901760
      %v1129 = vsub.f32 %v480, %v1128
      %1130 = vmatpush.msra.mxu0 %v1129
      %v1131 = vand.u32 %v477, 4294901760
      %v1132 = vsub.f32 %v477, %v1131
      %1133 = vmatpush.msra.mxu0 %v1132
      %v1134 = vand.u32 %v474, 4294901760
      %v1135 = vsub.f32 %v474, %v1134
      %1136 = vmatpush.msra.mxu0 %v1135
      %v1137 = vand.u32 %v501, 4294901760
      %v1138 = vsub.f32 %v501, %v1137
      %1139 = vmatmul.f32.gmra.mxu0 %v1138
      %v1140 = vpop.f32.mrf.mxu0
      %v1141 = vadd.f32 %v1101, %v1140
      %1142 = vdwg.mxu0
      %1143 = vmatpush.msra.mxu0 0.0
      %1144 = vmatpush.msra.mxu0 0.0
      %1145 = vmatpush.msra.mxu0 0.0
      %1146 = vmatpush.msra.mxu0 0.0
      %1147 = vmatpush.msra.mxu0 0.0
      %1148 = vmatpush.msra.mxu0 0.0
      %1149 = vmatpush.msra.mxu0 0.0
      %v1150 = vand.u32 %v498, 4294901760
      %1151 = vmatpush.msra.mxu0 %v1150
      %v1152 = vand.u32 %v495, 4294901760
      %1153 = vmatpush.msra.mxu0 %v1152
      %v1154 = vand.u32 %v492, 4294901760
      %1155 = vmatpush.msra.mxu0 %v1154
      %v1156 = vand.u32 %v489, 4294901760
      %1157 = vmatpush.msra.mxu0 %v1156
      %v1158 = vand.u32 %v486, 4294901760
      %1159 = vmatpush.msra.mxu0 %v1158
      %v1160 = vand.u32 %v483, 4294901760
      %1161 = vmatpush.msra.mxu0 %v1160
      %v1162 = vand.u32 %v480, 4294901760
      %1163 = vmatpush.msra.mxu0 %v1162
      %v1164 = vand.u32 %v477, 4294901760
      %1165 = vmatpush.msra.mxu0 %v1164
      %v1166 = vand.u32 %v474, 4294901760
      %1167 = vmatpush.msra.mxu0 %v1166
      %v1168 = vand.u32 %v501, 4294901760
      %v1169 = vsub.f32 %v501, %v1168
      %v1170 = vand.u32 %v1169, 4294901760
      %1171 = vmatmul.f32.gmra.mxu0 %v1170
      %v1172 = vpop.f32.mrf.mxu0
      %v1173 = vadd.f32 %v1141, %v1172
      %1174 = vdwg.mxu0
      %1175 = vmatpush.msra.mxu0 0.0
      %1176 = vmatpush.msra.mxu0 0.0
      %1177 = vmatpush.msra.mxu0 0.0
      %1178 = vmatpush.msra.mxu0 0.0
      %1179 = vmatpush.msra.mxu0 0.0
      %1180 = vmatpush.msra.mxu0 0.0
      %1181 = vmatpush.msra.mxu0 0.0
      %v1182 = vand.u32 %v498, 4294901760
      %v1183 = vsub.f32 %v498, %v1182
      %v1184 = vand.u32 %v1183, 4294901760
      %1185 = vmatpush.msra.mxu0 %v1184
      %v1186 = vand.u32 %v495, 4294901760
      %v1187 = vsub.f32 %v495, %v1186
      %v1188 = vand.u32 %v1187, 4294901760
      %1189 = vmatpush.msra.mxu0 %v1188
      %v1190 = vand.u32 %v492, 4294901760
      %v1191 = vsub.f32 %v492, %v1190
      %v1192 = vand.u32 %v1191, 4294901760
      %1193 = vmatpush.msra.mxu0 %v1192
      %v1194 = vand.u32 %v489, 4294901760
      %v1195 = vsub.f32 %v489, %v1194
      %v1196 = vand.u32 %v1195, 4294901760
      %1197 = vmatpush.msra.mxu0 %v1196
      %v1198 = vand.u32 %v486, 4294901760
      %v1199 = vsub.f32 %v486, %v1198
      %v1200 = vand.u32 %v1199, 4294901760
      %1201 = vmatpush.msra.mxu0 %v1200
      %v1202 = vand.u32 %v483, 4294901760
      %v1203 = vsub.f32 %v483, %v1202
      %v1204 = vand.u32 %v1203, 4294901760
      %1205 = vmatpush.msra.mxu0 %v1204
      %v1206 = vand.u32 %v480, 4294901760
      %v1207 = vsub.f32 %v480, %v1206
      %v1208 = vand.u32 %v1207, 4294901760
      %1209 = vmatpush.msra.mxu0 %v1208
      %v1210 = vand.u32 %v477, 4294901760
      %v1211 = vsub.f32 %v477, %v1210
      %v1212 = vand.u32 %v1211, 4294901760
      %1213 = vmatpush.msra.mxu0 %v1212
      %v1214 = vand.u32 %v474, 4294901760
      %v1215 = vsub.f32 %v474, %v1214
      %v1216 = vand.u32 %v1215, 4294901760
      %1217 = vmatpush.msra.mxu0 %v1216
      %v1218 = vand.u32 %v501, 4294901760
      %1219 = vmatmul.f32.gmra.mxu0 %v1218
      %v1220 = vpop.f32.mrf.mxu0
      %v1221 = vadd.f32 %v1173, %v1220
      %1222 = vdwg.mxu0
      %1223 = vmatpush.msra.mxu0 0.0
      %1224 = vmatpush.msra.mxu0 0.0
      %1225 = vmatpush.msra.mxu0 0.0
      %1226 = vmatpush.msra.mxu0 0.0
      %1227 = vmatpush.msra.mxu0 0.0
      %1228 = vmatpush.msra.mxu0 0.0
      %1229 = vmatpush.msra.mxu0 0.0
      %v1230 = vand.u32 %v498, 4294901760
      %1231 = vmatpush.msra.mxu0 %v1230
      %v1232 = vand.u32 %v495, 4294901760
      %1233 = vmatpush.msra.mxu0 %v1232
      %v1234 = vand.u32 %v492, 4294901760
      %1235 = vmatpush.msra.mxu0 %v1234
      %v1236 = vand.u32 %v489, 4294901760
      %1237 = vmatpush.msra.mxu0 %v1236
      %v1238 = vand.u32 %v486, 4294901760
      %1239 = vmatpush.msra.mxu0 %v1238
      %v1240 = vand.u32 %v483, 4294901760
      %1241 = vmatpush.msra.mxu0 %v1240
      %v1242 = vand.u32 %v480, 4294901760
      %1243 = vmatpush.msra.mxu0 %v1242
      %v1244 = vand.u32 %v477, 4294901760
      %1245 = vmatpush.msra.mxu0 %v1244
      %v1246 = vand.u32 %v474, 4294901760
      %1247 = vmatpush.msra.mxu0 %v1246
      %v1248 = vand.u32 %v501, 4294901760
      %1249 = vmatmul.f32.gmra.mxu0 %v1248
      %v1250 = vpop.f32.mrf.mxu0
      %v1251 = vadd.f32 %v1221, %v1250
      %1252 = vdwg.mxu0
      %v1253 = vld [vmem:[%s4] sm:$0x7]
      %v1255 = vperm.slane %v1253, 0
      %v1256 = vperm.slane %v1253, 1
      %v1257 = vperm.slane %v1253, 2
      %1258 = vrot.lane.b32.xlu0 %v1255, 109
      %v1259 = vpop.permute.xlu0 %1258
      %1260 = vrot.lane.b32.xlu0 %v1256, 109
      %v1261 = vpop.permute.xlu0 %1260
      %1262 = vrot.lane.b32.xlu0 %v1257, 109
      %v1263 = vpop.permute.xlu0 %1262
      %v1264 = vsel %vm378, %v1259, %v1261
      %v1265 = vsel %vm378, %v1261, %v1263
      %v1269 = vmul.f32 %v751, %v1264
      %v1270 = vmul.f32 %v1001, %v1265
      %v1271 = vmul.f32 %v1251, %v1263
      %1272 = vst [vmem:[%s244] sm:$0xff] 0.0
      %1273 = vst [vmem:[%s244 + $0x8] sm:$0xff] 0.0
      %1274 = vst [vmem:[%s244 + $0x10] sm:$0xff] 0.0
      %1278 = vrot.lane.b32.xlu0 %v1269, 19
      %v1279 = vpop.permute.xlu0 %1278
      %1280 = vrot.lane.b32.xlu0 %v1270, 19
      %v1281 = vpop.permute.xlu0 %1280
      %1282 = vrot.lane.b32.xlu0 %v1271, 19
      %v1283 = vpop.permute.xlu0 %1282
      %vm1284 = vcmask 154624
      %v1285 = vsel %vm1284, %v1279, %v1281
      %v1286 = vsel %vm1284, %v1281, %v1283
      %vm1290 = vcmask 1047704
      %1291 = vst.msk [vmem:[%s244] sm:$0xff] %vm1290, %v1279
      %1292 = vst [vmem:[%s244 + $0x8] sm:$0xff] %v1285
      %vm1293 = vcmask 416768
      %1294 = vst.msk [vmem:[%s244 + $0x10] sm:$0xff] %vm1293, %v1286
      %p1295 = scmp.lt.s32.totalorder %s16, 1
      %s1296 = scalar_select %p1295, %s16, 1
      %s1297 = smul.addr %s1296, 3
      %s1298 = smul.addr %s1297, 8
      %s1299 = scalar_lea.vmem %s5, %s1298
      // Predicated region
      $region41: #{unet2d_forward.14} parent=39 // pred_check
        %p1300 = pneg %p149
      $region42: #{unet2d_forward.14} parent=39 // pred_check_branch
        %1302 = sbr.rel (%p1300) target = $region44
      $region43: #{unet2d_forward.14} parent=39 // pred_region
        _
      $region44: #{unet2d_forward.14} parent=39 // pred_fallthru
        _
    $region40: #{unet2d_forward.14} parent=5 // pred_fallthru
      _
    %p1303 = scmp.le.s32.totalorder 2, %s11
    // Predicated region
    $region45: #{unet2d_forward.14} parent=5 // pred_check
      %p1304 = pneg %p1303
    $region46: #{unet2d_forward.14} parent=5 // pred_check_branch
      %1306 = sbr.rel (%p1304) target = $region48
    $region47: #{unet2d_forward.14} parent=5 // pred_region
      %s1307 = ssub.s32 %s11, 2
      // Predicated region
      $region49: #{unet2d_forward.14} parent=47 // pred_check
        %p1308 = pneg %p155
      $region50: #{unet2d_forward.14} parent=47 // pred_check_branch
        %1310 = sbr.rel (%p1308) target = $region52
      $region51: #{unet2d_forward.14} parent=47 // pred_region
        %p1311 = scmp.lt.s32.totalorder %s17, 1
        %s1312 = scalar_select %p1311, %s17, 1
        %s1313 = smul.addr %s1312, 3
        %s1314 = smul.addr %s1313, 8
        %s1315 = scalar_lea.vmem %s5, %s1314
      $region52: #{unet2d_forward.14} parent=47 // pred_fallthru
        _
    $region48: #{unet2d_forward.14} parent=5 // pred_fallthru
      _
  $region6: #{unet2d_forward.14} parent=0 // loop_footer
    %s15 = sadd.s32 1, %s11
  $region7: #{unet2d_forward.14} parent=0 // loop_footer_branch
    %10 = sbr.rel target = $region3
  $region8: #{unet2d_forward.14} parent=0 // loop_exit
    _

</llo_original>
